<compile_context>
chip_gen: v7x
topology: tpu7x:2x2x1
jax: 0.10.0
libtpu: 0.0.40
codegen_flags: <defaults>
</compile_context>

<pallas_src>
import jax
import jax.numpy as jnp
from jax.experimental import pallas as pl

# ----------------------------- model config ---------------------------------
TRG_VOCAB = 50
VOCAB_PAD = 128            # lane-dense padded vocab width for the kernel output
EMBED = 32
NUM_LAYERS = 2
HEADS = 4
HEAD_DIM = EMBED // HEADS
FWD_EXP = 4
FF_DIM = FWD_EXP * EMBED   # 128 (already lane-dense)
MAX_LEN = 16
BATCH = 2
SEQ = 8
LN_EPS = 1e-5


# ----------------------------- Pallas kernel --------------------------------
def decoder_kernel(
    xw_ref, pos_ref, enc_ref,
    wqkv_s_ref, wo_s_ref,
    wq_c_ref, wkv_c_ref, wo_c_ref,
    w1_ref, b1_ref, w2_ref, vec_ref,
    wout_ref, bout_ref,
    o_ref,
):
    N, S, E = xw_ref.shape
    S_enc = enc_ref.shape[1]
    H, D = HEADS, HEAD_DIM
    B = N * H                      # fused (batch, head) dim for attention
    NS = N * S
    scale = 1.0 / (D ** 0.5)
    f32 = jnp.float32

    def layernorm(v, g, b):
        m = jnp.mean(v, axis=-1, keepdims=True)
        var = jnp.mean((v - m) ** 2, axis=-1, keepdims=True)
        return (v - m) * jax.lax.rsqrt(var + LN_EPS) * g + b

    def bcast_batch(w3):
        # (H, a, b) -> (N*H, a, b): replicate per-head weights across batch.
        return jnp.broadcast_to(w3[None], (N,) + w3.shape).reshape(
            (B,) + w3.shape[1:])

    def bcast_heads(x3):
        # (N, Sx, E) -> (N*H, Sx, E): replicate activations across heads.
        return jnp.broadcast_to(x3[:, None], (N, H) + x3.shape[1:]).reshape(
            (B,) + x3.shape[1:])

    def attention(q_b, k_b, v_b, wo_h, bo):
        # q_b: (B, Sq, D); k_b, v_b: (B, Sk, D); wo_h: (H, D, E); bo: (1, E)
        Sq = q_b.shape[1]
        energy = jnp.einsum('bqd,bkd->bqk', q_b, k_b,
                            preferred_element_type=f32) * scale
        energy = energy - jnp.max(energy, axis=-1, keepdims=True)
        p = jnp.exp(energy)
        p = p * pl.reciprocal(jnp.sum(p, axis=-1, keepdims=True), approx=True)
        o_b = jnp.einsum('bqk,bkd->bqd', p, v_b, preferred_element_type=f32)
        # fused "concat heads + fc_out": project each head to E, sum over heads
        proj = jnp.einsum('bqd,bde->bqe', o_b, bcast_batch(wo_h),
                          preferred_element_type=f32)            # (B, Sq, E)
        merged = proj.reshape(N, H, Sq, E).sum(axis=1)           # (N, Sq, E)
        return merged.reshape(N * Sq, E) + bo

    # ---- word embedding + positional embedding (dropout = identity) --------
    x = (xw_ref[...] + pos_ref[...][None, :, :]).reshape(NS, E)

    # encoder output broadcast over heads once; reused by every layer
    enc_b = bcast_heads(enc_ref[...])                            # (B, S_enc, E)

    for li in range(NUM_LAYERS):                                 # static unroll
        vec = vec_ref[li]                                        # (9, E) slab
        bo_s, g_d, b_d = vec[0:1], vec[1:2], vec[2:3]
        bo_c, g_1, b_1 = vec[3:4], vec[4:5], vec[5:6]
        b2v, g_2, b_2 = vec[6:7], vec[7:8], vec[8:9]

        # ---- decoder self-attention (trg_mask ignored) ----------------------
        x_b = bcast_heads(x.reshape(N, S, E))                    # (B, S, E)
        qkv = jnp.einsum('bse,bef->bsf', x_b, bcast_batch(wqkv_s_ref[li]),
                         preferred_element_type=f32)             # (B, S, 3D)
        attn = attention(qkv[..., :D], qkv[..., D:2 * D], qkv[..., 2 * D:],
                         wo_s_ref[li], bo_s)                     # (NS, E)
        query = layernorm(attn + x, g_d, b_d)

        # ---- cross-attention: K/V from enc_out, Q from `query` (src_mask ignored)
        kv = jnp.einsum('bse,bef->bsf', enc_b, bcast_batch(wkv_c_ref[li]),
                        preferred_element_type=f32)              # (B, S_enc, 2D)
        q_b = jnp.einsum('bse,bed->bsd', bcast_heads(query.reshape(N, S, E)),
                         bcast_batch(wq_c_ref[li]),
                         preferred_element_type=f32)             # (B, S, D)
        attn = attention(q_b, kv[..., :D], kv[..., D:], wo_c_ref[li], bo_c)
        x1 = layernorm(attn + query, g_1, b_1)

        # ---- feed-forward: Linear -> ReLU -> Linear -------------------------
        h = jnp.dot(x1, w1_ref[li], preferred_element_type=f32) + b1_ref[li]
        h = jnp.maximum(h, 0.0)
        y = jnp.dot(h, w2_ref[li], preferred_element_type=f32) + b2v
        x = layernorm(y + x1, g_2, b_2)

    # ---- final vocab projection; lane-dense (VOCAB_PAD = 128) store ---------
    logits = jnp.dot(x, wout_ref[...], preferred_element_type=f32) + bout_ref[...]
    o_ref[...] = logits.astype(o_ref.dtype)


def decoder_pallas(token_ids, enc_out, packed):
    """token_ids: (N, S) int32; enc_out: (N, S_enc, E) f32 -> (N, S, V) f32."""
    N, S = token_ids.shape
    # Embedding lookups are gathers -> stay in plain XLA; everything else
    # (embedding add, both decoder layers, fc_out) runs in one Pallas kernel.
    word = jnp.take(packed["word_emb"], token_ids, axis=0)       # (N, S, E)
    pos = packed["pos_emb"][:S]                                  # (S, E)
    logits = pl.pallas_call(
        decoder_kernel,
        out_shape=jax.ShapeDtypeStruct((N * S, VOCAB_PAD), jnp.float32),
    )(
        word, pos, enc_out,
        packed["wqkv_self"], packed["wo_self"],
        packed["wq_cross"], packed["wkv_cross"], packed["wo_cross"],
        packed["w1"], packed["b1"], packed["w2"], packed["vecs"],
        packed["wout_pad"], packed["bout_pad"],
    )
    return logits.reshape(N, S, VOCAB_PAD)[:, :, :TRG_VOCAB]


# ----------------------------- parameter init -------------------------------
def init_params(key):
    ks = iter(jax.random.split(key, 64))

    def nrm(shape, s=0.05):
        return jax.random.normal(next(ks), shape, jnp.float32) * s

    def attn_params():
        return dict(wq=nrm((EMBED, EMBED)), wk=nrm((EMBED, EMBED)),
                    wv=nrm((EMBED, EMBED)), wo=nrm((EMBED, EMBED)),
                    bo=nrm((EMBED,), 0.02))

    layers = []
    for _ in range(NUM_LAYERS):
        layers.append(dict(
            self_attn=attn_params(),
            cross_attn=attn_params(),
            ln_dec_g=1.0 + nrm((EMBED,), 0.1), ln_dec_b=nrm((EMBED,), 0.1),
            ln1_g=1.0 + nrm((EMBED,), 0.1), ln1_b=nrm((EMBED,), 0.1),
            ln2_g=1.0 + nrm((EMBED,), 0.1), ln2_b=nrm((EMBED,), 0.1),
            w1=nrm((EMBED, FF_DIM)), b1=nrm((FF_DIM,), 0.02),
            w2=nrm((FF_DIM, EMBED)), b2=nrm((EMBED,), 0.02),
        ))
    return dict(
        word_emb=nrm((TRG_VOCAB, EMBED), 0.02),
        pos_emb=nrm((MAX_LEN, EMBED), 0.02),
        layers=layers,
        wout=nrm((EMBED, TRG_VOCAB)),
        bout=nrm((TRG_VOCAB,), 0.02),
    )


def pack_params(p):
    """Repack per-layer weights into stacked, head-split, kernel-friendly slabs."""
    E, D, H = EMBED, HEAD_DIM, HEADS

    def heads_in(w):      # (E, E) -> (H, E, D); head h reads cols [h*D:(h+1)*D]
        return jnp.transpose(w.reshape(E, H, D), (1, 0, 2))

    def heads_out(w):     # (E, E) -> (H, D, E); head h owns rows [h*D:(h+1)*D]
        return w.reshape(H, D, E)

    wqkv_s, wo_s, wq_c, wkv_c, wo_c = [], [], [], [], []
    w1s, b1s, w2s, vecs = [], [], [], []
    for lp in p["layers"]:
        sa, ca = lp["self_attn"], lp["cross_attn"]
        wqkv_s.append(jnp.concatenate(
            [heads_in(sa["wq"]), heads_in(sa["wk"]), heads_in(sa["wv"])], axis=-1))
        wo_s.append(heads_out(sa["wo"]))
        wq_c.append(heads_in(ca["wq"]))
        wkv_c.append(jnp.concatenate(
            [heads_in(ca["wk"]), heads_in(ca["wv"])], axis=-1))
        wo_c.append(heads_out(ca["wo"]))
        w1s.append(lp["w1"])
        b1s.append(lp["b1"].reshape(1, FF_DIM))
        w2s.append(lp["w2"])
        vecs.append(jnp.stack([
            sa["bo"], lp["ln_dec_g"], lp["ln_dec_b"],
            ca["bo"], lp["ln1_g"], lp["ln1_b"],
            lp["b2"], lp["ln2_g"], lp["ln2_b"],
        ], axis=0))                                              # (9, E)

    wout_pad = jnp.zeros((EMBED, VOCAB_PAD), jnp.float32)
    wout_pad = wout_pad.at[:, :TRG_VOCAB].set(p["wout"])
    bout_pad = jnp.zeros((1, VOCAB_PAD), jnp.float32)
    bout_pad = bout_pad.at[:, :TRG_VOCAB].set(p["bout"])

    return dict(
        word_emb=p["word_emb"], pos_emb=p["pos_emb"],
        wqkv_self=jnp.stack(wqkv_s), wo_self=jnp.stack(wo_s),
        wq_cross=jnp.stack(wq_c), wkv_cross=jnp.stack(wkv_c),
        wo_cross=jnp.stack(wo_c),
        w1=jnp.stack(w1s), b1=jnp.stack(b1s), w2=jnp.stack(w2s),
        vecs=jnp.stack(vecs),
        wout_pad=wout_pad, bout_pad=bout_pad,
    )


# ----------------------------- reference (pure JAX) --------------------------
def decoder_reference(token_ids, enc_out, params):
    def ln(v, g, b):
        m = jnp.mean(v, axis=-1, keepdims=True)
        var = jnp.mean((v - m) ** 2, axis=-1, keepdims=True)
        return (v - m) / jnp.sqrt(var + LN_EPS) * g + b

    def mha(values, keys, queries, ap):
        n, sq, _ = queries.shape
        sk = keys.shape[1]
        v = values @ ap["wv"]; k = keys @ ap["wk"]; q = queries @ ap["wq"]
        vh = v.reshape(n, sk, HEADS, HEAD_DIM)
        kh = k.reshape(n, sk, HEADS, HEAD_DIM)
        qh = q.reshape(n, sq, HEADS, HEAD_DIM)
        energy = jnp.einsum('nqhd,nkhd->nhqk', qh, kh) / (HEAD_DIM ** 0.5)
        att = jax.nn.softmax(energy, axis=3)
        o = jnp.einsum('nhqk,nkhd->nqhd', att, vh).reshape(n, sq, EMBED)
        return o @ ap["wo"] + ap["bo"]

    n, s = token_ids.shape
    word = jnp.take(params["word_emb"], token_ids, axis=0)
    x = word + params["pos_emb"][:s][None]
    for lp in params["layers"]:
        a = mha(x, x, x, lp["self_attn"])
        query = ln(a + x, lp["ln_dec_g"], lp["ln_dec_b"])
        a2 = mha(enc_out, enc_out, query, lp["cross_attn"])
        x1 = ln(a2 + query, lp["ln1_g"], lp["ln1_b"])
        h = jnp.maximum(x1 @ lp["w1"] + lp["b1"], 0.0)
        y = h @ lp["w2"] + lp["b2"]
        x = ln(y + x1, lp["ln2_g"], lp["ln2_b"])
    return x @ params["wout"] + params["bout"]


# ----------------------------------- main ------------------------------------
if __name__ == "__main__":
    key = jax.random.PRNGKey(0)
    pkey, tkey, ekey = jax.random.split(key, 3)
    params = init_params(pkey)
    packed = pack_params(params)

    token_ids = jax.random.randint(tkey, (BATCH, SEQ), 0, TRG_VOCAB, dtype=jnp.int32)
    enc_out = jax.random.normal(ekey, (BATCH, SEQ, EMBED), jnp.float32)

    out = jax.jit(decoder_pallas)(token_ids, enc_out, packed)
    out = jax.block_until_ready(out)

    ref = decoder_reference(token_ids, enc_out, params)
    assert out.shape == (BATCH, SEQ, TRG_VOCAB)
    # Tolerance 2e-3 (not 1e-4): the in-kernel softmax uses the EUP approximate
    # reciprocal (pl.reciprocal(..., approx=True)) per the perf review.
    assert jnp.allclose(out, ref, atol=2e-3, rtol=2e-3), "mismatch vs reference"
    print("KERNEL_OK")
</pallas_src>

<mosaic_0001>
module attributes {stable_mosaic.version = 11 : i64} {
  func.func @decoder_kernel(%arg0: memref<2x8x32xf32, #tpu.memory_space<vmem>>, %arg1: memref<8x32xf32, #tpu.memory_space<vmem>>, %arg2: memref<2x8x32xf32, #tpu.memory_space<vmem>>, %arg3: memref<2x4x32x24xf32, #tpu.memory_space<vmem>>, %arg4: memref<2x4x8x32xf32, #tpu.memory_space<vmem>>, %arg5: memref<2x4x32x8xf32, #tpu.memory_space<vmem>>, %arg6: memref<2x4x32x16xf32, #tpu.memory_space<vmem>>, %arg7: memref<2x4x8x32xf32, #tpu.memory_space<vmem>>, %arg8: memref<2x32x128xf32, #tpu.memory_space<vmem>>, %arg9: memref<2x1x128xf32, #tpu.memory_space<vmem>>, %arg10: memref<2x128x32xf32, #tpu.memory_space<vmem>>, %arg11: memref<2x9x32xf32, #tpu.memory_space<vmem>>, %arg12: memref<32x128xf32, #tpu.memory_space<vmem>>, %arg13: memref<1x128xf32, #tpu.memory_space<vmem>>, %arg14: memref<16x128xf32, #tpu.memory_space<vmem>>) attributes {dimension_semantics = [], scalar_prefetch = 0 : i64, scratch_operands = 0 : i64, tpu.core_type = #tpu.core_type<tc>} {
    %c0 = arith.constant 0 : index
    %c0_0 = arith.constant 0 : index
    %c0_1 = arith.constant 0 : index
    %0 = vector.load %arg0[%c0, %c0_0, %c0_1] : memref<2x8x32xf32, #tpu.memory_space<vmem>>, vector<2x8x32xf32>
    %c0_2 = arith.constant 0 : index
    %c0_3 = arith.constant 0 : index
    %1 = vector.load %arg1[%c0_2, %c0_3] : memref<8x32xf32, #tpu.memory_space<vmem>>, vector<8x32xf32>
    %2 = vector.shape_cast %1 : vector<8x32xf32> to vector<1x8x32xf32>
    %3 = vector.broadcast %2 : vector<1x8x32xf32> to vector<2x8x32xf32>
    %4 = arith.addf %0, %3 : vector<2x8x32xf32>
    %5 = vector.shape_cast %4 : vector<2x8x32xf32> to vector<16x32xf32>
    %c0_4 = arith.constant 0 : index
    %c0_5 = arith.constant 0 : index
    %c0_6 = arith.constant 0 : index
    %6 = vector.load %arg2[%c0_4, %c0_5, %c0_6] : memref<2x8x32xf32, #tpu.memory_space<vmem>>, vector<2x8x32xf32>
    %7 = vector.shape_cast %6 : vector<2x8x32xf32> to vector<2x1x8x32xf32>
    %8 = vector.shape_cast %7 : vector<2x1x8x32xf32> to vector<2x1x8x32xf32>
    %9 = vector.broadcast %8 : vector<2x1x8x32xf32> to vector<2x4x8x32xf32>
    %10 = vector.shape_cast %9 : vector<2x4x8x32xf32> to vector<8x8x32xf32>
    %c0_7 = arith.constant 0 : index
    %c0_8 = arith.constant 0 : index
    %c0_9 = arith.constant 0 : index
    %11 = vector.load %arg11[%c0_7, %c0_8, %c0_9] : memref<2x9x32xf32, #tpu.memory_space<vmem>>, vector<1x9x32xf32>
    %12 = vector.shape_cast %11 : vector<1x9x32xf32> to vector<9x32xf32>
    %13 = vector.extract_strided_slice %12 {offsets = [0, 0], sizes = [1, 32], strides = [1, 1]} : vector<9x32xf32> to vector<1x32xf32>
    %14 = vector.extract_strided_slice %12 {offsets = [1, 0], sizes = [1, 32], strides = [1, 1]} : vector<9x32xf32> to vector<1x32xf32>
    %15 = vector.extract_strided_slice %12 {offsets = [2, 0], sizes = [1, 32], strides = [1, 1]} : vector<9x32xf32> to vector<1x32xf32>
    %16 = vector.extract_strided_slice %12 {offsets = [3, 0], sizes = [1, 32], strides = [1, 1]} : vector<9x32xf32> to vector<1x32xf32>
    %17 = vector.extract_strided_slice %12 {offsets = [4, 0], sizes = [1, 32], strides = [1, 1]} : vector<9x32xf32> to vector<1x32xf32>
    %18 = vector.extract_strided_slice %12 {offsets = [5, 0], sizes = [1, 32], strides = [1, 1]} : vector<9x32xf32> to vector<1x32xf32>
    %19 = vector.extract_strided_slice %12 {offsets = [6, 0], sizes = [1, 32], strides = [1, 1]} : vector<9x32xf32> to vector<1x32xf32>
    %20 = vector.extract_strided_slice %12 {offsets = [7, 0], sizes = [1, 32], strides = [1, 1]} : vector<9x32xf32> to vector<1x32xf32>
    %21 = vector.extract_strided_slice %12 {offsets = [8, 0], sizes = [1, 32], strides = [1, 1]} : vector<9x32xf32> to vector<1x32xf32>
    %22 = vector.shape_cast %5 : vector<16x32xf32> to vector<2x8x32xf32>
    %23 = vector.shape_cast %22 : vector<2x8x32xf32> to vector<2x1x8x32xf32>
    %24 = vector.shape_cast %23 : vector<2x1x8x32xf32> to vector<2x1x8x32xf32>
    %25 = vector.broadcast %24 : vector<2x1x8x32xf32> to vector<2x4x8x32xf32>
    %26 = vector.shape_cast %25 : vector<2x4x8x32xf32> to vector<8x8x32xf32>
    %c0_10 = arith.constant 0 : index
    %c0_11 = arith.constant 0 : index
    %c0_12 = arith.constant 0 : index
    %c0_13 = arith.constant 0 : index
    %27 = vector.load %arg3[%c0_10, %c0_11, %c0_12, %c0_13] : memref<2x4x32x24xf32, #tpu.memory_space<vmem>>, vector<1x4x32x24xf32>
    %28 = vector.shape_cast %27 : vector<1x4x32x24xf32> to vector<4x32x24xf32>
    %29 = vector.shape_cast %28 : vector<4x32x24xf32> to vector<1x4x32x24xf32>
    %30 = vector.shape_cast %29 : vector<1x4x32x24xf32> to vector<1x4x32x24xf32>
    %31 = vector.broadcast %30 : vector<1x4x32x24xf32> to vector<2x4x32x24xf32>
    %32 = vector.shape_cast %31 : vector<2x4x32x24xf32> to vector<8x32x24xf32>
    "tpu.trace_start"() <{level = 10 : i32, message = "bse,bef->bsf"}> : () -> ()
    %cst = arith.constant dense<0.000000e+00> : vector<8x8x24xf32>
    %33 = tpu.matmul %26, %32, %cst {dimension_numbers = #tpu.dot_dimension_numbers<[2], [1], [1], [2], [0, 0, 0, 1, 1, 2], [0], [0]>} : vector<8x8x32xf32>, vector<8x32x24xf32>, vector<8x8x24xf32> -> vector<8x8x24xf32>
    "tpu.trace_stop"() : () -> ()
    %34 = vector.extract_strided_slice %33 {offsets = [0, 0, 0], sizes = [8, 8, 8], strides = [1, 1, 1]} : vector<8x8x24xf32> to vector<8x8x8xf32>
    %35 = vector.extract_strided_slice %33 {offsets = [0, 0, 8], sizes = [8, 8, 8], strides = [1, 1, 1]} : vector<8x8x24xf32> to vector<8x8x8xf32>
    %36 = vector.extract_strided_slice %33 {offsets = [0, 0, 16], sizes = [8, 8, 8], strides = [1, 1, 1]} : vector<8x8x24xf32> to vector<8x8x8xf32>
    %c0_14 = arith.constant 0 : index
    %c0_15 = arith.constant 0 : index
    %c0_16 = arith.constant 0 : index
    %c0_17 = arith.constant 0 : index
    %37 = vector.load %arg4[%c0_14, %c0_15, %c0_16, %c0_17] : memref<2x4x8x32xf32, #tpu.memory_space<vmem>>, vector<1x4x8x32xf32>
    %38 = vector.shape_cast %37 : vector<1x4x8x32xf32> to vector<4x8x32xf32>
    "tpu.trace_start"() <{level = 10 : i32, message = "bqd,bkd->bqk"}> : () -> ()
    %cst_18 = arith.constant dense<0.000000e+00> : vector<8x8x8xf32>
    %39 = tpu.matmul %34, %35, %cst_18 {dimension_numbers = #tpu.dot_dimension_numbers<[2], [2], [1], [1], [0, 0, 0, 1, 1, 1], [0], [0]>} : vector<8x8x8xf32>, vector<8x8x8xf32>, vector<8x8x8xf32> -> vector<8x8x8xf32>
    "tpu.trace_stop"() : () -> ()
    %cst_19 = arith.constant 0.353553385 : f32
    %40 = vector.broadcast %cst_19 : f32 to vector<8x8x8xf32>
    %41 = arith.mulf %39, %40 : vector<8x8x8xf32>
    %cst_20 = arith.constant dense<0xFF800000> : vector<8x8xf32>
    %42 = vector.multi_reduction <maximumf>, %41, %cst_20 [2] : vector<8x8x8xf32> to vector<8x8xf32>
    %43 = vector.shape_cast %42 : vector<8x8xf32> to vector<8x8x1xf32>
    %44 = vector.broadcast %43 : vector<8x8x1xf32> to vector<8x8x8xf32>
    %45 = arith.subf %41, %44 : vector<8x8x8xf32>
    %46 = math.exp %45 : vector<8x8x8xf32>
    %cst_21 = arith.constant dense<0.000000e+00> : vector<8x8xf32>
    %47 = vector.multi_reduction <add>, %46, %cst_21 [2] : vector<8x8x8xf32> to vector<8x8xf32>
    %48 = vector.shape_cast %47 : vector<8x8xf32> to vector<8x8x1xf32>
    %49 = tpu.reciprocal %48 {approx = true} : vector<8x8x1xf32> -> vector<8x8x1xf32>
    %50 = vector.broadcast %49 : vector<8x8x1xf32> to vector<8x8x8xf32>
    %51 = arith.mulf %46, %50 : vector<8x8x8xf32>
    "tpu.trace_start"() <{level = 10 : i32, message = "bqk,bkd->bqd"}> : () -> ()
    %cst_22 = arith.constant dense<0.000000e+00> : vector<8x8x8xf32>
    %52 = tpu.matmul %51, %36, %cst_22 {dimension_numbers = #tpu.dot_dimension_numbers<[2], [1], [1], [2], [0, 0, 0, 1, 1, 2], [0], [0]>} : vector<8x8x8xf32>, vector<8x8x8xf32>, vector<8x8x8xf32> -> vector<8x8x8xf32>
    "tpu.trace_stop"() : () -> ()
    %53 = vector.shape_cast %38 : vector<4x8x32xf32> to vector<1x4x8x32xf32>
    %54 = vector.shape_cast %53 : vector<1x4x8x32xf32> to vector<1x4x8x32xf32>
    %55 = vector.broadcast %54 : vector<1x4x8x32xf32> to vector<2x4x8x32xf32>
    %56 = vector.shape_cast %55 : vector<2x4x8x32xf32> to vector<8x8x32xf32>
    "tpu.trace_start"() <{level = 10 : i32, message = "bqd,bde->bqe"}> : () -> ()
    %cst_23 = arith.constant dense<0.000000e+00> : vector<8x8x32xf32>
    %57 = tpu.matmul %52, %56, %cst_23 {dimension_numbers = #tpu.dot_dimension_numbers<[2], [1], [1], [2], [0, 0, 0, 1, 1, 2], [0], [0]>} : vector<8x8x8xf32>, vector<8x8x32xf32>, vector<8x8x32xf32> -> vector<8x8x32xf32>
    "tpu.trace_stop"() : () -> ()
    %58 = vector.shape_cast %57 : vector<8x8x32xf32> to vector<2x4x8x32xf32>
    %cst_24 = arith.constant dense<0.000000e+00> : vector<2x8x32xf32>
    %59 = vector.multi_reduction <add>, %58, %cst_24 [1] : vector<2x4x8x32xf32> to vector<2x8x32xf32>
    %60 = vector.shape_cast %59 : vector<2x8x32xf32> to vector<16x32xf32>
    %61 = vector.broadcast %13 : vector<1x32xf32> to vector<16x32xf32>
    %62 = arith.addf %60, %61 : vector<16x32xf32>
    %63 = arith.addf %62, %5 : vector<16x32xf32>
    %cst_25 = arith.constant dense<0.000000e+00> : vector<16xf32>
    %64 = vector.multi_reduction <add>, %63, %cst_25 [1] : vector<16x32xf32> to vector<16xf32>
    %65 = vector.shape_cast %64 : vector<16xf32> to vector<16x1xf32>
    %cst_26 = arith.constant 3.200000e+01 : f32
    %66 = vector.broadcast %cst_26 : f32 to vector<16x1xf32>
    %67 = arith.divf %65, %66 : vector<16x1xf32>
    %68 = vector.broadcast %67 : vector<16x1xf32> to vector<16x32xf32>
    %69 = arith.subf %63, %68 : vector<16x32xf32>
    %70 = arith.mulf %69, %69 : vector<16x32xf32>
    %cst_27 = arith.constant dense<0.000000e+00> : vector<16xf32>
    %71 = vector.multi_reduction <add>, %70, %cst_27 [1] : vector<16x32xf32> to vector<16xf32>
    %72 = vector.shape_cast %71 : vector<16xf32> to vector<16x1xf32>
    %cst_28 = arith.constant 3.200000e+01 : f32
    %73 = vector.broadcast %cst_28 : f32 to vector<16x1xf32>
    %74 = arith.divf %72, %73 : vector<16x1xf32>
    %75 = vector.broadcast %67 : vector<16x1xf32> to vector<16x32xf32>
    %76 = arith.subf %63, %75 : vector<16x32xf32>
    %cst_29 = arith.constant 9.99999974E-6 : f32
    %77 = vector.broadcast %cst_29 : f32 to vector<16x1xf32>
    %78 = arith.addf %74, %77 : vector<16x1xf32>
    %79 = math.rsqrt %78 : vector<16x1xf32>
    %80 = vector.broadcast %79 : vector<16x1xf32> to vector<16x32xf32>
    %81 = arith.mulf %76, %80 : vector<16x32xf32>
    %82 = vector.broadcast %14 : vector<1x32xf32> to vector<16x32xf32>
    %83 = arith.mulf %81, %82 : vector<16x32xf32>
    %84 = vector.broadcast %15 : vector<1x32xf32> to vector<16x32xf32>
    %85 = arith.addf %83, %84 : vector<16x32xf32>
    %c0_30 = arith.constant 0 : index
    %c0_31 = arith.constant 0 : index
    %c0_32 = arith.constant 0 : index
    %c0_33 = arith.constant 0 : index
    %86 = vector.load %arg6[%c0_30, %c0_31, %c0_32, %c0_33] : memref<2x4x32x16xf32, #tpu.memory_space<vmem>>, vector<1x4x32x16xf32>
    %87 = vector.shape_cast %86 : vector<1x4x32x16xf32> to vector<4x32x16xf32>
    %88 = vector.shape_cast %87 : vector<4x32x16xf32> to vector<1x4x32x16xf32>
    %89 = vector.shape_cast %88 : vector<1x4x32x16xf32> to vector<1x4x32x16xf32>
    %90 = vector.broadcast %89 : vector<1x4x32x16xf32> to vector<2x4x32x16xf32>
    %91 = vector.shape_cast %90 : vector<2x4x32x16xf32> to vector<8x32x16xf32>
    "tpu.trace_start"() <{level = 10 : i32, message = "bse,bef->bsf"}> : () -> ()
    %cst_34 = arith.constant dense<0.000000e+00> : vector<8x8x16xf32>
    %92 = tpu.matmul %10, %91, %cst_34 {dimension_numbers = #tpu.dot_dimension_numbers<[2], [1], [1], [2], [0, 0, 0, 1, 1, 2], [0], [0]>} : vector<8x8x32xf32>, vector<8x32x16xf32>, vector<8x8x16xf32> -> vector<8x8x16xf32>
    "tpu.trace_stop"() : () -> ()
    %93 = vector.shape_cast %85 : vector<16x32xf32> to vector<2x8x32xf32>
    %94 = vector.shape_cast %93 : vector<2x8x32xf32> to vector<2x1x8x32xf32>
    %95 = vector.shape_cast %94 : vector<2x1x8x32xf32> to vector<2x1x8x32xf32>
    %96 = vector.broadcast %95 : vector<2x1x8x32xf32> to vector<2x4x8x32xf32>
    %97 = vector.shape_cast %96 : vector<2x4x8x32xf32> to vector<8x8x32xf32>
    %c0_35 = arith.constant 0 : index
    %c0_36 = arith.constant 0 : index
    %c0_37 = arith.constant 0 : index
    %c0_38 = arith.constant 0 : index
    %98 = vector.load %arg5[%c0_35, %c0_36, %c0_37, %c0_38] : memref<2x4x32x8xf32, #tpu.memory_space<vmem>>, vector<1x4x32x8xf32>
    %99 = vector.shape_cast %98 : vector<1x4x32x8xf32> to vector<4x32x8xf32>
    %100 = vector.shape_cast %99 : vector<4x32x8xf32> to vector<1x4x32x8xf32>
    %101 = vector.shape_cast %100 : vector<1x4x32x8xf32> to vector<1x4x32x8xf32>
    %102 = vector.broadcast %101 : vector<1x4x32x8xf32> to vector<2x4x32x8xf32>
    %103 = vector.shape_cast %102 : vector<2x4x32x8xf32> to vector<8x32x8xf32>
    "tpu.trace_start"() <{level = 10 : i32, message = "bse,bed->bsd"}> : () -> ()
    %cst_39 = arith.constant dense<0.000000e+00> : vector<8x8x8xf32>
    %104 = tpu.matmul %97, %103, %cst_39 {dimension_numbers = #tpu.dot_dimension_numbers<[2], [1], [1], [2], [0, 0, 0, 1, 1, 2], [0], [0]>} : vector<8x8x32xf32>, vector<8x32x8xf32>, vector<8x8x8xf32> -> vector<8x8x8xf32>
    "tpu.trace_stop"() : () -> ()
    %105 = vector.extract_strided_slice %92 {offsets = [0, 0, 0], sizes = [8, 8, 8], strides = [1, 1, 1]} : vector<8x8x16xf32> to vector<8x8x8xf32>
    %106 = vector.extract_strided_slice %92 {offsets = [0, 0, 8], sizes = [8, 8, 8], strides = [1, 1, 1]} : vector<8x8x16xf32> to vector<8x8x8xf32>
    %c0_40 = arith.constant 0 : index
    %c0_41 = arith.constant 0 : index
    %c0_42 = arith.constant 0 : index
    %c0_43 = arith.constant 0 : index
    %107 = vector.load %arg7[%c0_40, %c0_41, %c0_42, %c0_43] : memref<2x4x8x32xf32, #tpu.memory_space<vmem>>, vector<1x4x8x32xf32>
    %108 = vector.shape_cast %107 : vector<1x4x8x32xf32> to vector<4x8x32xf32>
    "tpu.trace_start"() <{level = 10 : i32, message = "bqd,bkd->bqk"}> : () -> ()
    %cst_44 = arith.constant dense<0.000000e+00> : vector<8x8x8xf32>
    %109 = tpu.matmul %104, %105, %cst_44 {dimension_numbers = #tpu.dot_dimension_numbers<[2], [2], [1], [1], [0, 0, 0, 1, 1, 1], [0], [0]>} : vector<8x8x8xf32>, vector<8x8x8xf32>, vector<8x8x8xf32> -> vector<8x8x8xf32>
    "tpu.trace_stop"() : () -> ()
    %cst_45 = arith.constant 0.353553385 : f32
    %110 = vector.broadcast %cst_45 : f32 to vector<8x8x8xf32>
    %111 = arith.mulf %109, %110 : vector<8x8x8xf32>
    %cst_46 = arith.constant dense<0xFF800000> : vector<8x8xf32>
    %112 = vector.multi_reduction <maximumf>, %111, %cst_46 [2] : vector<8x8x8xf32> to vector<8x8xf32>
    %113 = vector.shape_cast %112 : vector<8x8xf32> to vector<8x8x1xf32>
    %114 = vector.broadcast %113 : vector<8x8x1xf32> to vector<8x8x8xf32>
    %115 = arith.subf %111, %114 : vector<8x8x8xf32>
    %116 = math.exp %115 : vector<8x8x8xf32>
    %cst_47 = arith.constant dense<0.000000e+00> : vector<8x8xf32>
    %117 = vector.multi_reduction <add>, %116, %cst_47 [2] : vector<8x8x8xf32> to vector<8x8xf32>
    %118 = vector.shape_cast %117 : vector<8x8xf32> to vector<8x8x1xf32>
    %119 = tpu.reciprocal %118 {approx = true} : vector<8x8x1xf32> -> vector<8x8x1xf32>
    %120 = vector.broadcast %119 : vector<8x8x1xf32> to vector<8x8x8xf32>
    %121 = arith.mulf %116, %120 : vector<8x8x8xf32>
    "tpu.trace_start"() <{level = 10 : i32, message = "bqk,bkd->bqd"}> : () -> ()
    %cst_48 = arith.constant dense<0.000000e+00> : vector<8x8x8xf32>
    %122 = tpu.matmul %121, %106, %cst_48 {dimension_numbers = #tpu.dot_dimension_numbers<[2], [1], [1], [2], [0, 0, 0, 1, 1, 2], [0], [0]>} : vector<8x8x8xf32>, vector<8x8x8xf32>, vector<8x8x8xf32> -> vector<8x8x8xf32>
    "tpu.trace_stop"() : () -> ()
    %123 = vector.shape_cast %108 : vector<4x8x32xf32> to vector<1x4x8x32xf32>
    %124 = vector.shape_cast %123 : vector<1x4x8x32xf32> to vector<1x4x8x32xf32>
    %125 = vector.broadcast %124 : vector<1x4x8x32xf32> to vector<2x4x8x32xf32>
    %126 = vector.shape_cast %125 : vector<2x4x8x32xf32> to vector<8x8x32xf32>
    "tpu.trace_start"() <{level = 10 : i32, message = "bqd,bde->bqe"}> : () -> ()
    %cst_49 = arith.constant dense<0.000000e+00> : vector<8x8x32xf32>
    %127 = tpu.matmul %122, %126, %cst_49 {dimension_numbers = #tpu.dot_dimension_numbers<[2], [1], [1], [2], [0, 0, 0, 1, 1, 2], [0], [0]>} : vector<8x8x8xf32>, vector<8x8x32xf32>, vector<8x8x32xf32> -> vector<8x8x32xf32>
    "tpu.trace_stop"() : () -> ()
    %128 = vector.shape_cast %127 : vector<8x8x32xf32> to vector<2x4x8x32xf32>
    %cst_50 = arith.constant dense<0.000000e+00> : vector<2x8x32xf32>
    %129 = vector.multi_reduction <add>, %128, %cst_50 [1] : vector<2x4x8x32xf32> to vector<2x8x32xf32>
    %130 = vector.shape_cast %129 : vector<2x8x32xf32> to vector<16x32xf32>
    %131 = vector.broadcast %16 : vector<1x32xf32> to vector<16x32xf32>
    %132 = arith.addf %130, %131 : vector<16x32xf32>
    %133 = arith.addf %132, %85 : vector<16x32xf32>
    %cst_51 = arith.constant dense<0.000000e+00> : vector<16xf32>
    %134 = vector.multi_reduction <add>, %133, %cst_51 [1] : vector<16x32xf32> to vector<16xf32>
    %135 = vector.shape_cast %134 : vector<16xf32> to vector<16x1xf32>
    %cst_52 = arith.constant 3.200000e+01 : f32
    %136 = vector.broadcast %cst_52 : f32 to vector<16x1xf32>
    %137 = arith.divf %135, %136 : vector<16x1xf32>
    %138 = vector.broadcast %137 : vector<16x1xf32> to vector<16x32xf32>
    %139 = arith.subf %133, %138 : vector<16x32xf32>
    %140 = arith.mulf %139, %139 : vector<16x32xf32>
    %cst_53 = arith.constant dense<0.000000e+00> : vector<16xf32>
    %141 = vector.multi_reduction <add>, %140, %cst_53 [1] : vector<16x32xf32> to vector<16xf32>
    %142 = vector.shape_cast %141 : vector<16xf32> to vector<16x1xf32>
    %cst_54 = arith.constant 3.200000e+01 : f32
    %143 = vector.broadcast %cst_54 : f32 to vector<16x1xf32>
    %144 = arith.divf %142, %143 : vector<16x1xf32>
    %145 = vector.broadcast %137 : vector<16x1xf32> to vector<16x32xf32>
    %146 = arith.subf %133, %145 : vector<16x32xf32>
    %cst_55 = arith.constant 9.99999974E-6 : f32
    %147 = vector.broadcast %cst_55 : f32 to vector<16x1xf32>
    %148 = arith.addf %144, %147 : vector<16x1xf32>
    %149 = math.rsqrt %148 : vector<16x1xf32>
    %150 = vector.broadcast %149 : vector<16x1xf32> to vector<16x32xf32>
    %151 = arith.mulf %146, %150 : vector<16x32xf32>
    %152 = vector.broadcast %17 : vector<1x32xf32> to vector<16x32xf32>
    %153 = arith.mulf %151, %152 : vector<16x32xf32>
    %154 = vector.broadcast %18 : vector<1x32xf32> to vector<16x32xf32>
    %155 = arith.addf %153, %154 : vector<16x32xf32>
    %c0_56 = arith.constant 0 : index
    %c0_57 = arith.constant 0 : index
    %c0_58 = arith.constant 0 : index
    %156 = vector.load %arg8[%c0_56, %c0_57, %c0_58] : memref<2x32x128xf32, #tpu.memory_space<vmem>>, vector<1x32x128xf32>
    %157 = vector.shape_cast %156 : vector<1x32x128xf32> to vector<32x128xf32>
    %cst_59 = arith.constant dense<0.000000e+00> : vector<16x128xf32>
    %158 = tpu.matmul %155, %157, %cst_59 {dimension_numbers = #tpu.dot_dimension_numbers<[1], [0], [0], [1], [0, 0, 1, 1], [], []>} : vector<16x32xf32>, vector<32x128xf32>, vector<16x128xf32> -> vector<16x128xf32>
    %c0_60 = arith.constant 0 : index
    %c0_61 = arith.constant 0 : index
    %c0_62 = arith.constant 0 : index
    %159 = vector.load %arg9[%c0_60, %c0_61, %c0_62] : memref<2x1x128xf32, #tpu.memory_space<vmem>>, vector<1x1x128xf32>
    %160 = vector.shape_cast %159 : vector<1x1x128xf32> to vector<1x128xf32>
    %161 = vector.broadcast %160 : vector<1x128xf32> to vector<16x128xf32>
    %162 = arith.addf %158, %161 : vector<16x128xf32>
    %cst_63 = arith.constant 0.000000e+00 : f32
    %163 = vector.broadcast %cst_63 : f32 to vector<16x128xf32>
    %164 = arith.maximumf %162, %163 : vector<16x128xf32>
    %c0_64 = arith.constant 0 : index
    %c0_65 = arith.constant 0 : index
    %c0_66 = arith.constant 0 : index
    %165 = vector.load %arg10[%c0_64, %c0_65, %c0_66] : memref<2x128x32xf32, #tpu.memory_space<vmem>>, vector<1x128x32xf32>
    %166 = vector.shape_cast %165 : vector<1x128x32xf32> to vector<128x32xf32>
    %cst_67 = arith.constant dense<0.000000e+00> : vector<16x32xf32>
    %167 = tpu.matmul %164, %166, %cst_67 {dimension_numbers = #tpu.dot_dimension_numbers<[1], [0], [0], [1], [0, 0, 1, 1], [], []>} : vector<16x128xf32>, vector<128x32xf32>, vector<16x32xf32> -> vector<16x32xf32>
    %168 = vector.broadcast %19 : vector<1x32xf32> to vector<16x32xf32>
    %169 = arith.addf %167, %168 : vector<16x32xf32>
    %170 = arith.addf %169, %155 : vector<16x32xf32>
    %cst_68 = arith.constant dense<0.000000e+00> : vector<16xf32>
    %171 = vector.multi_reduction <add>, %170, %cst_68 [1] : vector<16x32xf32> to vector<16xf32>
    %172 = vector.shape_cast %171 : vector<16xf32> to vector<16x1xf32>
    %cst_69 = arith.constant 3.200000e+01 : f32
    %173 = vector.broadcast %cst_69 : f32 to vector<16x1xf32>
    %174 = arith.divf %172, %173 : vector<16x1xf32>
    %175 = vector.broadcast %174 : vector<16x1xf32> to vector<16x32xf32>
    %176 = arith.subf %170, %175 : vector<16x32xf32>
    %177 = arith.mulf %176, %176 : vector<16x32xf32>
    %cst_70 = arith.constant dense<0.000000e+00> : vector<16xf32>
    %178 = vector.multi_reduction <add>, %177, %cst_70 [1] : vector<16x32xf32> to vector<16xf32>
    %179 = vector.shape_cast %178 : vector<16xf32> to vector<16x1xf32>
    %cst_71 = arith.constant 3.200000e+01 : f32
    %180 = vector.broadcast %cst_71 : f32 to vector<16x1xf32>
    %181 = arith.divf %179, %180 : vector<16x1xf32>
    %182 = vector.broadcast %174 : vector<16x1xf32> to vector<16x32xf32>
    %183 = arith.subf %170, %182 : vector<16x32xf32>
    %cst_72 = arith.constant 9.99999974E-6 : f32
    %184 = vector.broadcast %cst_72 : f32 to vector<16x1xf32>
    %185 = arith.addf %181, %184 : vector<16x1xf32>
    %186 = math.rsqrt %185 : vector<16x1xf32>
    %187 = vector.broadcast %186 : vector<16x1xf32> to vector<16x32xf32>
    %188 = arith.mulf %183, %187 : vector<16x32xf32>
    %189 = vector.broadcast %20 : vector<1x32xf32> to vector<16x32xf32>
    %190 = arith.mulf %188, %189 : vector<16x32xf32>
    %191 = vector.broadcast %21 : vector<1x32xf32> to vector<16x32xf32>
    %192 = arith.addf %190, %191 : vector<16x32xf32>
    %c1 = arith.constant 1 : index
    %c0_73 = arith.constant 0 : index
    %c0_74 = arith.constant 0 : index
    %193 = vector.load %arg11[%c1, %c0_73, %c0_74] : memref<2x9x32xf32, #tpu.memory_space<vmem>>, vector<1x9x32xf32>
    %194 = vector.shape_cast %193 : vector<1x9x32xf32> to vector<9x32xf32>
    %195 = vector.extract_strided_slice %194 {offsets = [0, 0], sizes = [1, 32], strides = [1, 1]} : vector<9x32xf32> to vector<1x32xf32>
    %196 = vector.extract_strided_slice %194 {offsets = [1, 0], sizes = [1, 32], strides = [1, 1]} : vector<9x32xf32> to vector<1x32xf32>
    %197 = vector.extract_strided_slice %194 {offsets = [2, 0], sizes = [1, 32], strides = [1, 1]} : vector<9x32xf32> to vector<1x32xf32>
    %198 = vector.extract_strided_slice %194 {offsets = [3, 0], sizes = [1, 32], strides = [1, 1]} : vector<9x32xf32> to vector<1x32xf32>
    %199 = vector.extract_strided_slice %194 {offsets = [4, 0], sizes = [1, 32], strides = [1, 1]} : vector<9x32xf32> to vector<1x32xf32>
    %200 = vector.extract_strided_slice %194 {offsets = [5, 0], sizes = [1, 32], strides = [1, 1]} : vector<9x32xf32> to vector<1x32xf32>
    %201 = vector.extract_strided_slice %194 {offsets = [6, 0], sizes = [1, 32], strides = [1, 1]} : vector<9x32xf32> to vector<1x32xf32>
    %202 = vector.extract_strided_slice %194 {offsets = [7, 0], sizes = [1, 32], strides = [1, 1]} : vector<9x32xf32> to vector<1x32xf32>
    %203 = vector.extract_strided_slice %194 {offsets = [8, 0], sizes = [1, 32], strides = [1, 1]} : vector<9x32xf32> to vector<1x32xf32>
    %204 = vector.shape_cast %192 : vector<16x32xf32> to vector<2x8x32xf32>
    %205 = vector.shape_cast %204 : vector<2x8x32xf32> to vector<2x1x8x32xf32>
    %206 = vector.shape_cast %205 : vector<2x1x8x32xf32> to vector<2x1x8x32xf32>
    %207 = vector.broadcast %206 : vector<2x1x8x32xf32> to vector<2x4x8x32xf32>
    %208 = vector.shape_cast %207 : vector<2x4x8x32xf32> to vector<8x8x32xf32>
    %c1_75 = arith.constant 1 : index
    %c0_76 = arith.constant 0 : index
    %c0_77 = arith.constant 0 : index
    %c0_78 = arith.constant 0 : index
    %209 = vector.load %arg3[%c1_75, %c0_76, %c0_77, %c0_78] : memref<2x4x32x24xf32, #tpu.memory_space<vmem>>, vector<1x4x32x24xf32>
    %210 = vector.shape_cast %209 : vector<1x4x32x24xf32> to vector<4x32x24xf32>
    %211 = vector.shape_cast %210 : vector<4x32x24xf32> to vector<1x4x32x24xf32>
    %212 = vector.shape_cast %211 : vector<1x4x32x24xf32> to vector<1x4x32x24xf32>
    %213 = vector.broadcast %212 : vector<1x4x32x24xf32> to vector<2x4x32x24xf32>
    %214 = vector.shape_cast %213 : vector<2x4x32x24xf32> to vector<8x32x24xf32>
    "tpu.trace_start"() <{level = 10 : i32, message = "bse,bef->bsf"}> : () -> ()
    %cst_79 = arith.constant dense<0.000000e+00> : vector<8x8x24xf32>
    %215 = tpu.matmul %208, %214, %cst_79 {dimension_numbers = #tpu.dot_dimension_numbers<[2], [1], [1], [2], [0, 0, 0, 1, 1, 2], [0], [0]>} : vector<8x8x32xf32>, vector<8x32x24xf32>, vector<8x8x24xf32> -> vector<8x8x24xf32>
    "tpu.trace_stop"() : () -> ()
    %216 = vector.extract_strided_slice %215 {offsets = [0, 0, 0], sizes = [8, 8, 8], strides = [1, 1, 1]} : vector<8x8x24xf32> to vector<8x8x8xf32>
    %217 = vector.extract_strided_slice %215 {offsets = [0, 0, 8], sizes = [8, 8, 8], strides = [1, 1, 1]} : vector<8x8x24xf32> to vector<8x8x8xf32>
    %218 = vector.extract_strided_slice %215 {offsets = [0, 0, 16], sizes = [8, 8, 8], strides = [1, 1, 1]} : vector<8x8x24xf32> to vector<8x8x8xf32>
    %c1_80 = arith.constant 1 : index
    %c0_81 = arith.constant 0 : index
    %c0_82 = arith.constant 0 : index
    %c0_83 = arith.constant 0 : index
    %219 = vector.load %arg4[%c1_80, %c0_81, %c0_82, %c0_83] : memref<2x4x8x32xf32, #tpu.memory_space<vmem>>, vector<1x4x8x32xf32>
    %220 = vector.shape_cast %219 : vector<1x4x8x32xf32> to vector<4x8x32xf32>
    "tpu.trace_start"() <{level = 10 : i32, message = "bqd,bkd->bqk"}> : () -> ()
    %cst_84 = arith.constant dense<0.000000e+00> : vector<8x8x8xf32>
    %221 = tpu.matmul %216, %217, %cst_84 {dimension_numbers = #tpu.dot_dimension_numbers<[2], [2], [1], [1], [0, 0, 0, 1, 1, 1], [0], [0]>} : vector<8x8x8xf32>, vector<8x8x8xf32>, vector<8x8x8xf32> -> vector<8x8x8xf32>
    "tpu.trace_stop"() : () -> ()
    %cst_85 = arith.constant 0.353553385 : f32
    %222 = vector.broadcast %cst_85 : f32 to vector<8x8x8xf32>
    %223 = arith.mulf %221, %222 : vector<8x8x8xf32>
    %cst_86 = arith.constant dense<0xFF800000> : vector<8x8xf32>
    %224 = vector.multi_reduction <maximumf>, %223, %cst_86 [2] : vector<8x8x8xf32> to vector<8x8xf32>
    %225 = vector.shape_cast %224 : vector<8x8xf32> to vector<8x8x1xf32>
    %226 = vector.broadcast %225 : vector<8x8x1xf32> to vector<8x8x8xf32>
    %227 = arith.subf %223, %226 : vector<8x8x8xf32>
    %228 = math.exp %227 : vector<8x8x8xf32>
    %cst_87 = arith.constant dense<0.000000e+00> : vector<8x8xf32>
    %229 = vector.multi_reduction <add>, %228, %cst_87 [2] : vector<8x8x8xf32> to vector<8x8xf32>
    %230 = vector.shape_cast %229 : vector<8x8xf32> to vector<8x8x1xf32>
    %231 = tpu.reciprocal %230 {approx = true} : vector<8x8x1xf32> -> vector<8x8x1xf32>
    %232 = vector.broadcast %231 : vector<8x8x1xf32> to vector<8x8x8xf32>
    %233 = arith.mulf %228, %232 : vector<8x8x8xf32>
    "tpu.trace_start"() <{level = 10 : i32, message = "bqk,bkd->bqd"}> : () -> ()
    %cst_88 = arith.constant dense<0.000000e+00> : vector<8x8x8xf32>
    %234 = tpu.matmul %233, %218, %cst_88 {dimension_numbers = #tpu.dot_dimension_numbers<[2], [1], [1], [2], [0, 0, 0, 1, 1, 2], [0], [0]>} : vector<8x8x8xf32>, vector<8x8x8xf32>, vector<8x8x8xf32> -> vector<8x8x8xf32>
    "tpu.trace_stop"() : () -> ()
    %235 = vector.shape_cast %220 : vector<4x8x32xf32> to vector<1x4x8x32xf32>
    %236 = vector.shape_cast %235 : vector<1x4x8x32xf32> to vector<1x4x8x32xf32>
    %237 = vector.broadcast %236 : vector<1x4x8x32xf32> to vector<2x4x8x32xf32>
    %238 = vector.shape_cast %237 : vector<2x4x8x32xf32> to vector<8x8x32xf32>
    "tpu.trace_start"() <{level = 10 : i32, message = "bqd,bde->bqe"}> : () -> ()
    %cst_89 = arith.constant dense<0.000000e+00> : vector<8x8x32xf32>
    %239 = tpu.matmul %234, %238, %cst_89 {dimension_numbers = #tpu.dot_dimension_numbers<[2], [1], [1], [2], [0, 0, 0, 1, 1, 2], [0], [0]>} : vector<8x8x8xf32>, vector<8x8x32xf32>, vector<8x8x32xf32> -> vector<8x8x32xf32>
    "tpu.trace_stop"() : () -> ()
    %240 = vector.shape_cast %239 : vector<8x8x32xf32> to vector<2x4x8x32xf32>
    %cst_90 = arith.constant dense<0.000000e+00> : vector<2x8x32xf32>
    %241 = vector.multi_reduction <add>, %240, %cst_90 [1] : vector<2x4x8x32xf32> to vector<2x8x32xf32>
    %242 = vector.shape_cast %241 : vector<2x8x32xf32> to vector<16x32xf32>
    %243 = vector.broadcast %195 : vector<1x32xf32> to vector<16x32xf32>
    %244 = arith.addf %242, %243 : vector<16x32xf32>
    %245 = arith.addf %244, %192 : vector<16x32xf32>
    %cst_91 = arith.constant dense<0.000000e+00> : vector<16xf32>
    %246 = vector.multi_reduction <add>, %245, %cst_91 [1] : vector<16x32xf32> to vector<16xf32>
    %247 = vector.shape_cast %246 : vector<16xf32> to vector<16x1xf32>
    %cst_92 = arith.constant 3.200000e+01 : f32
    %248 = vector.broadcast %cst_92 : f32 to vector<16x1xf32>
    %249 = arith.divf %247, %248 : vector<16x1xf32>
    %250 = vector.broadcast %249 : vector<16x1xf32> to vector<16x32xf32>
    %251 = arith.subf %245, %250 : vector<16x32xf32>
    %252 = arith.mulf %251, %251 : vector<16x32xf32>
    %cst_93 = arith.constant dense<0.000000e+00> : vector<16xf32>
    %253 = vector.multi_reduction <add>, %252, %cst_93 [1] : vector<16x32xf32> to vector<16xf32>
    %254 = vector.shape_cast %253 : vector<16xf32> to vector<16x1xf32>
    %cst_94 = arith.constant 3.200000e+01 : f32
    %255 = vector.broadcast %cst_94 : f32 to vector<16x1xf32>
    %256 = arith.divf %254, %255 : vector<16x1xf32>
    %257 = vector.broadcast %249 : vector<16x1xf32> to vector<16x32xf32>
    %258 = arith.subf %245, %257 : vector<16x32xf32>
    %cst_95 = arith.constant 9.99999974E-6 : f32
    %259 = vector.broadcast %cst_95 : f32 to vector<16x1xf32>
    %260 = arith.addf %256, %259 : vector<16x1xf32>
    %261 = math.rsqrt %260 : vector<16x1xf32>
    %262 = vector.broadcast %261 : vector<16x1xf32> to vector<16x32xf32>
    %263 = arith.mulf %258, %262 : vector<16x32xf32>
    %264 = vector.broadcast %196 : vector<1x32xf32> to vector<16x32xf32>
    %265 = arith.mulf %263, %264 : vector<16x32xf32>
    %266 = vector.broadcast %197 : vector<1x32xf32> to vector<16x32xf32>
    %267 = arith.addf %265, %266 : vector<16x32xf32>
    %c1_96 = arith.constant 1 : index
    %c0_97 = arith.constant 0 : index
    %c0_98 = arith.constant 0 : index
    %c0_99 = arith.constant 0 : index
    %268 = vector.load %arg6[%c1_96, %c0_97, %c0_98, %c0_99] : memref<2x4x32x16xf32, #tpu.memory_space<vmem>>, vector<1x4x32x16xf32>
    %269 = vector.shape_cast %268 : vector<1x4x32x16xf32> to vector<4x32x16xf32>
    %270 = vector.shape_cast %269 : vector<4x32x16xf32> to vector<1x4x32x16xf32>
    %271 = vector.shape_cast %270 : vector<1x4x32x16xf32> to vector<1x4x32x16xf32>
    %272 = vector.broadcast %271 : vector<1x4x32x16xf32> to vector<2x4x32x16xf32>
    %273 = vector.shape_cast %272 : vector<2x4x32x16xf32> to vector<8x32x16xf32>
    "tpu.trace_start"() <{level = 10 : i32, message = "bse,bef->bsf"}> : () -> ()
    %cst_100 = arith.constant dense<0.000000e+00> : vector<8x8x16xf32>
    %274 = tpu.matmul %10, %273, %cst_100 {dimension_numbers = #tpu.dot_dimension_numbers<[2], [1], [1], [2], [0, 0, 0, 1, 1, 2], [0], [0]>} : vector<8x8x32xf32>, vector<8x32x16xf32>, vector<8x8x16xf32> -> vector<8x8x16xf32>
    "tpu.trace_stop"() : () -> ()
    %275 = vector.shape_cast %267 : vector<16x32xf32> to vector<2x8x32xf32>
    %276 = vector.shape_cast %275 : vector<2x8x32xf32> to vector<2x1x8x32xf32>
    %277 = vector.shape_cast %276 : vector<2x1x8x32xf32> to vector<2x1x8x32xf32>
    %278 = vector.broadcast %277 : vector<2x1x8x32xf32> to vector<2x4x8x32xf32>
    %279 = vector.shape_cast %278 : vector<2x4x8x32xf32> to vector<8x8x32xf32>
    %c1_101 = arith.constant 1 : index
    %c0_102 = arith.constant 0 : index
    %c0_103 = arith.constant 0 : index
    %c0_104 = arith.constant 0 : index
    %280 = vector.load %arg5[%c1_101, %c0_102, %c0_103, %c0_104] : memref<2x4x32x8xf32, #tpu.memory_space<vmem>>, vector<1x4x32x8xf32>
    %281 = vector.shape_cast %280 : vector<1x4x32x8xf32> to vector<4x32x8xf32>
    %282 = vector.shape_cast %281 : vector<4x32x8xf32> to vector<1x4x32x8xf32>
    %283 = vector.shape_cast %282 : vector<1x4x32x8xf32> to vector<1x4x32x8xf32>
    %284 = vector.broadcast %283 : vector<1x4x32x8xf32> to vector<2x4x32x8xf32>
    %285 = vector.shape_cast %284 : vector<2x4x32x8xf32> to vector<8x32x8xf32>
    "tpu.trace_start"() <{level = 10 : i32, message = "bse,bed->bsd"}> : () -> ()
    %cst_105 = arith.constant dense<0.000000e+00> : vector<8x8x8xf32>
    %286 = tpu.matmul %279, %285, %cst_105 {dimension_numbers = #tpu.dot_dimension_numbers<[2], [1], [1], [2], [0, 0, 0, 1, 1, 2], [0], [0]>} : vector<8x8x32xf32>, vector<8x32x8xf32>, vector<8x8x8xf32> -> vector<8x8x8xf32>
    "tpu.trace_stop"() : () -> ()
    %287 = vector.extract_strided_slice %274 {offsets = [0, 0, 0], sizes = [8, 8, 8], strides = [1, 1, 1]} : vector<8x8x16xf32> to vector<8x8x8xf32>
    %288 = vector.extract_strided_slice %274 {offsets = [0, 0, 8], sizes = [8, 8, 8], strides = [1, 1, 1]} : vector<8x8x16xf32> to vector<8x8x8xf32>
    %c1_106 = arith.constant 1 : index
    %c0_107 = arith.constant 0 : index
    %c0_108 = arith.constant 0 : index
    %c0_109 = arith.constant 0 : index
    %289 = vector.load %arg7[%c1_106, %c0_107, %c0_108, %c0_109] : memref<2x4x8x32xf32, #tpu.memory_space<vmem>>, vector<1x4x8x32xf32>
    %290 = vector.shape_cast %289 : vector<1x4x8x32xf32> to vector<4x8x32xf32>
    "tpu.trace_start"() <{level = 10 : i32, message = "bqd,bkd->bqk"}> : () -> ()
    %cst_110 = arith.constant dense<0.000000e+00> : vector<8x8x8xf32>
    %291 = tpu.matmul %286, %287, %cst_110 {dimension_numbers = #tpu.dot_dimension_numbers<[2], [2], [1], [1], [0, 0, 0, 1, 1, 1], [0], [0]>} : vector<8x8x8xf32>, vector<8x8x8xf32>, vector<8x8x8xf32> -> vector<8x8x8xf32>
    "tpu.trace_stop"() : () -> ()
    %cst_111 = arith.constant 0.353553385 : f32
    %292 = vector.broadcast %cst_111 : f32 to vector<8x8x8xf32>
    %293 = arith.mulf %291, %292 : vector<8x8x8xf32>
    %cst_112 = arith.constant dense<0xFF800000> : vector<8x8xf32>
    %294 = vector.multi_reduction <maximumf>, %293, %cst_112 [2] : vector<8x8x8xf32> to vector<8x8xf32>
    %295 = vector.shape_cast %294 : vector<8x8xf32> to vector<8x8x1xf32>
    %296 = vector.broadcast %295 : vector<8x8x1xf32> to vector<8x8x8xf32>
    %297 = arith.subf %293, %296 : vector<8x8x8xf32>
    %298 = math.exp %297 : vector<8x8x8xf32>
    %cst_113 = arith.constant dense<0.000000e+00> : vector<8x8xf32>
    %299 = vector.multi_reduction <add>, %298, %cst_113 [2] : vector<8x8x8xf32> to vector<8x8xf32>
    %300 = vector.shape_cast %299 : vector<8x8xf32> to vector<8x8x1xf32>
    %301 = tpu.reciprocal %300 {approx = true} : vector<8x8x1xf32> -> vector<8x8x1xf32>
    %302 = vector.broadcast %301 : vector<8x8x1xf32> to vector<8x8x8xf32>
    %303 = arith.mulf %298, %302 : vector<8x8x8xf32>
    "tpu.trace_start"() <{level = 10 : i32, message = "bqk,bkd->bqd"}> : () -> ()
    %cst_114 = arith.constant dense<0.000000e+00> : vector<8x8x8xf32>
    %304 = tpu.matmul %303, %288, %cst_114 {dimension_numbers = #tpu.dot_dimension_numbers<[2], [1], [1], [2], [0, 0, 0, 1, 1, 2], [0], [0]>} : vector<8x8x8xf32>, vector<8x8x8xf32>, vector<8x8x8xf32> -> vector<8x8x8xf32>
    "tpu.trace_stop"() : () -> ()
    %305 = vector.shape_cast %290 : vector<4x8x32xf32> to vector<1x4x8x32xf32>
    %306 = vector.shape_cast %305 : vector<1x4x8x32xf32> to vector<1x4x8x32xf32>
    %307 = vector.broadcast %306 : vector<1x4x8x32xf32> to vector<2x4x8x32xf32>
    %308 = vector.shape_cast %307 : vector<2x4x8x32xf32> to vector<8x8x32xf32>
    "tpu.trace_start"() <{level = 10 : i32, message = "bqd,bde->bqe"}> : () -> ()
    %cst_115 = arith.constant dense<0.000000e+00> : vector<8x8x32xf32>
    %309 = tpu.matmul %304, %308, %cst_115 {dimension_numbers = #tpu.dot_dimension_numbers<[2], [1], [1], [2], [0, 0, 0, 1, 1, 2], [0], [0]>} : vector<8x8x8xf32>, vector<8x8x32xf32>, vector<8x8x32xf32> -> vector<8x8x32xf32>
    "tpu.trace_stop"() : () -> ()
    %310 = vector.shape_cast %309 : vector<8x8x32xf32> to vector<2x4x8x32xf32>
    %cst_116 = arith.constant dense<0.000000e+00> : vector<2x8x32xf32>
    %311 = vector.multi_reduction <add>, %310, %cst_116 [1] : vector<2x4x8x32xf32> to vector<2x8x32xf32>
    %312 = vector.shape_cast %311 : vector<2x8x32xf32> to vector<16x32xf32>
    %313 = vector.broadcast %198 : vector<1x32xf32> to vector<16x32xf32>
    %314 = arith.addf %312, %313 : vector<16x32xf32>
    %315 = arith.addf %314, %267 : vector<16x32xf32>
    %cst_117 = arith.constant dense<0.000000e+00> : vector<16xf32>
    %316 = vector.multi_reduction <add>, %315, %cst_117 [1] : vector<16x32xf32> to vector<16xf32>
    %317 = vector.shape_cast %316 : vector<16xf32> to vector<16x1xf32>
    %cst_118 = arith.constant 3.200000e+01 : f32
    %318 = vector.broadcast %cst_118 : f32 to vector<16x1xf32>
    %319 = arith.divf %317, %318 : vector<16x1xf32>
    %320 = vector.broadcast %319 : vector<16x1xf32> to vector<16x32xf32>
    %321 = arith.subf %315, %320 : vector<16x32xf32>
    %322 = arith.mulf %321, %321 : vector<16x32xf32>
    %cst_119 = arith.constant dense<0.000000e+00> : vector<16xf32>
    %323 = vector.multi_reduction <add>, %322, %cst_119 [1] : vector<16x32xf32> to vector<16xf32>
    %324 = vector.shape_cast %323 : vector<16xf32> to vector<16x1xf32>
    %cst_120 = arith.constant 3.200000e+01 : f32
    %325 = vector.broadcast %cst_120 : f32 to vector<16x1xf32>
    %326 = arith.divf %324, %325 : vector<16x1xf32>
    %327 = vector.broadcast %319 : vector<16x1xf32> to vector<16x32xf32>
    %328 = arith.subf %315, %327 : vector<16x32xf32>
    %cst_121 = arith.constant 9.99999974E-6 : f32
    %329 = vector.broadcast %cst_121 : f32 to vector<16x1xf32>
    %330 = arith.addf %326, %329 : vector<16x1xf32>
    %331 = math.rsqrt %330 : vector<16x1xf32>
    %332 = vector.broadcast %331 : vector<16x1xf32> to vector<16x32xf32>
    %333 = arith.mulf %328, %332 : vector<16x32xf32>
    %334 = vector.broadcast %199 : vector<1x32xf32> to vector<16x32xf32>
    %335 = arith.mulf %333, %334 : vector<16x32xf32>
    %336 = vector.broadcast %200 : vector<1x32xf32> to vector<16x32xf32>
    %337 = arith.addf %335, %336 : vector<16x32xf32>
    %c1_122 = arith.constant 1 : index
    %c0_123 = arith.constant 0 : index
    %c0_124 = arith.constant 0 : index
    %338 = vector.load %arg8[%c1_122, %c0_123, %c0_124] : memref<2x32x128xf32, #tpu.memory_space<vmem>>, vector<1x32x128xf32>
    %339 = vector.shape_cast %338 : vector<1x32x128xf32> to vector<32x128xf32>
    %cst_125 = arith.constant dense<0.000000e+00> : vector<16x128xf32>
    %340 = tpu.matmul %337, %339, %cst_125 {dimension_numbers = #tpu.dot_dimension_numbers<[1], [0], [0], [1], [0, 0, 1, 1], [], []>} : vector<16x32xf32>, vector<32x128xf32>, vector<16x128xf32> -> vector<16x128xf32>
    %c1_126 = arith.constant 1 : index
    %c0_127 = arith.constant 0 : index
    %c0_128 = arith.constant 0 : index
    %341 = vector.load %arg9[%c1_126, %c0_127, %c0_128] : memref<2x1x128xf32, #tpu.memory_space<vmem>>, vector<1x1x128xf32>
    %342 = vector.shape_cast %341 : vector<1x1x128xf32> to vector<1x128xf32>
    %343 = vector.broadcast %342 : vector<1x128xf32> to vector<16x128xf32>
    %344 = arith.addf %340, %343 : vector<16x128xf32>
    %cst_129 = arith.constant 0.000000e+00 : f32
    %345 = vector.broadcast %cst_129 : f32 to vector<16x128xf32>
    %346 = arith.maximumf %344, %345 : vector<16x128xf32>
    %c1_130 = arith.constant 1 : index
    %c0_131 = arith.constant 0 : index
    %c0_132 = arith.constant 0 : index
    %347 = vector.load %arg10[%c1_130, %c0_131, %c0_132] : memref<2x128x32xf32, #tpu.memory_space<vmem>>, vector<1x128x32xf32>
    %348 = vector.shape_cast %347 : vector<1x128x32xf32> to vector<128x32xf32>
    %cst_133 = arith.constant dense<0.000000e+00> : vector<16x32xf32>
    %349 = tpu.matmul %346, %348, %cst_133 {dimension_numbers = #tpu.dot_dimension_numbers<[1], [0], [0], [1], [0, 0, 1, 1], [], []>} : vector<16x128xf32>, vector<128x32xf32>, vector<16x32xf32> -> vector<16x32xf32>
    %350 = vector.broadcast %201 : vector<1x32xf32> to vector<16x32xf32>
    %351 = arith.addf %349, %350 : vector<16x32xf32>
    %352 = arith.addf %351, %337 : vector<16x32xf32>
    %cst_134 = arith.constant dense<0.000000e+00> : vector<16xf32>
    %353 = vector.multi_reduction <add>, %352, %cst_134 [1] : vector<16x32xf32> to vector<16xf32>
    %354 = vector.shape_cast %353 : vector<16xf32> to vector<16x1xf32>
    %cst_135 = arith.constant 3.200000e+01 : f32
    %355 = vector.broadcast %cst_135 : f32 to vector<16x1xf32>
    %356 = arith.divf %354, %355 : vector<16x1xf32>
    %357 = vector.broadcast %356 : vector<16x1xf32> to vector<16x32xf32>
    %358 = arith.subf %352, %357 : vector<16x32xf32>
    %359 = arith.mulf %358, %358 : vector<16x32xf32>
    %cst_136 = arith.constant dense<0.000000e+00> : vector<16xf32>
    %360 = vector.multi_reduction <add>, %359, %cst_136 [1] : vector<16x32xf32> to vector<16xf32>
    %361 = vector.shape_cast %360 : vector<16xf32> to vector<16x1xf32>
    %cst_137 = arith.constant 3.200000e+01 : f32
    %362 = vector.broadcast %cst_137 : f32 to vector<16x1xf32>
    %363 = arith.divf %361, %362 : vector<16x1xf32>
    %364 = vector.broadcast %356 : vector<16x1xf32> to vector<16x32xf32>
    %365 = arith.subf %352, %364 : vector<16x32xf32>
    %cst_138 = arith.constant 9.99999974E-6 : f32
    %366 = vector.broadcast %cst_138 : f32 to vector<16x1xf32>
    %367 = arith.addf %363, %366 : vector<16x1xf32>
    %368 = math.rsqrt %367 : vector<16x1xf32>
    %369 = vector.broadcast %368 : vector<16x1xf32> to vector<16x32xf32>
    %370 = arith.mulf %365, %369 : vector<16x32xf32>
    %371 = vector.broadcast %202 : vector<1x32xf32> to vector<16x32xf32>
    %372 = arith.mulf %370, %371 : vector<16x32xf32>
    %373 = vector.broadcast %203 : vector<1x32xf32> to vector<16x32xf32>
    %374 = arith.addf %372, %373 : vector<16x32xf32>
    %c0_139 = arith.constant 0 : index
    %c0_140 = arith.constant 0 : index
    %375 = vector.load %arg12[%c0_139, %c0_140] : memref<32x128xf32, #tpu.memory_space<vmem>>, vector<32x128xf32>
    %cst_141 = arith.constant dense<0.000000e+00> : vector<16x128xf32>
    %376 = tpu.matmul %374, %375, %cst_141 {dimension_numbers = #tpu.dot_dimension_numbers<[1], [0], [0], [1], [0, 0, 1, 1], [], []>} : vector<16x32xf32>, vector<32x128xf32>, vector<16x128xf32> -> vector<16x128xf32>
    %c0_142 = arith.constant 0 : index
    %c0_143 = arith.constant 0 : index
    %377 = vector.load %arg13[%c0_142, %c0_143] : memref<1x128xf32, #tpu.memory_space<vmem>>, vector<1x128xf32>
    %378 = vector.broadcast %377 : vector<1x128xf32> to vector<16x128xf32>
    %379 = arith.addf %376, %378 : vector<16x128xf32>
    %c0_144 = arith.constant 0 : index
    %c0_145 = arith.constant 0 : index
    %380 = vector.load %arg14[%c0_144, %c0_145] : memref<16x128xf32, #tpu.memory_space<vmem>>, vector<16x128xf32>
    tpu.vector_store %arg14[%c0_144, %c0_145], %379 {strides = array<i32>} : memref<16x128xf32, #tpu.memory_space<vmem>>, vector<16x128xf32>,
    return
  }
}

</mosaic_0001>

<llo_original>
// kernel: decoder_pallas.1
$region0: #{decoder_pallas.1}
  #allocation0 [shape = 'u32[]', space=smem, size = 0x4, offset = 0x4, fixed_abs, tag = 'smem constant byte address 0x4 - core index']
  #allocation1 [shape = 'u32[144,128]{1,0:T(1,128)}', space=vmem, size = 0x12000, scoped, tag = 'internal scratch']
  %s0 = inlined_call_operand.vmem [shape: f32[2,8,32], index: 0, kind: input, shape index: {}]
  %s1 = inlined_call_operand.vmem [shape: f32[8,32], index: 1, kind: input, shape index: {}]
  %s2 = inlined_call_operand.vmem [shape: f32[2,8,32], index: 2, kind: input, shape index: {}]
  %s3 = inlined_call_operand.vmem [shape: f32[2,4,32,24], index: 3, kind: input, shape index: {}]
  %s4 = inlined_call_operand.vmem [shape: f32[2,4,8,32], index: 4, kind: input, shape index: {}]
  %s5 = inlined_call_operand.vmem [shape: f32[2,4,32,8], index: 5, kind: input, shape index: {}]
  %s6 = inlined_call_operand.vmem [shape: f32[2,4,32,16], index: 6, kind: input, shape index: {}]
  %s7 = inlined_call_operand.vmem [shape: f32[2,4,8,32], index: 7, kind: input, shape index: {}]
  %s8 = inlined_call_operand.vmem [shape: f32[2,32,128], index: 8, kind: input, shape index: {}]
  %s9 = inlined_call_operand.vmem [shape: f32[2,1,128], index: 9, kind: input, shape index: {}]
  %s10 = inlined_call_operand.vmem [shape: f32[2,128,32], index: 10, kind: input, shape index: {}]
  %s11 = inlined_call_operand.vmem [shape: f32[2,9,32], index: 11, kind: input, shape index: {}]
  %s12 = inlined_call_operand.vmem [shape: f32[32,128], index: 12, kind: input, shape index: {}]
  %s13 = inlined_call_operand.vmem [shape: f32[1,128], index: 13, kind: input, shape index: {}]
  %s14 = inlined_call_operand.hbm [shape: f32[16,128], index: 14, kind: output, shape index: {}]
  %s15 = sld [smem:[#allocation0]]
  $region66: #{decoder_pallas.1} parent=0
    _
  %s17 = ssub.s32 1, %s15
  %s18 = scalar_select 0, %s17, %s15
  $region1: #{decoder_pallas.1} parent=0
    #allocation2 [shape = 'u8[8192]{0}', space=vmem, size = 0x2000, scoped, tag = 'output window, operand 0, single buffered']
    #allocation3 [shape = 's32[1]{0}', space=sflag, size = 0x4, scoped, tag = 'scoped memory for decoder_pallas.1']
    %19 = vsyncpa [#allocation3], 0
    // Predicated region
    $region2: #{decoder_pallas.1} parent=1 // pred_check
      _
    $region3: #{decoder_pallas.1} parent=1 // pred_check_branch
      %21 = sbr.rel (0) target = $region5
    $region4: #{decoder_pallas.1} parent=1 // pred_region
      _
    $region5: #{decoder_pallas.1} parent=1 // pred_fallthru
      _
    // Predicated region
    $region6: #{decoder_pallas.1} parent=1 // pred_check
      _
    $region7: #{decoder_pallas.1} parent=1 // pred_check_branch
      %23 = sbr.rel (0) target = $region9
    $region8: #{decoder_pallas.1} parent=1 // pred_region
      _
    $region9: #{decoder_pallas.1} parent=1 // pred_fallthru
      _
    // Predicated region
    $region10: #{decoder_pallas.1} parent=1 // pred_check
      _
    $region11: #{decoder_pallas.1} parent=1 // pred_check_branch
      %25 = sbr.rel (0) target = $region13
    $region12: #{decoder_pallas.1} parent=1 // pred_region
      _
    $region13: #{decoder_pallas.1} parent=1 // pred_fallthru
      _
    // Predicated region
    $region14: #{decoder_pallas.1} parent=1 // pred_check
      _
    $region15: #{decoder_pallas.1} parent=1 // pred_check_branch
      %27 = sbr.rel (0) target = $region17
    $region16: #{decoder_pallas.1} parent=1 // pred_region
      _
    $region17: #{decoder_pallas.1} parent=1 // pred_fallthru
      _
    // Predicated region
    $region18: #{decoder_pallas.1} parent=1 // pred_check
      _
    $region19: #{decoder_pallas.1} parent=1 // pred_check_branch
      %29 = sbr.rel (0) target = $region21
    $region20: #{decoder_pallas.1} parent=1 // pred_region
      _
    $region21: #{decoder_pallas.1} parent=1 // pred_fallthru
      _
    // Predicated region
    $region22: #{decoder_pallas.1} parent=1 // pred_check
      _
    $region23: #{decoder_pallas.1} parent=1 // pred_check_branch
      %31 = sbr.rel (0) target = $region25
    $region24: #{decoder_pallas.1} parent=1 // pred_region
      _
    $region25: #{decoder_pallas.1} parent=1 // pred_fallthru
      _
    // Predicated region
    $region26: #{decoder_pallas.1} parent=1 // pred_check
      _
    $region27: #{decoder_pallas.1} parent=1 // pred_check_branch
      %33 = sbr.rel (0) target = $region29
    $region28: #{decoder_pallas.1} parent=1 // pred_region
      _
    $region29: #{decoder_pallas.1} parent=1 // pred_fallthru
      _
    // Predicated region
    $region30: #{decoder_pallas.1} parent=1 // pred_check
      _
    $region31: #{decoder_pallas.1} parent=1 // pred_check_branch
      %35 = sbr.rel (0) target = $region33
    $region32: #{decoder_pallas.1} parent=1 // pred_region
      _
    $region33: #{decoder_pallas.1} parent=1 // pred_fallthru
      _
    // Predicated region
    $region34: #{decoder_pallas.1} parent=1 // pred_check
      _
    $region35: #{decoder_pallas.1} parent=1 // pred_check_branch
      %37 = sbr.rel (0) target = $region37
    $region36: #{decoder_pallas.1} parent=1 // pred_region
      _
    $region37: #{decoder_pallas.1} parent=1 // pred_fallthru
      _
    // Predicated region
    $region38: #{decoder_pallas.1} parent=1 // pred_check
      _
    $region39: #{decoder_pallas.1} parent=1 // pred_check_branch
      %39 = sbr.rel (0) target = $region41
    $region40: #{decoder_pallas.1} parent=1 // pred_region
      _
    $region41: #{decoder_pallas.1} parent=1 // pred_fallthru
      _
    // Predicated region
    $region42: #{decoder_pallas.1} parent=1 // pred_check
      _
    $region43: #{decoder_pallas.1} parent=1 // pred_check_branch
      %41 = sbr.rel (0) target = $region45
    $region44: #{decoder_pallas.1} parent=1 // pred_region
      _
    $region45: #{decoder_pallas.1} parent=1 // pred_fallthru
      _
    // Predicated region
    $region46: #{decoder_pallas.1} parent=1 // pred_check
      _
    $region47: #{decoder_pallas.1} parent=1 // pred_check_branch
      %43 = sbr.rel (0) target = $region49
    $region48: #{decoder_pallas.1} parent=1 // pred_region
      _
    $region49: #{decoder_pallas.1} parent=1 // pred_fallthru
      _
    // Predicated region
    $region50: #{decoder_pallas.1} parent=1 // pred_check
      _
    $region51: #{decoder_pallas.1} parent=1 // pred_check_branch
      %45 = sbr.rel (0) target = $region53
    $region52: #{decoder_pallas.1} parent=1 // pred_region
      _
    $region53: #{decoder_pallas.1} parent=1 // pred_fallthru
      _
    // Predicated region
    $region54: #{decoder_pallas.1} parent=1 // pred_check
      _
    $region55: #{decoder_pallas.1} parent=1 // pred_check_branch
      %47 = sbr.rel (0) target = $region57
    $region56: #{decoder_pallas.1} parent=1 // pred_region
      _
    $region57: #{decoder_pallas.1} parent=1 // pred_fallthru
      _
    %v48 = vld [vmem:[%s0] sm:$0xff]
    %v49 = vld [vmem:[%s0 + $0x8] sm:$0xff]
    %v50 = vld [vmem:[%s1] sm:$0xff]
    %v51 = vadd.f32 %v48, %v50
    %v52 = vadd.f32 %v49, %v50
    %v53 = vld [vmem:[%s2] sm:$0xff]
    %v54 = vld [vmem:[%s2 + $0x8] sm:$0xff]
    %v55 = vld [vmem:[%s11] sm:$0xff]
    %v56 = vld [vmem:[%s11 + $0x8] sm:$0x1]
    %v57 = vld [vmem:[%s3] sm:$0xff]
    %v58 = vld [vmem:[%s3 + $0x8] sm:$0xff]
    %v59 = vld [vmem:[%s3 + $0x10] sm:$0xff]
    %v60 = vld [vmem:[%s3 + $0x18] sm:$0xff]
    %v61 = vld [vmem:[%s3 + $0x20] sm:$0xff]
    %v62 = vld [vmem:[%s3 + $0x28] sm:$0xff]
    %v63 = vld [vmem:[%s3 + $0x30] sm:$0xff]
    %v64 = vld [vmem:[%s3 + $0x38] sm:$0xff]
    %v65 = vld [vmem:[%s3 + $0x40] sm:$0xff]
    %v66 = vld [vmem:[%s3 + $0x48] sm:$0xff]
    %v67 = vld [vmem:[%s3 + $0x50] sm:$0xff]
    %v68 = vld [vmem:[%s3 + $0x58] sm:$0xff]
    %v69 = vld [vmem:[%s3 + $0x60] sm:$0xff]
    %v70 = vld [vmem:[%s3 + $0x68] sm:$0xff]
    %v71 = vld [vmem:[%s3 + $0x70] sm:$0xff]
    %v72 = vld [vmem:[%s3 + $0x78] sm:$0xff]
    %vm73 = vcmask 261120
    %v75 = vsel %vm73, %v51, 0
    %77 = vmatprep.subr.mxu0 0.0
    %78 = vmatpush1.msra.mxu0 %v57
    %79 = vmatprep.subr.mxu0 0.0
    %80 = vmatpush1.msra.mxu0 %v58
    %81 = vmatprep.subr.mxu0 0.0
    %82 = vmatpush1.msra.mxu0 %v59
    %83 = vmatprep.subr.mxu0 0.0
    %84 = vmatpush1.msra.mxu0 %v60
    %85 = vmatprep.subr.mxu0 0.0
    %86 = vmatpush1.msra.mxu0 0.0
    %87 = vmatprep.subr.mxu0 0.0
    %88 = vmatpush1.msra.mxu0 0.0
    %89 = vmatprep.subr.mxu0 0.0
    %90 = vmatpush1.msra.mxu0 0.0
    %91 = vmatprep.subr.mxu0 0.0
    %92 = vmatpush1.msra.mxu0 0.0
    %93 = vmatprep.subr.mxu0 0.0
    %94 = vmatpush1.msra.mxu0 0.0
    %95 = vmatprep.subr.mxu0 0.0
    %96 = vmatpush1.msra.mxu0 0.0
    %97 = vmatprep.subr.mxu0 0.0
    %98 = vmatpush1.msra.mxu0 0.0
    %99 = vmatprep.subr.mxu0 0.0
    %100 = vmatpush1.msra.mxu0 0.0
    %101 = vmatprep.subr.mxu0 0.0
    %102 = vmatpush1.msra.mxu0 0.0
    %103 = vmatprep.subr.mxu0 0.0
    %104 = vmatpush1.msra.mxu0 0.0
    %105 = vmatprep.subr.mxu0 0.0
    %106 = vmatpush1.msra.mxu0 0.0
    %107 = vmatprep.subr.mxu0 0.0
    %108 = vmatpush1.msra.mxu0 0.0
    %109 = vmatprep.subr.mxu0 0.0
    %110 = vmatpush1.msra.mxu0 0.0
    %111 = vmatprep.subr.mxu0 0.0
    %112 = vmatpush1.msra.mxu0 0.0
    %113 = vmatprep.subr.mxu0 0.0
    %114 = vmatpush1.msra.mxu0 0.0
    %115 = vmatprep.subr.mxu0 0.0
    %116 = vmatpush1.msra.mxu0 0.0
    %117 = vmatprep.subr.mxu0 0.0
    %118 = vmatpush1.msra.mxu0 0.0
    %119 = vmatprep.subr.mxu0 0.0
    %120 = vmatpush1.msra.mxu0 0.0
    %121 = vmatprep.subr.mxu0 0.0
    %122 = vmatpush1.msra.mxu0 0.0
    %123 = vmatprep.subr.mxu0 0.0
    %124 = vmatpush1.msra.mxu0 0.0
    %125 = vmatprep.subr.mxu0 0.0
    %126 = vmatpush1.msra.mxu0 0.0
    %127 = vmatprep.subr.mxu0 0.0
    %128 = vmatpush1.msra.mxu0 0.0
    %129 = vmatprep.subr.mxu0 0.0
    %130 = vmatpush1.msra.mxu0 0.0
    %131 = vmatprep.subr.mxu0 0.0
    %132 = vmatpush1.msra.mxu0 0.0
    %133 = vmatprep.subr.mxu0 0.0
    %134 = vmatpush1.msra.mxu0 0.0
    %135 = vmatprep.subr.mxu0 0.0
    %136 = vmatpush1.msra.mxu0 0.0
    %137 = vmatprep.subr.mxu0 0.0
    %138 = vmatpush1.msra.mxu0 0.0
    %139 = vmatprep.subr.mxu0 0.0
    %140 = vmatpush1.msra.mxu0 0.0
    %141 = vmatprep.mubr.f32.mxu0 0.0
    %142 = vmatmul.mubr.f32.gmra.mrb[0].mxu0 %v75
    %v143 = vpop.f32.mrb[0].mxu0
    %v144 = vadd.f32 0.0, %v143
    %v145 = vpop.f32.mrb[0].mxu0
    %146 = vdwg.mxu0
    %147 = vmatprep.subr.mxu0 0.0
    %148 = vmatpush1.msra.mxu0 %v61
    %149 = vmatprep.subr.mxu0 0.0
    %150 = vmatpush1.msra.mxu0 %v62
    %151 = vmatprep.subr.mxu0 0.0
    %152 = vmatpush1.msra.mxu0 %v63
    %153 = vmatprep.subr.mxu0 0.0
    %154 = vmatpush1.msra.mxu0 %v64
    %155 = vmatprep.subr.mxu0 0.0
    %156 = vmatpush1.msra.mxu0 0.0
    %157 = vmatprep.subr.mxu0 0.0
    %158 = vmatpush1.msra.mxu0 0.0
    %159 = vmatprep.subr.mxu0 0.0
    %160 = vmatpush1.msra.mxu0 0.0
    %161 = vmatprep.subr.mxu0 0.0
    %162 = vmatpush1.msra.mxu0 0.0
    %163 = vmatprep.subr.mxu0 0.0
    %164 = vmatpush1.msra.mxu0 0.0
    %165 = vmatprep.subr.mxu0 0.0
    %166 = vmatpush1.msra.mxu0 0.0
    %167 = vmatprep.subr.mxu0 0.0
    %168 = vmatpush1.msra.mxu0 0.0
    %169 = vmatprep.subr.mxu0 0.0
    %170 = vmatpush1.msra.mxu0 0.0
    %171 = vmatprep.subr.mxu0 0.0
    %172 = vmatpush1.msra.mxu0 0.0
    %173 = vmatprep.subr.mxu0 0.0
    %174 = vmatpush1.msra.mxu0 0.0
    %175 = vmatprep.subr.mxu0 0.0
    %176 = vmatpush1.msra.mxu0 0.0
    %177 = vmatprep.subr.mxu0 0.0
    %178 = vmatpush1.msra.mxu0 0.0
    %179 = vmatprep.subr.mxu0 0.0
    %180 = vmatpush1.msra.mxu0 0.0
    %181 = vmatprep.subr.mxu0 0.0
    %182 = vmatpush1.msra.mxu0 0.0
    %183 = vmatprep.subr.mxu0 0.0
    %184 = vmatpush1.msra.mxu0 0.0
    %185 = vmatprep.subr.mxu0 0.0
    %186 = vmatpush1.msra.mxu0 0.0
    %187 = vmatprep.subr.mxu0 0.0
    %188 = vmatpush1.msra.mxu0 0.0
    %189 = vmatprep.subr.mxu0 0.0
    %190 = vmatpush1.msra.mxu0 0.0
    %191 = vmatprep.subr.mxu0 0.0
    %192 = vmatpush1.msra.mxu0 0.0
    %193 = vmatprep.subr.mxu0 0.0
    %194 = vmatpush1.msra.mxu0 0.0
    %195 = vmatprep.subr.mxu0 0.0
    %196 = vmatpush1.msra.mxu0 0.0
    %197 = vmatprep.subr.mxu0 0.0
    %198 = vmatpush1.msra.mxu0 0.0
    %199 = vmatprep.subr.mxu0 0.0
    %200 = vmatpush1.msra.mxu0 0.0
    %201 = vmatprep.subr.mxu0 0.0
    %202 = vmatpush1.msra.mxu0 0.0
    %203 = vmatprep.subr.mxu0 0.0
    %204 = vmatpush1.msra.mxu0 0.0
    %205 = vmatprep.subr.mxu0 0.0
    %206 = vmatpush1.msra.mxu0 0.0
    %207 = vmatprep.subr.mxu0 0.0
    %208 = vmatpush1.msra.mxu0 0.0
    %209 = vmatprep.subr.mxu0 0.0
    %210 = vmatpush1.msra.mxu0 0.0
    %211 = vmatprep.mubr.f32.mxu0 0.0
    %212 = vmatmul.mubr.f32.gmra.mrb[0].mxu0 %v75
    %v213 = vpop.f32.mrb[0].mxu0
    %v214 = vadd.f32 0.0, %v213
    %v215 = vpop.f32.mrb[0].mxu0
    %216 = vdwg.mxu0
    %217 = vmatprep.subr.mxu0 0.0
    %218 = vmatpush1.msra.mxu0 %v65
    %219 = vmatprep.subr.mxu0 0.0
    %220 = vmatpush1.msra.mxu0 %v66
    %221 = vmatprep.subr.mxu0 0.0
    %222 = vmatpush1.msra.mxu0 %v67
    %223 = vmatprep.subr.mxu0 0.0
    %224 = vmatpush1.msra.mxu0 %v68
    %225 = vmatprep.subr.mxu0 0.0
    %226 = vmatpush1.msra.mxu0 0.0
    %227 = vmatprep.subr.mxu0 0.0
    %228 = vmatpush1.msra.mxu0 0.0
    %229 = vmatprep.subr.mxu0 0.0
    %230 = vmatpush1.msra.mxu0 0.0
    %231 = vmatprep.subr.mxu0 0.0
    %232 = vmatpush1.msra.mxu0 0.0
    %233 = vmatprep.subr.mxu0 0.0
    %234 = vmatpush1.msra.mxu0 0.0
    %235 = vmatprep.subr.mxu0 0.0
    %236 = vmatpush1.msra.mxu0 0.0
    %237 = vmatprep.subr.mxu0 0.0
    %238 = vmatpush1.msra.mxu0 0.0
    %239 = vmatprep.subr.mxu0 0.0
    %240 = vmatpush1.msra.mxu0 0.0
    %241 = vmatprep.subr.mxu0 0.0
    %242 = vmatpush1.msra.mxu0 0.0
    %243 = vmatprep.subr.mxu0 0.0
    %244 = vmatpush1.msra.mxu0 0.0
    %245 = vmatprep.subr.mxu0 0.0
    %246 = vmatpush1.msra.mxu0 0.0
    %247 = vmatprep.subr.mxu0 0.0
    %248 = vmatpush1.msra.mxu0 0.0
    %249 = vmatprep.subr.mxu0 0.0
    %250 = vmatpush1.msra.mxu0 0.0
    %251 = vmatprep.subr.mxu0 0.0
    %252 = vmatpush1.msra.mxu0 0.0
    %253 = vmatprep.subr.mxu0 0.0
    %254 = vmatpush1.msra.mxu0 0.0
    %255 = vmatprep.subr.mxu0 0.0
    %256 = vmatpush1.msra.mxu0 0.0
    %257 = vmatprep.subr.mxu0 0.0
    %258 = vmatpush1.msra.mxu0 0.0
    %259 = vmatprep.subr.mxu0 0.0
    %260 = vmatpush1.msra.mxu0 0.0
    %261 = vmatprep.subr.mxu0 0.0
    %262 = vmatpush1.msra.mxu0 0.0
    %263 = vmatprep.subr.mxu0 0.0
    %264 = vmatpush1.msra.mxu0 0.0
    %265 = vmatprep.subr.mxu0 0.0
    %266 = vmatpush1.msra.mxu0 0.0
    %267 = vmatprep.subr.mxu0 0.0
    %268 = vmatpush1.msra.mxu0 0.0
    %269 = vmatprep.subr.mxu0 0.0
    %270 = vmatpush1.msra.mxu0 0.0
    %271 = vmatprep.subr.mxu0 0.0
    %272 = vmatpush1.msra.mxu0 0.0
    %273 = vmatprep.subr.mxu0 0.0
    %274 = vmatpush1.msra.mxu0 0.0
    %275 = vmatprep.subr.mxu0 0.0
    %276 = vmatpush1.msra.mxu0 0.0
    %277 = vmatprep.subr.mxu0 0.0
    %278 = vmatpush1.msra.mxu0 0.0
    %279 = vmatprep.subr.mxu0 0.0
    %280 = vmatpush1.msra.mxu0 0.0
    %281 = vmatprep.mubr.f32.mxu0 0.0
    %282 = vmatmul.mubr.f32.gmra.mrb[0].mxu0 %v75
    %v283 = vpop.f32.mrb[0].mxu0
    %v284 = vadd.f32 0.0, %v283
    %v285 = vpop.f32.mrb[0].mxu0
    %286 = vdwg.mxu0
    %287 = vmatprep.subr.mxu0 0.0
    %288 = vmatpush1.msra.mxu0 %v69
    %289 = vmatprep.subr.mxu0 0.0
    %290 = vmatpush1.msra.mxu0 %v70
    %291 = vmatprep.subr.mxu0 0.0
    %292 = vmatpush1.msra.mxu0 %v71
    %293 = vmatprep.subr.mxu0 0.0
    %294 = vmatpush1.msra.mxu0 %v72
    %295 = vmatprep.subr.mxu0 0.0
    %296 = vmatpush1.msra.mxu0 0.0
    %297 = vmatprep.subr.mxu0 0.0
    %298 = vmatpush1.msra.mxu0 0.0
    %299 = vmatprep.subr.mxu0 0.0
    %300 = vmatpush1.msra.mxu0 0.0
    %301 = vmatprep.subr.mxu0 0.0
    %302 = vmatpush1.msra.mxu0 0.0
    %303 = vmatprep.subr.mxu0 0.0
    %304 = vmatpush1.msra.mxu0 0.0
    %305 = vmatprep.subr.mxu0 0.0
    %306 = vmatpush1.msra.mxu0 0.0
    %307 = vmatprep.subr.mxu0 0.0
    %308 = vmatpush1.msra.mxu0 0.0
    %309 = vmatprep.subr.mxu0 0.0
    %310 = vmatpush1.msra.mxu0 0.0
    %311 = vmatprep.subr.mxu0 0.0
    %312 = vmatpush1.msra.mxu0 0.0
    %313 = vmatprep.subr.mxu0 0.0
    %314 = vmatpush1.msra.mxu0 0.0
    %315 = vmatprep.subr.mxu0 0.0
    %316 = vmatpush1.msra.mxu0 0.0
    %317 = vmatprep.subr.mxu0 0.0
    %318 = vmatpush1.msra.mxu0 0.0
    %319 = vmatprep.subr.mxu0 0.0
    %320 = vmatpush1.msra.mxu0 0.0
    %321 = vmatprep.subr.mxu0 0.0
    %322 = vmatpush1.msra.mxu0 0.0
    %323 = vmatprep.subr.mxu0 0.0
    %324 = vmatpush1.msra.mxu0 0.0
    %325 = vmatprep.subr.mxu0 0.0
    %326 = vmatpush1.msra.mxu0 0.0
    %327 = vmatprep.subr.mxu0 0.0
    %328 = vmatpush1.msra.mxu0 0.0
    %329 = vmatprep.subr.mxu0 0.0
    %330 = vmatpush1.msra.mxu0 0.0
    %331 = vmatprep.subr.mxu0 0.0
    %332 = vmatpush1.msra.mxu0 0.0
    %333 = vmatprep.subr.mxu0 0.0
    %334 = vmatpush1.msra.mxu0 0.0
    %335 = vmatprep.subr.mxu0 0.0
    %336 = vmatpush1.msra.mxu0 0.0
    %337 = vmatprep.subr.mxu0 0.0
    %338 = vmatpush1.msra.mxu0 0.0
    %339 = vmatprep.subr.mxu0 0.0
    %340 = vmatpush1.msra.mxu0 0.0
    %341 = vmatprep.subr.mxu0 0.0
    %342 = vmatpush1.msra.mxu0 0.0
    %343 = vmatprep.subr.mxu0 0.0
    %344 = vmatpush1.msra.mxu0 0.0
    %345 = vmatprep.subr.mxu0 0.0
    %346 = vmatpush1.msra.mxu0 0.0
    %347 = vmatprep.subr.mxu0 0.0
    %348 = vmatpush1.msra.mxu0 0.0
    %349 = vmatprep.subr.mxu0 0.0
    %350 = vmatpush1.msra.mxu0 0.0
    %351 = vmatprep.mubr.f32.mxu0 0.0
    %352 = vmatmul.mubr.f32.gmra.mrb[0].mxu0 %v75
    %v353 = vpop.f32.mrb[0].mxu0
    %v354 = vadd.f32 0.0, %v353
    %v355 = vpop.f32.mrb[0].mxu0
    %356 = vdwg.mxu0
    %v358 = vsel %vm73, %v52, 0
    %360 = vmatprep.subr.mxu0 0.0
    %361 = vmatpush1.msra.mxu0 %v57
    %362 = vmatprep.subr.mxu0 0.0
    %363 = vmatpush1.msra.mxu0 %v58
    %364 = vmatprep.subr.mxu0 0.0
    %365 = vmatpush1.msra.mxu0 %v59
    %366 = vmatprep.subr.mxu0 0.0
    %367 = vmatpush1.msra.mxu0 %v60
    %368 = vmatprep.subr.mxu0 0.0
    %369 = vmatpush1.msra.mxu0 0.0
    %370 = vmatprep.subr.mxu0 0.0
    %371 = vmatpush1.msra.mxu0 0.0
    %372 = vmatprep.subr.mxu0 0.0
    %373 = vmatpush1.msra.mxu0 0.0
    %374 = vmatprep.subr.mxu0 0.0
    %375 = vmatpush1.msra.mxu0 0.0
    %376 = vmatprep.subr.mxu0 0.0
    %377 = vmatpush1.msra.mxu0 0.0
    %378 = vmatprep.subr.mxu0 0.0
    %379 = vmatpush1.msra.mxu0 0.0
    %380 = vmatprep.subr.mxu0 0.0
    %381 = vmatpush1.msra.mxu0 0.0
    %382 = vmatprep.subr.mxu0 0.0
    %383 = vmatpush1.msra.mxu0 0.0
    %384 = vmatprep.subr.mxu0 0.0
    %385 = vmatpush1.msra.mxu0 0.0
    %386 = vmatprep.subr.mxu0 0.0
    %387 = vmatpush1.msra.mxu0 0.0
    %388 = vmatprep.subr.mxu0 0.0
    %389 = vmatpush1.msra.mxu0 0.0
    %390 = vmatprep.subr.mxu0 0.0
    %391 = vmatpush1.msra.mxu0 0.0
    %392 = vmatprep.subr.mxu0 0.0
    %393 = vmatpush1.msra.mxu0 0.0
    %394 = vmatprep.subr.mxu0 0.0
    %395 = vmatpush1.msra.mxu0 0.0
    %396 = vmatprep.subr.mxu0 0.0
    %397 = vmatpush1.msra.mxu0 0.0
    %398 = vmatprep.subr.mxu0 0.0
    %399 = vmatpush1.msra.mxu0 0.0
    %400 = vmatprep.subr.mxu0 0.0
    %401 = vmatpush1.msra.mxu0 0.0
    %402 = vmatprep.subr.mxu0 0.0
    %403 = vmatpush1.msra.mxu0 0.0
    %404 = vmatprep.subr.mxu0 0.0
    %405 = vmatpush1.msra.mxu0 0.0
    %406 = vmatprep.subr.mxu0 0.0
    %407 = vmatpush1.msra.mxu0 0.0
    %408 = vmatprep.subr.mxu0 0.0
    %409 = vmatpush1.msra.mxu0 0.0
    %410 = vmatprep.subr.mxu0 0.0
    %411 = vmatpush1.msra.mxu0 0.0
    %412 = vmatprep.subr.mxu0 0.0
    %413 = vmatpush1.msra.mxu0 0.0
    %414 = vmatprep.subr.mxu0 0.0
    %415 = vmatpush1.msra.mxu0 0.0
    %416 = vmatprep.subr.mxu0 0.0
    %417 = vmatpush1.msra.mxu0 0.0
    %418 = vmatprep.subr.mxu0 0.0
    %419 = vmatpush1.msra.mxu0 0.0
    %420 = vmatprep.subr.mxu0 0.0
    %421 = vmatpush1.msra.mxu0 0.0
    %422 = vmatprep.subr.mxu0 0.0
    %423 = vmatpush1.msra.mxu0 0.0
    %424 = vmatprep.mubr.f32.mxu0 0.0
    %425 = vmatmul.mubr.f32.gmra.mrb[0].mxu0 %v358
    %v426 = vpop.f32.mrb[0].mxu0
    %v427 = vadd.f32 0.0, %v426
    %v428 = vpop.f32.mrb[0].mxu0
    %429 = vdwg.mxu0
    %430 = vmatprep.subr.mxu0 0.0
    %431 = vmatpush1.msra.mxu0 %v61
    %432 = vmatprep.subr.mxu0 0.0
    %433 = vmatpush1.msra.mxu0 %v62
    %434 = vmatprep.subr.mxu0 0.0
    %435 = vmatpush1.msra.mxu0 %v63
    %436 = vmatprep.subr.mxu0 0.0
    %437 = vmatpush1.msra.mxu0 %v64
    %438 = vmatprep.subr.mxu0 0.0
    %439 = vmatpush1.msra.mxu0 0.0
    %440 = vmatprep.subr.mxu0 0.0
    %441 = vmatpush1.msra.mxu0 0.0
    %442 = vmatprep.subr.mxu0 0.0
    %443 = vmatpush1.msra.mxu0 0.0
    %444 = vmatprep.subr.mxu0 0.0
    %445 = vmatpush1.msra.mxu0 0.0
    %446 = vmatprep.subr.mxu0 0.0
    %447 = vmatpush1.msra.mxu0 0.0
    %448 = vmatprep.subr.mxu0 0.0
    %449 = vmatpush1.msra.mxu0 0.0
    %450 = vmatprep.subr.mxu0 0.0
    %451 = vmatpush1.msra.mxu0 0.0
    %452 = vmatprep.subr.mxu0 0.0
    %453 = vmatpush1.msra.mxu0 0.0
    %454 = vmatprep.subr.mxu0 0.0
    %455 = vmatpush1.msra.mxu0 0.0
    %456 = vmatprep.subr.mxu0 0.0
    %457 = vmatpush1.msra.mxu0 0.0
    %458 = vmatprep.subr.mxu0 0.0
    %459 = vmatpush1.msra.mxu0 0.0
    %460 = vmatprep.subr.mxu0 0.0
    %461 = vmatpush1.msra.mxu0 0.0
    %462 = vmatprep.subr.mxu0 0.0
    %463 = vmatpush1.msra.mxu0 0.0
    %464 = vmatprep.subr.mxu0 0.0
    %465 = vmatpush1.msra.mxu0 0.0
    %466 = vmatprep.subr.mxu0 0.0
    %467 = vmatpush1.msra.mxu0 0.0
    %468 = vmatprep.subr.mxu0 0.0
    %469 = vmatpush1.msra.mxu0 0.0
    %470 = vmatprep.subr.mxu0 0.0
    %471 = vmatpush1.msra.mxu0 0.0
    %472 = vmatprep.subr.mxu0 0.0
    %473 = vmatpush1.msra.mxu0 0.0
    %474 = vmatprep.subr.mxu0 0.0
    %475 = vmatpush1.msra.mxu0 0.0
    %476 = vmatprep.subr.mxu0 0.0
    %477 = vmatpush1.msra.mxu0 0.0
    %478 = vmatprep.subr.mxu0 0.0
    %479 = vmatpush1.msra.mxu0 0.0
    %480 = vmatprep.subr.mxu0 0.0
    %481 = vmatpush1.msra.mxu0 0.0
    %482 = vmatprep.subr.mxu0 0.0
    %483 = vmatpush1.msra.mxu0 0.0
    %484 = vmatprep.subr.mxu0 0.0
    %485 = vmatpush1.msra.mxu0 0.0
    %486 = vmatprep.subr.mxu0 0.0
    %487 = vmatpush1.msra.mxu0 0.0
    %488 = vmatprep.subr.mxu0 0.0
    %489 = vmatpush1.msra.mxu0 0.0
    %490 = vmatprep.subr.mxu0 0.0
    %491 = vmatpush1.msra.mxu0 0.0
    %492 = vmatprep.subr.mxu0 0.0
    %493 = vmatpush1.msra.mxu0 0.0
    %494 = vmatprep.mubr.f32.mxu0 0.0
    %495 = vmatmul.mubr.f32.gmra.mrb[0].mxu0 %v358
    %v496 = vpop.f32.mrb[0].mxu0
    %v497 = vadd.f32 0.0, %v496
    %v498 = vpop.f32.mrb[0].mxu0
    %499 = vdwg.mxu0
    %500 = vmatprep.subr.mxu0 0.0
    %501 = vmatpush1.msra.mxu0 %v65
    %502 = vmatprep.subr.mxu0 0.0
    %503 = vmatpush1.msra.mxu0 %v66
    %504 = vmatprep.subr.mxu0 0.0
    %505 = vmatpush1.msra.mxu0 %v67
    %506 = vmatprep.subr.mxu0 0.0
    %507 = vmatpush1.msra.mxu0 %v68
    %508 = vmatprep.subr.mxu0 0.0
    %509 = vmatpush1.msra.mxu0 0.0
    %510 = vmatprep.subr.mxu0 0.0
    %511 = vmatpush1.msra.mxu0 0.0
    %512 = vmatprep.subr.mxu0 0.0
    %513 = vmatpush1.msra.mxu0 0.0
    %514 = vmatprep.subr.mxu0 0.0
    %515 = vmatpush1.msra.mxu0 0.0
    %516 = vmatprep.subr.mxu0 0.0
    %517 = vmatpush1.msra.mxu0 0.0
    %518 = vmatprep.subr.mxu0 0.0
    %519 = vmatpush1.msra.mxu0 0.0
    %520 = vmatprep.subr.mxu0 0.0
    %521 = vmatpush1.msra.mxu0 0.0
    %522 = vmatprep.subr.mxu0 0.0
    %523 = vmatpush1.msra.mxu0 0.0
    %524 = vmatprep.subr.mxu0 0.0
    %525 = vmatpush1.msra.mxu0 0.0
    %526 = vmatprep.subr.mxu0 0.0
    %527 = vmatpush1.msra.mxu0 0.0
    %528 = vmatprep.subr.mxu0 0.0
    %529 = vmatpush1.msra.mxu0 0.0
    %530 = vmatprep.subr.mxu0 0.0
    %531 = vmatpush1.msra.mxu0 0.0
    %532 = vmatprep.subr.mxu0 0.0
    %533 = vmatpush1.msra.mxu0 0.0
    %534 = vmatprep.subr.mxu0 0.0
    %535 = vmatpush1.msra.mxu0 0.0
    %536 = vmatprep.subr.mxu0 0.0
    %537 = vmatpush1.msra.mxu0 0.0
    %538 = vmatprep.subr.mxu0 0.0
    %539 = vmatpush1.msra.mxu0 0.0
    %540 = vmatprep.subr.mxu0 0.0
    %541 = vmatpush1.msra.mxu0 0.0
    %542 = vmatprep.subr.mxu0 0.0
    %543 = vmatpush1.msra.mxu0 0.0
    %544 = vmatprep.subr.mxu0 0.0
    %545 = vmatpush1.msra.mxu0 0.0
    %546 = vmatprep.subr.mxu0 0.0
    %547 = vmatpush1.msra.mxu0 0.0
    %548 = vmatprep.subr.mxu0 0.0
    %549 = vmatpush1.msra.mxu0 0.0
    %550 = vmatprep.subr.mxu0 0.0
    %551 = vmatpush1.msra.mxu0 0.0
    %552 = vmatprep.subr.mxu0 0.0
    %553 = vmatpush1.msra.mxu0 0.0
    %554 = vmatprep.subr.mxu0 0.0
    %555 = vmatpush1.msra.mxu0 0.0
    %556 = vmatprep.subr.mxu0 0.0
    %557 = vmatpush1.msra.mxu0 0.0
    %558 = vmatprep.subr.mxu0 0.0
    %559 = vmatpush1.msra.mxu0 0.0
    %560 = vmatprep.subr.mxu0 0.0
    %561 = vmatpush1.msra.mxu0 0.0
    %562 = vmatprep.subr.mxu0 0.0
    %563 = vmatpush1.msra.mxu0 0.0
    %564 = vmatprep.mubr.f32.mxu0 0.0
    %565 = vmatmul.mubr.f32.gmra.mrb[0].mxu0 %v358
    %v566 = vpop.f32.mrb[0].mxu0
    %v567 = vadd.f32 0.0, %v566
    %v568 = vpop.f32.mrb[0].mxu0
    %569 = vdwg.mxu0
    %570 = vmatprep.subr.mxu0 0.0
    %571 = vmatpush1.msra.mxu0 %v69
    %572 = vmatprep.subr.mxu0 0.0
    %573 = vmatpush1.msra.mxu0 %v70
    %574 = vmatprep.subr.mxu0 0.0
    %575 = vmatpush1.msra.mxu0 %v71
    %576 = vmatprep.subr.mxu0 0.0
    %577 = vmatpush1.msra.mxu0 %v72
    %578 = vmatprep.subr.mxu0 0.0
    %579 = vmatpush1.msra.mxu0 0.0
    %580 = vmatprep.subr.mxu0 0.0
    %581 = vmatpush1.msra.mxu0 0.0
    %582 = vmatprep.subr.mxu0 0.0
    %583 = vmatpush1.msra.mxu0 0.0
    %584 = vmatprep.subr.mxu0 0.0
    %585 = vmatpush1.msra.mxu0 0.0
    %586 = vmatprep.subr.mxu0 0.0
    %587 = vmatpush1.msra.mxu0 0.0
    %588 = vmatprep.subr.mxu0 0.0
    %589 = vmatpush1.msra.mxu0 0.0
    %590 = vmatprep.subr.mxu0 0.0
    %591 = vmatpush1.msra.mxu0 0.0
    %592 = vmatprep.subr.mxu0 0.0
    %593 = vmatpush1.msra.mxu0 0.0
    %594 = vmatprep.subr.mxu0 0.0
    %595 = vmatpush1.msra.mxu0 0.0
    %596 = vmatprep.subr.mxu0 0.0
    %597 = vmatpush1.msra.mxu0 0.0
    %598 = vmatprep.subr.mxu0 0.0
    %599 = vmatpush1.msra.mxu0 0.0
    %600 = vmatprep.subr.mxu0 0.0
    %601 = vmatpush1.msra.mxu0 0.0
    %602 = vmatprep.subr.mxu0 0.0
    %603 = vmatpush1.msra.mxu0 0.0
    %604 = vmatprep.subr.mxu0 0.0
    %605 = vmatpush1.msra.mxu0 0.0
    %606 = vmatprep.subr.mxu0 0.0
    %607 = vmatpush1.msra.mxu0 0.0
    %608 = vmatprep.subr.mxu0 0.0
    %609 = vmatpush1.msra.mxu0 0.0
    %610 = vmatprep.subr.mxu0 0.0
    %611 = vmatpush1.msra.mxu0 0.0
    %612 = vmatprep.subr.mxu0 0.0
    %613 = vmatpush1.msra.mxu0 0.0
    %614 = vmatprep.subr.mxu0 0.0
    %615 = vmatpush1.msra.mxu0 0.0
    %616 = vmatprep.subr.mxu0 0.0
    %617 = vmatpush1.msra.mxu0 0.0
    %618 = vmatprep.subr.mxu0 0.0
    %619 = vmatpush1.msra.mxu0 0.0
    %620 = vmatprep.subr.mxu0 0.0
    %621 = vmatpush1.msra.mxu0 0.0
    %622 = vmatprep.subr.mxu0 0.0
    %623 = vmatpush1.msra.mxu0 0.0
    %624 = vmatprep.subr.mxu0 0.0
    %625 = vmatpush1.msra.mxu0 0.0
    %626 = vmatprep.subr.mxu0 0.0
    %627 = vmatpush1.msra.mxu0 0.0
    %628 = vmatprep.subr.mxu0 0.0
    %629 = vmatpush1.msra.mxu0 0.0
    %630 = vmatprep.subr.mxu0 0.0
    %631 = vmatpush1.msra.mxu0 0.0
    %632 = vmatprep.subr.mxu0 0.0
    %633 = vmatpush1.msra.mxu0 0.0
    %634 = vmatprep.mubr.f32.mxu0 0.0
    %635 = vmatmul.mubr.f32.gmra.mrb[0].mxu0 %v358
    %v636 = vpop.f32.mrb[0].mxu0
    %v637 = vadd.f32 0.0, %v636
    %v638 = vpop.f32.mrb[0].mxu0
    %639 = vdwg.mxu0
    %v640 = vld [vmem:[%s4] sm:$0xff]
    %v641 = vld [vmem:[%s4 + $0x8] sm:$0xff]
    %v642 = vld [vmem:[%s4 + $0x10] sm:$0xff]
    %v643 = vld [vmem:[%s4 + $0x18] sm:$0xff]
    %645 = vrot.lane.b32.xlu0 %v144, 120
    %v646 = vpop.permute.xlu0 %645
    %vm647 = vcmask 64512
    %v648 = vsel %vm647, %v144, 0
    %v650 = vsel %vm647, %v646, 0
    %652 = vmatprep.subr.mxu0 0.0
    %653 = vmatpush1.xpose.msra.mxu0 %v650
    %654 = vmatprep.subr.mxu0 0.0
    %655 = vmatpush1.xpose.msra.mxu0 0.0
    %656 = vmatprep.subr.mxu0 0.0
    %657 = vmatpush1.xpose.msra.mxu0 0.0
    %658 = vmatprep.subr.mxu0 0.0
    %659 = vmatpush1.xpose.msra.mxu0 0.0
    %660 = vmatprep.subr.mxu0 0.0
    %661 = vmatpush1.xpose.msra.mxu0 0.0
    %662 = vmatprep.subr.mxu0 0.0
    %663 = vmatpush1.xpose.msra.mxu0 0.0
    %664 = vmatprep.subr.mxu0 0.0
    %665 = vmatpush1.xpose.msra.mxu0 0.0
    %666 = vmatprep.subr.mxu0 0.0
    %667 = vmatpush1.xpose.msra.mxu0 0.0
    %668 = vmatprep.subr.mxu0 0.0
    %669 = vmatpush1.xpose.msra.mxu0 0.0
    %670 = vmatprep.subr.mxu0 0.0
    %671 = vmatpush1.xpose.msra.mxu0 0.0
    %672 = vmatprep.subr.mxu0 0.0
    %673 = vmatpush1.xpose.msra.mxu0 0.0
    %674 = vmatprep.subr.mxu0 0.0
    %675 = vmatpush1.xpose.msra.mxu0 0.0
    %676 = vmatprep.subr.mxu0 0.0
    %677 = vmatpush1.xpose.msra.mxu0 0.0
    %678 = vmatprep.subr.mxu0 0.0
    %679 = vmatpush1.xpose.msra.mxu0 0.0
    %680 = vmatprep.subr.mxu0 0.0
    %681 = vmatpush1.xpose.msra.mxu0 0.0
    %682 = vmatprep.subr.mxu0 0.0
    %683 = vmatpush1.xpose.msra.mxu0 0.0
    %684 = vmatprep.subr.mxu0 0.0
    %685 = vmatpush1.xpose.msra.mxu0 0.0
    %686 = vmatprep.subr.mxu0 0.0
    %687 = vmatpush1.xpose.msra.mxu0 0.0
    %688 = vmatprep.subr.mxu0 0.0
    %689 = vmatpush1.xpose.msra.mxu0 0.0
    %690 = vmatprep.subr.mxu0 0.0
    %691 = vmatpush1.xpose.msra.mxu0 0.0
    %692 = vmatprep.subr.mxu0 0.0
    %693 = vmatpush1.xpose.msra.mxu0 0.0
    %694 = vmatprep.subr.mxu0 0.0
    %695 = vmatpush1.xpose.msra.mxu0 0.0
    %696 = vmatprep.subr.mxu0 0.0
    %697 = vmatpush1.xpose.msra.mxu0 0.0
    %698 = vmatprep.subr.mxu0 0.0
    %699 = vmatpush1.xpose.msra.mxu0 0.0
    %700 = vmatprep.subr.mxu0 0.0
    %701 = vmatpush1.xpose.msra.mxu0 0.0
    %702 = vmatprep.subr.mxu0 0.0
    %703 = vmatpush1.xpose.msra.mxu0 0.0
    %704 = vmatprep.subr.mxu0 0.0
    %705 = vmatpush1.xpose.msra.mxu0 0.0
    %706 = vmatprep.subr.mxu0 0.0
    %707 = vmatpush1.xpose.msra.mxu0 0.0
    %708 = vmatprep.subr.mxu0 0.0
    %709 = vmatpush1.xpose.msra.mxu0 0.0
    %710 = vmatprep.subr.mxu0 0.0
    %711 = vmatpush1.xpose.msra.mxu0 0.0
    %712 = vmatprep.subr.mxu0 0.0
    %713 = vmatpush1.xpose.msra.mxu0 0.0
    %714 = vmatprep.subr.mxu0 0.0
    %715 = vmatpush1.xpose.msra.mxu0 0.0
    %716 = vmatprep.mubr.f32.mxu0 0.0
    %717 = vmatmul.mubr.f32.gmra.mrb[0].mxu0 %v648
    %v718 = vpop.f32.mrb[0].mxu0
    %v719 = vadd.f32 0.0, %v718
    %v720 = vpop.f32.mrb[0].mxu0
    %721 = vdwg.mxu0
    %723 = vrot.lane.b32.xlu0 %v214, 120
    %v724 = vpop.permute.xlu0 %723
    %v725 = vsel %vm647, %v214, 0
    %v727 = vsel %vm647, %v724, 0
    %729 = vmatprep.subr.mxu0 0.0
    %730 = vmatpush1.xpose.msra.mxu0 %v727
    %731 = vmatprep.subr.mxu0 0.0
    %732 = vmatpush1.xpose.msra.mxu0 0.0
    %733 = vmatprep.subr.mxu0 0.0
    %734 = vmatpush1.xpose.msra.mxu0 0.0
    %735 = vmatprep.subr.mxu0 0.0
    %736 = vmatpush1.xpose.msra.mxu0 0.0
    %737 = vmatprep.subr.mxu0 0.0
    %738 = vmatpush1.xpose.msra.mxu0 0.0
    %739 = vmatprep.subr.mxu0 0.0
    %740 = vmatpush1.xpose.msra.mxu0 0.0
    %741 = vmatprep.subr.mxu0 0.0
    %742 = vmatpush1.xpose.msra.mxu0 0.0
    %743 = vmatprep.subr.mxu0 0.0
    %744 = vmatpush1.xpose.msra.mxu0 0.0
    %745 = vmatprep.subr.mxu0 0.0
    %746 = vmatpush1.xpose.msra.mxu0 0.0
    %747 = vmatprep.subr.mxu0 0.0
    %748 = vmatpush1.xpose.msra.mxu0 0.0
    %749 = vmatprep.subr.mxu0 0.0
    %750 = vmatpush1.xpose.msra.mxu0 0.0
    %751 = vmatprep.subr.mxu0 0.0
    %752 = vmatpush1.xpose.msra.mxu0 0.0
    %753 = vmatprep.subr.mxu0 0.0
    %754 = vmatpush1.xpose.msra.mxu0 0.0
    %755 = vmatprep.subr.mxu0 0.0
    %756 = vmatpush1.xpose.msra.mxu0 0.0
    %757 = vmatprep.subr.mxu0 0.0
    %758 = vmatpush1.xpose.msra.mxu0 0.0
    %759 = vmatprep.subr.mxu0 0.0
    %760 = vmatpush1.xpose.msra.mxu0 0.0
    %761 = vmatprep.subr.mxu0 0.0
    %762 = vmatpush1.xpose.msra.mxu0 0.0
    %763 = vmatprep.subr.mxu0 0.0
    %764 = vmatpush1.xpose.msra.mxu0 0.0
    %765 = vmatprep.subr.mxu0 0.0
    %766 = vmatpush1.xpose.msra.mxu0 0.0
    %767 = vmatprep.subr.mxu0 0.0
    %768 = vmatpush1.xpose.msra.mxu0 0.0
    %769 = vmatprep.subr.mxu0 0.0
    %770 = vmatpush1.xpose.msra.mxu0 0.0
    %771 = vmatprep.subr.mxu0 0.0
    %772 = vmatpush1.xpose.msra.mxu0 0.0
    %773 = vmatprep.subr.mxu0 0.0
    %774 = vmatpush1.xpose.msra.mxu0 0.0
    %775 = vmatprep.subr.mxu0 0.0
    %776 = vmatpush1.xpose.msra.mxu0 0.0
    %777 = vmatprep.subr.mxu0 0.0
    %778 = vmatpush1.xpose.msra.mxu0 0.0
    %779 = vmatprep.subr.mxu0 0.0
    %780 = vmatpush1.xpose.msra.mxu0 0.0
    %781 = vmatprep.subr.mxu0 0.0
    %782 = vmatpush1.xpose.msra.mxu0 0.0
    %783 = vmatprep.subr.mxu0 0.0
    %784 = vmatpush1.xpose.msra.mxu0 0.0
    %785 = vmatprep.subr.mxu0 0.0
    %786 = vmatpush1.xpose.msra.mxu0 0.0
    %787 = vmatprep.subr.mxu0 0.0
    %788 = vmatpush1.xpose.msra.mxu0 0.0
    %789 = vmatprep.subr.mxu0 0.0
    %790 = vmatpush1.xpose.msra.mxu0 0.0
    %791 = vmatprep.subr.mxu0 0.0
    %792 = vmatpush1.xpose.msra.mxu0 0.0
    %793 = vmatprep.mubr.f32.mxu0 0.0
    %794 = vmatmul.mubr.f32.gmra.mrb[0].mxu0 %v725
    %v795 = vpop.f32.mrb[0].mxu0
    %v796 = vadd.f32 0.0, %v795
    %v797 = vpop.f32.mrb[0].mxu0
    %798 = vdwg.mxu0
    %800 = vrot.lane.b32.xlu0 %v284, 120
    %v801 = vpop.permute.xlu0 %800
    %v802 = vsel %vm647, %v284, 0
    %v804 = vsel %vm647, %v801, 0
    %806 = vmatprep.subr.mxu0 0.0
    %807 = vmatpush1.xpose.msra.mxu0 %v804
    %808 = vmatprep.subr.mxu0 0.0
    %809 = vmatpush1.xpose.msra.mxu0 0.0
    %810 = vmatprep.subr.mxu0 0.0
    %811 = vmatpush1.xpose.msra.mxu0 0.0
    %812 = vmatprep.subr.mxu0 0.0
    %813 = vmatpush1.xpose.msra.mxu0 0.0
    %814 = vmatprep.subr.mxu0 0.0
    %815 = vmatpush1.xpose.msra.mxu0 0.0
    %816 = vmatprep.subr.mxu0 0.0
    %817 = vmatpush1.xpose.msra.mxu0 0.0
    %818 = vmatprep.subr.mxu0 0.0
    %819 = vmatpush1.xpose.msra.mxu0 0.0
    %820 = vmatprep.subr.mxu0 0.0
    %821 = vmatpush1.xpose.msra.mxu0 0.0
    %822 = vmatprep.subr.mxu0 0.0
    %823 = vmatpush1.xpose.msra.mxu0 0.0
    %824 = vmatprep.subr.mxu0 0.0
    %825 = vmatpush1.xpose.msra.mxu0 0.0
    %826 = vmatprep.subr.mxu0 0.0
    %827 = vmatpush1.xpose.msra.mxu0 0.0
    %828 = vmatprep.subr.mxu0 0.0
    %829 = vmatpush1.xpose.msra.mxu0 0.0
    %830 = vmatprep.subr.mxu0 0.0
    %831 = vmatpush1.xpose.msra.mxu0 0.0
    %832 = vmatprep.subr.mxu0 0.0
    %833 = vmatpush1.xpose.msra.mxu0 0.0
    %834 = vmatprep.subr.mxu0 0.0
    %835 = vmatpush1.xpose.msra.mxu0 0.0
    %836 = vmatprep.subr.mxu0 0.0
    %837 = vmatpush1.xpose.msra.mxu0 0.0
    %838 = vmatprep.subr.mxu0 0.0
    %839 = vmatpush1.xpose.msra.mxu0 0.0
    %840 = vmatprep.subr.mxu0 0.0
    %841 = vmatpush1.xpose.msra.mxu0 0.0
    %842 = vmatprep.subr.mxu0 0.0
    %843 = vmatpush1.xpose.msra.mxu0 0.0
    %844 = vmatprep.subr.mxu0 0.0
    %845 = vmatpush1.xpose.msra.mxu0 0.0
    %846 = vmatprep.subr.mxu0 0.0
    %847 = vmatpush1.xpose.msra.mxu0 0.0
    %848 = vmatprep.subr.mxu0 0.0
    %849 = vmatpush1.xpose.msra.mxu0 0.0
    %850 = vmatprep.subr.mxu0 0.0
    %851 = vmatpush1.xpose.msra.mxu0 0.0
    %852 = vmatprep.subr.mxu0 0.0
    %853 = vmatpush1.xpose.msra.mxu0 0.0
    %854 = vmatprep.subr.mxu0 0.0
    %855 = vmatpush1.xpose.msra.mxu0 0.0
    %856 = vmatprep.subr.mxu0 0.0
    %857 = vmatpush1.xpose.msra.mxu0 0.0
    %858 = vmatprep.subr.mxu0 0.0
    %859 = vmatpush1.xpose.msra.mxu0 0.0
    %860 = vmatprep.subr.mxu0 0.0
    %861 = vmatpush1.xpose.msra.mxu0 0.0
    %862 = vmatprep.subr.mxu0 0.0
    %863 = vmatpush1.xpose.msra.mxu0 0.0
    %864 = vmatprep.subr.mxu0 0.0
    %865 = vmatpush1.xpose.msra.mxu0 0.0
    %866 = vmatprep.subr.mxu0 0.0
    %867 = vmatpush1.xpose.msra.mxu0 0.0
    %868 = vmatprep.subr.mxu0 0.0
    %869 = vmatpush1.xpose.msra.mxu0 0.0
    %870 = vmatprep.mubr.f32.mxu0 0.0
    %871 = vmatmul.mubr.f32.gmra.mrb[0].mxu0 %v802
    %v872 = vpop.f32.mrb[0].mxu0
    %v873 = vadd.f32 0.0, %v872
    %v874 = vpop.f32.mrb[0].mxu0
    %875 = vdwg.mxu0
    %877 = vrot.lane.b32.xlu0 %v354, 120
    %v878 = vpop.permute.xlu0 %877
    %v879 = vsel %vm647, %v354, 0
    %v881 = vsel %vm647, %v878, 0
    %883 = vmatprep.subr.mxu0 0.0
    %884 = vmatpush1.xpose.msra.mxu0 %v881
    %885 = vmatprep.subr.mxu0 0.0
    %886 = vmatpush1.xpose.msra.mxu0 0.0
    %887 = vmatprep.subr.mxu0 0.0
    %888 = vmatpush1.xpose.msra.mxu0 0.0
    %889 = vmatprep.subr.mxu0 0.0
    %890 = vmatpush1.xpose.msra.mxu0 0.0
    %891 = vmatprep.subr.mxu0 0.0
    %892 = vmatpush1.xpose.msra.mxu0 0.0
    %893 = vmatprep.subr.mxu0 0.0
    %894 = vmatpush1.xpose.msra.mxu0 0.0
    %895 = vmatprep.subr.mxu0 0.0
    %896 = vmatpush1.xpose.msra.mxu0 0.0
    %897 = vmatprep.subr.mxu0 0.0
    %898 = vmatpush1.xpose.msra.mxu0 0.0
    %899 = vmatprep.subr.mxu0 0.0
    %900 = vmatpush1.xpose.msra.mxu0 0.0
    %901 = vmatprep.subr.mxu0 0.0
    %902 = vmatpush1.xpose.msra.mxu0 0.0
    %903 = vmatprep.subr.mxu0 0.0
    %904 = vmatpush1.xpose.msra.mxu0 0.0
    %905 = vmatprep.subr.mxu0 0.0
    %906 = vmatpush1.xpose.msra.mxu0 0.0
    %907 = vmatprep.subr.mxu0 0.0
    %908 = vmatpush1.xpose.msra.mxu0 0.0
    %909 = vmatprep.subr.mxu0 0.0
    %910 = vmatpush1.xpose.msra.mxu0 0.0
    %911 = vmatprep.subr.mxu0 0.0
    %912 = vmatpush1.xpose.msra.mxu0 0.0
    %913 = vmatprep.subr.mxu0 0.0
    %914 = vmatpush1.xpose.msra.mxu0 0.0
    %915 = vmatprep.subr.mxu0 0.0
    %916 = vmatpush1.xpose.msra.mxu0 0.0
    %917 = vmatprep.subr.mxu0 0.0
    %918 = vmatpush1.xpose.msra.mxu0 0.0
    %919 = vmatprep.subr.mxu0 0.0
    %920 = vmatpush1.xpose.msra.mxu0 0.0
    %921 = vmatprep.subr.mxu0 0.0
    %922 = vmatpush1.xpose.msra.mxu0 0.0
    %923 = vmatprep.subr.mxu0 0.0
    %924 = vmatpush1.xpose.msra.mxu0 0.0
    %925 = vmatprep.subr.mxu0 0.0
    %926 = vmatpush1.xpose.msra.mxu0 0.0
    %927 = vmatprep.subr.mxu0 0.0
    %928 = vmatpush1.xpose.msra.mxu0 0.0
    %929 = vmatprep.subr.mxu0 0.0
    %930 = vmatpush1.xpose.msra.mxu0 0.0
    %931 = vmatprep.subr.mxu0 0.0
    %932 = vmatpush1.xpose.msra.mxu0 0.0
    %933 = vmatprep.subr.mxu0 0.0
    %934 = vmatpush1.xpose.msra.mxu0 0.0
    %935 = vmatprep.subr.mxu0 0.0
    %936 = vmatpush1.xpose.msra.mxu0 0.0
    %937 = vmatprep.subr.mxu0 0.0
    %938 = vmatpush1.xpose.msra.mxu0 0.0
    %939 = vmatprep.subr.mxu0 0.0
    %940 = vmatpush1.xpose.msra.mxu0 0.0
    %941 = vmatprep.subr.mxu0 0.0
    %942 = vmatpush1.xpose.msra.mxu0 0.0
    %943 = vmatprep.subr.mxu0 0.0
    %944 = vmatpush1.xpose.msra.mxu0 0.0
    %945 = vmatprep.subr.mxu0 0.0
    %946 = vmatpush1.xpose.msra.mxu0 0.0
    %947 = vmatprep.mubr.f32.mxu0 0.0
    %948 = vmatmul.mubr.f32.gmra.mrb[0].mxu0 %v879
    %v949 = vpop.f32.mrb[0].mxu0
    %v950 = vadd.f32 0.0, %v949
    %v951 = vpop.f32.mrb[0].mxu0
    %952 = vdwg.mxu0
    %954 = vrot.lane.b32.xlu0 %v427, 120
    %v955 = vpop.permute.xlu0 %954
    %v956 = vsel %vm647, %v427, 0
    %v958 = vsel %vm647, %v955, 0
    %960 = vmatprep.subr.mxu0 0.0
    %961 = vmatpush1.xpose.msra.mxu0 %v958
    %962 = vmatprep.subr.mxu0 0.0
    %963 = vmatpush1.xpose.msra.mxu0 0.0
    %964 = vmatprep.subr.mxu0 0.0
    %965 = vmatpush1.xpose.msra.mxu0 0.0
    %966 = vmatprep.subr.mxu0 0.0
    %967 = vmatpush1.xpose.msra.mxu0 0.0
    %968 = vmatprep.subr.mxu0 0.0
    %969 = vmatpush1.xpose.msra.mxu0 0.0
    %970 = vmatprep.subr.mxu0 0.0
    %971 = vmatpush1.xpose.msra.mxu0 0.0
    %972 = vmatprep.subr.mxu0 0.0
    %973 = vmatpush1.xpose.msra.mxu0 0.0
    %974 = vmatprep.subr.mxu0 0.0
    %975 = vmatpush1.xpose.msra.mxu0 0.0
    %976 = vmatprep.subr.mxu0 0.0
    %977 = vmatpush1.xpose.msra.mxu0 0.0
    %978 = vmatprep.subr.mxu0 0.0
    %979 = vmatpush1.xpose.msra.mxu0 0.0
    %980 = vmatprep.subr.mxu0 0.0
    %981 = vmatpush1.xpose.msra.mxu0 0.0
    %982 = vmatprep.subr.mxu0 0.0
    %983 = vmatpush1.xpose.msra.mxu0 0.0
    %984 = vmatprep.subr.mxu0 0.0
    %985 = vmatpush1.xpose.msra.mxu0 0.0
    %986 = vmatprep.subr.mxu0 0.0
    %987 = vmatpush1.xpose.msra.mxu0 0.0
    %988 = vmatprep.subr.mxu0 0.0
    %989 = vmatpush1.xpose.msra.mxu0 0.0
    %990 = vmatprep.subr.mxu0 0.0
    %991 = vmatpush1.xpose.msra.mxu0 0.0
    %992 = vmatprep.subr.mxu0 0.0
    %993 = vmatpush1.xpose.msra.mxu0 0.0
    %994 = vmatprep.subr.mxu0 0.0
    %995 = vmatpush1.xpose.msra.mxu0 0.0
    %996 = vmatprep.subr.mxu0 0.0
    %997 = vmatpush1.xpose.msra.mxu0 0.0
    %998 = vmatprep.subr.mxu0 0.0
    %999 = vmatpush1.xpose.msra.mxu0 0.0
    %1000 = vmatprep.subr.mxu0 0.0
    %1001 = vmatpush1.xpose.msra.mxu0 0.0
    %1002 = vmatprep.subr.mxu0 0.0
    %1003 = vmatpush1.xpose.msra.mxu0 0.0
    %1004 = vmatprep.subr.mxu0 0.0
    %1005 = vmatpush1.xpose.msra.mxu0 0.0
    %1006 = vmatprep.subr.mxu0 0.0
    %1007 = vmatpush1.xpose.msra.mxu0 0.0
    %1008 = vmatprep.subr.mxu0 0.0
    %1009 = vmatpush1.xpose.msra.mxu0 0.0
    %1010 = vmatprep.subr.mxu0 0.0
    %1011 = vmatpush1.xpose.msra.mxu0 0.0
    %1012 = vmatprep.subr.mxu0 0.0
    %1013 = vmatpush1.xpose.msra.mxu0 0.0
    %1014 = vmatprep.subr.mxu0 0.0
    %1015 = vmatpush1.xpose.msra.mxu0 0.0
    %1016 = vmatprep.subr.mxu0 0.0
    %1017 = vmatpush1.xpose.msra.mxu0 0.0
    %1018 = vmatprep.subr.mxu0 0.0
    %1019 = vmatpush1.xpose.msra.mxu0 0.0
    %1020 = vmatprep.subr.mxu0 0.0
    %1021 = vmatpush1.xpose.msra.mxu0 0.0
    %1022 = vmatprep.subr.mxu0 0.0
    %1023 = vmatpush1.xpose.msra.mxu0 0.0
    %1024 = vmatprep.mubr.f32.mxu0 0.0
    %1025 = vmatmul.mubr.f32.gmra.mrb[0].mxu0 %v956
    %v1026 = vpop.f32.mrb[0].mxu0
    %v1027 = vadd.f32 0.0, %v1026
    %v1028 = vpop.f32.mrb[0].mxu0
    %1029 = vdwg.mxu0
    %1031 = vrot.lane.b32.xlu0 %v497, 120
    %v1032 = vpop.permute.xlu0 %1031
    %v1033 = vsel %vm647, %v497, 0
    %v1035 = vsel %vm647, %v1032, 0
    %1037 = vmatprep.subr.mxu0 0.0
    %1038 = vmatpush1.xpose.msra.mxu0 %v1035
    %1039 = vmatprep.subr.mxu0 0.0
    %1040 = vmatpush1.xpose.msra.mxu0 0.0
    %1041 = vmatprep.subr.mxu0 0.0
    %1042 = vmatpush1.xpose.msra.mxu0 0.0
    %1043 = vmatprep.subr.mxu0 0.0
    %1044 = vmatpush1.xpose.msra.mxu0 0.0
    %1045 = vmatprep.subr.mxu0 0.0
    %1046 = vmatpush1.xpose.msra.mxu0 0.0
    %1047 = vmatprep.subr.mxu0 0.0
    %1048 = vmatpush1.xpose.msra.mxu0 0.0
    %1049 = vmatprep.subr.mxu0 0.0
    %1050 = vmatpush1.xpose.msra.mxu0 0.0
    %1051 = vmatprep.subr.mxu0 0.0
    %1052 = vmatpush1.xpose.msra.mxu0 0.0
    %1053 = vmatprep.subr.mxu0 0.0
    %1054 = vmatpush1.xpose.msra.mxu0 0.0
    %1055 = vmatprep.subr.mxu0 0.0
    %1056 = vmatpush1.xpose.msra.mxu0 0.0
    %1057 = vmatprep.subr.mxu0 0.0
    %1058 = vmatpush1.xpose.msra.mxu0 0.0
    %1059 = vmatprep.subr.mxu0 0.0
    %1060 = vmatpush1.xpose.msra.mxu0 0.0
    %1061 = vmatprep.subr.mxu0 0.0
    %1062 = vmatpush1.xpose.msra.mxu0 0.0
    %1063 = vmatprep.subr.mxu0 0.0
    %1064 = vmatpush1.xpose.msra.mxu0 0.0
    %1065 = vmatprep.subr.mxu0 0.0
    %1066 = vmatpush1.xpose.msra.mxu0 0.0
    %1067 = vmatprep.subr.mxu0 0.0
    %1068 = vmatpush1.xpose.msra.mxu0 0.0
    %1069 = vmatprep.subr.mxu0 0.0
    %1070 = vmatpush1.xpose.msra.mxu0 0.0
    %1071 = vmatprep.subr.mxu0 0.0
    %1072 = vmatpush1.xpose.msra.mxu0 0.0
    %1073 = vmatprep.subr.mxu0 0.0
    %1074 = vmatpush1.xpose.msra.mxu0 0.0
    %1075 = vmatprep.subr.mxu0 0.0
    %1076 = vmatpush1.xpose.msra.mxu0 0.0
    %1077 = vmatprep.subr.mxu0 0.0
    %1078 = vmatpush1.xpose.msra.mxu0 0.0
    %1079 = vmatprep.subr.mxu0 0.0
    %1080 = vmatpush1.xpose.msra.mxu0 0.0
    %1081 = vmatprep.subr.mxu0 0.0
    %1082 = vmatpush1.xpose.msra.mxu0 0.0
    %1083 = vmatprep.subr.mxu0 0.0
    %1084 = vmatpush1.xpose.msra.mxu0 0.0
    %1085 = vmatprep.subr.mxu0 0.0
    %1086 = vmatpush1.xpose.msra.mxu0 0.0
    %1087 = vmatprep.subr.mxu0 0.0
    %1088 = vmatpush1.xpose.msra.mxu0 0.0
    %1089 = vmatprep.subr.mxu0 0.0
    %1090 = vmatpush1.xpose.msra.mxu0 0.0
    %1091 = vmatprep.subr.mxu0 0.0
    %1092 = vmatpush1.xpose.msra.mxu0 0.0
    %1093 = vmatprep.subr.mxu0 0.0
    %1094 = vmatpush1.xpose.msra.mxu0 0.0
    %1095 = vmatprep.subr.mxu0 0.0
    %1096 = vmatpush1.xpose.msra.mxu0 0.0
    %1097 = vmatprep.subr.mxu0 0.0
    %1098 = vmatpush1.xpose.msra.mxu0 0.0
    %1099 = vmatprep.subr.mxu0 0.0
    %1100 = vmatpush1.xpose.msra.mxu0 0.0
    %1101 = vmatprep.mubr.f32.mxu0 0.0
    %1102 = vmatmul.mubr.f32.gmra.mrb[0].mxu0 %v1033
    %v1103 = vpop.f32.mrb[0].mxu0
    %v1104 = vadd.f32 0.0, %v1103
    %v1105 = vpop.f32.mrb[0].mxu0
    %1106 = vdwg.mxu0
    %1108 = vrot.lane.b32.xlu0 %v567, 120
    %v1109 = vpop.permute.xlu0 %1108
    %v1110 = vsel %vm647, %v567, 0
    %v1112 = vsel %vm647, %v1109, 0
    %1114 = vmatprep.subr.mxu0 0.0
    %1115 = vmatpush1.xpose.msra.mxu0 %v1112
    %1116 = vmatprep.subr.mxu0 0.0
    %1117 = vmatpush1.xpose.msra.mxu0 0.0
    %1118 = vmatprep.subr.mxu0 0.0
    %1119 = vmatpush1.xpose.msra.mxu0 0.0
    %1120 = vmatprep.subr.mxu0 0.0
    %1121 = vmatpush1.xpose.msra.mxu0 0.0
    %1122 = vmatprep.subr.mxu0 0.0
    %1123 = vmatpush1.xpose.msra.mxu0 0.0
    %1124 = vmatprep.subr.mxu0 0.0
    %1125 = vmatpush1.xpose.msra.mxu0 0.0
    %1126 = vmatprep.subr.mxu0 0.0
    %1127 = vmatpush1.xpose.msra.mxu0 0.0
    %1128 = vmatprep.subr.mxu0 0.0
    %1129 = vmatpush1.xpose.msra.mxu0 0.0
    %1130 = vmatprep.subr.mxu0 0.0
    %1131 = vmatpush1.xpose.msra.mxu0 0.0
    %1132 = vmatprep.subr.mxu0 0.0
    %1133 = vmatpush1.xpose.msra.mxu0 0.0
    %1134 = vmatprep.subr.mxu0 0.0
    %1135 = vmatpush1.xpose.msra.mxu0 0.0
    %1136 = vmatprep.subr.mxu0 0.0
    %1137 = vmatpush1.xpose.msra.mxu0 0.0
    %1138 = vmatprep.subr.mxu0 0.0
    %1139 = vmatpush1.xpose.msra.mxu0 0.0
    %1140 = vmatprep.subr.mxu0 0.0
    %1141 = vmatpush1.xpose.msra.mxu0 0.0
    %1142 = vmatprep.subr.mxu0 0.0
    %1143 = vmatpush1.xpose.msra.mxu0 0.0
    %1144 = vmatprep.subr.mxu0 0.0
    %1145 = vmatpush1.xpose.msra.mxu0 0.0
    %1146 = vmatprep.subr.mxu0 0.0
    %1147 = vmatpush1.xpose.msra.mxu0 0.0
    %1148 = vmatprep.subr.mxu0 0.0
    %1149 = vmatpush1.xpose.msra.mxu0 0.0
    %1150 = vmatprep.subr.mxu0 0.0
    %1151 = vmatpush1.xpose.msra.mxu0 0.0
    %1152 = vmatprep.subr.mxu0 0.0
    %1153 = vmatpush1.xpose.msra.mxu0 0.0
    %1154 = vmatprep.subr.mxu0 0.0
    %1155 = vmatpush1.xpose.msra.mxu0 0.0
    %1156 = vmatprep.subr.mxu0 0.0
    %1157 = vmatpush1.xpose.msra.mxu0 0.0
    %1158 = vmatprep.subr.mxu0 0.0
    %1159 = vmatpush1.xpose.msra.mxu0 0.0
    %1160 = vmatprep.subr.mxu0 0.0
    %1161 = vmatpush1.xpose.msra.mxu0 0.0
    %1162 = vmatprep.subr.mxu0 0.0
    %1163 = vmatpush1.xpose.msra.mxu0 0.0
    %1164 = vmatprep.subr.mxu0 0.0
    %1165 = vmatpush1.xpose.msra.mxu0 0.0
    %1166 = vmatprep.subr.mxu0 0.0
    %1167 = vmatpush1.xpose.msra.mxu0 0.0
    %1168 = vmatprep.subr.mxu0 0.0
    %1169 = vmatpush1.xpose.msra.mxu0 0.0
    %1170 = vmatprep.subr.mxu0 0.0
    %1171 = vmatpush1.xpose.msra.mxu0 0.0
    %1172 = vmatprep.subr.mxu0 0.0
    %1173 = vmatpush1.xpose.msra.mxu0 0.0
    %1174 = vmatprep.subr.mxu0 0.0
    %1175 = vmatpush1.xpose.msra.mxu0 0.0
    %1176 = vmatprep.subr.mxu0 0.0
    %1177 = vmatpush1.xpose.msra.mxu0 0.0
    %1178 = vmatprep.mubr.f32.mxu0 0.0
    %1179 = vmatmul.mubr.f32.gmra.mrb[0].mxu0 %v1110
    %v1180 = vpop.f32.mrb[0].mxu0
    %v1181 = vadd.f32 0.0, %v1180
    %v1182 = vpop.f32.mrb[0].mxu0
    %1183 = vdwg.mxu0
    %1185 = vrot.lane.b32.xlu0 %v637, 120
    %v1186 = vpop.permute.xlu0 %1185
    %v1187 = vsel %vm647, %v637, 0
    %v1189 = vsel %vm647, %v1186, 0
    %1191 = vmatprep.subr.mxu0 0.0
    %1192 = vmatpush1.xpose.msra.mxu0 %v1189
    %1193 = vmatprep.subr.mxu0 0.0
    %1194 = vmatpush1.xpose.msra.mxu0 0.0
    %1195 = vmatprep.subr.mxu0 0.0
    %1196 = vmatpush1.xpose.msra.mxu0 0.0
    %1197 = vmatprep.subr.mxu0 0.0
    %1198 = vmatpush1.xpose.msra.mxu0 0.0
    %1199 = vmatprep.subr.mxu0 0.0
    %1200 = vmatpush1.xpose.msra.mxu0 0.0
    %1201 = vmatprep.subr.mxu0 0.0
    %1202 = vmatpush1.xpose.msra.mxu0 0.0
    %1203 = vmatprep.subr.mxu0 0.0
    %1204 = vmatpush1.xpose.msra.mxu0 0.0
    %1205 = vmatprep.subr.mxu0 0.0
    %1206 = vmatpush1.xpose.msra.mxu0 0.0
    %1207 = vmatprep.subr.mxu0 0.0
    %1208 = vmatpush1.xpose.msra.mxu0 0.0
    %1209 = vmatprep.subr.mxu0 0.0
    %1210 = vmatpush1.xpose.msra.mxu0 0.0
    %1211 = vmatprep.subr.mxu0 0.0
    %1212 = vmatpush1.xpose.msra.mxu0 0.0
    %1213 = vmatprep.subr.mxu0 0.0
    %1214 = vmatpush1.xpose.msra.mxu0 0.0
    %1215 = vmatprep.subr.mxu0 0.0
    %1216 = vmatpush1.xpose.msra.mxu0 0.0
    %1217 = vmatprep.subr.mxu0 0.0
    %1218 = vmatpush1.xpose.msra.mxu0 0.0
    %1219 = vmatprep.subr.mxu0 0.0
    %1220 = vmatpush1.xpose.msra.mxu0 0.0
    %1221 = vmatprep.subr.mxu0 0.0
    %1222 = vmatpush1.xpose.msra.mxu0 0.0
    %1223 = vmatprep.subr.mxu0 0.0
    %1224 = vmatpush1.xpose.msra.mxu0 0.0
    %1225 = vmatprep.subr.mxu0 0.0
    %1226 = vmatpush1.xpose.msra.mxu0 0.0
    %1227 = vmatprep.subr.mxu0 0.0
    %1228 = vmatpush1.xpose.msra.mxu0 0.0
    %1229 = vmatprep.subr.mxu0 0.0
    %1230 = vmatpush1.xpose.msra.mxu0 0.0
    %1231 = vmatprep.subr.mxu0 0.0
    %1232 = vmatpush1.xpose.msra.mxu0 0.0
    %1233 = vmatprep.subr.mxu0 0.0
    %1234 = vmatpush1.xpose.msra.mxu0 0.0
    %1235 = vmatprep.subr.mxu0 0.0
    %1236 = vmatpush1.xpose.msra.mxu0 0.0
    %1237 = vmatprep.subr.mxu0 0.0
    %1238 = vmatpush1.xpose.msra.mxu0 0.0
    %1239 = vmatprep.subr.mxu0 0.0
    %1240 = vmatpush1.xpose.msra.mxu0 0.0
    %1241 = vmatprep.subr.mxu0 0.0
    %1242 = vmatpush1.xpose.msra.mxu0 0.0
    %1243 = vmatprep.subr.mxu0 0.0
    %1244 = vmatpush1.xpose.msra.mxu0 0.0
    %1245 = vmatprep.subr.mxu0 0.0
    %1246 = vmatpush1.xpose.msra.mxu0 0.0
    %1247 = vmatprep.subr.mxu0 0.0
    %1248 = vmatpush1.xpose.msra.mxu0 0.0
    %1249 = vmatprep.subr.mxu0 0.0
    %1250 = vmatpush1.xpose.msra.mxu0 0.0
    %1251 = vmatprep.subr.mxu0 0.0
    %1252 = vmatpush1.xpose.msra.mxu0 0.0
    %1253 = vmatprep.subr.mxu0 0.0
    %1254 = vmatpush1.xpose.msra.mxu0 0.0
    %1255 = vmatprep.mubr.f32.mxu0 0.0
    %1256 = vmatmul.mubr.f32.gmra.mrb[0].mxu0 %v1187
    %v1257 = vpop.f32.mrb[0].mxu0
    %v1258 = vadd.f32 0.0, %v1257
    %v1259 = vpop.f32.mrb[0].mxu0
    %1260 = vdwg.mxu0
    %v1261 = vmul.f32 %v719, 0.35355338
    %v1262 = vmul.f32 %v796, 0.35355338
    %v1263 = vmul.f32 %v873, 0.35355338
    %v1264 = vmul.f32 %v950, 0.35355338
    %v1265 = vmul.f32 %v1027, 0.35355338
    %v1266 = vmul.f32 %v1104, 0.35355338
    %v1267 = vmul.f32 %v1181, 0.35355338
    %v1268 = vmul.f32 %v1258, 0.35355338
    %v1269 = vsel %vm647, %v1261, -inf
    %1270 = vmax.xlane.f32.xlu0 %v1269
    %v1271 = vpop.xlane.xlu0 %1270
    %v1272 = vsel %vm647, %v1262, -inf
    %1273 = vmax.xlane.f32.xlu0 %v1272
    %v1274 = vpop.xlane.xlu0 %1273
    %v1275 = vsel %vm647, %v1263, -inf
    %1276 = vmax.xlane.f32.xlu0 %v1275
    %v1277 = vpop.xlane.xlu0 %1276
    %v1278 = vsel %vm647, %v1264, -inf
    %1279 = vmax.xlane.f32.xlu0 %v1278
    %v1280 = vpop.xlane.xlu0 %1279
    %v1281 = vsel %vm647, %v1265, -inf
    %1282 = vmax.xlane.f32.xlu0 %v1281
    %v1283 = vpop.xlane.xlu0 %1282
    %v1284 = vsel %vm647, %v1266, -inf
    %1285 = vmax.xlane.f32.xlu0 %v1284
    %v1286 = vpop.xlane.xlu0 %1285
    %v1287 = vsel %vm647, %v1267, -inf
    %1288 = vmax.xlane.f32.xlu0 %v1287
    %v1289 = vpop.xlane.xlu0 %1288
    %v1290 = vsel %vm647, %v1268, -inf
    %1291 = vmax.xlane.f32.xlu0 %v1290
    %v1292 = vpop.xlane.xlu0 %1291
    %v1293 = vsub.f32 %v1261, %v1271
    %v1294 = vsub.f32 %v1262, %v1274
    %v1295 = vsub.f32 %v1263, %v1277
    %v1296 = vsub.f32 %v1264, %v1280
    %v1297 = vsub.f32 %v1265, %v1283
    %v1298 = vsub.f32 %v1266, %v1286
    %v1299 = vsub.f32 %v1267, %v1289
    %v1300 = vsub.f32 %v1268, %v1292
    %v1301 = vmul.f32 %v1293, 1.442695
    %v1302 = vpow.pop %v1301
    %v1303 = vmul.f32 %v1294, 1.442695
    %v1304 = vpow.pop %v1303
    %v1305 = vmul.f32 %v1295, 1.442695
    %v1306 = vpow.pop %v1305
    %v1307 = vmul.f32 %v1296, 1.442695
    %v1308 = vpow.pop %v1307
    %v1309 = vmul.f32 %v1297, 1.442695
    %v1310 = vpow.pop %v1309
    %v1311 = vmul.f32 %v1298, 1.442695
    %v1312 = vpow.pop %v1311
    %v1313 = vmul.f32 %v1299, 1.442695
    %v1314 = vpow.pop %v1313
    %v1315 = vmul.f32 %v1300, 1.442695
    %v1316 = vpow.pop %v1315
    %v1317 = vsel %vm647, %v1302, 0.0
    %1318 = vadd.xlane.f32.xlu0 %v1317
    %v1319 = vpop.xlane.xlu0 %1318
    %v1320 = vsel %vm647, %v1304, 0.0
    %1321 = vadd.xlane.f32.xlu0 %v1320
    %v1322 = vpop.xlane.xlu0 %1321
    %v1323 = vsel %vm647, %v1306, 0.0
    %1324 = vadd.xlane.f32.xlu0 %v1323
    %v1325 = vpop.xlane.xlu0 %1324
    %v1326 = vsel %vm647, %v1308, 0.0
    %1327 = vadd.xlane.f32.xlu0 %v1326
    %v1328 = vpop.xlane.xlu0 %1327
    %v1329 = vsel %vm647, %v1310, 0.0
    %1330 = vadd.xlane.f32.xlu0 %v1329
    %v1331 = vpop.xlane.xlu0 %1330
    %v1332 = vsel %vm647, %v1312, 0.0
    %1333 = vadd.xlane.f32.xlu0 %v1332
    %v1334 = vpop.xlane.xlu0 %1333
    %v1335 = vsel %vm647, %v1314, 0.0
    %1336 = vadd.xlane.f32.xlu0 %v1335
    %v1337 = vpop.xlane.xlu0 %1336
    %v1338 = vsel %vm647, %v1316, 0.0
    %1339 = vadd.xlane.f32.xlu0 %v1338
    %v1340 = vpop.xlane.xlu0 %1339
    %v1341 = vrcp.pop %v1319
    %v1342 = vrcp.pop %v1322
    %v1343 = vrcp.pop %v1325
    %v1344 = vrcp.pop %v1328
    %v1345 = vrcp.pop %v1331
    %v1346 = vrcp.pop %v1334
    %v1347 = vrcp.pop %v1337
    %v1348 = vrcp.pop %v1340
    %v1349 = vmul.f32 %v1302, %v1341
    %v1350 = vmul.f32 %v1304, %v1342
    %v1351 = vmul.f32 %v1306, %v1343
    %v1352 = vmul.f32 %v1308, %v1344
    %v1353 = vmul.f32 %v1310, %v1345
    %v1354 = vmul.f32 %v1312, %v1346
    %v1355 = vmul.f32 %v1314, %v1347
    %v1356 = vmul.f32 %v1316, %v1348
    %1357 = vrot.lane.b32.xlu0 %v144, 112
    %v1358 = vpop.permute.xlu0 %1357
    %v1361 = vsel %vm647, %v1349, 0
    %1363 = vmatprep.subr.mxu0 0.0
    %1364 = vmatpush1.msra.mxu0 %v1358
    %1365 = vmatprep.subr.mxu0 0.0
    %1366 = vmatpush1.msra.mxu0 0.0
    %1367 = vmatprep.subr.mxu0 0.0
    %1368 = vmatpush1.msra.mxu0 0.0
    %1369 = vmatprep.subr.mxu0 0.0
    %1370 = vmatpush1.msra.mxu0 0.0
    %1371 = vmatprep.subr.mxu0 0.0
    %1372 = vmatpush1.msra.mxu0 0.0
    %1373 = vmatprep.subr.mxu0 0.0
    %1374 = vmatpush1.msra.mxu0 0.0
    %1375 = vmatprep.subr.mxu0 0.0
    %1376 = vmatpush1.msra.mxu0 0.0
    %1377 = vmatprep.subr.mxu0 0.0
    %1378 = vmatpush1.msra.mxu0 0.0
    %1379 = vmatprep.subr.mxu0 0.0
    %1380 = vmatpush1.msra.mxu0 0.0
    %1381 = vmatprep.subr.mxu0 0.0
    %1382 = vmatpush1.msra.mxu0 0.0
    %1383 = vmatprep.subr.mxu0 0.0
    %1384 = vmatpush1.msra.mxu0 0.0
    %1385 = vmatprep.subr.mxu0 0.0
    %1386 = vmatpush1.msra.mxu0 0.0
    %1387 = vmatprep.subr.mxu0 0.0
    %1388 = vmatpush1.msra.mxu0 0.0
    %1389 = vmatprep.subr.mxu0 0.0
    %1390 = vmatpush1.msra.mxu0 0.0
    %1391 = vmatprep.subr.mxu0 0.0
    %1392 = vmatpush1.msra.mxu0 0.0
    %1393 = vmatprep.subr.mxu0 0.0
    %1394 = vmatpush1.msra.mxu0 0.0
    %1395 = vmatprep.subr.mxu0 0.0
    %1396 = vmatpush1.msra.mxu0 0.0
    %1397 = vmatprep.subr.mxu0 0.0
    %1398 = vmatpush1.msra.mxu0 0.0
    %1399 = vmatprep.subr.mxu0 0.0
    %1400 = vmatpush1.msra.mxu0 0.0
    %1401 = vmatprep.subr.mxu0 0.0
    %1402 = vmatpush1.msra.mxu0 0.0
    %1403 = vmatprep.subr.mxu0 0.0
    %1404 = vmatpush1.msra.mxu0 0.0
    %1405 = vmatprep.subr.mxu0 0.0
    %1406 = vmatpush1.msra.mxu0 0.0
    %1407 = vmatprep.subr.mxu0 0.0
    %1408 = vmatpush1.msra.mxu0 0.0
    %1409 = vmatprep.subr.mxu0 0.0
    %1410 = vmatpush1.msra.mxu0 0.0
    %1411 = vmatprep.subr.mxu0 0.0
    %1412 = vmatpush1.msra.mxu0 0.0
    %1413 = vmatprep.subr.mxu0 0.0
    %1414 = vmatpush1.msra.mxu0 0.0
    %1415 = vmatprep.subr.mxu0 0.0
    %1416 = vmatpush1.msra.mxu0 0.0
    %1417 = vmatprep.subr.mxu0 0.0
    %1418 = vmatpush1.msra.mxu0 0.0
    %1419 = vmatprep.subr.mxu0 0.0
    %1420 = vmatpush1.msra.mxu0 0.0
    %1421 = vmatprep.subr.mxu0 0.0
    %1422 = vmatpush1.msra.mxu0 0.0
    %1423 = vmatprep.subr.mxu0 0.0
    %1424 = vmatpush1.msra.mxu0 0.0
    %1425 = vmatprep.subr.mxu0 0.0
    %1426 = vmatpush1.msra.mxu0 0.0
    %1427 = vmatprep.mubr.f32.mxu0 0.0
    %1428 = vmatmul.mubr.f32.gmra.mrb[0].mxu0 %v1361
    %v1429 = vpop.f32.mrb[0].mxu0
    %v1430 = vadd.f32 0.0, %v1429
    %v1431 = vpop.f32.mrb[0].mxu0
    %1432 = vdwg.mxu0
    %1433 = vrot.lane.b32.xlu0 %v214, 112
    %v1434 = vpop.permute.xlu0 %1433
    %v1437 = vsel %vm647, %v1350, 0
    %1439 = vmatprep.subr.mxu0 0.0
    %1440 = vmatpush1.msra.mxu0 %v1434
    %1441 = vmatprep.subr.mxu0 0.0
    %1442 = vmatpush1.msra.mxu0 0.0
    %1443 = vmatprep.subr.mxu0 0.0
    %1444 = vmatpush1.msra.mxu0 0.0
    %1445 = vmatprep.subr.mxu0 0.0
    %1446 = vmatpush1.msra.mxu0 0.0
    %1447 = vmatprep.subr.mxu0 0.0
    %1448 = vmatpush1.msra.mxu0 0.0
    %1449 = vmatprep.subr.mxu0 0.0
    %1450 = vmatpush1.msra.mxu0 0.0
    %1451 = vmatprep.subr.mxu0 0.0
    %1452 = vmatpush1.msra.mxu0 0.0
    %1453 = vmatprep.subr.mxu0 0.0
    %1454 = vmatpush1.msra.mxu0 0.0
    %1455 = vmatprep.subr.mxu0 0.0
    %1456 = vmatpush1.msra.mxu0 0.0
    %1457 = vmatprep.subr.mxu0 0.0
    %1458 = vmatpush1.msra.mxu0 0.0
    %1459 = vmatprep.subr.mxu0 0.0
    %1460 = vmatpush1.msra.mxu0 0.0
    %1461 = vmatprep.subr.mxu0 0.0
    %1462 = vmatpush1.msra.mxu0 0.0
    %1463 = vmatprep.subr.mxu0 0.0
    %1464 = vmatpush1.msra.mxu0 0.0
    %1465 = vmatprep.subr.mxu0 0.0
    %1466 = vmatpush1.msra.mxu0 0.0
    %1467 = vmatprep.subr.mxu0 0.0
    %1468 = vmatpush1.msra.mxu0 0.0
    %1469 = vmatprep.subr.mxu0 0.0
    %1470 = vmatpush1.msra.mxu0 0.0
    %1471 = vmatprep.subr.mxu0 0.0
    %1472 = vmatpush1.msra.mxu0 0.0
    %1473 = vmatprep.subr.mxu0 0.0
    %1474 = vmatpush1.msra.mxu0 0.0
    %1475 = vmatprep.subr.mxu0 0.0
    %1476 = vmatpush1.msra.mxu0 0.0
    %1477 = vmatprep.subr.mxu0 0.0
    %1478 = vmatpush1.msra.mxu0 0.0
    %1479 = vmatprep.subr.mxu0 0.0
    %1480 = vmatpush1.msra.mxu0 0.0
    %1481 = vmatprep.subr.mxu0 0.0
    %1482 = vmatpush1.msra.mxu0 0.0
    %1483 = vmatprep.subr.mxu0 0.0
    %1484 = vmatpush1.msra.mxu0 0.0
    %1485 = vmatprep.subr.mxu0 0.0
    %1486 = vmatpush1.msra.mxu0 0.0
    %1487 = vmatprep.subr.mxu0 0.0
    %1488 = vmatpush1.msra.mxu0 0.0
    %1489 = vmatprep.subr.mxu0 0.0
    %1490 = vmatpush1.msra.mxu0 0.0
    %1491 = vmatprep.subr.mxu0 0.0
    %1492 = vmatpush1.msra.mxu0 0.0
    %1493 = vmatprep.subr.mxu0 0.0
    %1494 = vmatpush1.msra.mxu0 0.0
    %1495 = vmatprep.subr.mxu0 0.0
    %1496 = vmatpush1.msra.mxu0 0.0
    %1497 = vmatprep.subr.mxu0 0.0
    %1498 = vmatpush1.msra.mxu0 0.0
    %1499 = vmatprep.subr.mxu0 0.0
    %1500 = vmatpush1.msra.mxu0 0.0
    %1501 = vmatprep.subr.mxu0 0.0
    %1502 = vmatpush1.msra.mxu0 0.0
    %1503 = vmatprep.mubr.f32.mxu0 0.0
    %1504 = vmatmul.mubr.f32.gmra.mrb[0].mxu0 %v1437
    %v1505 = vpop.f32.mrb[0].mxu0
    %v1506 = vadd.f32 0.0, %v1505
    %v1507 = vpop.f32.mrb[0].mxu0
    %1508 = vdwg.mxu0
    %1509 = vrot.lane.b32.xlu0 %v284, 112
    %v1510 = vpop.permute.xlu0 %1509
    %v1513 = vsel %vm647, %v1351, 0
    %1515 = vmatprep.subr.mxu0 0.0
    %1516 = vmatpush1.msra.mxu0 %v1510
    %1517 = vmatprep.subr.mxu0 0.0
    %1518 = vmatpush1.msra.mxu0 0.0
    %1519 = vmatprep.subr.mxu0 0.0
    %1520 = vmatpush1.msra.mxu0 0.0
    %1521 = vmatprep.subr.mxu0 0.0
    %1522 = vmatpush1.msra.mxu0 0.0
    %1523 = vmatprep.subr.mxu0 0.0
    %1524 = vmatpush1.msra.mxu0 0.0
    %1525 = vmatprep.subr.mxu0 0.0
    %1526 = vmatpush1.msra.mxu0 0.0
    %1527 = vmatprep.subr.mxu0 0.0
    %1528 = vmatpush1.msra.mxu0 0.0
    %1529 = vmatprep.subr.mxu0 0.0
    %1530 = vmatpush1.msra.mxu0 0.0
    %1531 = vmatprep.subr.mxu0 0.0
    %1532 = vmatpush1.msra.mxu0 0.0
    %1533 = vmatprep.subr.mxu0 0.0
    %1534 = vmatpush1.msra.mxu0 0.0
    %1535 = vmatprep.subr.mxu0 0.0
    %1536 = vmatpush1.msra.mxu0 0.0
    %1537 = vmatprep.subr.mxu0 0.0
    %1538 = vmatpush1.msra.mxu0 0.0
    %1539 = vmatprep.subr.mxu0 0.0
    %1540 = vmatpush1.msra.mxu0 0.0
    %1541 = vmatprep.subr.mxu0 0.0
    %1542 = vmatpush1.msra.mxu0 0.0
    %1543 = vmatprep.subr.mxu0 0.0
    %1544 = vmatpush1.msra.mxu0 0.0
    %1545 = vmatprep.subr.mxu0 0.0
    %1546 = vmatpush1.msra.mxu0 0.0
    %1547 = vmatprep.subr.mxu0 0.0
    %1548 = vmatpush1.msra.mxu0 0.0
    %1549 = vmatprep.subr.mxu0 0.0
    %1550 = vmatpush1.msra.mxu0 0.0
    %1551 = vmatprep.subr.mxu0 0.0
    %1552 = vmatpush1.msra.mxu0 0.0
    %1553 = vmatprep.subr.mxu0 0.0
    %1554 = vmatpush1.msra.mxu0 0.0
    %1555 = vmatprep.subr.mxu0 0.0
    %1556 = vmatpush1.msra.mxu0 0.0
    %1557 = vmatprep.subr.mxu0 0.0
    %1558 = vmatpush1.msra.mxu0 0.0
    %1559 = vmatprep.subr.mxu0 0.0
    %1560 = vmatpush1.msra.mxu0 0.0
    %1561 = vmatprep.subr.mxu0 0.0
    %1562 = vmatpush1.msra.mxu0 0.0
    %1563 = vmatprep.subr.mxu0 0.0
    %1564 = vmatpush1.msra.mxu0 0.0
    %1565 = vmatprep.subr.mxu0 0.0
    %1566 = vmatpush1.msra.mxu0 0.0
    %1567 = vmatprep.subr.mxu0 0.0
    %1568 = vmatpush1.msra.mxu0 0.0
    %1569 = vmatprep.subr.mxu0 0.0
    %1570 = vmatpush1.msra.mxu0 0.0
    %1571 = vmatprep.subr.mxu0 0.0
    %1572 = vmatpush1.msra.mxu0 0.0
    %1573 = vmatprep.subr.mxu0 0.0
    %1574 = vmatpush1.msra.mxu0 0.0
    %1575 = vmatprep.subr.mxu0 0.0
    %1576 = vmatpush1.msra.mxu0 0.0
    %1577 = vmatprep.subr.mxu0 0.0
    %1578 = vmatpush1.msra.mxu0 0.0
    %1579 = vmatprep.mubr.f32.mxu0 0.0
    %1580 = vmatmul.mubr.f32.gmra.mrb[0].mxu0 %v1513
    %v1581 = vpop.f32.mrb[0].mxu0
    %v1582 = vadd.f32 0.0, %v1581
    %v1583 = vpop.f32.mrb[0].mxu0
    %1584 = vdwg.mxu0
    %1585 = vrot.lane.b32.xlu0 %v354, 112
    %v1586 = vpop.permute.xlu0 %1585
    %v1589 = vsel %vm647, %v1352, 0
    %1591 = vmatprep.subr.mxu0 0.0
    %1592 = vmatpush1.msra.mxu0 %v1586
    %1593 = vmatprep.subr.mxu0 0.0
    %1594 = vmatpush1.msra.mxu0 0.0
    %1595 = vmatprep.subr.mxu0 0.0
    %1596 = vmatpush1.msra.mxu0 0.0
    %1597 = vmatprep.subr.mxu0 0.0
    %1598 = vmatpush1.msra.mxu0 0.0
    %1599 = vmatprep.subr.mxu0 0.0
    %1600 = vmatpush1.msra.mxu0 0.0
    %1601 = vmatprep.subr.mxu0 0.0
    %1602 = vmatpush1.msra.mxu0 0.0
    %1603 = vmatprep.subr.mxu0 0.0
    %1604 = vmatpush1.msra.mxu0 0.0
    %1605 = vmatprep.subr.mxu0 0.0
    %1606 = vmatpush1.msra.mxu0 0.0
    %1607 = vmatprep.subr.mxu0 0.0
    %1608 = vmatpush1.msra.mxu0 0.0
    %1609 = vmatprep.subr.mxu0 0.0
    %1610 = vmatpush1.msra.mxu0 0.0
    %1611 = vmatprep.subr.mxu0 0.0
    %1612 = vmatpush1.msra.mxu0 0.0
    %1613 = vmatprep.subr.mxu0 0.0
    %1614 = vmatpush1.msra.mxu0 0.0
    %1615 = vmatprep.subr.mxu0 0.0
    %1616 = vmatpush1.msra.mxu0 0.0
    %1617 = vmatprep.subr.mxu0 0.0
    %1618 = vmatpush1.msra.mxu0 0.0
    %1619 = vmatprep.subr.mxu0 0.0
    %1620 = vmatpush1.msra.mxu0 0.0
    %1621 = vmatprep.subr.mxu0 0.0
    %1622 = vmatpush1.msra.mxu0 0.0
    %1623 = vmatprep.subr.mxu0 0.0
    %1624 = vmatpush1.msra.mxu0 0.0
    %1625 = vmatprep.subr.mxu0 0.0
    %1626 = vmatpush1.msra.mxu0 0.0
    %1627 = vmatprep.subr.mxu0 0.0
    %1628 = vmatpush1.msra.mxu0 0.0
    %1629 = vmatprep.subr.mxu0 0.0
    %1630 = vmatpush1.msra.mxu0 0.0
    %1631 = vmatprep.subr.mxu0 0.0
    %1632 = vmatpush1.msra.mxu0 0.0
    %1633 = vmatprep.subr.mxu0 0.0
    %1634 = vmatpush1.msra.mxu0 0.0
    %1635 = vmatprep.subr.mxu0 0.0
    %1636 = vmatpush1.msra.mxu0 0.0
    %1637 = vmatprep.subr.mxu0 0.0
    %1638 = vmatpush1.msra.mxu0 0.0
    %1639 = vmatprep.subr.mxu0 0.0
    %1640 = vmatpush1.msra.mxu0 0.0
    %1641 = vmatprep.subr.mxu0 0.0
    %1642 = vmatpush1.msra.mxu0 0.0
    %1643 = vmatprep.subr.mxu0 0.0
    %1644 = vmatpush1.msra.mxu0 0.0
    %1645 = vmatprep.subr.mxu0 0.0
    %1646 = vmatpush1.msra.mxu0 0.0
    %1647 = vmatprep.subr.mxu0 0.0
    %1648 = vmatpush1.msra.mxu0 0.0
    %1649 = vmatprep.subr.mxu0 0.0
    %1650 = vmatpush1.msra.mxu0 0.0
    %1651 = vmatprep.subr.mxu0 0.0
    %1652 = vmatpush1.msra.mxu0 0.0
    %1653 = vmatprep.subr.mxu0 0.0
    %1654 = vmatpush1.msra.mxu0 0.0
    %1655 = vmatprep.mubr.f32.mxu0 0.0
    %1656 = vmatmul.mubr.f32.gmra.mrb[0].mxu0 %v1589
    %v1657 = vpop.f32.mrb[0].mxu0
    %v1658 = vadd.f32 0.0, %v1657
    %v1659 = vpop.f32.mrb[0].mxu0
    %1660 = vdwg.mxu0
    %1661 = vrot.lane.b32.xlu0 %v427, 112
    %v1662 = vpop.permute.xlu0 %1661
    %v1665 = vsel %vm647, %v1353, 0
    %1667 = vmatprep.subr.mxu0 0.0
    %1668 = vmatpush1.msra.mxu0 %v1662
    %1669 = vmatprep.subr.mxu0 0.0
    %1670 = vmatpush1.msra.mxu0 0.0
    %1671 = vmatprep.subr.mxu0 0.0
    %1672 = vmatpush1.msra.mxu0 0.0
    %1673 = vmatprep.subr.mxu0 0.0
    %1674 = vmatpush1.msra.mxu0 0.0
    %1675 = vmatprep.subr.mxu0 0.0
    %1676 = vmatpush1.msra.mxu0 0.0
    %1677 = vmatprep.subr.mxu0 0.0
    %1678 = vmatpush1.msra.mxu0 0.0
    %1679 = vmatprep.subr.mxu0 0.0
    %1680 = vmatpush1.msra.mxu0 0.0
    %1681 = vmatprep.subr.mxu0 0.0
    %1682 = vmatpush1.msra.mxu0 0.0
    %1683 = vmatprep.subr.mxu0 0.0
    %1684 = vmatpush1.msra.mxu0 0.0
    %1685 = vmatprep.subr.mxu0 0.0
    %1686 = vmatpush1.msra.mxu0 0.0
    %1687 = vmatprep.subr.mxu0 0.0
    %1688 = vmatpush1.msra.mxu0 0.0
    %1689 = vmatprep.subr.mxu0 0.0
    %1690 = vmatpush1.msra.mxu0 0.0
    %1691 = vmatprep.subr.mxu0 0.0
    %1692 = vmatpush1.msra.mxu0 0.0
    %1693 = vmatprep.subr.mxu0 0.0
    %1694 = vmatpush1.msra.mxu0 0.0
    %1695 = vmatprep.subr.mxu0 0.0
    %1696 = vmatpush1.msra.mxu0 0.0
    %1697 = vmatprep.subr.mxu0 0.0
    %1698 = vmatpush1.msra.mxu0 0.0
    %1699 = vmatprep.subr.mxu0 0.0
    %1700 = vmatpush1.msra.mxu0 0.0
    %1701 = vmatprep.subr.mxu0 0.0
    %1702 = vmatpush1.msra.mxu0 0.0
    %1703 = vmatprep.subr.mxu0 0.0
    %1704 = vmatpush1.msra.mxu0 0.0
    %1705 = vmatprep.subr.mxu0 0.0
    %1706 = vmatpush1.msra.mxu0 0.0
    %1707 = vmatprep.subr.mxu0 0.0
    %1708 = vmatpush1.msra.mxu0 0.0
    %1709 = vmatprep.subr.mxu0 0.0
    %1710 = vmatpush1.msra.mxu0 0.0
    %1711 = vmatprep.subr.mxu0 0.0
    %1712 = vmatpush1.msra.mxu0 0.0
    %1713 = vmatprep.subr.mxu0 0.0
    %1714 = vmatpush1.msra.mxu0 0.0
    %1715 = vmatprep.subr.mxu0 0.0
    %1716 = vmatpush1.msra.mxu0 0.0
    %1717 = vmatprep.subr.mxu0 0.0
    %1718 = vmatpush1.msra.mxu0 0.0
    %1719 = vmatprep.subr.mxu0 0.0
    %1720 = vmatpush1.msra.mxu0 0.0
    %1721 = vmatprep.subr.mxu0 0.0
    %1722 = vmatpush1.msra.mxu0 0.0
    %1723 = vmatprep.subr.mxu0 0.0
    %1724 = vmatpush1.msra.mxu0 0.0
    %1725 = vmatprep.subr.mxu0 0.0
    %1726 = vmatpush1.msra.mxu0 0.0
    %1727 = vmatprep.subr.mxu0 0.0
    %1728 = vmatpush1.msra.mxu0 0.0
    %1729 = vmatprep.subr.mxu0 0.0
    %1730 = vmatpush1.msra.mxu0 0.0
    %1731 = vmatprep.mubr.f32.mxu0 0.0
    %1732 = vmatmul.mubr.f32.gmra.mrb[0].mxu0 %v1665
    %v1733 = vpop.f32.mrb[0].mxu0
    %v1734 = vadd.f32 0.0, %v1733
    %v1735 = vpop.f32.mrb[0].mxu0
    %1736 = vdwg.mxu0
    %1737 = vrot.lane.b32.xlu0 %v497, 112
    %v1738 = vpop.permute.xlu0 %1737
    %v1741 = vsel %vm647, %v1354, 0
    %1743 = vmatprep.subr.mxu0 0.0
    %1744 = vmatpush1.msra.mxu0 %v1738
    %1745 = vmatprep.subr.mxu0 0.0
    %1746 = vmatpush1.msra.mxu0 0.0
    %1747 = vmatprep.subr.mxu0 0.0
    %1748 = vmatpush1.msra.mxu0 0.0
    %1749 = vmatprep.subr.mxu0 0.0
    %1750 = vmatpush1.msra.mxu0 0.0
    %1751 = vmatprep.subr.mxu0 0.0
    %1752 = vmatpush1.msra.mxu0 0.0
    %1753 = vmatprep.subr.mxu0 0.0
    %1754 = vmatpush1.msra.mxu0 0.0
    %1755 = vmatprep.subr.mxu0 0.0
    %1756 = vmatpush1.msra.mxu0 0.0
    %1757 = vmatprep.subr.mxu0 0.0
    %1758 = vmatpush1.msra.mxu0 0.0
    %1759 = vmatprep.subr.mxu0 0.0
    %1760 = vmatpush1.msra.mxu0 0.0
    %1761 = vmatprep.subr.mxu0 0.0
    %1762 = vmatpush1.msra.mxu0 0.0
    %1763 = vmatprep.subr.mxu0 0.0
    %1764 = vmatpush1.msra.mxu0 0.0
    %1765 = vmatprep.subr.mxu0 0.0
    %1766 = vmatpush1.msra.mxu0 0.0
    %1767 = vmatprep.subr.mxu0 0.0
    %1768 = vmatpush1.msra.mxu0 0.0
    %1769 = vmatprep.subr.mxu0 0.0
    %1770 = vmatpush1.msra.mxu0 0.0
    %1771 = vmatprep.subr.mxu0 0.0
    %1772 = vmatpush1.msra.mxu0 0.0
    %1773 = vmatprep.subr.mxu0 0.0
    %1774 = vmatpush1.msra.mxu0 0.0
    %1775 = vmatprep.subr.mxu0 0.0
    %1776 = vmatpush1.msra.mxu0 0.0
    %1777 = vmatprep.subr.mxu0 0.0
    %1778 = vmatpush1.msra.mxu0 0.0
    %1779 = vmatprep.subr.mxu0 0.0
    %1780 = vmatpush1.msra.mxu0 0.0
    %1781 = vmatprep.subr.mxu0 0.0
    %1782 = vmatpush1.msra.mxu0 0.0
    %1783 = vmatprep.subr.mxu0 0.0
    %1784 = vmatpush1.msra.mxu0 0.0
    %1785 = vmatprep.subr.mxu0 0.0
    %1786 = vmatpush1.msra.mxu0 0.0
    %1787 = vmatprep.subr.mxu0 0.0
    %1788 = vmatpush1.msra.mxu0 0.0
    %1789 = vmatprep.subr.mxu0 0.0
    %1790 = vmatpush1.msra.mxu0 0.0
    %1791 = vmatprep.subr.mxu0 0.0
    %1792 = vmatpush1.msra.mxu0 0.0
    %1793 = vmatprep.subr.mxu0 0.0
    %1794 = vmatpush1.msra.mxu0 0.0
    %1795 = vmatprep.subr.mxu0 0.0
    %1796 = vmatpush1.msra.mxu0 0.0
    %1797 = vmatprep.subr.mxu0 0.0
    %1798 = vmatpush1.msra.mxu0 0.0
    %1799 = vmatprep.subr.mxu0 0.0
    %1800 = vmatpush1.msra.mxu0 0.0
    %1801 = vmatprep.subr.mxu0 0.0
    %1802 = vmatpush1.msra.mxu0 0.0
    %1803 = vmatprep.subr.mxu0 0.0
    %1804 = vmatpush1.msra.mxu0 0.0
    %1805 = vmatprep.subr.mxu0 0.0
    %1806 = vmatpush1.msra.mxu0 0.0
    %1807 = vmatprep.mubr.f32.mxu0 0.0
    %1808 = vmatmul.mubr.f32.gmra.mrb[0].mxu0 %v1741
    %v1809 = vpop.f32.mrb[0].mxu0
    %v1810 = vadd.f32 0.0, %v1809
    %v1811 = vpop.f32.mrb[0].mxu0
    %1812 = vdwg.mxu0
    %1813 = vrot.lane.b32.xlu0 %v567, 112
    %v1814 = vpop.permute.xlu0 %1813
    %v1817 = vsel %vm647, %v1355, 0
    %1819 = vmatprep.subr.mxu0 0.0
    %1820 = vmatpush1.msra.mxu0 %v1814
    %1821 = vmatprep.subr.mxu0 0.0
    %1822 = vmatpush1.msra.mxu0 0.0
    %1823 = vmatprep.subr.mxu0 0.0
    %1824 = vmatpush1.msra.mxu0 0.0
    %1825 = vmatprep.subr.mxu0 0.0
    %1826 = vmatpush1.msra.mxu0 0.0
    %1827 = vmatprep.subr.mxu0 0.0
    %1828 = vmatpush1.msra.mxu0 0.0
    %1829 = vmatprep.subr.mxu0 0.0
    %1830 = vmatpush1.msra.mxu0 0.0
    %1831 = vmatprep.subr.mxu0 0.0
    %1832 = vmatpush1.msra.mxu0 0.0
    %1833 = vmatprep.subr.mxu0 0.0
    %1834 = vmatpush1.msra.mxu0 0.0
    %1835 = vmatprep.subr.mxu0 0.0
    %1836 = vmatpush1.msra.mxu0 0.0
    %1837 = vmatprep.subr.mxu0 0.0
    %1838 = vmatpush1.msra.mxu0 0.0
    %1839 = vmatprep.subr.mxu0 0.0
    %1840 = vmatpush1.msra.mxu0 0.0
    %1841 = vmatprep.subr.mxu0 0.0
    %1842 = vmatpush1.msra.mxu0 0.0
    %1843 = vmatprep.subr.mxu0 0.0
    %1844 = vmatpush1.msra.mxu0 0.0
    %1845 = vmatprep.subr.mxu0 0.0
    %1846 = vmatpush1.msra.mxu0 0.0
    %1847 = vmatprep.subr.mxu0 0.0
    %1848 = vmatpush1.msra.mxu0 0.0
    %1849 = vmatprep.subr.mxu0 0.0
    %1850 = vmatpush1.msra.mxu0 0.0
    %1851 = vmatprep.subr.mxu0 0.0
    %1852 = vmatpush1.msra.mxu0 0.0
    %1853 = vmatprep.subr.mxu0 0.0
    %1854 = vmatpush1.msra.mxu0 0.0
    %1855 = vmatprep.subr.mxu0 0.0
    %1856 = vmatpush1.msra.mxu0 0.0
    %1857 = vmatprep.subr.mxu0 0.0
    %1858 = vmatpush1.msra.mxu0 0.0
    %1859 = vmatprep.subr.mxu0 0.0
    %1860 = vmatpush1.msra.mxu0 0.0
    %1861 = vmatprep.subr.mxu0 0.0
    %1862 = vmatpush1.msra.mxu0 0.0
    %1863 = vmatprep.subr.mxu0 0.0
    %1864 = vmatpush1.msra.mxu0 0.0
    %1865 = vmatprep.subr.mxu0 0.0
    %1866 = vmatpush1.msra.mxu0 0.0
    %1867 = vmatprep.subr.mxu0 0.0
    %1868 = vmatpush1.msra.mxu0 0.0
    %1869 = vmatprep.subr.mxu0 0.0
    %1870 = vmatpush1.msra.mxu0 0.0
    %1871 = vmatprep.subr.mxu0 0.0
    %1872 = vmatpush1.msra.mxu0 0.0
    %1873 = vmatprep.subr.mxu0 0.0
    %1874 = vmatpush1.msra.mxu0 0.0
    %1875 = vmatprep.subr.mxu0 0.0
    %1876 = vmatpush1.msra.mxu0 0.0
    %1877 = vmatprep.subr.mxu0 0.0
    %1878 = vmatpush1.msra.mxu0 0.0
    %1879 = vmatprep.subr.mxu0 0.0
    %1880 = vmatpush1.msra.mxu0 0.0
    %1881 = vmatprep.subr.mxu0 0.0
    %1882 = vmatpush1.msra.mxu0 0.0
    %1883 = vmatprep.mubr.f32.mxu0 0.0
    %1884 = vmatmul.mubr.f32.gmra.mrb[0].mxu0 %v1817
    %v1885 = vpop.f32.mrb[0].mxu0
    %v1886 = vadd.f32 0.0, %v1885
    %v1887 = vpop.f32.mrb[0].mxu0
    %1888 = vdwg.mxu0
    %1889 = vrot.lane.b32.xlu0 %v637, 112
    %v1890 = vpop.permute.xlu0 %1889
    %v1893 = vsel %vm647, %v1356, 0
    %1895 = vmatprep.subr.mxu0 0.0
    %1896 = vmatpush1.msra.mxu0 %v1890
    %1897 = vmatprep.subr.mxu0 0.0
    %1898 = vmatpush1.msra.mxu0 0.0
    %1899 = vmatprep.subr.mxu0 0.0
    %1900 = vmatpush1.msra.mxu0 0.0
    %1901 = vmatprep.subr.mxu0 0.0
    %1902 = vmatpush1.msra.mxu0 0.0
    %1903 = vmatprep.subr.mxu0 0.0
    %1904 = vmatpush1.msra.mxu0 0.0
    %1905 = vmatprep.subr.mxu0 0.0
    %1906 = vmatpush1.msra.mxu0 0.0
    %1907 = vmatprep.subr.mxu0 0.0
    %1908 = vmatpush1.msra.mxu0 0.0
    %1909 = vmatprep.subr.mxu0 0.0
    %1910 = vmatpush1.msra.mxu0 0.0
    %1911 = vmatprep.subr.mxu0 0.0
    %1912 = vmatpush1.msra.mxu0 0.0
    %1913 = vmatprep.subr.mxu0 0.0
    %1914 = vmatpush1.msra.mxu0 0.0
    %1915 = vmatprep.subr.mxu0 0.0
    %1916 = vmatpush1.msra.mxu0 0.0
    %1917 = vmatprep.subr.mxu0 0.0
    %1918 = vmatpush1.msra.mxu0 0.0
    %1919 = vmatprep.subr.mxu0 0.0
    %1920 = vmatpush1.msra.mxu0 0.0
    %1921 = vmatprep.subr.mxu0 0.0
    %1922 = vmatpush1.msra.mxu0 0.0
    %1923 = vmatprep.subr.mxu0 0.0
    %1924 = vmatpush1.msra.mxu0 0.0
    %1925 = vmatprep.subr.mxu0 0.0
    %1926 = vmatpush1.msra.mxu0 0.0
    %1927 = vmatprep.subr.mxu0 0.0
    %1928 = vmatpush1.msra.mxu0 0.0
    %1929 = vmatprep.subr.mxu0 0.0
    %1930 = vmatpush1.msra.mxu0 0.0
    %1931 = vmatprep.subr.mxu0 0.0
    %1932 = vmatpush1.msra.mxu0 0.0
    %1933 = vmatprep.subr.mxu0 0.0
    %1934 = vmatpush1.msra.mxu0 0.0
    %1935 = vmatprep.subr.mxu0 0.0
    %1936 = vmatpush1.msra.mxu0 0.0
    %1937 = vmatprep.subr.mxu0 0.0
    %1938 = vmatpush1.msra.mxu0 0.0
    %1939 = vmatprep.subr.mxu0 0.0
    %1940 = vmatpush1.msra.mxu0 0.0
    %1941 = vmatprep.subr.mxu0 0.0
    %1942 = vmatpush1.msra.mxu0 0.0
    %1943 = vmatprep.subr.mxu0 0.0
    %1944 = vmatpush1.msra.mxu0 0.0
    %1945 = vmatprep.subr.mxu0 0.0
    %1946 = vmatpush1.msra.mxu0 0.0
    %1947 = vmatprep.subr.mxu0 0.0
    %1948 = vmatpush1.msra.mxu0 0.0
    %1949 = vmatprep.subr.mxu0 0.0
    %1950 = vmatpush1.msra.mxu0 0.0
    %1951 = vmatprep.subr.mxu0 0.0
    %1952 = vmatpush1.msra.mxu0 0.0
    %1953 = vmatprep.subr.mxu0 0.0
    %1954 = vmatpush1.msra.mxu0 0.0
    %1955 = vmatprep.subr.mxu0 0.0
    %1956 = vmatpush1.msra.mxu0 0.0
    %1957 = vmatprep.subr.mxu0 0.0
    %1958 = vmatpush1.msra.mxu0 0.0
    %1959 = vmatprep.mubr.f32.mxu0 0.0
    %1960 = vmatmul.mubr.f32.gmra.mrb[0].mxu0 %v1893
    %v1961 = vpop.f32.mrb[0].mxu0
    %v1962 = vadd.f32 0.0, %v1961
    %v1963 = vpop.f32.mrb[0].mxu0
    %1964 = vdwg.mxu0
    %v1966 = vsel %vm647, %v1430, 0
    %1968 = vmatprep.subr.mxu0 0.0
    %1969 = vmatpush1.msra.mxu0 %v640
    %1970 = vmatprep.subr.mxu0 0.0
    %1971 = vmatpush1.msra.mxu0 0.0
    %1972 = vmatprep.subr.mxu0 0.0
    %1973 = vmatpush1.msra.mxu0 0.0
    %1974 = vmatprep.subr.mxu0 0.0
    %1975 = vmatpush1.msra.mxu0 0.0
    %1976 = vmatprep.subr.mxu0 0.0
    %1977 = vmatpush1.msra.mxu0 0.0
    %1978 = vmatprep.subr.mxu0 0.0
    %1979 = vmatpush1.msra.mxu0 0.0
    %1980 = vmatprep.subr.mxu0 0.0
    %1981 = vmatpush1.msra.mxu0 0.0
    %1982 = vmatprep.subr.mxu0 0.0
    %1983 = vmatpush1.msra.mxu0 0.0
    %1984 = vmatprep.subr.mxu0 0.0
    %1985 = vmatpush1.msra.mxu0 0.0
    %1986 = vmatprep.subr.mxu0 0.0
    %1987 = vmatpush1.msra.mxu0 0.0
    %1988 = vmatprep.subr.mxu0 0.0
    %1989 = vmatpush1.msra.mxu0 0.0
    %1990 = vmatprep.subr.mxu0 0.0
    %1991 = vmatpush1.msra.mxu0 0.0
    %1992 = vmatprep.subr.mxu0 0.0
    %1993 = vmatpush1.msra.mxu0 0.0
    %1994 = vmatprep.subr.mxu0 0.0
    %1995 = vmatpush1.msra.mxu0 0.0
    %1996 = vmatprep.subr.mxu0 0.0
    %1997 = vmatpush1.msra.mxu0 0.0
    %1998 = vmatprep.subr.mxu0 0.0
    %1999 = vmatpush1.msra.mxu0 0.0
    %2000 = vmatprep.subr.mxu0 0.0
    %2001 = vmatpush1.msra.mxu0 0.0
    %2002 = vmatprep.subr.mxu0 0.0
    %2003 = vmatpush1.msra.mxu0 0.0
    %2004 = vmatprep.subr.mxu0 0.0
    %2005 = vmatpush1.msra.mxu0 0.0
    %2006 = vmatprep.subr.mxu0 0.0
    %2007 = vmatpush1.msra.mxu0 0.0
    %2008 = vmatprep.subr.mxu0 0.0
    %2009 = vmatpush1.msra.mxu0 0.0
    %2010 = vmatprep.subr.mxu0 0.0
    %2011 = vmatpush1.msra.mxu0 0.0
    %2012 = vmatprep.subr.mxu0 0.0
    %2013 = vmatpush1.msra.mxu0 0.0
    %2014 = vmatprep.subr.mxu0 0.0
    %2015 = vmatpush1.msra.mxu0 0.0
    %2016 = vmatprep.subr.mxu0 0.0
    %2017 = vmatpush1.msra.mxu0 0.0
    %2018 = vmatprep.subr.mxu0 0.0
    %2019 = vmatpush1.msra.mxu0 0.0
    %2020 = vmatprep.subr.mxu0 0.0
    %2021 = vmatpush1.msra.mxu0 0.0
    %2022 = vmatprep.subr.mxu0 0.0
    %2023 = vmatpush1.msra.mxu0 0.0
    %2024 = vmatprep.subr.mxu0 0.0
    %2025 = vmatpush1.msra.mxu0 0.0
    %2026 = vmatprep.subr.mxu0 0.0
    %2027 = vmatpush1.msra.mxu0 0.0
    %2028 = vmatprep.subr.mxu0 0.0
    %2029 = vmatpush1.msra.mxu0 0.0
    %2030 = vmatprep.subr.mxu0 0.0
    %2031 = vmatpush1.msra.mxu0 0.0
    %2032 = vmatprep.mubr.f32.mxu0 0.0
    %2033 = vmatmul.mubr.f32.gmra.mrb[0].mxu0 %v1966
    %v2034 = vpop.f32.mrb[0].mxu0
    %v2035 = vadd.f32 0.0, %v2034
    %v2036 = vpop.f32.mrb[0].mxu0
    %2037 = vdwg.mxu0
    %v2039 = vsel %vm647, %v1506, 0
    %2041 = vmatprep.subr.mxu0 0.0
    %2042 = vmatpush1.msra.mxu0 %v641
    %2043 = vmatprep.subr.mxu0 0.0
    %2044 = vmatpush1.msra.mxu0 0.0
    %2045 = vmatprep.subr.mxu0 0.0
    %2046 = vmatpush1.msra.mxu0 0.0
    %2047 = vmatprep.subr.mxu0 0.0
    %2048 = vmatpush1.msra.mxu0 0.0
    %2049 = vmatprep.subr.mxu0 0.0
    %2050 = vmatpush1.msra.mxu0 0.0
    %2051 = vmatprep.subr.mxu0 0.0
    %2052 = vmatpush1.msra.mxu0 0.0
    %2053 = vmatprep.subr.mxu0 0.0
    %2054 = vmatpush1.msra.mxu0 0.0
    %2055 = vmatprep.subr.mxu0 0.0
    %2056 = vmatpush1.msra.mxu0 0.0
    %2057 = vmatprep.subr.mxu0 0.0
    %2058 = vmatpush1.msra.mxu0 0.0
    %2059 = vmatprep.subr.mxu0 0.0
    %2060 = vmatpush1.msra.mxu0 0.0
    %2061 = vmatprep.subr.mxu0 0.0
    %2062 = vmatpush1.msra.mxu0 0.0
    %2063 = vmatprep.subr.mxu0 0.0
    %2064 = vmatpush1.msra.mxu0 0.0
    %2065 = vmatprep.subr.mxu0 0.0
    %2066 = vmatpush1.msra.mxu0 0.0
    %2067 = vmatprep.subr.mxu0 0.0
    %2068 = vmatpush1.msra.mxu0 0.0
    %2069 = vmatprep.subr.mxu0 0.0
    %2070 = vmatpush1.msra.mxu0 0.0
    %2071 = vmatprep.subr.mxu0 0.0
    %2072 = vmatpush1.msra.mxu0 0.0
    %2073 = vmatprep.subr.mxu0 0.0
    %2074 = vmatpush1.msra.mxu0 0.0
    %2075 = vmatprep.subr.mxu0 0.0
    %2076 = vmatpush1.msra.mxu0 0.0
    %2077 = vmatprep.subr.mxu0 0.0
    %2078 = vmatpush1.msra.mxu0 0.0
    %2079 = vmatprep.subr.mxu0 0.0
    %2080 = vmatpush1.msra.mxu0 0.0
    %2081 = vmatprep.subr.mxu0 0.0
    %2082 = vmatpush1.msra.mxu0 0.0
    %2083 = vmatprep.subr.mxu0 0.0
    %2084 = vmatpush1.msra.mxu0 0.0
    %2085 = vmatprep.subr.mxu0 0.0
    %2086 = vmatpush1.msra.mxu0 0.0
    %2087 = vmatprep.subr.mxu0 0.0
    %2088 = vmatpush1.msra.mxu0 0.0
    %2089 = vmatprep.subr.mxu0 0.0
    %2090 = vmatpush1.msra.mxu0 0.0
    %2091 = vmatprep.subr.mxu0 0.0
    %2092 = vmatpush1.msra.mxu0 0.0
    %2093 = vmatprep.subr.mxu0 0.0
    %2094 = vmatpush1.msra.mxu0 0.0
    %2095 = vmatprep.subr.mxu0 0.0
    %2096 = vmatpush1.msra.mxu0 0.0
    %2097 = vmatprep.subr.mxu0 0.0
    %2098 = vmatpush1.msra.mxu0 0.0
    %2099 = vmatprep.subr.mxu0 0.0
    %2100 = vmatpush1.msra.mxu0 0.0
    %2101 = vmatprep.subr.mxu0 0.0
    %2102 = vmatpush1.msra.mxu0 0.0
    %2103 = vmatprep.subr.mxu0 0.0
    %2104 = vmatpush1.msra.mxu0 0.0
    %2105 = vmatprep.mubr.f32.mxu0 0.0
    %2106 = vmatmul.mubr.f32.gmra.mrb[0].mxu0 %v2039
    %v2107 = vpop.f32.mrb[0].mxu0
    %v2108 = vadd.f32 0.0, %v2107
    %v2109 = vpop.f32.mrb[0].mxu0
    %2110 = vdwg.mxu0
    %v2112 = vsel %vm647, %v1582, 0
    %2114 = vmatprep.subr.mxu0 0.0
    %2115 = vmatpush1.msra.mxu0 %v642
    %2116 = vmatprep.subr.mxu0 0.0
    %2117 = vmatpush1.msra.mxu0 0.0
    %2118 = vmatprep.subr.mxu0 0.0
    %2119 = vmatpush1.msra.mxu0 0.0
    %2120 = vmatprep.subr.mxu0 0.0
    %2121 = vmatpush1.msra.mxu0 0.0
    %2122 = vmatprep.subr.mxu0 0.0
    %2123 = vmatpush1.msra.mxu0 0.0
    %2124 = vmatprep.subr.mxu0 0.0
    %2125 = vmatpush1.msra.mxu0 0.0
    %2126 = vmatprep.subr.mxu0 0.0
    %2127 = vmatpush1.msra.mxu0 0.0
    %2128 = vmatprep.subr.mxu0 0.0
    %2129 = vmatpush1.msra.mxu0 0.0
    %2130 = vmatprep.subr.mxu0 0.0
    %2131 = vmatpush1.msra.mxu0 0.0
    %2132 = vmatprep.subr.mxu0 0.0
    %2133 = vmatpush1.msra.mxu0 0.0
    %2134 = vmatprep.subr.mxu0 0.0
    %2135 = vmatpush1.msra.mxu0 0.0
    %2136 = vmatprep.subr.mxu0 0.0
    %2137 = vmatpush1.msra.mxu0 0.0
    %2138 = vmatprep.subr.mxu0 0.0
    %2139 = vmatpush1.msra.mxu0 0.0
    %2140 = vmatprep.subr.mxu0 0.0
    %2141 = vmatpush1.msra.mxu0 0.0
    %2142 = vmatprep.subr.mxu0 0.0
    %2143 = vmatpush1.msra.mxu0 0.0
    %2144 = vmatprep.subr.mxu0 0.0
    %2145 = vmatpush1.msra.mxu0 0.0
    %2146 = vmatprep.subr.mxu0 0.0
    %2147 = vmatpush1.msra.mxu0 0.0
    %2148 = vmatprep.subr.mxu0 0.0
    %2149 = vmatpush1.msra.mxu0 0.0
    %2150 = vmatprep.subr.mxu0 0.0
    %2151 = vmatpush1.msra.mxu0 0.0
    %2152 = vmatprep.subr.mxu0 0.0
    %2153 = vmatpush1.msra.mxu0 0.0
    %2154 = vmatprep.subr.mxu0 0.0
    %2155 = vmatpush1.msra.mxu0 0.0
    %2156 = vmatprep.subr.mxu0 0.0
    %2157 = vmatpush1.msra.mxu0 0.0
    %2158 = vmatprep.subr.mxu0 0.0
    %2159 = vmatpush1.msra.mxu0 0.0
    %2160 = vmatprep.subr.mxu0 0.0
    %2161 = vmatpush1.msra.mxu0 0.0
    %2162 = vmatprep.subr.mxu0 0.0
    %2163 = vmatpush1.msra.mxu0 0.0
    %2164 = vmatprep.subr.mxu0 0.0
    %2165 = vmatpush1.msra.mxu0 0.0
    %2166 = vmatprep.subr.mxu0 0.0
    %2167 = vmatpush1.msra.mxu0 0.0
    %2168 = vmatprep.subr.mxu0 0.0
    %2169 = vmatpush1.msra.mxu0 0.0
    %2170 = vmatprep.subr.mxu0 0.0
    %2171 = vmatpush1.msra.mxu0 0.0
    %2172 = vmatprep.subr.mxu0 0.0
    %2173 = vmatpush1.msra.mxu0 0.0
    %2174 = vmatprep.subr.mxu0 0.0
    %2175 = vmatpush1.msra.mxu0 0.0
    %2176 = vmatprep.subr.mxu0 0.0
    %2177 = vmatpush1.msra.mxu0 0.0
    %2178 = vmatprep.mubr.f32.mxu0 0.0
    %2179 = vmatmul.mubr.f32.gmra.mrb[0].mxu0 %v2112
    %v2180 = vpop.f32.mrb[0].mxu0
    %v2181 = vadd.f32 0.0, %v2180
    %v2182 = vpop.f32.mrb[0].mxu0
    %2183 = vdwg.mxu0
    %v2185 = vsel %vm647, %v1658, 0
    %2187 = vmatprep.subr.mxu0 0.0
    %2188 = vmatpush1.msra.mxu0 %v643
    %2189 = vmatprep.subr.mxu0 0.0
    %2190 = vmatpush1.msra.mxu0 0.0
    %2191 = vmatprep.subr.mxu0 0.0
    %2192 = vmatpush1.msra.mxu0 0.0
    %2193 = vmatprep.subr.mxu0 0.0
    %2194 = vmatpush1.msra.mxu0 0.0
    %2195 = vmatprep.subr.mxu0 0.0
    %2196 = vmatpush1.msra.mxu0 0.0
    %2197 = vmatprep.subr.mxu0 0.0
    %2198 = vmatpush1.msra.mxu0 0.0
    %2199 = vmatprep.subr.mxu0 0.0
    %2200 = vmatpush1.msra.mxu0 0.0
    %2201 = vmatprep.subr.mxu0 0.0
    %2202 = vmatpush1.msra.mxu0 0.0
    %2203 = vmatprep.subr.mxu0 0.0
    %2204 = vmatpush1.msra.mxu0 0.0
    %2205 = vmatprep.subr.mxu0 0.0
    %2206 = vmatpush1.msra.mxu0 0.0
    %2207 = vmatprep.subr.mxu0 0.0
    %2208 = vmatpush1.msra.mxu0 0.0
    %2209 = vmatprep.subr.mxu0 0.0
    %2210 = vmatpush1.msra.mxu0 0.0
    %2211 = vmatprep.subr.mxu0 0.0
    %2212 = vmatpush1.msra.mxu0 0.0
    %2213 = vmatprep.subr.mxu0 0.0
    %2214 = vmatpush1.msra.mxu0 0.0
    %2215 = vmatprep.subr.mxu0 0.0
    %2216 = vmatpush1.msra.mxu0 0.0
    %2217 = vmatprep.subr.mxu0 0.0
    %2218 = vmatpush1.msra.mxu0 0.0
    %2219 = vmatprep.subr.mxu0 0.0
    %2220 = vmatpush1.msra.mxu0 0.0
    %2221 = vmatprep.subr.mxu0 0.0
    %2222 = vmatpush1.msra.mxu0 0.0
    %2223 = vmatprep.subr.mxu0 0.0
    %2224 = vmatpush1.msra.mxu0 0.0
    %2225 = vmatprep.subr.mxu0 0.0
    %2226 = vmatpush1.msra.mxu0 0.0
    %2227 = vmatprep.subr.mxu0 0.0
    %2228 = vmatpush1.msra.mxu0 0.0
    %2229 = vmatprep.subr.mxu0 0.0
    %2230 = vmatpush1.msra.mxu0 0.0
    %2231 = vmatprep.subr.mxu0 0.0
    %2232 = vmatpush1.msra.mxu0 0.0
    %2233 = vmatprep.subr.mxu0 0.0
    %2234 = vmatpush1.msra.mxu0 0.0
    %2235 = vmatprep.subr.mxu0 0.0
    %2236 = vmatpush1.msra.mxu0 0.0
    %2237 = vmatprep.subr.mxu0 0.0
    %2238 = vmatpush1.msra.mxu0 0.0
    %2239 = vmatprep.subr.mxu0 0.0
    %2240 = vmatpush1.msra.mxu0 0.0
    %2241 = vmatprep.subr.mxu0 0.0
    %2242 = vmatpush1.msra.mxu0 0.0
    %2243 = vmatprep.subr.mxu0 0.0
    %2244 = vmatpush1.msra.mxu0 0.0
    %2245 = vmatprep.subr.mxu0 0.0
    %2246 = vmatpush1.msra.mxu0 0.0
    %2247 = vmatprep.subr.mxu0 0.0
    %2248 = vmatpush1.msra.mxu0 0.0
    %2249 = vmatprep.subr.mxu0 0.0
    %2250 = vmatpush1.msra.mxu0 0.0
    %2251 = vmatprep.mubr.f32.mxu0 0.0
    %2252 = vmatmul.mubr.f32.gmra.mrb[0].mxu0 %v2185
    %v2253 = vpop.f32.mrb[0].mxu0
    %v2254 = vadd.f32 0.0, %v2253
    %v2255 = vpop.f32.mrb[0].mxu0
    %2256 = vdwg.mxu0
    %v2258 = vsel %vm647, %v1734, 0
    %2260 = vmatprep.subr.mxu0 0.0
    %2261 = vmatpush1.msra.mxu0 %v640
    %2262 = vmatprep.subr.mxu0 0.0
    %2263 = vmatpush1.msra.mxu0 0.0
    %2264 = vmatprep.subr.mxu0 0.0
    %2265 = vmatpush1.msra.mxu0 0.0
    %2266 = vmatprep.subr.mxu0 0.0
    %2267 = vmatpush1.msra.mxu0 0.0
    %2268 = vmatprep.subr.mxu0 0.0
    %2269 = vmatpush1.msra.mxu0 0.0
    %2270 = vmatprep.subr.mxu0 0.0
    %2271 = vmatpush1.msra.mxu0 0.0
    %2272 = vmatprep.subr.mxu0 0.0
    %2273 = vmatpush1.msra.mxu0 0.0
    %2274 = vmatprep.subr.mxu0 0.0
    %2275 = vmatpush1.msra.mxu0 0.0
    %2276 = vmatprep.subr.mxu0 0.0
    %2277 = vmatpush1.msra.mxu0 0.0
    %2278 = vmatprep.subr.mxu0 0.0
    %2279 = vmatpush1.msra.mxu0 0.0
    %2280 = vmatprep.subr.mxu0 0.0
    %2281 = vmatpush1.msra.mxu0 0.0
    %2282 = vmatprep.subr.mxu0 0.0
    %2283 = vmatpush1.msra.mxu0 0.0
    %2284 = vmatprep.subr.mxu0 0.0
    %2285 = vmatpush1.msra.mxu0 0.0
    %2286 = vmatprep.subr.mxu0 0.0
    %2287 = vmatpush1.msra.mxu0 0.0
    %2288 = vmatprep.subr.mxu0 0.0
    %2289 = vmatpush1.msra.mxu0 0.0
    %2290 = vmatprep.subr.mxu0 0.0
    %2291 = vmatpush1.msra.mxu0 0.0
    %2292 = vmatprep.subr.mxu0 0.0
    %2293 = vmatpush1.msra.mxu0 0.0
    %2294 = vmatprep.subr.mxu0 0.0
    %2295 = vmatpush1.msra.mxu0 0.0
    %2296 = vmatprep.subr.mxu0 0.0
    %2297 = vmatpush1.msra.mxu0 0.0
    %2298 = vmatprep.subr.mxu0 0.0
    %2299 = vmatpush1.msra.mxu0 0.0
    %2300 = vmatprep.subr.mxu0 0.0
    %2301 = vmatpush1.msra.mxu0 0.0
    %2302 = vmatprep.subr.mxu0 0.0
    %2303 = vmatpush1.msra.mxu0 0.0
    %2304 = vmatprep.subr.mxu0 0.0
    %2305 = vmatpush1.msra.mxu0 0.0
    %2306 = vmatprep.subr.mxu0 0.0
    %2307 = vmatpush1.msra.mxu0 0.0
    %2308 = vmatprep.subr.mxu0 0.0
    %2309 = vmatpush1.msra.mxu0 0.0
    %2310 = vmatprep.subr.mxu0 0.0
    %2311 = vmatpush1.msra.mxu0 0.0
    %2312 = vmatprep.subr.mxu0 0.0
    %2313 = vmatpush1.msra.mxu0 0.0
    %2314 = vmatprep.subr.mxu0 0.0
    %2315 = vmatpush1.msra.mxu0 0.0
    %2316 = vmatprep.subr.mxu0 0.0
    %2317 = vmatpush1.msra.mxu0 0.0
    %2318 = vmatprep.subr.mxu0 0.0
    %2319 = vmatpush1.msra.mxu0 0.0
    %2320 = vmatprep.subr.mxu0 0.0
    %2321 = vmatpush1.msra.mxu0 0.0
    %2322 = vmatprep.subr.mxu0 0.0
    %2323 = vmatpush1.msra.mxu0 0.0
    %2324 = vmatprep.mubr.f32.mxu0 0.0
    %2325 = vmatmul.mubr.f32.gmra.mrb[0].mxu0 %v2258
    %v2326 = vpop.f32.mrb[0].mxu0
    %v2327 = vadd.f32 0.0, %v2326
    %v2328 = vpop.f32.mrb[0].mxu0
    %2329 = vdwg.mxu0
    %v2331 = vsel %vm647, %v1810, 0
    %2333 = vmatprep.subr.mxu0 0.0
    %2334 = vmatpush1.msra.mxu0 %v641
    %2335 = vmatprep.subr.mxu0 0.0
    %2336 = vmatpush1.msra.mxu0 0.0
    %2337 = vmatprep.subr.mxu0 0.0
    %2338 = vmatpush1.msra.mxu0 0.0
    %2339 = vmatprep.subr.mxu0 0.0
    %2340 = vmatpush1.msra.mxu0 0.0
    %2341 = vmatprep.subr.mxu0 0.0
    %2342 = vmatpush1.msra.mxu0 0.0
    %2343 = vmatprep.subr.mxu0 0.0
    %2344 = vmatpush1.msra.mxu0 0.0
    %2345 = vmatprep.subr.mxu0 0.0
    %2346 = vmatpush1.msra.mxu0 0.0
    %2347 = vmatprep.subr.mxu0 0.0
    %2348 = vmatpush1.msra.mxu0 0.0
    %2349 = vmatprep.subr.mxu0 0.0
    %2350 = vmatpush1.msra.mxu0 0.0
    %2351 = vmatprep.subr.mxu0 0.0
    %2352 = vmatpush1.msra.mxu0 0.0
    %2353 = vmatprep.subr.mxu0 0.0
    %2354 = vmatpush1.msra.mxu0 0.0
    %2355 = vmatprep.subr.mxu0 0.0
    %2356 = vmatpush1.msra.mxu0 0.0
    %2357 = vmatprep.subr.mxu0 0.0
    %2358 = vmatpush1.msra.mxu0 0.0
    %2359 = vmatprep.subr.mxu0 0.0
    %2360 = vmatpush1.msra.mxu0 0.0
    %2361 = vmatprep.subr.mxu0 0.0
    %2362 = vmatpush1.msra.mxu0 0.0
    %2363 = vmatprep.subr.mxu0 0.0
    %2364 = vmatpush1.msra.mxu0 0.0
    %2365 = vmatprep.subr.mxu0 0.0
    %2366 = vmatpush1.msra.mxu0 0.0
    %2367 = vmatprep.subr.mxu0 0.0
    %2368 = vmatpush1.msra.mxu0 0.0
    %2369 = vmatprep.subr.mxu0 0.0
    %2370 = vmatpush1.msra.mxu0 0.0
    %2371 = vmatprep.subr.mxu0 0.0
    %2372 = vmatpush1.msra.mxu0 0.0
    %2373 = vmatprep.subr.mxu0 0.0
    %2374 = vmatpush1.msra.mxu0 0.0
    %2375 = vmatprep.subr.mxu0 0.0
    %2376 = vmatpush1.msra.mxu0 0.0
    %2377 = vmatprep.subr.mxu0 0.0
    %2378 = vmatpush1.msra.mxu0 0.0
    %2379 = vmatprep.subr.mxu0 0.0
    %2380 = vmatpush1.msra.mxu0 0.0
    %2381 = vmatprep.subr.mxu0 0.0
    %2382 = vmatpush1.msra.mxu0 0.0
    %2383 = vmatprep.subr.mxu0 0.0
    %2384 = vmatpush1.msra.mxu0 0.0
    %2385 = vmatprep.subr.mxu0 0.0
    %2386 = vmatpush1.msra.mxu0 0.0
    %2387 = vmatprep.subr.mxu0 0.0
    %2388 = vmatpush1.msra.mxu0 0.0
    %2389 = vmatprep.subr.mxu0 0.0
    %2390 = vmatpush1.msra.mxu0 0.0
    %2391 = vmatprep.subr.mxu0 0.0
    %2392 = vmatpush1.msra.mxu0 0.0
    %2393 = vmatprep.subr.mxu0 0.0
    %2394 = vmatpush1.msra.mxu0 0.0
    %2395 = vmatprep.subr.mxu0 0.0
    %2396 = vmatpush1.msra.mxu0 0.0
    %2397 = vmatprep.mubr.f32.mxu0 0.0
    %2398 = vmatmul.mubr.f32.gmra.mrb[0].mxu0 %v2331
    %v2399 = vpop.f32.mrb[0].mxu0
    %v2400 = vadd.f32 0.0, %v2399
    %v2401 = vpop.f32.mrb[0].mxu0
    %2402 = vdwg.mxu0
    %v2404 = vsel %vm647, %v1886, 0
    %2406 = vmatprep.subr.mxu0 0.0
    %2407 = vmatpush1.msra.mxu0 %v642
    %2408 = vmatprep.subr.mxu0 0.0
    %2409 = vmatpush1.msra.mxu0 0.0
    %2410 = vmatprep.subr.mxu0 0.0
    %2411 = vmatpush1.msra.mxu0 0.0
    %2412 = vmatprep.subr.mxu0 0.0
    %2413 = vmatpush1.msra.mxu0 0.0
    %2414 = vmatprep.subr.mxu0 0.0
    %2415 = vmatpush1.msra.mxu0 0.0
    %2416 = vmatprep.subr.mxu0 0.0
    %2417 = vmatpush1.msra.mxu0 0.0
    %2418 = vmatprep.subr.mxu0 0.0
    %2419 = vmatpush1.msra.mxu0 0.0
    %2420 = vmatprep.subr.mxu0 0.0
    %2421 = vmatpush1.msra.mxu0 0.0
    %2422 = vmatprep.subr.mxu0 0.0
    %2423 = vmatpush1.msra.mxu0 0.0
    %2424 = vmatprep.subr.mxu0 0.0
    %2425 = vmatpush1.msra.mxu0 0.0
    %2426 = vmatprep.subr.mxu0 0.0
    %2427 = vmatpush1.msra.mxu0 0.0
    %2428 = vmatprep.subr.mxu0 0.0
    %2429 = vmatpush1.msra.mxu0 0.0
    %2430 = vmatprep.subr.mxu0 0.0
    %2431 = vmatpush1.msra.mxu0 0.0
    %2432 = vmatprep.subr.mxu0 0.0
    %2433 = vmatpush1.msra.mxu0 0.0
    %2434 = vmatprep.subr.mxu0 0.0
    %2435 = vmatpush1.msra.mxu0 0.0
    %2436 = vmatprep.subr.mxu0 0.0
    %2437 = vmatpush1.msra.mxu0 0.0
    %2438 = vmatprep.subr.mxu0 0.0
    %2439 = vmatpush1.msra.mxu0 0.0
    %2440 = vmatprep.subr.mxu0 0.0
    %2441 = vmatpush1.msra.mxu0 0.0
    %2442 = vmatprep.subr.mxu0 0.0
    %2443 = vmatpush1.msra.mxu0 0.0
    %2444 = vmatprep.subr.mxu0 0.0
    %2445 = vmatpush1.msra.mxu0 0.0
    %2446 = vmatprep.subr.mxu0 0.0
    %2447 = vmatpush1.msra.mxu0 0.0
    %2448 = vmatprep.subr.mxu0 0.0
    %2449 = vmatpush1.msra.mxu0 0.0
    %2450 = vmatprep.subr.mxu0 0.0
    %2451 = vmatpush1.msra.mxu0 0.0
    %2452 = vmatprep.subr.mxu0 0.0
    %2453 = vmatpush1.msra.mxu0 0.0
    %2454 = vmatprep.subr.mxu0 0.0
    %2455 = vmatpush1.msra.mxu0 0.0
    %2456 = vmatprep.subr.mxu0 0.0
    %2457 = vmatpush1.msra.mxu0 0.0
    %2458 = vmatprep.subr.mxu0 0.0
    %2459 = vmatpush1.msra.mxu0 0.0
    %2460 = vmatprep.subr.mxu0 0.0
    %2461 = vmatpush1.msra.mxu0 0.0
    %2462 = vmatprep.subr.mxu0 0.0
    %2463 = vmatpush1.msra.mxu0 0.0
    %2464 = vmatprep.subr.mxu0 0.0
    %2465 = vmatpush1.msra.mxu0 0.0
    %2466 = vmatprep.subr.mxu0 0.0
    %2467 = vmatpush1.msra.mxu0 0.0
    %2468 = vmatprep.subr.mxu0 0.0
    %2469 = vmatpush1.msra.mxu0 0.0
    %2470 = vmatprep.mubr.f32.mxu0 0.0
    %2471 = vmatmul.mubr.f32.gmra.mrb[0].mxu0 %v2404
    %v2472 = vpop.f32.mrb[0].mxu0
    %v2473 = vadd.f32 0.0, %v2472
    %v2474 = vpop.f32.mrb[0].mxu0
    %2475 = vdwg.mxu0
    %v2477 = vsel %vm647, %v1962, 0
    %2479 = vmatprep.subr.mxu0 0.0
    %2480 = vmatpush1.msra.mxu0 %v643
    %2481 = vmatprep.subr.mxu0 0.0
    %2482 = vmatpush1.msra.mxu0 0.0
    %2483 = vmatprep.subr.mxu0 0.0
    %2484 = vmatpush1.msra.mxu0 0.0
    %2485 = vmatprep.subr.mxu0 0.0
    %2486 = vmatpush1.msra.mxu0 0.0
    %2487 = vmatprep.subr.mxu0 0.0
    %2488 = vmatpush1.msra.mxu0 0.0
    %2489 = vmatprep.subr.mxu0 0.0
    %2490 = vmatpush1.msra.mxu0 0.0
    %2491 = vmatprep.subr.mxu0 0.0
    %2492 = vmatpush1.msra.mxu0 0.0
    %2493 = vmatprep.subr.mxu0 0.0
    %2494 = vmatpush1.msra.mxu0 0.0
    %2495 = vmatprep.subr.mxu0 0.0
    %2496 = vmatpush1.msra.mxu0 0.0
    %2497 = vmatprep.subr.mxu0 0.0
    %2498 = vmatpush1.msra.mxu0 0.0
    %2499 = vmatprep.subr.mxu0 0.0
    %2500 = vmatpush1.msra.mxu0 0.0
    %2501 = vmatprep.subr.mxu0 0.0
    %2502 = vmatpush1.msra.mxu0 0.0
    %2503 = vmatprep.subr.mxu0 0.0
    %2504 = vmatpush1.msra.mxu0 0.0
    %2505 = vmatprep.subr.mxu0 0.0
    %2506 = vmatpush1.msra.mxu0 0.0
    %2507 = vmatprep.subr.mxu0 0.0
    %2508 = vmatpush1.msra.mxu0 0.0
    %2509 = vmatprep.subr.mxu0 0.0
    %2510 = vmatpush1.msra.mxu0 0.0
    %2511 = vmatprep.subr.mxu0 0.0
    %2512 = vmatpush1.msra.mxu0 0.0
    %2513 = vmatprep.subr.mxu0 0.0
    %2514 = vmatpush1.msra.mxu0 0.0
    %2515 = vmatprep.subr.mxu0 0.0
    %2516 = vmatpush1.msra.mxu0 0.0
    %2517 = vmatprep.subr.mxu0 0.0
    %2518 = vmatpush1.msra.mxu0 0.0
    %2519 = vmatprep.subr.mxu0 0.0
    %2520 = vmatpush1.msra.mxu0 0.0
    %2521 = vmatprep.subr.mxu0 0.0
    %2522 = vmatpush1.msra.mxu0 0.0
    %2523 = vmatprep.subr.mxu0 0.0
    %2524 = vmatpush1.msra.mxu0 0.0
    %2525 = vmatprep.subr.mxu0 0.0
    %2526 = vmatpush1.msra.mxu0 0.0
    %2527 = vmatprep.subr.mxu0 0.0
    %2528 = vmatpush1.msra.mxu0 0.0
    %2529 = vmatprep.subr.mxu0 0.0
    %2530 = vmatpush1.msra.mxu0 0.0
    %2531 = vmatprep.subr.mxu0 0.0
    %2532 = vmatpush1.msra.mxu0 0.0
    %2533 = vmatprep.subr.mxu0 0.0
    %2534 = vmatpush1.msra.mxu0 0.0
    %2535 = vmatprep.subr.mxu0 0.0
    %2536 = vmatpush1.msra.mxu0 0.0
    %2537 = vmatprep.subr.mxu0 0.0
    %2538 = vmatpush1.msra.mxu0 0.0
    %2539 = vmatprep.subr.mxu0 0.0
    %2540 = vmatpush1.msra.mxu0 0.0
    %2541 = vmatprep.subr.mxu0 0.0
    %2542 = vmatpush1.msra.mxu0 0.0
    %2543 = vmatprep.mubr.f32.mxu0 0.0
    %2544 = vmatmul.mubr.f32.gmra.mrb[0].mxu0 %v2477
    %v2545 = vpop.f32.mrb[0].mxu0
    %v2546 = vadd.f32 0.0, %v2545
    %v2547 = vpop.f32.mrb[0].mxu0
    %2548 = vdwg.mxu0
    %v2549 = vsel %vm73, %v2035, 0.0
    %v2550 = vsel %vm73, %v2108, 0.0
    %v2551 = vadd.f32 %v2549, %v2550
    %v2552 = vsel %vm73, %v2181, 0.0
    %v2553 = vadd.f32 %v2551, %v2552
    %v2554 = vsel %vm73, %v2254, 0.0
    %v2555 = vadd.f32 %v2553, %v2554
    %v2556 = vsel %vm73, %v2327, 0.0
    %v2557 = vsel %vm73, %v2400, 0.0
    %v2558 = vadd.f32 %v2556, %v2557
    %v2559 = vsel %vm73, %v2473, 0.0
    %v2560 = vadd.f32 %v2558, %v2559
    %v2561 = vsel %vm73, %v2546, 0.0
    %v2562 = vadd.f32 %v2560, %v2561
    %v2563 = vlaneseq
    %v2564 = vshrl.u32 %v2563, 7
    %v2565 = vsub.s32 0, %v2564
    %v2566 = vrot.slane %v55, %v2565
    %v2567 = vadd.f32 %v2555, %v2566
    %v2568 = vadd.f32 %v2562, %v2566
    %v2569 = vadd.f32 %v2567, %v51
    %v2570 = vadd.f32 %v2568, %v52
    %v2571 = vsel %vm73, %v2569, 0.0
    %2572 = vadd.xlane.f32.xlu0 %v2571
    %v2573 = vpop.xlane.xlu0 %2572
    %v2574 = vsel %vm73, %v2570, 0.0
    %2575 = vadd.xlane.f32.xlu0 %v2574
    %v2576 = vpop.xlane.xlu0 %2575
    %v2577 = vrcp.pop 32.0
    %v2578 = vmul.f32 %v2573, %v2577
    %v2579 = vmul.f32 %v2576, %v2577
    %v2580 = vsub.f32 %v2569, %v2578
    %v2581 = vsub.f32 %v2570, %v2579
    %v2582 = vmul.f32 %v2580, %v2580
    %v2583 = vmul.f32 %v2581, %v2581
    %v2584 = vsel %vm73, %v2582, 0.0
    %2585 = vadd.xlane.f32.xlu0 %v2584
    %v2586 = vpop.xlane.xlu0 %2585
    %v2587 = vsel %vm73, %v2583, 0.0
    %2588 = vadd.xlane.f32.xlu0 %v2587
    %v2589 = vpop.xlane.xlu0 %2588
    %v2590 = vmul.f32 %v2586, %v2577
    %v2591 = vmul.f32 %v2589, %v2577
    %v2592 = vadd.f32 %v2590, 1e-05
    %v2593 = vadd.f32 %v2591, 1e-05
    %v2594 = vrsqrt.pop %v2592
    %v2595 = vrsqrt.pop %v2593
    %v2596 = vmul.f32 %v2580, %v2594
    %v2597 = vmul.f32 %v2581, %v2595
    %v2598 = vlaneseq
    %v2599 = vshrl.u32 %v2598, 7
    %v2600 = vsub.s32 1, %v2599
    %v2601 = vrot.slane %v55, %v2600
    %v2602 = vmul.f32 %v2596, %v2601
    %v2603 = vmul.f32 %v2597, %v2601
    %v2604 = vlaneseq
    %v2605 = vshrl.u32 %v2604, 7
    %v2606 = vsub.s32 2, %v2605
    %v2607 = vrot.slane %v55, %v2606
    %v2608 = vadd.f32 %v2602, %v2607
    %v2609 = vadd.f32 %v2603, %v2607
    %v2610 = vld [vmem:[%s6] sm:$0xff]
    %v2611 = vld [vmem:[%s6 + $0x8] sm:$0xff]
    %v2612 = vld [vmem:[%s6 + $0x10] sm:$0xff]
    %v2613 = vld [vmem:[%s6 + $0x18] sm:$0xff]
    %v2614 = vld [vmem:[%s6 + $0x20] sm:$0xff]
    %v2615 = vld [vmem:[%s6 + $0x28] sm:$0xff]
    %v2616 = vld [vmem:[%s6 + $0x30] sm:$0xff]
    %v2617 = vld [vmem:[%s6 + $0x38] sm:$0xff]
    %v2618 = vld [vmem:[%s6 + $0x40] sm:$0xff]
    %v2619 = vld [vmem:[%s6 + $0x48] sm:$0xff]
    %v2620 = vld [vmem:[%s6 + $0x50] sm:$0xff]
    %v2621 = vld [vmem:[%s6 + $0x58] sm:$0xff]
    %v2622 = vld [vmem:[%s6 + $0x60] sm:$0xff]
    %v2623 = vld [vmem:[%s6 + $0x68] sm:$0xff]
    %v2624 = vld [vmem:[%s6 + $0x70] sm:$0xff]
    %v2625 = vld [vmem:[%s6 + $0x78] sm:$0xff]
    %v2627 = vsel %vm73, %v53, 0
    %2629 = vmatprep.subr.mxu0 0.0
    %2630 = vmatpush1.msra.mxu0 %v2610
    %2631 = vmatprep.subr.mxu0 0.0
    %2632 = vmatpush1.msra.mxu0 %v2611
    %2633 = vmatprep.subr.mxu0 0.0
    %2634 = vmatpush1.msra.mxu0 %v2612
    %2635 = vmatprep.subr.mxu0 0.0
    %2636 = vmatpush1.msra.mxu0 %v2613
    %2637 = vmatprep.subr.mxu0 0.0
    %2638 = vmatpush1.msra.mxu0 0.0
    %2639 = vmatprep.subr.mxu0 0.0
    %2640 = vmatpush1.msra.mxu0 0.0
    %2641 = vmatprep.subr.mxu0 0.0
    %2642 = vmatpush1.msra.mxu0 0.0
    %2643 = vmatprep.subr.mxu0 0.0
    %2644 = vmatpush1.msra.mxu0 0.0
    %2645 = vmatprep.subr.mxu0 0.0
    %2646 = vmatpush1.msra.mxu0 0.0
    %2647 = vmatprep.subr.mxu0 0.0
    %2648 = vmatpush1.msra.mxu0 0.0
    %2649 = vmatprep.subr.mxu0 0.0
    %2650 = vmatpush1.msra.mxu0 0.0
    %2651 = vmatprep.subr.mxu0 0.0
    %2652 = vmatpush1.msra.mxu0 0.0
    %2653 = vmatprep.subr.mxu0 0.0
    %2654 = vmatpush1.msra.mxu0 0.0
    %2655 = vmatprep.subr.mxu0 0.0
    %2656 = vmatpush1.msra.mxu0 0.0
    %2657 = vmatprep.subr.mxu0 0.0
    %2658 = vmatpush1.msra.mxu0 0.0
    %2659 = vmatprep.subr.mxu0 0.0
    %2660 = vmatpush1.msra.mxu0 0.0
    %2661 = vmatprep.subr.mxu0 0.0
    %2662 = vmatpush1.msra.mxu0 0.0
    %2663 = vmatprep.subr.mxu0 0.0
    %2664 = vmatpush1.msra.mxu0 0.0
    %2665 = vmatprep.subr.mxu0 0.0
    %2666 = vmatpush1.msra.mxu0 0.0
    %2667 = vmatprep.subr.mxu0 0.0
    %2668 = vmatpush1.msra.mxu0 0.0
    %2669 = vmatprep.subr.mxu0 0.0
    %2670 = vmatpush1.msra.mxu0 0.0
    %2671 = vmatprep.subr.mxu0 0.0
    %2672 = vmatpush1.msra.mxu0 0.0
    %2673 = vmatprep.subr.mxu0 0.0
    %2674 = vmatpush1.msra.mxu0 0.0
    %2675 = vmatprep.subr.mxu0 0.0
    %2676 = vmatpush1.msra.mxu0 0.0
    %2677 = vmatprep.subr.mxu0 0.0
    %2678 = vmatpush1.msra.mxu0 0.0
    %2679 = vmatprep.subr.mxu0 0.0
    %2680 = vmatpush1.msra.mxu0 0.0
    %2681 = vmatprep.subr.mxu0 0.0
    %2682 = vmatpush1.msra.mxu0 0.0
    %2683 = vmatprep.subr.mxu0 0.0
    %2684 = vmatpush1.msra.mxu0 0.0
    %2685 = vmatprep.subr.mxu0 0.0
    %2686 = vmatpush1.msra.mxu0 0.0
    %2687 = vmatprep.subr.mxu0 0.0
    %2688 = vmatpush1.msra.mxu0 0.0
    %2689 = vmatprep.subr.mxu0 0.0
    %2690 = vmatpush1.msra.mxu0 0.0
    %2691 = vmatprep.subr.mxu0 0.0
    %2692 = vmatpush1.msra.mxu0 0.0
    %2693 = vmatprep.mubr.f32.mxu0 0.0
    %2694 = vmatmul.mubr.f32.gmra.mrb[0].mxu0 %v2627
    %v2695 = vpop.f32.mrb[0].mxu0
    %v2696 = vadd.f32 0.0, %v2695
    %v2697 = vpop.f32.mrb[0].mxu0
    %2698 = vdwg.mxu0
    %2699 = vmatprep.subr.mxu0 0.0
    %2700 = vmatpush1.msra.mxu0 %v2614
    %2701 = vmatprep.subr.mxu0 0.0
    %2702 = vmatpush1.msra.mxu0 %v2615
    %2703 = vmatprep.subr.mxu0 0.0
    %2704 = vmatpush1.msra.mxu0 %v2616
    %2705 = vmatprep.subr.mxu0 0.0
    %2706 = vmatpush1.msra.mxu0 %v2617
    %2707 = vmatprep.subr.mxu0 0.0
    %2708 = vmatpush1.msra.mxu0 0.0
    %2709 = vmatprep.subr.mxu0 0.0
    %2710 = vmatpush1.msra.mxu0 0.0
    %2711 = vmatprep.subr.mxu0 0.0
    %2712 = vmatpush1.msra.mxu0 0.0
    %2713 = vmatprep.subr.mxu0 0.0
    %2714 = vmatpush1.msra.mxu0 0.0
    %2715 = vmatprep.subr.mxu0 0.0
    %2716 = vmatpush1.msra.mxu0 0.0
    %2717 = vmatprep.subr.mxu0 0.0
    %2718 = vmatpush1.msra.mxu0 0.0
    %2719 = vmatprep.subr.mxu0 0.0
    %2720 = vmatpush1.msra.mxu0 0.0
    %2721 = vmatprep.subr.mxu0 0.0
    %2722 = vmatpush1.msra.mxu0 0.0
    %2723 = vmatprep.subr.mxu0 0.0
    %2724 = vmatpush1.msra.mxu0 0.0
    %2725 = vmatprep.subr.mxu0 0.0
    %2726 = vmatpush1.msra.mxu0 0.0
    %2727 = vmatprep.subr.mxu0 0.0
    %2728 = vmatpush1.msra.mxu0 0.0
    %2729 = vmatprep.subr.mxu0 0.0
    %2730 = vmatpush1.msra.mxu0 0.0
    %2731 = vmatprep.subr.mxu0 0.0
    %2732 = vmatpush1.msra.mxu0 0.0
    %2733 = vmatprep.subr.mxu0 0.0
    %2734 = vmatpush1.msra.mxu0 0.0
    %2735 = vmatprep.subr.mxu0 0.0
    %2736 = vmatpush1.msra.mxu0 0.0
    %2737 = vmatprep.subr.mxu0 0.0
    %2738 = vmatpush1.msra.mxu0 0.0
    %2739 = vmatprep.subr.mxu0 0.0
    %2740 = vmatpush1.msra.mxu0 0.0
    %2741 = vmatprep.subr.mxu0 0.0
    %2742 = vmatpush1.msra.mxu0 0.0
    %2743 = vmatprep.subr.mxu0 0.0
    %2744 = vmatpush1.msra.mxu0 0.0
    %2745 = vmatprep.subr.mxu0 0.0
    %2746 = vmatpush1.msra.mxu0 0.0
    %2747 = vmatprep.subr.mxu0 0.0
    %2748 = vmatpush1.msra.mxu0 0.0
    %2749 = vmatprep.subr.mxu0 0.0
    %2750 = vmatpush1.msra.mxu0 0.0
    %2751 = vmatprep.subr.mxu0 0.0
    %2752 = vmatpush1.msra.mxu0 0.0
    %2753 = vmatprep.subr.mxu0 0.0
    %2754 = vmatpush1.msra.mxu0 0.0
    %2755 = vmatprep.subr.mxu0 0.0
    %2756 = vmatpush1.msra.mxu0 0.0
    %2757 = vmatprep.subr.mxu0 0.0
    %2758 = vmatpush1.msra.mxu0 0.0
    %2759 = vmatprep.subr.mxu0 0.0
    %2760 = vmatpush1.msra.mxu0 0.0
    %2761 = vmatprep.subr.mxu0 0.0
    %2762 = vmatpush1.msra.mxu0 0.0
    %2763 = vmatprep.mubr.f32.mxu0 0.0
    %2764 = vmatmul.mubr.f32.gmra.mrb[0].mxu0 %v2627
    %v2765 = vpop.f32.mrb[0].mxu0
    %v2766 = vadd.f32 0.0, %v2765
    %v2767 = vpop.f32.mrb[0].mxu0
    %2768 = vdwg.mxu0
    %2769 = vmatprep.subr.mxu0 0.0
    %2770 = vmatpush1.msra.mxu0 %v2618
    %2771 = vmatprep.subr.mxu0 0.0
    %2772 = vmatpush1.msra.mxu0 %v2619
    %2773 = vmatprep.subr.mxu0 0.0
    %2774 = vmatpush1.msra.mxu0 %v2620
    %2775 = vmatprep.subr.mxu0 0.0
    %2776 = vmatpush1.msra.mxu0 %v2621
    %2777 = vmatprep.subr.mxu0 0.0
    %2778 = vmatpush1.msra.mxu0 0.0
    %2779 = vmatprep.subr.mxu0 0.0
    %2780 = vmatpush1.msra.mxu0 0.0
    %2781 = vmatprep.subr.mxu0 0.0
    %2782 = vmatpush1.msra.mxu0 0.0
    %2783 = vmatprep.subr.mxu0 0.0
    %2784 = vmatpush1.msra.mxu0 0.0
    %2785 = vmatprep.subr.mxu0 0.0
    %2786 = vmatpush1.msra.mxu0 0.0
    %2787 = vmatprep.subr.mxu0 0.0
    %2788 = vmatpush1.msra.mxu0 0.0
    %2789 = vmatprep.subr.mxu0 0.0
    %2790 = vmatpush1.msra.mxu0 0.0
    %2791 = vmatprep.subr.mxu0 0.0
    %2792 = vmatpush1.msra.mxu0 0.0
    %2793 = vmatprep.subr.mxu0 0.0
    %2794 = vmatpush1.msra.mxu0 0.0
    %2795 = vmatprep.subr.mxu0 0.0
    %2796 = vmatpush1.msra.mxu0 0.0
    %2797 = vmatprep.subr.mxu0 0.0
    %2798 = vmatpush1.msra.mxu0 0.0
    %2799 = vmatprep.subr.mxu0 0.0
    %2800 = vmatpush1.msra.mxu0 0.0
    %2801 = vmatprep.subr.mxu0 0.0
    %2802 = vmatpush1.msra.mxu0 0.0
    %2803 = vmatprep.subr.mxu0 0.0
    %2804 = vmatpush1.msra.mxu0 0.0
    %2805 = vmatprep.subr.mxu0 0.0
    %2806 = vmatpush1.msra.mxu0 0.0
    %2807 = vmatprep.subr.mxu0 0.0
    %2808 = vmatpush1.msra.mxu0 0.0
    %2809 = vmatprep.subr.mxu0 0.0
    %2810 = vmatpush1.msra.mxu0 0.0
    %2811 = vmatprep.subr.mxu0 0.0
    %2812 = vmatpush1.msra.mxu0 0.0
    %2813 = vmatprep.subr.mxu0 0.0
    %2814 = vmatpush1.msra.mxu0 0.0
    %2815 = vmatprep.subr.mxu0 0.0
    %2816 = vmatpush1.msra.mxu0 0.0
    %2817 = vmatprep.subr.mxu0 0.0
    %2818 = vmatpush1.msra.mxu0 0.0
    %2819 = vmatprep.subr.mxu0 0.0
    %2820 = vmatpush1.msra.mxu0 0.0
    %2821 = vmatprep.subr.mxu0 0.0
    %2822 = vmatpush1.msra.mxu0 0.0
    %2823 = vmatprep.subr.mxu0 0.0
    %2824 = vmatpush1.msra.mxu0 0.0
    %2825 = vmatprep.subr.mxu0 0.0
    %2826 = vmatpush1.msra.mxu0 0.0
    %2827 = vmatprep.subr.mxu0 0.0
    %2828 = vmatpush1.msra.mxu0 0.0
    %2829 = vmatprep.subr.mxu0 0.0
    %2830 = vmatpush1.msra.mxu0 0.0
    %2831 = vmatprep.subr.mxu0 0.0
    %2832 = vmatpush1.msra.mxu0 0.0
    %2833 = vmatprep.mubr.f32.mxu0 0.0
    %2834 = vmatmul.mubr.f32.gmra.mrb[0].mxu0 %v2627
    %v2835 = vpop.f32.mrb[0].mxu0
    %v2836 = vadd.f32 0.0, %v2835
    %v2837 = vpop.f32.mrb[0].mxu0
    %2838 = vdwg.mxu0
    %2839 = vmatprep.subr.mxu0 0.0
    %2840 = vmatpush1.msra.mxu0 %v2622
    %2841 = vmatprep.subr.mxu0 0.0
    %2842 = vmatpush1.msra.mxu0 %v2623
    %2843 = vmatprep.subr.mxu0 0.0
    %2844 = vmatpush1.msra.mxu0 %v2624
    %2845 = vmatprep.subr.mxu0 0.0
    %2846 = vmatpush1.msra.mxu0 %v2625
    %2847 = vmatprep.subr.mxu0 0.0
    %2848 = vmatpush1.msra.mxu0 0.0
    %2849 = vmatprep.subr.mxu0 0.0
    %2850 = vmatpush1.msra.mxu0 0.0
    %2851 = vmatprep.subr.mxu0 0.0
    %2852 = vmatpush1.msra.mxu0 0.0
    %2853 = vmatprep.subr.mxu0 0.0
    %2854 = vmatpush1.msra.mxu0 0.0
    %2855 = vmatprep.subr.mxu0 0.0
    %2856 = vmatpush1.msra.mxu0 0.0
    %2857 = vmatprep.subr.mxu0 0.0
    %2858 = vmatpush1.msra.mxu0 0.0
    %2859 = vmatprep.subr.mxu0 0.0
    %2860 = vmatpush1.msra.mxu0 0.0
    %2861 = vmatprep.subr.mxu0 0.0
    %2862 = vmatpush1.msra.mxu0 0.0
    %2863 = vmatprep.subr.mxu0 0.0
    %2864 = vmatpush1.msra.mxu0 0.0
    %2865 = vmatprep.subr.mxu0 0.0
    %2866 = vmatpush1.msra.mxu0 0.0
    %2867 = vmatprep.subr.mxu0 0.0
    %2868 = vmatpush1.msra.mxu0 0.0
    %2869 = vmatprep.subr.mxu0 0.0
    %2870 = vmatpush1.msra.mxu0 0.0
    %2871 = vmatprep.subr.mxu0 0.0
    %2872 = vmatpush1.msra.mxu0 0.0
    %2873 = vmatprep.subr.mxu0 0.0
    %2874 = vmatpush1.msra.mxu0 0.0
    %2875 = vmatprep.subr.mxu0 0.0
    %2876 = vmatpush1.msra.mxu0 0.0
    %2877 = vmatprep.subr.mxu0 0.0
    %2878 = vmatpush1.msra.mxu0 0.0
    %2879 = vmatprep.subr.mxu0 0.0
    %2880 = vmatpush1.msra.mxu0 0.0
    %2881 = vmatprep.subr.mxu0 0.0
    %2882 = vmatpush1.msra.mxu0 0.0
    %2883 = vmatprep.subr.mxu0 0.0
    %2884 = vmatpush1.msra.mxu0 0.0
    %2885 = vmatprep.subr.mxu0 0.0
    %2886 = vmatpush1.msra.mxu0 0.0
    %2887 = vmatprep.subr.mxu0 0.0
    %2888 = vmatpush1.msra.mxu0 0.0
    %2889 = vmatprep.subr.mxu0 0.0
    %2890 = vmatpush1.msra.mxu0 0.0
    %2891 = vmatprep.subr.mxu0 0.0
    %2892 = vmatpush1.msra.mxu0 0.0
    %2893 = vmatprep.subr.mxu0 0.0
    %2894 = vmatpush1.msra.mxu0 0.0
    %2895 = vmatprep.subr.mxu0 0.0
    %2896 = vmatpush1.msra.mxu0 0.0
    %2897 = vmatprep.subr.mxu0 0.0
    %2898 = vmatpush1.msra.mxu0 0.0
    %2899 = vmatprep.subr.mxu0 0.0
    %2900 = vmatpush1.msra.mxu0 0.0
    %2901 = vmatprep.subr.mxu0 0.0
    %2902 = vmatpush1.msra.mxu0 0.0
    %2903 = vmatprep.mubr.f32.mxu0 0.0
    %2904 = vmatmul.mubr.f32.gmra.mrb[0].mxu0 %v2627
    %v2905 = vpop.f32.mrb[0].mxu0
    %v2906 = vadd.f32 0.0, %v2905
    %v2907 = vpop.f32.mrb[0].mxu0
    %2908 = vdwg.mxu0
    %v2910 = vsel %vm73, %v54, 0
    %2912 = vmatprep.subr.mxu0 0.0
    %2913 = vmatpush1.msra.mxu0 %v2610
    %2914 = vmatprep.subr.mxu0 0.0
    %2915 = vmatpush1.msra.mxu0 %v2611
    %2916 = vmatprep.subr.mxu0 0.0
    %2917 = vmatpush1.msra.mxu0 %v2612
    %2918 = vmatprep.subr.mxu0 0.0
    %2919 = vmatpush1.msra.mxu0 %v2613
    %2920 = vmatprep.subr.mxu0 0.0
    %2921 = vmatpush1.msra.mxu0 0.0
    %2922 = vmatprep.subr.mxu0 0.0
    %2923 = vmatpush1.msra.mxu0 0.0
    %2924 = vmatprep.subr.mxu0 0.0
    %2925 = vmatpush1.msra.mxu0 0.0
    %2926 = vmatprep.subr.mxu0 0.0
    %2927 = vmatpush1.msra.mxu0 0.0
    %2928 = vmatprep.subr.mxu0 0.0
    %2929 = vmatpush1.msra.mxu0 0.0
    %2930 = vmatprep.subr.mxu0 0.0
    %2931 = vmatpush1.msra.mxu0 0.0
    %2932 = vmatprep.subr.mxu0 0.0
    %2933 = vmatpush1.msra.mxu0 0.0
    %2934 = vmatprep.subr.mxu0 0.0
    %2935 = vmatpush1.msra.mxu0 0.0
    %2936 = vmatprep.subr.mxu0 0.0
    %2937 = vmatpush1.msra.mxu0 0.0
    %2938 = vmatprep.subr.mxu0 0.0
    %2939 = vmatpush1.msra.mxu0 0.0
    %2940 = vmatprep.subr.mxu0 0.0
    %2941 = vmatpush1.msra.mxu0 0.0
    %2942 = vmatprep.subr.mxu0 0.0
    %2943 = vmatpush1.msra.mxu0 0.0
    %2944 = vmatprep.subr.mxu0 0.0
    %2945 = vmatpush1.msra.mxu0 0.0
    %2946 = vmatprep.subr.mxu0 0.0
    %2947 = vmatpush1.msra.mxu0 0.0
    %2948 = vmatprep.subr.mxu0 0.0
    %2949 = vmatpush1.msra.mxu0 0.0
    %2950 = vmatprep.subr.mxu0 0.0
    %2951 = vmatpush1.msra.mxu0 0.0
    %2952 = vmatprep.subr.mxu0 0.0
    %2953 = vmatpush1.msra.mxu0 0.0
    %2954 = vmatprep.subr.mxu0 0.0
    %2955 = vmatpush1.msra.mxu0 0.0
    %2956 = vmatprep.subr.mxu0 0.0
    %2957 = vmatpush1.msra.mxu0 0.0
    %2958 = vmatprep.subr.mxu0 0.0
    %2959 = vmatpush1.msra.mxu0 0.0
    %2960 = vmatprep.subr.mxu0 0.0
    %2961 = vmatpush1.msra.mxu0 0.0
    %2962 = vmatprep.subr.mxu0 0.0
    %2963 = vmatpush1.msra.mxu0 0.0
    %2964 = vmatprep.subr.mxu0 0.0
    %2965 = vmatpush1.msra.mxu0 0.0
    %2966 = vmatprep.subr.mxu0 0.0
    %2967 = vmatpush1.msra.mxu0 0.0
    %2968 = vmatprep.subr.mxu0 0.0
    %2969 = vmatpush1.msra.mxu0 0.0
    %2970 = vmatprep.subr.mxu0 0.0
    %2971 = vmatpush1.msra.mxu0 0.0
    %2972 = vmatprep.subr.mxu0 0.0
    %2973 = vmatpush1.msra.mxu0 0.0
    %2974 = vmatprep.subr.mxu0 0.0
    %2975 = vmatpush1.msra.mxu0 0.0
    %2976 = vmatprep.mubr.f32.mxu0 0.0
    %2977 = vmatmul.mubr.f32.gmra.mrb[0].mxu0 %v2910
    %v2978 = vpop.f32.mrb[0].mxu0
    %v2979 = vadd.f32 0.0, %v2978
    %v2980 = vpop.f32.mrb[0].mxu0
    %2981 = vdwg.mxu0
    %2982 = vmatprep.subr.mxu0 0.0
    %2983 = vmatpush1.msra.mxu0 %v2614
    %2984 = vmatprep.subr.mxu0 0.0
    %2985 = vmatpush1.msra.mxu0 %v2615
    %2986 = vmatprep.subr.mxu0 0.0
    %2987 = vmatpush1.msra.mxu0 %v2616
    %2988 = vmatprep.subr.mxu0 0.0
    %2989 = vmatpush1.msra.mxu0 %v2617
    %2990 = vmatprep.subr.mxu0 0.0
    %2991 = vmatpush1.msra.mxu0 0.0
    %2992 = vmatprep.subr.mxu0 0.0
    %2993 = vmatpush1.msra.mxu0 0.0
    %2994 = vmatprep.subr.mxu0 0.0
    %2995 = vmatpush1.msra.mxu0 0.0
    %2996 = vmatprep.subr.mxu0 0.0
    %2997 = vmatpush1.msra.mxu0 0.0
    %2998 = vmatprep.subr.mxu0 0.0
    %2999 = vmatpush1.msra.mxu0 0.0
    %3000 = vmatprep.subr.mxu0 0.0
    %3001 = vmatpush1.msra.mxu0 0.0
    %3002 = vmatprep.subr.mxu0 0.0
    %3003 = vmatpush1.msra.mxu0 0.0
    %3004 = vmatprep.subr.mxu0 0.0
    %3005 = vmatpush1.msra.mxu0 0.0
    %3006 = vmatprep.subr.mxu0 0.0
    %3007 = vmatpush1.msra.mxu0 0.0
    %3008 = vmatprep.subr.mxu0 0.0
    %3009 = vmatpush1.msra.mxu0 0.0
    %3010 = vmatprep.subr.mxu0 0.0
    %3011 = vmatpush1.msra.mxu0 0.0
    %3012 = vmatprep.subr.mxu0 0.0
    %3013 = vmatpush1.msra.mxu0 0.0
    %3014 = vmatprep.subr.mxu0 0.0
    %3015 = vmatpush1.msra.mxu0 0.0
    %3016 = vmatprep.subr.mxu0 0.0
    %3017 = vmatpush1.msra.mxu0 0.0
    %3018 = vmatprep.subr.mxu0 0.0
    %3019 = vmatpush1.msra.mxu0 0.0
    %3020 = vmatprep.subr.mxu0 0.0
    %3021 = vmatpush1.msra.mxu0 0.0
    %3022 = vmatprep.subr.mxu0 0.0
    %3023 = vmatpush1.msra.mxu0 0.0
    %3024 = vmatprep.subr.mxu0 0.0
    %3025 = vmatpush1.msra.mxu0 0.0
    %3026 = vmatprep.subr.mxu0 0.0
    %3027 = vmatpush1.msra.mxu0 0.0
    %3028 = vmatprep.subr.mxu0 0.0
    %3029 = vmatpush1.msra.mxu0 0.0
    %3030 = vmatprep.subr.mxu0 0.0
    %3031 = vmatpush1.msra.mxu0 0.0
    %3032 = vmatprep.subr.mxu0 0.0
    %3033 = vmatpush1.msra.mxu0 0.0
    %3034 = vmatprep.subr.mxu0 0.0
    %3035 = vmatpush1.msra.mxu0 0.0
    %3036 = vmatprep.subr.mxu0 0.0
    %3037 = vmatpush1.msra.mxu0 0.0
    %3038 = vmatprep.subr.mxu0 0.0
    %3039 = vmatpush1.msra.mxu0 0.0
    %3040 = vmatprep.subr.mxu0 0.0
    %3041 = vmatpush1.msra.mxu0 0.0
    %3042 = vmatprep.subr.mxu0 0.0
    %3043 = vmatpush1.msra.mxu0 0.0
    %3044 = vmatprep.subr.mxu0 0.0
    %3045 = vmatpush1.msra.mxu0 0.0
    %3046 = vmatprep.mubr.f32.mxu0 0.0
    %3047 = vmatmul.mubr.f32.gmra.mrb[0].mxu0 %v2910
    %v3048 = vpop.f32.mrb[0].mxu0
    %v3049 = vadd.f32 0.0, %v3048
    %v3050 = vpop.f32.mrb[0].mxu0
    %3051 = vdwg.mxu0
    %3052 = vmatprep.subr.mxu0 0.0
    %3053 = vmatpush1.msra.mxu0 %v2618
    %3054 = vmatprep.subr.mxu0 0.0
    %3055 = vmatpush1.msra.mxu0 %v2619
    %3056 = vmatprep.subr.mxu0 0.0
    %3057 = vmatpush1.msra.mxu0 %v2620
    %3058 = vmatprep.subr.mxu0 0.0
    %3059 = vmatpush1.msra.mxu0 %v2621
    %3060 = vmatprep.subr.mxu0 0.0
    %3061 = vmatpush1.msra.mxu0 0.0
    %3062 = vmatprep.subr.mxu0 0.0
    %3063 = vmatpush1.msra.mxu0 0.0
    %3064 = vmatprep.subr.mxu0 0.0
    %3065 = vmatpush1.msra.mxu0 0.0
    %3066 = vmatprep.subr.mxu0 0.0
    %3067 = vmatpush1.msra.mxu0 0.0
    %3068 = vmatprep.subr.mxu0 0.0
    %3069 = vmatpush1.msra.mxu0 0.0
    %3070 = vmatprep.subr.mxu0 0.0
    %3071 = vmatpush1.msra.mxu0 0.0
    %3072 = vmatprep.subr.mxu0 0.0
    %3073 = vmatpush1.msra.mxu0 0.0
    %3074 = vmatprep.subr.mxu0 0.0
    %3075 = vmatpush1.msra.mxu0 0.0
    %3076 = vmatprep.subr.mxu0 0.0
    %3077 = vmatpush1.msra.mxu0 0.0
    %3078 = vmatprep.subr.mxu0 0.0
    %3079 = vmatpush1.msra.mxu0 0.0
    %3080 = vmatprep.subr.mxu0 0.0
    %3081 = vmatpush1.msra.mxu0 0.0
    %3082 = vmatprep.subr.mxu0 0.0
    %3083 = vmatpush1.msra.mxu0 0.0
    %3084 = vmatprep.subr.mxu0 0.0
    %3085 = vmatpush1.msra.mxu0 0.0
    %3086 = vmatprep.subr.mxu0 0.0
    %3087 = vmatpush1.msra.mxu0 0.0
    %3088 = vmatprep.subr.mxu0 0.0
    %3089 = vmatpush1.msra.mxu0 0.0
    %3090 = vmatprep.subr.mxu0 0.0
    %3091 = vmatpush1.msra.mxu0 0.0
    %3092 = vmatprep.subr.mxu0 0.0
    %3093 = vmatpush1.msra.mxu0 0.0
    %3094 = vmatprep.subr.mxu0 0.0
    %3095 = vmatpush1.msra.mxu0 0.0
    %3096 = vmatprep.subr.mxu0 0.0
    %3097 = vmatpush1.msra.mxu0 0.0
    %3098 = vmatprep.subr.mxu0 0.0
    %3099 = vmatpush1.msra.mxu0 0.0
    %3100 = vmatprep.subr.mxu0 0.0
    %3101 = vmatpush1.msra.mxu0 0.0
    %3102 = vmatprep.subr.mxu0 0.0
    %3103 = vmatpush1.msra.mxu0 0.0
    %3104 = vmatprep.subr.mxu0 0.0
    %3105 = vmatpush1.msra.mxu0 0.0
    %3106 = vmatprep.subr.mxu0 0.0
    %3107 = vmatpush1.msra.mxu0 0.0
    %3108 = vmatprep.subr.mxu0 0.0
    %3109 = vmatpush1.msra.mxu0 0.0
    %3110 = vmatprep.subr.mxu0 0.0
    %3111 = vmatpush1.msra.mxu0 0.0
    %3112 = vmatprep.subr.mxu0 0.0
    %3113 = vmatpush1.msra.mxu0 0.0
    %3114 = vmatprep.subr.mxu0 0.0
    %3115 = vmatpush1.msra.mxu0 0.0
    %3116 = vmatprep.mubr.f32.mxu0 0.0
    %3117 = vmatmul.mubr.f32.gmra.mrb[0].mxu0 %v2910
    %v3118 = vpop.f32.mrb[0].mxu0
    %v3119 = vadd.f32 0.0, %v3118
    %v3120 = vpop.f32.mrb[0].mxu0
    %3121 = vdwg.mxu0
    %3122 = vmatprep.subr.mxu0 0.0
    %3123 = vmatpush1.msra.mxu0 %v2622
    %3124 = vmatprep.subr.mxu0 0.0
    %3125 = vmatpush1.msra.mxu0 %v2623
    %3126 = vmatprep.subr.mxu0 0.0
    %3127 = vmatpush1.msra.mxu0 %v2624
    %3128 = vmatprep.subr.mxu0 0.0
    %3129 = vmatpush1.msra.mxu0 %v2625
    %3130 = vmatprep.subr.mxu0 0.0
    %3131 = vmatpush1.msra.mxu0 0.0
    %3132 = vmatprep.subr.mxu0 0.0
    %3133 = vmatpush1.msra.mxu0 0.0
    %3134 = vmatprep.subr.mxu0 0.0
    %3135 = vmatpush1.msra.mxu0 0.0
    %3136 = vmatprep.subr.mxu0 0.0
    %3137 = vmatpush1.msra.mxu0 0.0
    %3138 = vmatprep.subr.mxu0 0.0
    %3139 = vmatpush1.msra.mxu0 0.0
    %3140 = vmatprep.subr.mxu0 0.0
    %3141 = vmatpush1.msra.mxu0 0.0
    %3142 = vmatprep.subr.mxu0 0.0
    %3143 = vmatpush1.msra.mxu0 0.0
    %3144 = vmatprep.subr.mxu0 0.0
    %3145 = vmatpush1.msra.mxu0 0.0
    %3146 = vmatprep.subr.mxu0 0.0
    %3147 = vmatpush1.msra.mxu0 0.0
    %3148 = vmatprep.subr.mxu0 0.0
    %3149 = vmatpush1.msra.mxu0 0.0
    %3150 = vmatprep.subr.mxu0 0.0
    %3151 = vmatpush1.msra.mxu0 0.0
    %3152 = vmatprep.subr.mxu0 0.0
    %3153 = vmatpush1.msra.mxu0 0.0
    %3154 = vmatprep.subr.mxu0 0.0
    %3155 = vmatpush1.msra.mxu0 0.0
    %3156 = vmatprep.subr.mxu0 0.0
    %3157 = vmatpush1.msra.mxu0 0.0
    %3158 = vmatprep.subr.mxu0 0.0
    %3159 = vmatpush1.msra.mxu0 0.0
    %3160 = vmatprep.subr.mxu0 0.0
    %3161 = vmatpush1.msra.mxu0 0.0
    %3162 = vmatprep.subr.mxu0 0.0
    %3163 = vmatpush1.msra.mxu0 0.0
    %3164 = vmatprep.subr.mxu0 0.0
    %3165 = vmatpush1.msra.mxu0 0.0
    %3166 = vmatprep.subr.mxu0 0.0
    %3167 = vmatpush1.msra.mxu0 0.0
    %3168 = vmatprep.subr.mxu0 0.0
    %3169 = vmatpush1.msra.mxu0 0.0
    %3170 = vmatprep.subr.mxu0 0.0
    %3171 = vmatpush1.msra.mxu0 0.0
    %3172 = vmatprep.subr.mxu0 0.0
    %3173 = vmatpush1.msra.mxu0 0.0
    %3174 = vmatprep.subr.mxu0 0.0
    %3175 = vmatpush1.msra.mxu0 0.0
    %3176 = vmatprep.subr.mxu0 0.0
    %3177 = vmatpush1.msra.mxu0 0.0
    %3178 = vmatprep.subr.mxu0 0.0
    %3179 = vmatpush1.msra.mxu0 0.0
    %3180 = vmatprep.subr.mxu0 0.0
    %3181 = vmatpush1.msra.mxu0 0.0
    %3182 = vmatprep.subr.mxu0 0.0
    %3183 = vmatpush1.msra.mxu0 0.0
    %3184 = vmatprep.subr.mxu0 0.0
    %3185 = vmatpush1.msra.mxu0 0.0
    %3186 = vmatprep.mubr.f32.mxu0 0.0
    %3187 = vmatmul.mubr.f32.gmra.mrb[0].mxu0 %v2910
    %v3188 = vpop.f32.mrb[0].mxu0
    %v3189 = vadd.f32 0.0, %v3188
    %v3190 = vpop.f32.mrb[0].mxu0
    %3191 = vdwg.mxu0
    %v3192 = vld [vmem:[%s5] sm:$0xff]
    %v3193 = vld [vmem:[%s5 + $0x8] sm:$0xff]
    %v3194 = vld [vmem:[%s5 + $0x10] sm:$0xff]
    %v3195 = vld [vmem:[%s5 + $0x18] sm:$0xff]
    %v3196 = vld [vmem:[%s5 + $0x20] sm:$0xff]
    %v3197 = vld [vmem:[%s5 + $0x28] sm:$0xff]
    %v3198 = vld [vmem:[%s5 + $0x30] sm:$0xff]
    %v3199 = vld [vmem:[%s5 + $0x38] sm:$0xff]
    %v3200 = vld [vmem:[%s5 + $0x40] sm:$0xff]
    %v3201 = vld [vmem:[%s5 + $0x48] sm:$0xff]
    %v3202 = vld [vmem:[%s5 + $0x50] sm:$0xff]
    %v3203 = vld [vmem:[%s5 + $0x58] sm:$0xff]
    %v3204 = vld [vmem:[%s5 + $0x60] sm:$0xff]
    %v3205 = vld [vmem:[%s5 + $0x68] sm:$0xff]
    %v3206 = vld [vmem:[%s5 + $0x70] sm:$0xff]
    %v3207 = vld [vmem:[%s5 + $0x78] sm:$0xff]
    %v3209 = vsel %vm73, %v2608, 0
    %3211 = vmatprep.subr.mxu0 0.0
    %3212 = vmatpush1.msra.mxu0 %v3192
    %3213 = vmatprep.subr.mxu0 0.0
    %3214 = vmatpush1.msra.mxu0 %v3193
    %3215 = vmatprep.subr.mxu0 0.0
    %3216 = vmatpush1.msra.mxu0 %v3194
    %3217 = vmatprep.subr.mxu0 0.0
    %3218 = vmatpush1.msra.mxu0 %v3195
    %3219 = vmatprep.subr.mxu0 0.0
    %3220 = vmatpush1.msra.mxu0 0.0
    %3221 = vmatprep.subr.mxu0 0.0
    %3222 = vmatpush1.msra.mxu0 0.0
    %3223 = vmatprep.subr.mxu0 0.0
    %3224 = vmatpush1.msra.mxu0 0.0
    %3225 = vmatprep.subr.mxu0 0.0
    %3226 = vmatpush1.msra.mxu0 0.0
    %3227 = vmatprep.subr.mxu0 0.0
    %3228 = vmatpush1.msra.mxu0 0.0
    %3229 = vmatprep.subr.mxu0 0.0
    %3230 = vmatpush1.msra.mxu0 0.0
    %3231 = vmatprep.subr.mxu0 0.0
    %3232 = vmatpush1.msra.mxu0 0.0
    %3233 = vmatprep.subr.mxu0 0.0
    %3234 = vmatpush1.msra.mxu0 0.0
    %3235 = vmatprep.subr.mxu0 0.0
    %3236 = vmatpush1.msra.mxu0 0.0
    %3237 = vmatprep.subr.mxu0 0.0
    %3238 = vmatpush1.msra.mxu0 0.0
    %3239 = vmatprep.subr.mxu0 0.0
    %3240 = vmatpush1.msra.mxu0 0.0
    %3241 = vmatprep.subr.mxu0 0.0
    %3242 = vmatpush1.msra.mxu0 0.0
    %3243 = vmatprep.subr.mxu0 0.0
    %3244 = vmatpush1.msra.mxu0 0.0
    %3245 = vmatprep.subr.mxu0 0.0
    %3246 = vmatpush1.msra.mxu0 0.0
    %3247 = vmatprep.subr.mxu0 0.0
    %3248 = vmatpush1.msra.mxu0 0.0
    %3249 = vmatprep.subr.mxu0 0.0
    %3250 = vmatpush1.msra.mxu0 0.0
    %3251 = vmatprep.subr.mxu0 0.0
    %3252 = vmatpush1.msra.mxu0 0.0
    %3253 = vmatprep.subr.mxu0 0.0
    %3254 = vmatpush1.msra.mxu0 0.0
    %3255 = vmatprep.subr.mxu0 0.0
    %3256 = vmatpush1.msra.mxu0 0.0
    %3257 = vmatprep.subr.mxu0 0.0
    %3258 = vmatpush1.msra.mxu0 0.0
    %3259 = vmatprep.subr.mxu0 0.0
    %3260 = vmatpush1.msra.mxu0 0.0
    %3261 = vmatprep.subr.mxu0 0.0
    %3262 = vmatpush1.msra.mxu0 0.0
    %3263 = vmatprep.subr.mxu0 0.0
    %3264 = vmatpush1.msra.mxu0 0.0
    %3265 = vmatprep.subr.mxu0 0.0
    %3266 = vmatpush1.msra.mxu0 0.0
    %3267 = vmatprep.subr.mxu0 0.0
    %3268 = vmatpush1.msra.mxu0 0.0
    %3269 = vmatprep.subr.mxu0 0.0
    %3270 = vmatpush1.msra.mxu0 0.0
    %3271 = vmatprep.subr.mxu0 0.0
    %3272 = vmatpush1.msra.mxu0 0.0
    %3273 = vmatprep.subr.mxu0 0.0
    %3274 = vmatpush1.msra.mxu0 0.0
    %3275 = vmatprep.mubr.f32.mxu0 0.0
    %3276 = vmatmul.mubr.f32.gmra.mrb[0].mxu0 %v3209
    %v3277 = vpop.f32.mrb[0].mxu0
    %v3278 = vadd.f32 0.0, %v3277
    %v3279 = vpop.f32.mrb[0].mxu0
    %3280 = vdwg.mxu0
    %3281 = vmatprep.subr.mxu0 0.0
    %3282 = vmatpush1.msra.mxu0 %v3196
    %3283 = vmatprep.subr.mxu0 0.0
    %3284 = vmatpush1.msra.mxu0 %v3197
    %3285 = vmatprep.subr.mxu0 0.0
    %3286 = vmatpush1.msra.mxu0 %v3198
    %3287 = vmatprep.subr.mxu0 0.0
    %3288 = vmatpush1.msra.mxu0 %v3199
    %3289 = vmatprep.subr.mxu0 0.0
    %3290 = vmatpush1.msra.mxu0 0.0
    %3291 = vmatprep.subr.mxu0 0.0
    %3292 = vmatpush1.msra.mxu0 0.0
    %3293 = vmatprep.subr.mxu0 0.0
    %3294 = vmatpush1.msra.mxu0 0.0
    %3295 = vmatprep.subr.mxu0 0.0
    %3296 = vmatpush1.msra.mxu0 0.0
    %3297 = vmatprep.subr.mxu0 0.0
    %3298 = vmatpush1.msra.mxu0 0.0
    %3299 = vmatprep.subr.mxu0 0.0
    %3300 = vmatpush1.msra.mxu0 0.0
    %3301 = vmatprep.subr.mxu0 0.0
    %3302 = vmatpush1.msra.mxu0 0.0
    %3303 = vmatprep.subr.mxu0 0.0
    %3304 = vmatpush1.msra.mxu0 0.0
    %3305 = vmatprep.subr.mxu0 0.0
    %3306 = vmatpush1.msra.mxu0 0.0
    %3307 = vmatprep.subr.mxu0 0.0
    %3308 = vmatpush1.msra.mxu0 0.0
    %3309 = vmatprep.subr.mxu0 0.0
    %3310 = vmatpush1.msra.mxu0 0.0
    %3311 = vmatprep.subr.mxu0 0.0
    %3312 = vmatpush1.msra.mxu0 0.0
    %3313 = vmatprep.subr.mxu0 0.0
    %3314 = vmatpush1.msra.mxu0 0.0
    %3315 = vmatprep.subr.mxu0 0.0
    %3316 = vmatpush1.msra.mxu0 0.0
    %3317 = vmatprep.subr.mxu0 0.0
    %3318 = vmatpush1.msra.mxu0 0.0
    %3319 = vmatprep.subr.mxu0 0.0
    %3320 = vmatpush1.msra.mxu0 0.0
    %3321 = vmatprep.subr.mxu0 0.0
    %3322 = vmatpush1.msra.mxu0 0.0
    %3323 = vmatprep.subr.mxu0 0.0
    %3324 = vmatpush1.msra.mxu0 0.0
    %3325 = vmatprep.subr.mxu0 0.0
    %3326 = vmatpush1.msra.mxu0 0.0
    %3327 = vmatprep.subr.mxu0 0.0
    %3328 = vmatpush1.msra.mxu0 0.0
    %3329 = vmatprep.subr.mxu0 0.0
    %3330 = vmatpush1.msra.mxu0 0.0
    %3331 = vmatprep.subr.mxu0 0.0
    %3332 = vmatpush1.msra.mxu0 0.0
    %3333 = vmatprep.subr.mxu0 0.0
    %3334 = vmatpush1.msra.mxu0 0.0
    %3335 = vmatprep.subr.mxu0 0.0
    %3336 = vmatpush1.msra.mxu0 0.0
    %3337 = vmatprep.subr.mxu0 0.0
    %3338 = vmatpush1.msra.mxu0 0.0
    %3339 = vmatprep.subr.mxu0 0.0
    %3340 = vmatpush1.msra.mxu0 0.0
    %3341 = vmatprep.subr.mxu0 0.0
    %3342 = vmatpush1.msra.mxu0 0.0
    %3343 = vmatprep.subr.mxu0 0.0
    %3344 = vmatpush1.msra.mxu0 0.0
    %3345 = vmatprep.mubr.f32.mxu0 0.0
    %3346 = vmatmul.mubr.f32.gmra.mrb[0].mxu0 %v3209
    %v3347 = vpop.f32.mrb[0].mxu0
    %v3348 = vadd.f32 0.0, %v3347
    %v3349 = vpop.f32.mrb[0].mxu0
    %3350 = vdwg.mxu0
    %3351 = vmatprep.subr.mxu0 0.0
    %3352 = vmatpush1.msra.mxu0 %v3200
    %3353 = vmatprep.subr.mxu0 0.0
    %3354 = vmatpush1.msra.mxu0 %v3201
    %3355 = vmatprep.subr.mxu0 0.0
    %3356 = vmatpush1.msra.mxu0 %v3202
    %3357 = vmatprep.subr.mxu0 0.0
    %3358 = vmatpush1.msra.mxu0 %v3203
    %3359 = vmatprep.subr.mxu0 0.0
    %3360 = vmatpush1.msra.mxu0 0.0
    %3361 = vmatprep.subr.mxu0 0.0
    %3362 = vmatpush1.msra.mxu0 0.0
    %3363 = vmatprep.subr.mxu0 0.0
    %3364 = vmatpush1.msra.mxu0 0.0
    %3365 = vmatprep.subr.mxu0 0.0
    %3366 = vmatpush1.msra.mxu0 0.0
    %3367 = vmatprep.subr.mxu0 0.0
    %3368 = vmatpush1.msra.mxu0 0.0
    %3369 = vmatprep.subr.mxu0 0.0
    %3370 = vmatpush1.msra.mxu0 0.0
    %3371 = vmatprep.subr.mxu0 0.0
    %3372 = vmatpush1.msra.mxu0 0.0
    %3373 = vmatprep.subr.mxu0 0.0
    %3374 = vmatpush1.msra.mxu0 0.0
    %3375 = vmatprep.subr.mxu0 0.0
    %3376 = vmatpush1.msra.mxu0 0.0
    %3377 = vmatprep.subr.mxu0 0.0
    %3378 = vmatpush1.msra.mxu0 0.0
    %3379 = vmatprep.subr.mxu0 0.0
    %3380 = vmatpush1.msra.mxu0 0.0
    %3381 = vmatprep.subr.mxu0 0.0
    %3382 = vmatpush1.msra.mxu0 0.0
    %3383 = vmatprep.subr.mxu0 0.0
    %3384 = vmatpush1.msra.mxu0 0.0
    %3385 = vmatprep.subr.mxu0 0.0
    %3386 = vmatpush1.msra.mxu0 0.0
    %3387 = vmatprep.subr.mxu0 0.0
    %3388 = vmatpush1.msra.mxu0 0.0
    %3389 = vmatprep.subr.mxu0 0.0
    %3390 = vmatpush1.msra.mxu0 0.0
    %3391 = vmatprep.subr.mxu0 0.0
    %3392 = vmatpush1.msra.mxu0 0.0
    %3393 = vmatprep.subr.mxu0 0.0
    %3394 = vmatpush1.msra.mxu0 0.0
    %3395 = vmatprep.subr.mxu0 0.0
    %3396 = vmatpush1.msra.mxu0 0.0
    %3397 = vmatprep.subr.mxu0 0.0
    %3398 = vmatpush1.msra.mxu0 0.0
    %3399 = vmatprep.subr.mxu0 0.0
    %3400 = vmatpush1.msra.mxu0 0.0
    %3401 = vmatprep.subr.mxu0 0.0
    %3402 = vmatpush1.msra.mxu0 0.0
    %3403 = vmatprep.subr.mxu0 0.0
    %3404 = vmatpush1.msra.mxu0 0.0
    %3405 = vmatprep.subr.mxu0 0.0
    %3406 = vmatpush1.msra.mxu0 0.0
    %3407 = vmatprep.subr.mxu0 0.0
    %3408 = vmatpush1.msra.mxu0 0.0
    %3409 = vmatprep.subr.mxu0 0.0
    %3410 = vmatpush1.msra.mxu0 0.0
    %3411 = vmatprep.subr.mxu0 0.0
    %3412 = vmatpush1.msra.mxu0 0.0
    %3413 = vmatprep.subr.mxu0 0.0
    %3414 = vmatpush1.msra.mxu0 0.0
    %3415 = vmatprep.mubr.f32.mxu0 0.0
    %3416 = vmatmul.mubr.f32.gmra.mrb[0].mxu0 %v3209
    %v3417 = vpop.f32.mrb[0].mxu0
    %v3418 = vadd.f32 0.0, %v3417
    %v3419 = vpop.f32.mrb[0].mxu0
    %3420 = vdwg.mxu0
    %3421 = vmatprep.subr.mxu0 0.0
    %3422 = vmatpush1.msra.mxu0 %v3204
    %3423 = vmatprep.subr.mxu0 0.0
    %3424 = vmatpush1.msra.mxu0 %v3205
    %3425 = vmatprep.subr.mxu0 0.0
    %3426 = vmatpush1.msra.mxu0 %v3206
    %3427 = vmatprep.subr.mxu0 0.0
    %3428 = vmatpush1.msra.mxu0 %v3207
    %3429 = vmatprep.subr.mxu0 0.0
    %3430 = vmatpush1.msra.mxu0 0.0
    %3431 = vmatprep.subr.mxu0 0.0
    %3432 = vmatpush1.msra.mxu0 0.0
    %3433 = vmatprep.subr.mxu0 0.0
    %3434 = vmatpush1.msra.mxu0 0.0
    %3435 = vmatprep.subr.mxu0 0.0
    %3436 = vmatpush1.msra.mxu0 0.0
    %3437 = vmatprep.subr.mxu0 0.0
    %3438 = vmatpush1.msra.mxu0 0.0
    %3439 = vmatprep.subr.mxu0 0.0
    %3440 = vmatpush1.msra.mxu0 0.0
    %3441 = vmatprep.subr.mxu0 0.0
    %3442 = vmatpush1.msra.mxu0 0.0
    %3443 = vmatprep.subr.mxu0 0.0
    %3444 = vmatpush1.msra.mxu0 0.0
    %3445 = vmatprep.subr.mxu0 0.0
    %3446 = vmatpush1.msra.mxu0 0.0
    %3447 = vmatprep.subr.mxu0 0.0
    %3448 = vmatpush1.msra.mxu0 0.0
    %3449 = vmatprep.subr.mxu0 0.0
    %3450 = vmatpush1.msra.mxu0 0.0
    %3451 = vmatprep.subr.mxu0 0.0
    %3452 = vmatpush1.msra.mxu0 0.0
    %3453 = vmatprep.subr.mxu0 0.0
    %3454 = vmatpush1.msra.mxu0 0.0
    %3455 = vmatprep.subr.mxu0 0.0
    %3456 = vmatpush1.msra.mxu0 0.0
    %3457 = vmatprep.subr.mxu0 0.0
    %3458 = vmatpush1.msra.mxu0 0.0
    %3459 = vmatprep.subr.mxu0 0.0
    %3460 = vmatpush1.msra.mxu0 0.0
    %3461 = vmatprep.subr.mxu0 0.0
    %3462 = vmatpush1.msra.mxu0 0.0
    %3463 = vmatprep.subr.mxu0 0.0
    %3464 = vmatpush1.msra.mxu0 0.0
    %3465 = vmatprep.subr.mxu0 0.0
    %3466 = vmatpush1.msra.mxu0 0.0
    %3467 = vmatprep.subr.mxu0 0.0
    %3468 = vmatpush1.msra.mxu0 0.0
    %3469 = vmatprep.subr.mxu0 0.0
    %3470 = vmatpush1.msra.mxu0 0.0
    %3471 = vmatprep.subr.mxu0 0.0
    %3472 = vmatpush1.msra.mxu0 0.0
    %3473 = vmatprep.subr.mxu0 0.0
    %3474 = vmatpush1.msra.mxu0 0.0
    %3475 = vmatprep.subr.mxu0 0.0
    %3476 = vmatpush1.msra.mxu0 0.0
    %3477 = vmatprep.subr.mxu0 0.0
    %3478 = vmatpush1.msra.mxu0 0.0
    %3479 = vmatprep.subr.mxu0 0.0
    %3480 = vmatpush1.msra.mxu0 0.0
    %3481 = vmatprep.subr.mxu0 0.0
    %3482 = vmatpush1.msra.mxu0 0.0
    %3483 = vmatprep.subr.mxu0 0.0
    %3484 = vmatpush1.msra.mxu0 0.0
    %3485 = vmatprep.mubr.f32.mxu0 0.0
    %3486 = vmatmul.mubr.f32.gmra.mrb[0].mxu0 %v3209
    %v3487 = vpop.f32.mrb[0].mxu0
    %v3488 = vadd.f32 0.0, %v3487
    %v3489 = vpop.f32.mrb[0].mxu0
    %3490 = vdwg.mxu0
    %v3492 = vsel %vm73, %v2609, 0
    %3494 = vmatprep.subr.mxu0 0.0
    %3495 = vmatpush1.msra.mxu0 %v3192
    %3496 = vmatprep.subr.mxu0 0.0
    %3497 = vmatpush1.msra.mxu0 %v3193
    %3498 = vmatprep.subr.mxu0 0.0
    %3499 = vmatpush1.msra.mxu0 %v3194
    %3500 = vmatprep.subr.mxu0 0.0
    %3501 = vmatpush1.msra.mxu0 %v3195
    %3502 = vmatprep.subr.mxu0 0.0
    %3503 = vmatpush1.msra.mxu0 0.0
    %3504 = vmatprep.subr.mxu0 0.0
    %3505 = vmatpush1.msra.mxu0 0.0
    %3506 = vmatprep.subr.mxu0 0.0
    %3507 = vmatpush1.msra.mxu0 0.0
    %3508 = vmatprep.subr.mxu0 0.0
    %3509 = vmatpush1.msra.mxu0 0.0
    %3510 = vmatprep.subr.mxu0 0.0
    %3511 = vmatpush1.msra.mxu0 0.0
    %3512 = vmatprep.subr.mxu0 0.0
    %3513 = vmatpush1.msra.mxu0 0.0
    %3514 = vmatprep.subr.mxu0 0.0
    %3515 = vmatpush1.msra.mxu0 0.0
    %3516 = vmatprep.subr.mxu0 0.0
    %3517 = vmatpush1.msra.mxu0 0.0
    %3518 = vmatprep.subr.mxu0 0.0
    %3519 = vmatpush1.msra.mxu0 0.0
    %3520 = vmatprep.subr.mxu0 0.0
    %3521 = vmatpush1.msra.mxu0 0.0
    %3522 = vmatprep.subr.mxu0 0.0
    %3523 = vmatpush1.msra.mxu0 0.0
    %3524 = vmatprep.subr.mxu0 0.0
    %3525 = vmatpush1.msra.mxu0 0.0
    %3526 = vmatprep.subr.mxu0 0.0
    %3527 = vmatpush1.msra.mxu0 0.0
    %3528 = vmatprep.subr.mxu0 0.0
    %3529 = vmatpush1.msra.mxu0 0.0
    %3530 = vmatprep.subr.mxu0 0.0
    %3531 = vmatpush1.msra.mxu0 0.0
    %3532 = vmatprep.subr.mxu0 0.0
    %3533 = vmatpush1.msra.mxu0 0.0
    %3534 = vmatprep.subr.mxu0 0.0
    %3535 = vmatpush1.msra.mxu0 0.0
    %3536 = vmatprep.subr.mxu0 0.0
    %3537 = vmatpush1.msra.mxu0 0.0
    %3538 = vmatprep.subr.mxu0 0.0
    %3539 = vmatpush1.msra.mxu0 0.0
    %3540 = vmatprep.subr.mxu0 0.0
    %3541 = vmatpush1.msra.mxu0 0.0
    %3542 = vmatprep.subr.mxu0 0.0
    %3543 = vmatpush1.msra.mxu0 0.0
    %3544 = vmatprep.subr.mxu0 0.0
    %3545 = vmatpush1.msra.mxu0 0.0
    %3546 = vmatprep.subr.mxu0 0.0
    %3547 = vmatpush1.msra.mxu0 0.0
    %3548 = vmatprep.subr.mxu0 0.0
    %3549 = vmatpush1.msra.mxu0 0.0
    %3550 = vmatprep.subr.mxu0 0.0
    %3551 = vmatpush1.msra.mxu0 0.0
    %3552 = vmatprep.subr.mxu0 0.0
    %3553 = vmatpush1.msra.mxu0 0.0
    %3554 = vmatprep.subr.mxu0 0.0
    %3555 = vmatpush1.msra.mxu0 0.0
    %3556 = vmatprep.subr.mxu0 0.0
    %3557 = vmatpush1.msra.mxu0 0.0
    %3558 = vmatprep.mubr.f32.mxu0 0.0
    %3559 = vmatmul.mubr.f32.gmra.mrb[0].mxu0 %v3492
    %v3560 = vpop.f32.mrb[0].mxu0
    %v3561 = vadd.f32 0.0, %v3560
    %v3562 = vpop.f32.mrb[0].mxu0
    %3563 = vdwg.mxu0
    %3564 = vmatprep.subr.mxu0 0.0
    %3565 = vmatpush1.msra.mxu0 %v3196
    %3566 = vmatprep.subr.mxu0 0.0
    %3567 = vmatpush1.msra.mxu0 %v3197
    %3568 = vmatprep.subr.mxu0 0.0
    %3569 = vmatpush1.msra.mxu0 %v3198
    %3570 = vmatprep.subr.mxu0 0.0
    %3571 = vmatpush1.msra.mxu0 %v3199
    %3572 = vmatprep.subr.mxu0 0.0
    %3573 = vmatpush1.msra.mxu0 0.0
    %3574 = vmatprep.subr.mxu0 0.0
    %3575 = vmatpush1.msra.mxu0 0.0
    %3576 = vmatprep.subr.mxu0 0.0
    %3577 = vmatpush1.msra.mxu0 0.0
    %3578 = vmatprep.subr.mxu0 0.0
    %3579 = vmatpush1.msra.mxu0 0.0
    %3580 = vmatprep.subr.mxu0 0.0
    %3581 = vmatpush1.msra.mxu0 0.0
    %3582 = vmatprep.subr.mxu0 0.0
    %3583 = vmatpush1.msra.mxu0 0.0
    %3584 = vmatprep.subr.mxu0 0.0
    %3585 = vmatpush1.msra.mxu0 0.0
    %3586 = vmatprep.subr.mxu0 0.0
    %3587 = vmatpush1.msra.mxu0 0.0
    %3588 = vmatprep.subr.mxu0 0.0
    %3589 = vmatpush1.msra.mxu0 0.0
    %3590 = vmatprep.subr.mxu0 0.0
    %3591 = vmatpush1.msra.mxu0 0.0
    %3592 = vmatprep.subr.mxu0 0.0
    %3593 = vmatpush1.msra.mxu0 0.0
    %3594 = vmatprep.subr.mxu0 0.0
    %3595 = vmatpush1.msra.mxu0 0.0
    %3596 = vmatprep.subr.mxu0 0.0
    %3597 = vmatpush1.msra.mxu0 0.0
    %3598 = vmatprep.subr.mxu0 0.0
    %3599 = vmatpush1.msra.mxu0 0.0
    %3600 = vmatprep.subr.mxu0 0.0
    %3601 = vmatpush1.msra.mxu0 0.0
    %3602 = vmatprep.subr.mxu0 0.0
    %3603 = vmatpush1.msra.mxu0 0.0
    %3604 = vmatprep.subr.mxu0 0.0
    %3605 = vmatpush1.msra.mxu0 0.0
    %3606 = vmatprep.subr.mxu0 0.0
    %3607 = vmatpush1.msra.mxu0 0.0
    %3608 = vmatprep.subr.mxu0 0.0
    %3609 = vmatpush1.msra.mxu0 0.0
    %3610 = vmatprep.subr.mxu0 0.0
    %3611 = vmatpush1.msra.mxu0 0.0
    %3612 = vmatprep.subr.mxu0 0.0
    %3613 = vmatpush1.msra.mxu0 0.0
    %3614 = vmatprep.subr.mxu0 0.0
    %3615 = vmatpush1.msra.mxu0 0.0
    %3616 = vmatprep.subr.mxu0 0.0
    %3617 = vmatpush1.msra.mxu0 0.0
    %3618 = vmatprep.subr.mxu0 0.0
    %3619 = vmatpush1.msra.mxu0 0.0
    %3620 = vmatprep.subr.mxu0 0.0
    %3621 = vmatpush1.msra.mxu0 0.0
    %3622 = vmatprep.subr.mxu0 0.0
    %3623 = vmatpush1.msra.mxu0 0.0
    %3624 = vmatprep.subr.mxu0 0.0
    %3625 = vmatpush1.msra.mxu0 0.0
    %3626 = vmatprep.subr.mxu0 0.0
    %3627 = vmatpush1.msra.mxu0 0.0
    %3628 = vmatprep.mubr.f32.mxu0 0.0
    %3629 = vmatmul.mubr.f32.gmra.mrb[0].mxu0 %v3492
    %v3630 = vpop.f32.mrb[0].mxu0
    %v3631 = vadd.f32 0.0, %v3630
    %v3632 = vpop.f32.mrb[0].mxu0
    %3633 = vdwg.mxu0
    %3634 = vmatprep.subr.mxu0 0.0
    %3635 = vmatpush1.msra.mxu0 %v3200
    %3636 = vmatprep.subr.mxu0 0.0
    %3637 = vmatpush1.msra.mxu0 %v3201
    %3638 = vmatprep.subr.mxu0 0.0
    %3639 = vmatpush1.msra.mxu0 %v3202
    %3640 = vmatprep.subr.mxu0 0.0
    %3641 = vmatpush1.msra.mxu0 %v3203
    %3642 = vmatprep.subr.mxu0 0.0
    %3643 = vmatpush1.msra.mxu0 0.0
    %3644 = vmatprep.subr.mxu0 0.0
    %3645 = vmatpush1.msra.mxu0 0.0
    %3646 = vmatprep.subr.mxu0 0.0
    %3647 = vmatpush1.msra.mxu0 0.0
    %3648 = vmatprep.subr.mxu0 0.0
    %3649 = vmatpush1.msra.mxu0 0.0
    %3650 = vmatprep.subr.mxu0 0.0
    %3651 = vmatpush1.msra.mxu0 0.0
    %3652 = vmatprep.subr.mxu0 0.0
    %3653 = vmatpush1.msra.mxu0 0.0
    %3654 = vmatprep.subr.mxu0 0.0
    %3655 = vmatpush1.msra.mxu0 0.0
    %3656 = vmatprep.subr.mxu0 0.0
    %3657 = vmatpush1.msra.mxu0 0.0
    %3658 = vmatprep.subr.mxu0 0.0
    %3659 = vmatpush1.msra.mxu0 0.0
    %3660 = vmatprep.subr.mxu0 0.0
    %3661 = vmatpush1.msra.mxu0 0.0
    %3662 = vmatprep.subr.mxu0 0.0
    %3663 = vmatpush1.msra.mxu0 0.0
    %3664 = vmatprep.subr.mxu0 0.0
    %3665 = vmatpush1.msra.mxu0 0.0
    %3666 = vmatprep.subr.mxu0 0.0
    %3667 = vmatpush1.msra.mxu0 0.0
    %3668 = vmatprep.subr.mxu0 0.0
    %3669 = vmatpush1.msra.mxu0 0.0
    %3670 = vmatprep.subr.mxu0 0.0
    %3671 = vmatpush1.msra.mxu0 0.0
    %3672 = vmatprep.subr.mxu0 0.0
    %3673 = vmatpush1.msra.mxu0 0.0
    %3674 = vmatprep.subr.mxu0 0.0
    %3675 = vmatpush1.msra.mxu0 0.0
    %3676 = vmatprep.subr.mxu0 0.0
    %3677 = vmatpush1.msra.mxu0 0.0
    %3678 = vmatprep.subr.mxu0 0.0
    %3679 = vmatpush1.msra.mxu0 0.0
    %3680 = vmatprep.subr.mxu0 0.0
    %3681 = vmatpush1.msra.mxu0 0.0
    %3682 = vmatprep.subr.mxu0 0.0
    %3683 = vmatpush1.msra.mxu0 0.0
    %3684 = vmatprep.subr.mxu0 0.0
    %3685 = vmatpush1.msra.mxu0 0.0
    %3686 = vmatprep.subr.mxu0 0.0
    %3687 = vmatpush1.msra.mxu0 0.0
    %3688 = vmatprep.subr.mxu0 0.0
    %3689 = vmatpush1.msra.mxu0 0.0
    %3690 = vmatprep.subr.mxu0 0.0
    %3691 = vmatpush1.msra.mxu0 0.0
    %3692 = vmatprep.subr.mxu0 0.0
    %3693 = vmatpush1.msra.mxu0 0.0
    %3694 = vmatprep.subr.mxu0 0.0
    %3695 = vmatpush1.msra.mxu0 0.0
    %3696 = vmatprep.subr.mxu0 0.0
    %3697 = vmatpush1.msra.mxu0 0.0
    %3698 = vmatprep.mubr.f32.mxu0 0.0
    %3699 = vmatmul.mubr.f32.gmra.mrb[0].mxu0 %v3492
    %v3700 = vpop.f32.mrb[0].mxu0
    %v3701 = vadd.f32 0.0, %v3700
    %v3702 = vpop.f32.mrb[0].mxu0
    %3703 = vdwg.mxu0
    %3704 = vmatprep.subr.mxu0 0.0
    %3705 = vmatpush1.msra.mxu0 %v3204
    %3706 = vmatprep.subr.mxu0 0.0
    %3707 = vmatpush1.msra.mxu0 %v3205
    %3708 = vmatprep.subr.mxu0 0.0
    %3709 = vmatpush1.msra.mxu0 %v3206
    %3710 = vmatprep.subr.mxu0 0.0
    %3711 = vmatpush1.msra.mxu0 %v3207
    %3712 = vmatprep.subr.mxu0 0.0
    %3713 = vmatpush1.msra.mxu0 0.0
    %3714 = vmatprep.subr.mxu0 0.0
    %3715 = vmatpush1.msra.mxu0 0.0
    %3716 = vmatprep.subr.mxu0 0.0
    %3717 = vmatpush1.msra.mxu0 0.0
    %3718 = vmatprep.subr.mxu0 0.0
    %3719 = vmatpush1.msra.mxu0 0.0
    %3720 = vmatprep.subr.mxu0 0.0
    %3721 = vmatpush1.msra.mxu0 0.0
    %3722 = vmatprep.subr.mxu0 0.0
    %3723 = vmatpush1.msra.mxu0 0.0
    %3724 = vmatprep.subr.mxu0 0.0
    %3725 = vmatpush1.msra.mxu0 0.0
    %3726 = vmatprep.subr.mxu0 0.0
    %3727 = vmatpush1.msra.mxu0 0.0
    %3728 = vmatprep.subr.mxu0 0.0
    %3729 = vmatpush1.msra.mxu0 0.0
    %3730 = vmatprep.subr.mxu0 0.0
    %3731 = vmatpush1.msra.mxu0 0.0
    %3732 = vmatprep.subr.mxu0 0.0
    %3733 = vmatpush1.msra.mxu0 0.0
    %3734 = vmatprep.subr.mxu0 0.0
    %3735 = vmatpush1.msra.mxu0 0.0
    %3736 = vmatprep.subr.mxu0 0.0
    %3737 = vmatpush1.msra.mxu0 0.0
    %3738 = vmatprep.subr.mxu0 0.0
    %3739 = vmatpush1.msra.mxu0 0.0
    %3740 = vmatprep.subr.mxu0 0.0
    %3741 = vmatpush1.msra.mxu0 0.0
    %3742 = vmatprep.subr.mxu0 0.0
    %3743 = vmatpush1.msra.mxu0 0.0
    %3744 = vmatprep.subr.mxu0 0.0
    %3745 = vmatpush1.msra.mxu0 0.0
    %3746 = vmatprep.subr.mxu0 0.0
    %3747 = vmatpush1.msra.mxu0 0.0
    %3748 = vmatprep.subr.mxu0 0.0
    %3749 = vmatpush1.msra.mxu0 0.0
    %3750 = vmatprep.subr.mxu0 0.0
    %3751 = vmatpush1.msra.mxu0 0.0
    %3752 = vmatprep.subr.mxu0 0.0
    %3753 = vmatpush1.msra.mxu0 0.0
    %3754 = vmatprep.subr.mxu0 0.0
    %3755 = vmatpush1.msra.mxu0 0.0
    %3756 = vmatprep.subr.mxu0 0.0
    %3757 = vmatpush1.msra.mxu0 0.0
    %3758 = vmatprep.subr.mxu0 0.0
    %3759 = vmatpush1.msra.mxu0 0.0
    %3760 = vmatprep.subr.mxu0 0.0
    %3761 = vmatpush1.msra.mxu0 0.0
    %3762 = vmatprep.subr.mxu0 0.0
    %3763 = vmatpush1.msra.mxu0 0.0
    %3764 = vmatprep.subr.mxu0 0.0
    %3765 = vmatpush1.msra.mxu0 0.0
    %3766 = vmatprep.subr.mxu0 0.0
    %3767 = vmatpush1.msra.mxu0 0.0
    %3768 = vmatprep.mubr.f32.mxu0 0.0
    %3769 = vmatmul.mubr.f32.gmra.mrb[0].mxu0 %v3492
    %v3770 = vpop.f32.mrb[0].mxu0
    %v3771 = vadd.f32 0.0, %v3770
    %v3772 = vpop.f32.mrb[0].mxu0
    %3773 = vdwg.mxu0
    %v3774 = vld [vmem:[%s7] sm:$0xff]
    %v3775 = vld [vmem:[%s7 + $0x8] sm:$0xff]
    %v3776 = vld [vmem:[%s7 + $0x10] sm:$0xff]
    %v3777 = vld [vmem:[%s7 + $0x18] sm:$0xff]
    %v3779 = vsel %vm647, %v3278, 0
    %v3782 = vsel %vm647, %v2696, 0
    %3784 = vmatprep.subr.mxu0 0.0
    %3785 = vmatpush1.xpose.msra.mxu0 %v3782
    %3786 = vmatprep.subr.mxu0 0.0
    %3787 = vmatpush1.xpose.msra.mxu0 0.0
    %3788 = vmatprep.subr.mxu0 0.0
    %3789 = vmatpush1.xpose.msra.mxu0 0.0
    %3790 = vmatprep.subr.mxu0 0.0
    %3791 = vmatpush1.xpose.msra.mxu0 0.0
    %3792 = vmatprep.subr.mxu0 0.0
    %3793 = vmatpush1.xpose.msra.mxu0 0.0
    %3794 = vmatprep.subr.mxu0 0.0
    %3795 = vmatpush1.xpose.msra.mxu0 0.0
    %3796 = vmatprep.subr.mxu0 0.0
    %3797 = vmatpush1.xpose.msra.mxu0 0.0
    %3798 = vmatprep.subr.mxu0 0.0
    %3799 = vmatpush1.xpose.msra.mxu0 0.0
    %3800 = vmatprep.subr.mxu0 0.0
    %3801 = vmatpush1.xpose.msra.mxu0 0.0
    %3802 = vmatprep.subr.mxu0 0.0
    %3803 = vmatpush1.xpose.msra.mxu0 0.0
    %3804 = vmatprep.subr.mxu0 0.0
    %3805 = vmatpush1.xpose.msra.mxu0 0.0
    %3806 = vmatprep.subr.mxu0 0.0
    %3807 = vmatpush1.xpose.msra.mxu0 0.0
    %3808 = vmatprep.subr.mxu0 0.0
    %3809 = vmatpush1.xpose.msra.mxu0 0.0
    %3810 = vmatprep.subr.mxu0 0.0
    %3811 = vmatpush1.xpose.msra.mxu0 0.0
    %3812 = vmatprep.subr.mxu0 0.0
    %3813 = vmatpush1.xpose.msra.mxu0 0.0
    %3814 = vmatprep.subr.mxu0 0.0
    %3815 = vmatpush1.xpose.msra.mxu0 0.0
    %3816 = vmatprep.subr.mxu0 0.0
    %3817 = vmatpush1.xpose.msra.mxu0 0.0
    %3818 = vmatprep.subr.mxu0 0.0
    %3819 = vmatpush1.xpose.msra.mxu0 0.0
    %3820 = vmatprep.subr.mxu0 0.0
    %3821 = vmatpush1.xpose.msra.mxu0 0.0
    %3822 = vmatprep.subr.mxu0 0.0
    %3823 = vmatpush1.xpose.msra.mxu0 0.0
    %3824 = vmatprep.subr.mxu0 0.0
    %3825 = vmatpush1.xpose.msra.mxu0 0.0
    %3826 = vmatprep.subr.mxu0 0.0
    %3827 = vmatpush1.xpose.msra.mxu0 0.0
    %3828 = vmatprep.subr.mxu0 0.0
    %3829 = vmatpush1.xpose.msra.mxu0 0.0
    %3830 = vmatprep.subr.mxu0 0.0
    %3831 = vmatpush1.xpose.msra.mxu0 0.0
    %3832 = vmatprep.subr.mxu0 0.0
    %3833 = vmatpush1.xpose.msra.mxu0 0.0
    %3834 = vmatprep.subr.mxu0 0.0
    %3835 = vmatpush1.xpose.msra.mxu0 0.0
    %3836 = vmatprep.subr.mxu0 0.0
    %3837 = vmatpush1.xpose.msra.mxu0 0.0
    %3838 = vmatprep.subr.mxu0 0.0
    %3839 = vmatpush1.xpose.msra.mxu0 0.0
    %3840 = vmatprep.subr.mxu0 0.0
    %3841 = vmatpush1.xpose.msra.mxu0 0.0
    %3842 = vmatprep.subr.mxu0 0.0
    %3843 = vmatpush1.xpose.msra.mxu0 0.0
    %3844 = vmatprep.subr.mxu0 0.0
    %3845 = vmatpush1.xpose.msra.mxu0 0.0
    %3846 = vmatprep.subr.mxu0 0.0
    %3847 = vmatpush1.xpose.msra.mxu0 0.0
    %3848 = vmatprep.mubr.f32.mxu0 0.0
    %3849 = vmatmul.mubr.f32.gmra.mrb[0].mxu0 %v3779
    %v3850 = vpop.f32.mrb[0].mxu0
    %v3851 = vadd.f32 0.0, %v3850
    %v3852 = vpop.f32.mrb[0].mxu0
    %3853 = vdwg.mxu0
    %v3855 = vsel %vm647, %v3348, 0
    %v3858 = vsel %vm647, %v2766, 0
    %3860 = vmatprep.subr.mxu0 0.0
    %3861 = vmatpush1.xpose.msra.mxu0 %v3858
    %3862 = vmatprep.subr.mxu0 0.0
    %3863 = vmatpush1.xpose.msra.mxu0 0.0
    %3864 = vmatprep.subr.mxu0 0.0
    %3865 = vmatpush1.xpose.msra.mxu0 0.0
    %3866 = vmatprep.subr.mxu0 0.0
    %3867 = vmatpush1.xpose.msra.mxu0 0.0
    %3868 = vmatprep.subr.mxu0 0.0
    %3869 = vmatpush1.xpose.msra.mxu0 0.0
    %3870 = vmatprep.subr.mxu0 0.0
    %3871 = vmatpush1.xpose.msra.mxu0 0.0
    %3872 = vmatprep.subr.mxu0 0.0
    %3873 = vmatpush1.xpose.msra.mxu0 0.0
    %3874 = vmatprep.subr.mxu0 0.0
    %3875 = vmatpush1.xpose.msra.mxu0 0.0
    %3876 = vmatprep.subr.mxu0 0.0
    %3877 = vmatpush1.xpose.msra.mxu0 0.0
    %3878 = vmatprep.subr.mxu0 0.0
    %3879 = vmatpush1.xpose.msra.mxu0 0.0
    %3880 = vmatprep.subr.mxu0 0.0
    %3881 = vmatpush1.xpose.msra.mxu0 0.0
    %3882 = vmatprep.subr.mxu0 0.0
    %3883 = vmatpush1.xpose.msra.mxu0 0.0
    %3884 = vmatprep.subr.mxu0 0.0
    %3885 = vmatpush1.xpose.msra.mxu0 0.0
    %3886 = vmatprep.subr.mxu0 0.0
    %3887 = vmatpush1.xpose.msra.mxu0 0.0
    %3888 = vmatprep.subr.mxu0 0.0
    %3889 = vmatpush1.xpose.msra.mxu0 0.0
    %3890 = vmatprep.subr.mxu0 0.0
    %3891 = vmatpush1.xpose.msra.mxu0 0.0
    %3892 = vmatprep.subr.mxu0 0.0
    %3893 = vmatpush1.xpose.msra.mxu0 0.0
    %3894 = vmatprep.subr.mxu0 0.0
    %3895 = vmatpush1.xpose.msra.mxu0 0.0
    %3896 = vmatprep.subr.mxu0 0.0
    %3897 = vmatpush1.xpose.msra.mxu0 0.0
    %3898 = vmatprep.subr.mxu0 0.0
    %3899 = vmatpush1.xpose.msra.mxu0 0.0
    %3900 = vmatprep.subr.mxu0 0.0
    %3901 = vmatpush1.xpose.msra.mxu0 0.0
    %3902 = vmatprep.subr.mxu0 0.0
    %3903 = vmatpush1.xpose.msra.mxu0 0.0
    %3904 = vmatprep.subr.mxu0 0.0
    %3905 = vmatpush1.xpose.msra.mxu0 0.0
    %3906 = vmatprep.subr.mxu0 0.0
    %3907 = vmatpush1.xpose.msra.mxu0 0.0
    %3908 = vmatprep.subr.mxu0 0.0
    %3909 = vmatpush1.xpose.msra.mxu0 0.0
    %3910 = vmatprep.subr.mxu0 0.0
    %3911 = vmatpush1.xpose.msra.mxu0 0.0
    %3912 = vmatprep.subr.mxu0 0.0
    %3913 = vmatpush1.xpose.msra.mxu0 0.0
    %3914 = vmatprep.subr.mxu0 0.0
    %3915 = vmatpush1.xpose.msra.mxu0 0.0
    %3916 = vmatprep.subr.mxu0 0.0
    %3917 = vmatpush1.xpose.msra.mxu0 0.0
    %3918 = vmatprep.subr.mxu0 0.0
    %3919 = vmatpush1.xpose.msra.mxu0 0.0
    %3920 = vmatprep.subr.mxu0 0.0
    %3921 = vmatpush1.xpose.msra.mxu0 0.0
    %3922 = vmatprep.subr.mxu0 0.0
    %3923 = vmatpush1.xpose.msra.mxu0 0.0
    %3924 = vmatprep.mubr.f32.mxu0 0.0
    %3925 = vmatmul.mubr.f32.gmra.mrb[0].mxu0 %v3855
    %v3926 = vpop.f32.mrb[0].mxu0
    %v3927 = vadd.f32 0.0, %v3926
    %v3928 = vpop.f32.mrb[0].mxu0
    %3929 = vdwg.mxu0
    %v3931 = vsel %vm647, %v3418, 0
    %v3934 = vsel %vm647, %v2836, 0
    %3936 = vmatprep.subr.mxu0 0.0
    %3937 = vmatpush1.xpose.msra.mxu0 %v3934
    %3938 = vmatprep.subr.mxu0 0.0
    %3939 = vmatpush1.xpose.msra.mxu0 0.0
    %3940 = vmatprep.subr.mxu0 0.0
    %3941 = vmatpush1.xpose.msra.mxu0 0.0
    %3942 = vmatprep.subr.mxu0 0.0
    %3943 = vmatpush1.xpose.msra.mxu0 0.0
    %3944 = vmatprep.subr.mxu0 0.0
    %3945 = vmatpush1.xpose.msra.mxu0 0.0
    %3946 = vmatprep.subr.mxu0 0.0
    %3947 = vmatpush1.xpose.msra.mxu0 0.0
    %3948 = vmatprep.subr.mxu0 0.0
    %3949 = vmatpush1.xpose.msra.mxu0 0.0
    %3950 = vmatprep.subr.mxu0 0.0
    %3951 = vmatpush1.xpose.msra.mxu0 0.0
    %3952 = vmatprep.subr.mxu0 0.0
    %3953 = vmatpush1.xpose.msra.mxu0 0.0
    %3954 = vmatprep.subr.mxu0 0.0
    %3955 = vmatpush1.xpose.msra.mxu0 0.0
    %3956 = vmatprep.subr.mxu0 0.0
    %3957 = vmatpush1.xpose.msra.mxu0 0.0
    %3958 = vmatprep.subr.mxu0 0.0
    %3959 = vmatpush1.xpose.msra.mxu0 0.0
    %3960 = vmatprep.subr.mxu0 0.0
    %3961 = vmatpush1.xpose.msra.mxu0 0.0
    %3962 = vmatprep.subr.mxu0 0.0
    %3963 = vmatpush1.xpose.msra.mxu0 0.0
    %3964 = vmatprep.subr.mxu0 0.0
    %3965 = vmatpush1.xpose.msra.mxu0 0.0
    %3966 = vmatprep.subr.mxu0 0.0
    %3967 = vmatpush1.xpose.msra.mxu0 0.0
    %3968 = vmatprep.subr.mxu0 0.0
    %3969 = vmatpush1.xpose.msra.mxu0 0.0
    %3970 = vmatprep.subr.mxu0 0.0
    %3971 = vmatpush1.xpose.msra.mxu0 0.0
    %3972 = vmatprep.subr.mxu0 0.0
    %3973 = vmatpush1.xpose.msra.mxu0 0.0
    %3974 = vmatprep.subr.mxu0 0.0
    %3975 = vmatpush1.xpose.msra.mxu0 0.0
    %3976 = vmatprep.subr.mxu0 0.0
    %3977 = vmatpush1.xpose.msra.mxu0 0.0
    %3978 = vmatprep.subr.mxu0 0.0
    %3979 = vmatpush1.xpose.msra.mxu0 0.0
    %3980 = vmatprep.subr.mxu0 0.0
    %3981 = vmatpush1.xpose.msra.mxu0 0.0
    %3982 = vmatprep.subr.mxu0 0.0
    %3983 = vmatpush1.xpose.msra.mxu0 0.0
    %3984 = vmatprep.subr.mxu0 0.0
    %3985 = vmatpush1.xpose.msra.mxu0 0.0
    %3986 = vmatprep.subr.mxu0 0.0
    %3987 = vmatpush1.xpose.msra.mxu0 0.0
    %3988 = vmatprep.subr.mxu0 0.0
    %3989 = vmatpush1.xpose.msra.mxu0 0.0
    %3990 = vmatprep.subr.mxu0 0.0
    %3991 = vmatpush1.xpose.msra.mxu0 0.0
    %3992 = vmatprep.subr.mxu0 0.0
    %3993 = vmatpush1.xpose.msra.mxu0 0.0
    %3994 = vmatprep.subr.mxu0 0.0
    %3995 = vmatpush1.xpose.msra.mxu0 0.0
    %3996 = vmatprep.subr.mxu0 0.0
    %3997 = vmatpush1.xpose.msra.mxu0 0.0
    %3998 = vmatprep.subr.mxu0 0.0
    %3999 = vmatpush1.xpose.msra.mxu0 0.0
    %4000 = vmatprep.mubr.f32.mxu0 0.0
    %4001 = vmatmul.mubr.f32.gmra.mrb[0].mxu0 %v3931
    %v4002 = vpop.f32.mrb[0].mxu0
    %v4003 = vadd.f32 0.0, %v4002
    %v4004 = vpop.f32.mrb[0].mxu0
    %4005 = vdwg.mxu0
    %v4007 = vsel %vm647, %v3488, 0
    %v4010 = vsel %vm647, %v2906, 0
    %4012 = vmatprep.subr.mxu0 0.0
    %4013 = vmatpush1.xpose.msra.mxu0 %v4010
    %4014 = vmatprep.subr.mxu0 0.0
    %4015 = vmatpush1.xpose.msra.mxu0 0.0
    %4016 = vmatprep.subr.mxu0 0.0
    %4017 = vmatpush1.xpose.msra.mxu0 0.0
    %4018 = vmatprep.subr.mxu0 0.0
    %4019 = vmatpush1.xpose.msra.mxu0 0.0
    %4020 = vmatprep.subr.mxu0 0.0
    %4021 = vmatpush1.xpose.msra.mxu0 0.0
    %4022 = vmatprep.subr.mxu0 0.0
    %4023 = vmatpush1.xpose.msra.mxu0 0.0
    %4024 = vmatprep.subr.mxu0 0.0
    %4025 = vmatpush1.xpose.msra.mxu0 0.0
    %4026 = vmatprep.subr.mxu0 0.0
    %4027 = vmatpush1.xpose.msra.mxu0 0.0
    %4028 = vmatprep.subr.mxu0 0.0
    %4029 = vmatpush1.xpose.msra.mxu0 0.0
    %4030 = vmatprep.subr.mxu0 0.0
    %4031 = vmatpush1.xpose.msra.mxu0 0.0
    %4032 = vmatprep.subr.mxu0 0.0
    %4033 = vmatpush1.xpose.msra.mxu0 0.0
    %4034 = vmatprep.subr.mxu0 0.0
    %4035 = vmatpush1.xpose.msra.mxu0 0.0
    %4036 = vmatprep.subr.mxu0 0.0
    %4037 = vmatpush1.xpose.msra.mxu0 0.0
    %4038 = vmatprep.subr.mxu0 0.0
    %4039 = vmatpush1.xpose.msra.mxu0 0.0
    %4040 = vmatprep.subr.mxu0 0.0
    %4041 = vmatpush1.xpose.msra.mxu0 0.0
    %4042 = vmatprep.subr.mxu0 0.0
    %4043 = vmatpush1.xpose.msra.mxu0 0.0
    %4044 = vmatprep.subr.mxu0 0.0
    %4045 = vmatpush1.xpose.msra.mxu0 0.0
    %4046 = vmatprep.subr.mxu0 0.0
    %4047 = vmatpush1.xpose.msra.mxu0 0.0
    %4048 = vmatprep.subr.mxu0 0.0
    %4049 = vmatpush1.xpose.msra.mxu0 0.0
    %4050 = vmatprep.subr.mxu0 0.0
    %4051 = vmatpush1.xpose.msra.mxu0 0.0
    %4052 = vmatprep.subr.mxu0 0.0
    %4053 = vmatpush1.xpose.msra.mxu0 0.0
    %4054 = vmatprep.subr.mxu0 0.0
    %4055 = vmatpush1.xpose.msra.mxu0 0.0
    %4056 = vmatprep.subr.mxu0 0.0
    %4057 = vmatpush1.xpose.msra.mxu0 0.0
    %4058 = vmatprep.subr.mxu0 0.0
    %4059 = vmatpush1.xpose.msra.mxu0 0.0
    %4060 = vmatprep.subr.mxu0 0.0
    %4061 = vmatpush1.xpose.msra.mxu0 0.0
    %4062 = vmatprep.subr.mxu0 0.0
    %4063 = vmatpush1.xpose.msra.mxu0 0.0
    %4064 = vmatprep.subr.mxu0 0.0
    %4065 = vmatpush1.xpose.msra.mxu0 0.0
    %4066 = vmatprep.subr.mxu0 0.0
    %4067 = vmatpush1.xpose.msra.mxu0 0.0
    %4068 = vmatprep.subr.mxu0 0.0
    %4069 = vmatpush1.xpose.msra.mxu0 0.0
    %4070 = vmatprep.subr.mxu0 0.0
    %4071 = vmatpush1.xpose.msra.mxu0 0.0
    %4072 = vmatprep.subr.mxu0 0.0
    %4073 = vmatpush1.xpose.msra.mxu0 0.0
    %4074 = vmatprep.subr.mxu0 0.0
    %4075 = vmatpush1.xpose.msra.mxu0 0.0
    %4076 = vmatprep.mubr.f32.mxu0 0.0
    %4077 = vmatmul.mubr.f32.gmra.mrb[0].mxu0 %v4007
    %v4078 = vpop.f32.mrb[0].mxu0
    %v4079 = vadd.f32 0.0, %v4078
    %v4080 = vpop.f32.mrb[0].mxu0
    %4081 = vdwg.mxu0
    %v4083 = vsel %vm647, %v3561, 0
    %v4086 = vsel %vm647, %v2979, 0
    %4088 = vmatprep.subr.mxu0 0.0
    %4089 = vmatpush1.xpose.msra.mxu0 %v4086
    %4090 = vmatprep.subr.mxu0 0.0
    %4091 = vmatpush1.xpose.msra.mxu0 0.0
    %4092 = vmatprep.subr.mxu0 0.0
    %4093 = vmatpush1.xpose.msra.mxu0 0.0
    %4094 = vmatprep.subr.mxu0 0.0
    %4095 = vmatpush1.xpose.msra.mxu0 0.0
    %4096 = vmatprep.subr.mxu0 0.0
    %4097 = vmatpush1.xpose.msra.mxu0 0.0
    %4098 = vmatprep.subr.mxu0 0.0
    %4099 = vmatpush1.xpose.msra.mxu0 0.0
    %4100 = vmatprep.subr.mxu0 0.0
    %4101 = vmatpush1.xpose.msra.mxu0 0.0
    %4102 = vmatprep.subr.mxu0 0.0
    %4103 = vmatpush1.xpose.msra.mxu0 0.0
    %4104 = vmatprep.subr.mxu0 0.0
    %4105 = vmatpush1.xpose.msra.mxu0 0.0
    %4106 = vmatprep.subr.mxu0 0.0
    %4107 = vmatpush1.xpose.msra.mxu0 0.0
    %4108 = vmatprep.subr.mxu0 0.0
    %4109 = vmatpush1.xpose.msra.mxu0 0.0
    %4110 = vmatprep.subr.mxu0 0.0
    %4111 = vmatpush1.xpose.msra.mxu0 0.0
    %4112 = vmatprep.subr.mxu0 0.0
    %4113 = vmatpush1.xpose.msra.mxu0 0.0
    %4114 = vmatprep.subr.mxu0 0.0
    %4115 = vmatpush1.xpose.msra.mxu0 0.0
    %4116 = vmatprep.subr.mxu0 0.0
    %4117 = vmatpush1.xpose.msra.mxu0 0.0
    %4118 = vmatprep.subr.mxu0 0.0
    %4119 = vmatpush1.xpose.msra.mxu0 0.0
    %4120 = vmatprep.subr.mxu0 0.0
    %4121 = vmatpush1.xpose.msra.mxu0 0.0
    %4122 = vmatprep.subr.mxu0 0.0
    %4123 = vmatpush1.xpose.msra.mxu0 0.0
    %4124 = vmatprep.subr.mxu0 0.0
    %4125 = vmatpush1.xpose.msra.mxu0 0.0
    %4126 = vmatprep.subr.mxu0 0.0
    %4127 = vmatpush1.xpose.msra.mxu0 0.0
    %4128 = vmatprep.subr.mxu0 0.0
    %4129 = vmatpush1.xpose.msra.mxu0 0.0
    %4130 = vmatprep.subr.mxu0 0.0
    %4131 = vmatpush1.xpose.msra.mxu0 0.0
    %4132 = vmatprep.subr.mxu0 0.0
    %4133 = vmatpush1.xpose.msra.mxu0 0.0
    %4134 = vmatprep.subr.mxu0 0.0
    %4135 = vmatpush1.xpose.msra.mxu0 0.0
    %4136 = vmatprep.subr.mxu0 0.0
    %4137 = vmatpush1.xpose.msra.mxu0 0.0
    %4138 = vmatprep.subr.mxu0 0.0
    %4139 = vmatpush1.xpose.msra.mxu0 0.0
    %4140 = vmatprep.subr.mxu0 0.0
    %4141 = vmatpush1.xpose.msra.mxu0 0.0
    %4142 = vmatprep.subr.mxu0 0.0
    %4143 = vmatpush1.xpose.msra.mxu0 0.0
    %4144 = vmatprep.subr.mxu0 0.0
    %4145 = vmatpush1.xpose.msra.mxu0 0.0
    %4146 = vmatprep.subr.mxu0 0.0
    %4147 = vmatpush1.xpose.msra.mxu0 0.0
    %4148 = vmatprep.subr.mxu0 0.0
    %4149 = vmatpush1.xpose.msra.mxu0 0.0
    %4150 = vmatprep.subr.mxu0 0.0
    %4151 = vmatpush1.xpose.msra.mxu0 0.0
    %4152 = vmatprep.mubr.f32.mxu0 0.0
    %4153 = vmatmul.mubr.f32.gmra.mrb[0].mxu0 %v4083
    %v4154 = vpop.f32.mrb[0].mxu0
    %v4155 = vadd.f32 0.0, %v4154
    %v4156 = vpop.f32.mrb[0].mxu0
    %4157 = vdwg.mxu0
    %v4159 = vsel %vm647, %v3631, 0
    %v4162 = vsel %vm647, %v3049, 0
    %4164 = vmatprep.subr.mxu0 0.0
    %4165 = vmatpush1.xpose.msra.mxu0 %v4162
    %4166 = vmatprep.subr.mxu0 0.0
    %4167 = vmatpush1.xpose.msra.mxu0 0.0
    %4168 = vmatprep.subr.mxu0 0.0
    %4169 = vmatpush1.xpose.msra.mxu0 0.0
    %4170 = vmatprep.subr.mxu0 0.0
    %4171 = vmatpush1.xpose.msra.mxu0 0.0
    %4172 = vmatprep.subr.mxu0 0.0
    %4173 = vmatpush1.xpose.msra.mxu0 0.0
    %4174 = vmatprep.subr.mxu0 0.0
    %4175 = vmatpush1.xpose.msra.mxu0 0.0
    %4176 = vmatprep.subr.mxu0 0.0
    %4177 = vmatpush1.xpose.msra.mxu0 0.0
    %4178 = vmatprep.subr.mxu0 0.0
    %4179 = vmatpush1.xpose.msra.mxu0 0.0
    %4180 = vmatprep.subr.mxu0 0.0
    %4181 = vmatpush1.xpose.msra.mxu0 0.0
    %4182 = vmatprep.subr.mxu0 0.0
    %4183 = vmatpush1.xpose.msra.mxu0 0.0
    %4184 = vmatprep.subr.mxu0 0.0
    %4185 = vmatpush1.xpose.msra.mxu0 0.0
    %4186 = vmatprep.subr.mxu0 0.0
    %4187 = vmatpush1.xpose.msra.mxu0 0.0
    %4188 = vmatprep.subr.mxu0 0.0
    %4189 = vmatpush1.xpose.msra.mxu0 0.0
    %4190 = vmatprep.subr.mxu0 0.0
    %4191 = vmatpush1.xpose.msra.mxu0 0.0
    %4192 = vmatprep.subr.mxu0 0.0
    %4193 = vmatpush1.xpose.msra.mxu0 0.0
    %4194 = vmatprep.subr.mxu0 0.0
    %4195 = vmatpush1.xpose.msra.mxu0 0.0
    %4196 = vmatprep.subr.mxu0 0.0
    %4197 = vmatpush1.xpose.msra.mxu0 0.0
    %4198 = vmatprep.subr.mxu0 0.0
    %4199 = vmatpush1.xpose.msra.mxu0 0.0
    %4200 = vmatprep.subr.mxu0 0.0
    %4201 = vmatpush1.xpose.msra.mxu0 0.0
    %4202 = vmatprep.subr.mxu0 0.0
    %4203 = vmatpush1.xpose.msra.mxu0 0.0
    %4204 = vmatprep.subr.mxu0 0.0
    %4205 = vmatpush1.xpose.msra.mxu0 0.0
    %4206 = vmatprep.subr.mxu0 0.0
    %4207 = vmatpush1.xpose.msra.mxu0 0.0
    %4208 = vmatprep.subr.mxu0 0.0
    %4209 = vmatpush1.xpose.msra.mxu0 0.0
    %4210 = vmatprep.subr.mxu0 0.0
    %4211 = vmatpush1.xpose.msra.mxu0 0.0
    %4212 = vmatprep.subr.mxu0 0.0
    %4213 = vmatpush1.xpose.msra.mxu0 0.0
    %4214 = vmatprep.subr.mxu0 0.0
    %4215 = vmatpush1.xpose.msra.mxu0 0.0
    %4216 = vmatprep.subr.mxu0 0.0
    %4217 = vmatpush1.xpose.msra.mxu0 0.0
    %4218 = vmatprep.subr.mxu0 0.0
    %4219 = vmatpush1.xpose.msra.mxu0 0.0
    %4220 = vmatprep.subr.mxu0 0.0
    %4221 = vmatpush1.xpose.msra.mxu0 0.0
    %4222 = vmatprep.subr.mxu0 0.0
    %4223 = vmatpush1.xpose.msra.mxu0 0.0
    %4224 = vmatprep.subr.mxu0 0.0
    %4225 = vmatpush1.xpose.msra.mxu0 0.0
    %4226 = vmatprep.subr.mxu0 0.0
    %4227 = vmatpush1.xpose.msra.mxu0 0.0
    %4228 = vmatprep.mubr.f32.mxu0 0.0
    %4229 = vmatmul.mubr.f32.gmra.mrb[0].mxu0 %v4159
    %v4230 = vpop.f32.mrb[0].mxu0
    %v4231 = vadd.f32 0.0, %v4230
    %v4232 = vpop.f32.mrb[0].mxu0
    %4233 = vdwg.mxu0
    %v4235 = vsel %vm647, %v3701, 0
    %v4238 = vsel %vm647, %v3119, 0
    %4240 = vmatprep.subr.mxu0 0.0
    %4241 = vmatpush1.xpose.msra.mxu0 %v4238
    %4242 = vmatprep.subr.mxu0 0.0
    %4243 = vmatpush1.xpose.msra.mxu0 0.0
    %4244 = vmatprep.subr.mxu0 0.0
    %4245 = vmatpush1.xpose.msra.mxu0 0.0
    %4246 = vmatprep.subr.mxu0 0.0
    %4247 = vmatpush1.xpose.msra.mxu0 0.0
    %4248 = vmatprep.subr.mxu0 0.0
    %4249 = vmatpush1.xpose.msra.mxu0 0.0
    %4250 = vmatprep.subr.mxu0 0.0
    %4251 = vmatpush1.xpose.msra.mxu0 0.0
    %4252 = vmatprep.subr.mxu0 0.0
    %4253 = vmatpush1.xpose.msra.mxu0 0.0
    %4254 = vmatprep.subr.mxu0 0.0
    %4255 = vmatpush1.xpose.msra.mxu0 0.0
    %4256 = vmatprep.subr.mxu0 0.0
    %4257 = vmatpush1.xpose.msra.mxu0 0.0
    %4258 = vmatprep.subr.mxu0 0.0
    %4259 = vmatpush1.xpose.msra.mxu0 0.0
    %4260 = vmatprep.subr.mxu0 0.0
    %4261 = vmatpush1.xpose.msra.mxu0 0.0
    %4262 = vmatprep.subr.mxu0 0.0
    %4263 = vmatpush1.xpose.msra.mxu0 0.0
    %4264 = vmatprep.subr.mxu0 0.0
    %4265 = vmatpush1.xpose.msra.mxu0 0.0
    %4266 = vmatprep.subr.mxu0 0.0
    %4267 = vmatpush1.xpose.msra.mxu0 0.0
    %4268 = vmatprep.subr.mxu0 0.0
    %4269 = vmatpush1.xpose.msra.mxu0 0.0
    %4270 = vmatprep.subr.mxu0 0.0
    %4271 = vmatpush1.xpose.msra.mxu0 0.0
    %4272 = vmatprep.subr.mxu0 0.0
    %4273 = vmatpush1.xpose.msra.mxu0 0.0
    %4274 = vmatprep.subr.mxu0 0.0
    %4275 = vmatpush1.xpose.msra.mxu0 0.0
    %4276 = vmatprep.subr.mxu0 0.0
    %4277 = vmatpush1.xpose.msra.mxu0 0.0
    %4278 = vmatprep.subr.mxu0 0.0
    %4279 = vmatpush1.xpose.msra.mxu0 0.0
    %4280 = vmatprep.subr.mxu0 0.0
    %4281 = vmatpush1.xpose.msra.mxu0 0.0
    %4282 = vmatprep.subr.mxu0 0.0
    %4283 = vmatpush1.xpose.msra.mxu0 0.0
    %4284 = vmatprep.subr.mxu0 0.0
    %4285 = vmatpush1.xpose.msra.mxu0 0.0
    %4286 = vmatprep.subr.mxu0 0.0
    %4287 = vmatpush1.xpose.msra.mxu0 0.0
    %4288 = vmatprep.subr.mxu0 0.0
    %4289 = vmatpush1.xpose.msra.mxu0 0.0
    %4290 = vmatprep.subr.mxu0 0.0
    %4291 = vmatpush1.xpose.msra.mxu0 0.0
    %4292 = vmatprep.subr.mxu0 0.0
    %4293 = vmatpush1.xpose.msra.mxu0 0.0
    %4294 = vmatprep.subr.mxu0 0.0
    %4295 = vmatpush1.xpose.msra.mxu0 0.0
    %4296 = vmatprep.subr.mxu0 0.0
    %4297 = vmatpush1.xpose.msra.mxu0 0.0
    %4298 = vmatprep.subr.mxu0 0.0
    %4299 = vmatpush1.xpose.msra.mxu0 0.0
    %4300 = vmatprep.subr.mxu0 0.0
    %4301 = vmatpush1.xpose.msra.mxu0 0.0
    %4302 = vmatprep.subr.mxu0 0.0
    %4303 = vmatpush1.xpose.msra.mxu0 0.0
    %4304 = vmatprep.mubr.f32.mxu0 0.0
    %4305 = vmatmul.mubr.f32.gmra.mrb[0].mxu0 %v4235
    %v4306 = vpop.f32.mrb[0].mxu0
    %v4307 = vadd.f32 0.0, %v4306
    %v4308 = vpop.f32.mrb[0].mxu0
    %4309 = vdwg.mxu0
    %v4311 = vsel %vm647, %v3771, 0
    %v4314 = vsel %vm647, %v3189, 0
    %4316 = vmatprep.subr.mxu0 0.0
    %4317 = vmatpush1.xpose.msra.mxu0 %v4314
    %4318 = vmatprep.subr.mxu0 0.0
    %4319 = vmatpush1.xpose.msra.mxu0 0.0
    %4320 = vmatprep.subr.mxu0 0.0
    %4321 = vmatpush1.xpose.msra.mxu0 0.0
    %4322 = vmatprep.subr.mxu0 0.0
    %4323 = vmatpush1.xpose.msra.mxu0 0.0
    %4324 = vmatprep.subr.mxu0 0.0
    %4325 = vmatpush1.xpose.msra.mxu0 0.0
    %4326 = vmatprep.subr.mxu0 0.0
    %4327 = vmatpush1.xpose.msra.mxu0 0.0
    %4328 = vmatprep.subr.mxu0 0.0
    %4329 = vmatpush1.xpose.msra.mxu0 0.0
    %4330 = vmatprep.subr.mxu0 0.0
    %4331 = vmatpush1.xpose.msra.mxu0 0.0
    %4332 = vmatprep.subr.mxu0 0.0
    %4333 = vmatpush1.xpose.msra.mxu0 0.0
    %4334 = vmatprep.subr.mxu0 0.0
    %4335 = vmatpush1.xpose.msra.mxu0 0.0
    %4336 = vmatprep.subr.mxu0 0.0
    %4337 = vmatpush1.xpose.msra.mxu0 0.0
    %4338 = vmatprep.subr.mxu0 0.0
    %4339 = vmatpush1.xpose.msra.mxu0 0.0
    %4340 = vmatprep.subr.mxu0 0.0
    %4341 = vmatpush1.xpose.msra.mxu0 0.0
    %4342 = vmatprep.subr.mxu0 0.0
    %4343 = vmatpush1.xpose.msra.mxu0 0.0
    %4344 = vmatprep.subr.mxu0 0.0
    %4345 = vmatpush1.xpose.msra.mxu0 0.0
    %4346 = vmatprep.subr.mxu0 0.0
    %4347 = vmatpush1.xpose.msra.mxu0 0.0
    %4348 = vmatprep.subr.mxu0 0.0
    %4349 = vmatpush1.xpose.msra.mxu0 0.0
    %4350 = vmatprep.subr.mxu0 0.0
    %4351 = vmatpush1.xpose.msra.mxu0 0.0
    %4352 = vmatprep.subr.mxu0 0.0
    %4353 = vmatpush1.xpose.msra.mxu0 0.0
    %4354 = vmatprep.subr.mxu0 0.0
    %4355 = vmatpush1.xpose.msra.mxu0 0.0
    %4356 = vmatprep.subr.mxu0 0.0
    %4357 = vmatpush1.xpose.msra.mxu0 0.0
    %4358 = vmatprep.subr.mxu0 0.0
    %4359 = vmatpush1.xpose.msra.mxu0 0.0
    %4360 = vmatprep.subr.mxu0 0.0
    %4361 = vmatpush1.xpose.msra.mxu0 0.0
    %4362 = vmatprep.subr.mxu0 0.0
    %4363 = vmatpush1.xpose.msra.mxu0 0.0
    %4364 = vmatprep.subr.mxu0 0.0
    %4365 = vmatpush1.xpose.msra.mxu0 0.0
    %4366 = vmatprep.subr.mxu0 0.0
    %4367 = vmatpush1.xpose.msra.mxu0 0.0
    %4368 = vmatprep.subr.mxu0 0.0
    %4369 = vmatpush1.xpose.msra.mxu0 0.0
    %4370 = vmatprep.subr.mxu0 0.0
    %4371 = vmatpush1.xpose.msra.mxu0 0.0
    %4372 = vmatprep.subr.mxu0 0.0
    %4373 = vmatpush1.xpose.msra.mxu0 0.0
    %4374 = vmatprep.subr.mxu0 0.0
    %4375 = vmatpush1.xpose.msra.mxu0 0.0
    %4376 = vmatprep.subr.mxu0 0.0
    %4377 = vmatpush1.xpose.msra.mxu0 0.0
    %4378 = vmatprep.subr.mxu0 0.0
    %4379 = vmatpush1.xpose.msra.mxu0 0.0
    %4380 = vmatprep.mubr.f32.mxu0 0.0
    %4381 = vmatmul.mubr.f32.gmra.mrb[0].mxu0 %v4311
    %v4382 = vpop.f32.mrb[0].mxu0
    %v4383 = vadd.f32 0.0, %v4382
    %v4384 = vpop.f32.mrb[0].mxu0
    %4385 = vdwg.mxu0
    %v4386 = vmul.f32 %v3851, 0.35355338
    %v4387 = vmul.f32 %v3927, 0.35355338
    %v4388 = vmul.f32 %v4003, 0.35355338
    %v4389 = vmul.f32 %v4079, 0.35355338
    %v4390 = vmul.f32 %v4155, 0.35355338
    %v4391 = vmul.f32 %v4231, 0.35355338
    %v4392 = vmul.f32 %v4307, 0.35355338
    %v4393 = vmul.f32 %v4383, 0.35355338
    %v4394 = vsel %vm647, %v4386, -inf
    %4395 = vmax.xlane.f32.xlu0 %v4394
    %v4396 = vpop.xlane.xlu0 %4395
    %v4397 = vsel %vm647, %v4387, -inf
    %4398 = vmax.xlane.f32.xlu0 %v4397
    %v4399 = vpop.xlane.xlu0 %4398
    %v4400 = vsel %vm647, %v4388, -inf
    %4401 = vmax.xlane.f32.xlu0 %v4400
    %v4402 = vpop.xlane.xlu0 %4401
    %v4403 = vsel %vm647, %v4389, -inf
    %4404 = vmax.xlane.f32.xlu0 %v4403
    %v4405 = vpop.xlane.xlu0 %4404
    %v4406 = vsel %vm647, %v4390, -inf
    %4407 = vmax.xlane.f32.xlu0 %v4406
    %v4408 = vpop.xlane.xlu0 %4407
    %v4409 = vsel %vm647, %v4391, -inf
    %4410 = vmax.xlane.f32.xlu0 %v4409
    %v4411 = vpop.xlane.xlu0 %4410
    %v4412 = vsel %vm647, %v4392, -inf
    %4413 = vmax.xlane.f32.xlu0 %v4412
    %v4414 = vpop.xlane.xlu0 %4413
    %v4415 = vsel %vm647, %v4393, -inf
    %4416 = vmax.xlane.f32.xlu0 %v4415
    %v4417 = vpop.xlane.xlu0 %4416
    %v4418 = vsub.f32 %v4386, %v4396
    %v4419 = vsub.f32 %v4387, %v4399
    %v4420 = vsub.f32 %v4388, %v4402
    %v4421 = vsub.f32 %v4389, %v4405
    %v4422 = vsub.f32 %v4390, %v4408
    %v4423 = vsub.f32 %v4391, %v4411
    %v4424 = vsub.f32 %v4392, %v4414
    %v4425 = vsub.f32 %v4393, %v4417
    %v4426 = vmul.f32 %v4418, 1.442695
    %v4427 = vpow.pop %v4426
    %v4428 = vmul.f32 %v4419, 1.442695
    %v4429 = vpow.pop %v4428
    %v4430 = vmul.f32 %v4420, 1.442695
    %v4431 = vpow.pop %v4430
    %v4432 = vmul.f32 %v4421, 1.442695
    %v4433 = vpow.pop %v4432
    %v4434 = vmul.f32 %v4422, 1.442695
    %v4435 = vpow.pop %v4434
    %v4436 = vmul.f32 %v4423, 1.442695
    %v4437 = vpow.pop %v4436
    %v4438 = vmul.f32 %v4424, 1.442695
    %v4439 = vpow.pop %v4438
    %v4440 = vmul.f32 %v4425, 1.442695
    %v4441 = vpow.pop %v4440
    %v4442 = vsel %vm647, %v4427, 0.0
    %4443 = vadd.xlane.f32.xlu0 %v4442
    %v4444 = vpop.xlane.xlu0 %4443
    %v4445 = vsel %vm647, %v4429, 0.0
    %4446 = vadd.xlane.f32.xlu0 %v4445
    %v4447 = vpop.xlane.xlu0 %4446
    %v4448 = vsel %vm647, %v4431, 0.0
    %4449 = vadd.xlane.f32.xlu0 %v4448
    %v4450 = vpop.xlane.xlu0 %4449
    %v4451 = vsel %vm647, %v4433, 0.0
    %4452 = vadd.xlane.f32.xlu0 %v4451
    %v4453 = vpop.xlane.xlu0 %4452
    %v4454 = vsel %vm647, %v4435, 0.0
    %4455 = vadd.xlane.f32.xlu0 %v4454
    %v4456 = vpop.xlane.xlu0 %4455
    %v4457 = vsel %vm647, %v4437, 0.0
    %4458 = vadd.xlane.f32.xlu0 %v4457
    %v4459 = vpop.xlane.xlu0 %4458
    %v4460 = vsel %vm647, %v4439, 0.0
    %4461 = vadd.xlane.f32.xlu0 %v4460
    %v4462 = vpop.xlane.xlu0 %4461
    %v4463 = vsel %vm647, %v4441, 0.0
    %4464 = vadd.xlane.f32.xlu0 %v4463
    %v4465 = vpop.xlane.xlu0 %4464
    %v4466 = vrcp.pop %v4444
    %v4467 = vrcp.pop %v4447
    %v4468 = vrcp.pop %v4450
    %v4469 = vrcp.pop %v4453
    %v4470 = vrcp.pop %v4456
    %v4471 = vrcp.pop %v4459
    %v4472 = vrcp.pop %v4462
    %v4473 = vrcp.pop %v4465
    %v4474 = vmul.f32 %v4427, %v4466
    %v4475 = vmul.f32 %v4429, %v4467
    %v4476 = vmul.f32 %v4431, %v4468
    %v4477 = vmul.f32 %v4433, %v4469
    %v4478 = vmul.f32 %v4435, %v4470
    %v4479 = vmul.f32 %v4437, %v4471
    %v4480 = vmul.f32 %v4439, %v4472
    %v4481 = vmul.f32 %v4441, %v4473
    %4482 = vrot.lane.b32.xlu0 %v2696, 120
    %v4483 = vpop.permute.xlu0 %4482
    %v4486 = vsel %vm647, %v4474, 0
    %4488 = vmatprep.subr.mxu0 0.0
    %4489 = vmatpush1.msra.mxu0 %v4483
    %4490 = vmatprep.subr.mxu0 0.0
    %4491 = vmatpush1.msra.mxu0 0.0
    %4492 = vmatprep.subr.mxu0 0.0
    %4493 = vmatpush1.msra.mxu0 0.0
    %4494 = vmatprep.subr.mxu0 0.0
    %4495 = vmatpush1.msra.mxu0 0.0
    %4496 = vmatprep.subr.mxu0 0.0
    %4497 = vmatpush1.msra.mxu0 0.0
    %4498 = vmatprep.subr.mxu0 0.0
    %4499 = vmatpush1.msra.mxu0 0.0
    %4500 = vmatprep.subr.mxu0 0.0
    %4501 = vmatpush1.msra.mxu0 0.0
    %4502 = vmatprep.subr.mxu0 0.0
    %4503 = vmatpush1.msra.mxu0 0.0
    %4504 = vmatprep.subr.mxu0 0.0
    %4505 = vmatpush1.msra.mxu0 0.0
    %4506 = vmatprep.subr.mxu0 0.0
    %4507 = vmatpush1.msra.mxu0 0.0
    %4508 = vmatprep.subr.mxu0 0.0
    %4509 = vmatpush1.msra.mxu0 0.0
    %4510 = vmatprep.subr.mxu0 0.0
    %4511 = vmatpush1.msra.mxu0 0.0
    %4512 = vmatprep.subr.mxu0 0.0
    %4513 = vmatpush1.msra.mxu0 0.0
    %4514 = vmatprep.subr.mxu0 0.0
    %4515 = vmatpush1.msra.mxu0 0.0
    %4516 = vmatprep.subr.mxu0 0.0
    %4517 = vmatpush1.msra.mxu0 0.0
    %4518 = vmatprep.subr.mxu0 0.0
    %4519 = vmatpush1.msra.mxu0 0.0
    %4520 = vmatprep.subr.mxu0 0.0
    %4521 = vmatpush1.msra.mxu0 0.0
    %4522 = vmatprep.subr.mxu0 0.0
    %4523 = vmatpush1.msra.mxu0 0.0
    %4524 = vmatprep.subr.mxu0 0.0
    %4525 = vmatpush1.msra.mxu0 0.0
    %4526 = vmatprep.subr.mxu0 0.0
    %4527 = vmatpush1.msra.mxu0 0.0
    %4528 = vmatprep.subr.mxu0 0.0
    %4529 = vmatpush1.msra.mxu0 0.0
    %4530 = vmatprep.subr.mxu0 0.0
    %4531 = vmatpush1.msra.mxu0 0.0
    %4532 = vmatprep.subr.mxu0 0.0
    %4533 = vmatpush1.msra.mxu0 0.0
    %4534 = vmatprep.subr.mxu0 0.0
    %4535 = vmatpush1.msra.mxu0 0.0
    %4536 = vmatprep.subr.mxu0 0.0
    %4537 = vmatpush1.msra.mxu0 0.0
    %4538 = vmatprep.subr.mxu0 0.0
    %4539 = vmatpush1.msra.mxu0 0.0
    %4540 = vmatprep.subr.mxu0 0.0
    %4541 = vmatpush1.msra.mxu0 0.0
    %4542 = vmatprep.subr.mxu0 0.0
    %4543 = vmatpush1.msra.mxu0 0.0
    %4544 = vmatprep.subr.mxu0 0.0
    %4545 = vmatpush1.msra.mxu0 0.0
    %4546 = vmatprep.subr.mxu0 0.0
    %4547 = vmatpush1.msra.mxu0 0.0
    %4548 = vmatprep.subr.mxu0 0.0
    %4549 = vmatpush1.msra.mxu0 0.0
    %4550 = vmatprep.subr.mxu0 0.0
    %4551 = vmatpush1.msra.mxu0 0.0
    %4552 = vmatprep.mubr.f32.mxu0 0.0
    %4553 = vmatmul.mubr.f32.gmra.mrb[0].mxu0 %v4486
    %v4554 = vpop.f32.mrb[0].mxu0
    %v4555 = vadd.f32 0.0, %v4554
    %v4556 = vpop.f32.mrb[0].mxu0
    %4557 = vdwg.mxu0
    %4558 = vrot.lane.b32.xlu0 %v2766, 120
    %v4559 = vpop.permute.xlu0 %4558
    %v4562 = vsel %vm647, %v4475, 0
    %4564 = vmatprep.subr.mxu0 0.0
    %4565 = vmatpush1.msra.mxu0 %v4559
    %4566 = vmatprep.subr.mxu0 0.0
    %4567 = vmatpush1.msra.mxu0 0.0
    %4568 = vmatprep.subr.mxu0 0.0
    %4569 = vmatpush1.msra.mxu0 0.0
    %4570 = vmatprep.subr.mxu0 0.0
    %4571 = vmatpush1.msra.mxu0 0.0
    %4572 = vmatprep.subr.mxu0 0.0
    %4573 = vmatpush1.msra.mxu0 0.0
    %4574 = vmatprep.subr.mxu0 0.0
    %4575 = vmatpush1.msra.mxu0 0.0
    %4576 = vmatprep.subr.mxu0 0.0
    %4577 = vmatpush1.msra.mxu0 0.0
    %4578 = vmatprep.subr.mxu0 0.0
    %4579 = vmatpush1.msra.mxu0 0.0
    %4580 = vmatprep.subr.mxu0 0.0
    %4581 = vmatpush1.msra.mxu0 0.0
    %4582 = vmatprep.subr.mxu0 0.0
    %4583 = vmatpush1.msra.mxu0 0.0
    %4584 = vmatprep.subr.mxu0 0.0
    %4585 = vmatpush1.msra.mxu0 0.0
    %4586 = vmatprep.subr.mxu0 0.0
    %4587 = vmatpush1.msra.mxu0 0.0
    %4588 = vmatprep.subr.mxu0 0.0
    %4589 = vmatpush1.msra.mxu0 0.0
    %4590 = vmatprep.subr.mxu0 0.0
    %4591 = vmatpush1.msra.mxu0 0.0
    %4592 = vmatprep.subr.mxu0 0.0
    %4593 = vmatpush1.msra.mxu0 0.0
    %4594 = vmatprep.subr.mxu0 0.0
    %4595 = vmatpush1.msra.mxu0 0.0
    %4596 = vmatprep.subr.mxu0 0.0
    %4597 = vmatpush1.msra.mxu0 0.0
    %4598 = vmatprep.subr.mxu0 0.0
    %4599 = vmatpush1.msra.mxu0 0.0
    %4600 = vmatprep.subr.mxu0 0.0
    %4601 = vmatpush1.msra.mxu0 0.0
    %4602 = vmatprep.subr.mxu0 0.0
    %4603 = vmatpush1.msra.mxu0 0.0
    %4604 = vmatprep.subr.mxu0 0.0
    %4605 = vmatpush1.msra.mxu0 0.0
    %4606 = vmatprep.subr.mxu0 0.0
    %4607 = vmatpush1.msra.mxu0 0.0
    %4608 = vmatprep.subr.mxu0 0.0
    %4609 = vmatpush1.msra.mxu0 0.0
    %4610 = vmatprep.subr.mxu0 0.0
    %4611 = vmatpush1.msra.mxu0 0.0
    %4612 = vmatprep.subr.mxu0 0.0
    %4613 = vmatpush1.msra.mxu0 0.0
    %4614 = vmatprep.subr.mxu0 0.0
    %4615 = vmatpush1.msra.mxu0 0.0
    %4616 = vmatprep.subr.mxu0 0.0
    %4617 = vmatpush1.msra.mxu0 0.0
    %4618 = vmatprep.subr.mxu0 0.0
    %4619 = vmatpush1.msra.mxu0 0.0
    %4620 = vmatprep.subr.mxu0 0.0
    %4621 = vmatpush1.msra.mxu0 0.0
    %4622 = vmatprep.subr.mxu0 0.0
    %4623 = vmatpush1.msra.mxu0 0.0
    %4624 = vmatprep.subr.mxu0 0.0
    %4625 = vmatpush1.msra.mxu0 0.0
    %4626 = vmatprep.subr.mxu0 0.0
    %4627 = vmatpush1.msra.mxu0 0.0
    %4628 = vmatprep.mubr.f32.mxu0 0.0
    %4629 = vmatmul.mubr.f32.gmra.mrb[0].mxu0 %v4562
    %v4630 = vpop.f32.mrb[0].mxu0
    %v4631 = vadd.f32 0.0, %v4630
    %v4632 = vpop.f32.mrb[0].mxu0
    %4633 = vdwg.mxu0
    %4634 = vrot.lane.b32.xlu0 %v2836, 120
    %v4635 = vpop.permute.xlu0 %4634
    %v4638 = vsel %vm647, %v4476, 0
    %4640 = vmatprep.subr.mxu0 0.0
    %4641 = vmatpush1.msra.mxu0 %v4635
    %4642 = vmatprep.subr.mxu0 0.0
    %4643 = vmatpush1.msra.mxu0 0.0
    %4644 = vmatprep.subr.mxu0 0.0
    %4645 = vmatpush1.msra.mxu0 0.0
    %4646 = vmatprep.subr.mxu0 0.0
    %4647 = vmatpush1.msra.mxu0 0.0
    %4648 = vmatprep.subr.mxu0 0.0
    %4649 = vmatpush1.msra.mxu0 0.0
    %4650 = vmatprep.subr.mxu0 0.0
    %4651 = vmatpush1.msra.mxu0 0.0
    %4652 = vmatprep.subr.mxu0 0.0
    %4653 = vmatpush1.msra.mxu0 0.0
    %4654 = vmatprep.subr.mxu0 0.0
    %4655 = vmatpush1.msra.mxu0 0.0
    %4656 = vmatprep.subr.mxu0 0.0
    %4657 = vmatpush1.msra.mxu0 0.0
    %4658 = vmatprep.subr.mxu0 0.0
    %4659 = vmatpush1.msra.mxu0 0.0
    %4660 = vmatprep.subr.mxu0 0.0
    %4661 = vmatpush1.msra.mxu0 0.0
    %4662 = vmatprep.subr.mxu0 0.0
    %4663 = vmatpush1.msra.mxu0 0.0
    %4664 = vmatprep.subr.mxu0 0.0
    %4665 = vmatpush1.msra.mxu0 0.0
    %4666 = vmatprep.subr.mxu0 0.0
    %4667 = vmatpush1.msra.mxu0 0.0
    %4668 = vmatprep.subr.mxu0 0.0
    %4669 = vmatpush1.msra.mxu0 0.0
    %4670 = vmatprep.subr.mxu0 0.0
    %4671 = vmatpush1.msra.mxu0 0.0
    %4672 = vmatprep.subr.mxu0 0.0
    %4673 = vmatpush1.msra.mxu0 0.0
    %4674 = vmatprep.subr.mxu0 0.0
    %4675 = vmatpush1.msra.mxu0 0.0
    %4676 = vmatprep.subr.mxu0 0.0
    %4677 = vmatpush1.msra.mxu0 0.0
    %4678 = vmatprep.subr.mxu0 0.0
    %4679 = vmatpush1.msra.mxu0 0.0
    %4680 = vmatprep.subr.mxu0 0.0
    %4681 = vmatpush1.msra.mxu0 0.0
    %4682 = vmatprep.subr.mxu0 0.0
    %4683 = vmatpush1.msra.mxu0 0.0
    %4684 = vmatprep.subr.mxu0 0.0
    %4685 = vmatpush1.msra.mxu0 0.0
    %4686 = vmatprep.subr.mxu0 0.0
    %4687 = vmatpush1.msra.mxu0 0.0
    %4688 = vmatprep.subr.mxu0 0.0
    %4689 = vmatpush1.msra.mxu0 0.0
    %4690 = vmatprep.subr.mxu0 0.0
    %4691 = vmatpush1.msra.mxu0 0.0
    %4692 = vmatprep.subr.mxu0 0.0
    %4693 = vmatpush1.msra.mxu0 0.0
    %4694 = vmatprep.subr.mxu0 0.0
    %4695 = vmatpush1.msra.mxu0 0.0
    %4696 = vmatprep.subr.mxu0 0.0
    %4697 = vmatpush1.msra.mxu0 0.0
    %4698 = vmatprep.subr.mxu0 0.0
    %4699 = vmatpush1.msra.mxu0 0.0
    %4700 = vmatprep.subr.mxu0 0.0
    %4701 = vmatpush1.msra.mxu0 0.0
    %4702 = vmatprep.subr.mxu0 0.0
    %4703 = vmatpush1.msra.mxu0 0.0
    %4704 = vmatprep.mubr.f32.mxu0 0.0
    %4705 = vmatmul.mubr.f32.gmra.mrb[0].mxu0 %v4638
    %v4706 = vpop.f32.mrb[0].mxu0
    %v4707 = vadd.f32 0.0, %v4706
    %v4708 = vpop.f32.mrb[0].mxu0
    %4709 = vdwg.mxu0
    %4710 = vrot.lane.b32.xlu0 %v2906, 120
    %v4711 = vpop.permute.xlu0 %4710
    %v4714 = vsel %vm647, %v4477, 0
    %4716 = vmatprep.subr.mxu0 0.0
    %4717 = vmatpush1.msra.mxu0 %v4711
    %4718 = vmatprep.subr.mxu0 0.0
    %4719 = vmatpush1.msra.mxu0 0.0
    %4720 = vmatprep.subr.mxu0 0.0
    %4721 = vmatpush1.msra.mxu0 0.0
    %4722 = vmatprep.subr.mxu0 0.0
    %4723 = vmatpush1.msra.mxu0 0.0
    %4724 = vmatprep.subr.mxu0 0.0
    %4725 = vmatpush1.msra.mxu0 0.0
    %4726 = vmatprep.subr.mxu0 0.0
    %4727 = vmatpush1.msra.mxu0 0.0
    %4728 = vmatprep.subr.mxu0 0.0
    %4729 = vmatpush1.msra.mxu0 0.0
    %4730 = vmatprep.subr.mxu0 0.0
    %4731 = vmatpush1.msra.mxu0 0.0
    %4732 = vmatprep.subr.mxu0 0.0
    %4733 = vmatpush1.msra.mxu0 0.0
    %4734 = vmatprep.subr.mxu0 0.0
    %4735 = vmatpush1.msra.mxu0 0.0
    %4736 = vmatprep.subr.mxu0 0.0
    %4737 = vmatpush1.msra.mxu0 0.0
    %4738 = vmatprep.subr.mxu0 0.0
    %4739 = vmatpush1.msra.mxu0 0.0
    %4740 = vmatprep.subr.mxu0 0.0
    %4741 = vmatpush1.msra.mxu0 0.0
    %4742 = vmatprep.subr.mxu0 0.0
    %4743 = vmatpush1.msra.mxu0 0.0
    %4744 = vmatprep.subr.mxu0 0.0
    %4745 = vmatpush1.msra.mxu0 0.0
    %4746 = vmatprep.subr.mxu0 0.0
    %4747 = vmatpush1.msra.mxu0 0.0
    %4748 = vmatprep.subr.mxu0 0.0
    %4749 = vmatpush1.msra.mxu0 0.0
    %4750 = vmatprep.subr.mxu0 0.0
    %4751 = vmatpush1.msra.mxu0 0.0
    %4752 = vmatprep.subr.mxu0 0.0
    %4753 = vmatpush1.msra.mxu0 0.0
    %4754 = vmatprep.subr.mxu0 0.0
    %4755 = vmatpush1.msra.mxu0 0.0
    %4756 = vmatprep.subr.mxu0 0.0
    %4757 = vmatpush1.msra.mxu0 0.0
    %4758 = vmatprep.subr.mxu0 0.0
    %4759 = vmatpush1.msra.mxu0 0.0
    %4760 = vmatprep.subr.mxu0 0.0
    %4761 = vmatpush1.msra.mxu0 0.0
    %4762 = vmatprep.subr.mxu0 0.0
    %4763 = vmatpush1.msra.mxu0 0.0
    %4764 = vmatprep.subr.mxu0 0.0
    %4765 = vmatpush1.msra.mxu0 0.0
    %4766 = vmatprep.subr.mxu0 0.0
    %4767 = vmatpush1.msra.mxu0 0.0
    %4768 = vmatprep.subr.mxu0 0.0
    %4769 = vmatpush1.msra.mxu0 0.0
    %4770 = vmatprep.subr.mxu0 0.0
    %4771 = vmatpush1.msra.mxu0 0.0
    %4772 = vmatprep.subr.mxu0 0.0
    %4773 = vmatpush1.msra.mxu0 0.0
    %4774 = vmatprep.subr.mxu0 0.0
    %4775 = vmatpush1.msra.mxu0 0.0
    %4776 = vmatprep.subr.mxu0 0.0
    %4777 = vmatpush1.msra.mxu0 0.0
    %4778 = vmatprep.subr.mxu0 0.0
    %4779 = vmatpush1.msra.mxu0 0.0
    %4780 = vmatprep.mubr.f32.mxu0 0.0
    %4781 = vmatmul.mubr.f32.gmra.mrb[0].mxu0 %v4714
    %v4782 = vpop.f32.mrb[0].mxu0
    %v4783 = vadd.f32 0.0, %v4782
    %v4784 = vpop.f32.mrb[0].mxu0
    %4785 = vdwg.mxu0
    %4786 = vrot.lane.b32.xlu0 %v2979, 120
    %v4787 = vpop.permute.xlu0 %4786
    %v4790 = vsel %vm647, %v4478, 0
    %4792 = vmatprep.subr.mxu0 0.0
    %4793 = vmatpush1.msra.mxu0 %v4787
    %4794 = vmatprep.subr.mxu0 0.0
    %4795 = vmatpush1.msra.mxu0 0.0
    %4796 = vmatprep.subr.mxu0 0.0
    %4797 = vmatpush1.msra.mxu0 0.0
    %4798 = vmatprep.subr.mxu0 0.0
    %4799 = vmatpush1.msra.mxu0 0.0
    %4800 = vmatprep.subr.mxu0 0.0
    %4801 = vmatpush1.msra.mxu0 0.0
    %4802 = vmatprep.subr.mxu0 0.0
    %4803 = vmatpush1.msra.mxu0 0.0
    %4804 = vmatprep.subr.mxu0 0.0
    %4805 = vmatpush1.msra.mxu0 0.0
    %4806 = vmatprep.subr.mxu0 0.0
    %4807 = vmatpush1.msra.mxu0 0.0
    %4808 = vmatprep.subr.mxu0 0.0
    %4809 = vmatpush1.msra.mxu0 0.0
    %4810 = vmatprep.subr.mxu0 0.0
    %4811 = vmatpush1.msra.mxu0 0.0
    %4812 = vmatprep.subr.mxu0 0.0
    %4813 = vmatpush1.msra.mxu0 0.0
    %4814 = vmatprep.subr.mxu0 0.0
    %4815 = vmatpush1.msra.mxu0 0.0
    %4816 = vmatprep.subr.mxu0 0.0
    %4817 = vmatpush1.msra.mxu0 0.0
    %4818 = vmatprep.subr.mxu0 0.0
    %4819 = vmatpush1.msra.mxu0 0.0
    %4820 = vmatprep.subr.mxu0 0.0
    %4821 = vmatpush1.msra.mxu0 0.0
    %4822 = vmatprep.subr.mxu0 0.0
    %4823 = vmatpush1.msra.mxu0 0.0
    %4824 = vmatprep.subr.mxu0 0.0
    %4825 = vmatpush1.msra.mxu0 0.0
    %4826 = vmatprep.subr.mxu0 0.0
    %4827 = vmatpush1.msra.mxu0 0.0
    %4828 = vmatprep.subr.mxu0 0.0
    %4829 = vmatpush1.msra.mxu0 0.0
    %4830 = vmatprep.subr.mxu0 0.0
    %4831 = vmatpush1.msra.mxu0 0.0
    %4832 = vmatprep.subr.mxu0 0.0
    %4833 = vmatpush1.msra.mxu0 0.0
    %4834 = vmatprep.subr.mxu0 0.0
    %4835 = vmatpush1.msra.mxu0 0.0
    %4836 = vmatprep.subr.mxu0 0.0
    %4837 = vmatpush1.msra.mxu0 0.0
    %4838 = vmatprep.subr.mxu0 0.0
    %4839 = vmatpush1.msra.mxu0 0.0
    %4840 = vmatprep.subr.mxu0 0.0
    %4841 = vmatpush1.msra.mxu0 0.0
    %4842 = vmatprep.subr.mxu0 0.0
    %4843 = vmatpush1.msra.mxu0 0.0
    %4844 = vmatprep.subr.mxu0 0.0
    %4845 = vmatpush1.msra.mxu0 0.0
    %4846 = vmatprep.subr.mxu0 0.0
    %4847 = vmatpush1.msra.mxu0 0.0
    %4848 = vmatprep.subr.mxu0 0.0
    %4849 = vmatpush1.msra.mxu0 0.0
    %4850 = vmatprep.subr.mxu0 0.0
    %4851 = vmatpush1.msra.mxu0 0.0
    %4852 = vmatprep.subr.mxu0 0.0
    %4853 = vmatpush1.msra.mxu0 0.0
    %4854 = vmatprep.subr.mxu0 0.0
    %4855 = vmatpush1.msra.mxu0 0.0
    %4856 = vmatprep.mubr.f32.mxu0 0.0
    %4857 = vmatmul.mubr.f32.gmra.mrb[0].mxu0 %v4790
    %v4858 = vpop.f32.mrb[0].mxu0
    %v4859 = vadd.f32 0.0, %v4858
    %v4860 = vpop.f32.mrb[0].mxu0
    %4861 = vdwg.mxu0
    %4862 = vrot.lane.b32.xlu0 %v3049, 120
    %v4863 = vpop.permute.xlu0 %4862
    %v4866 = vsel %vm647, %v4479, 0
    %4868 = vmatprep.subr.mxu0 0.0
    %4869 = vmatpush1.msra.mxu0 %v4863
    %4870 = vmatprep.subr.mxu0 0.0
    %4871 = vmatpush1.msra.mxu0 0.0
    %4872 = vmatprep.subr.mxu0 0.0
    %4873 = vmatpush1.msra.mxu0 0.0
    %4874 = vmatprep.subr.mxu0 0.0
    %4875 = vmatpush1.msra.mxu0 0.0
    %4876 = vmatprep.subr.mxu0 0.0
    %4877 = vmatpush1.msra.mxu0 0.0
    %4878 = vmatprep.subr.mxu0 0.0
    %4879 = vmatpush1.msra.mxu0 0.0
    %4880 = vmatprep.subr.mxu0 0.0
    %4881 = vmatpush1.msra.mxu0 0.0
    %4882 = vmatprep.subr.mxu0 0.0
    %4883 = vmatpush1.msra.mxu0 0.0
    %4884 = vmatprep.subr.mxu0 0.0
    %4885 = vmatpush1.msra.mxu0 0.0
    %4886 = vmatprep.subr.mxu0 0.0
    %4887 = vmatpush1.msra.mxu0 0.0
    %4888 = vmatprep.subr.mxu0 0.0
    %4889 = vmatpush1.msra.mxu0 0.0
    %4890 = vmatprep.subr.mxu0 0.0
    %4891 = vmatpush1.msra.mxu0 0.0
    %4892 = vmatprep.subr.mxu0 0.0
    %4893 = vmatpush1.msra.mxu0 0.0
    %4894 = vmatprep.subr.mxu0 0.0
    %4895 = vmatpush1.msra.mxu0 0.0
    %4896 = vmatprep.subr.mxu0 0.0
    %4897 = vmatpush1.msra.mxu0 0.0
    %4898 = vmatprep.subr.mxu0 0.0
    %4899 = vmatpush1.msra.mxu0 0.0
    %4900 = vmatprep.subr.mxu0 0.0
    %4901 = vmatpush1.msra.mxu0 0.0
    %4902 = vmatprep.subr.mxu0 0.0
    %4903 = vmatpush1.msra.mxu0 0.0
    %4904 = vmatprep.subr.mxu0 0.0
    %4905 = vmatpush1.msra.mxu0 0.0
    %4906 = vmatprep.subr.mxu0 0.0
    %4907 = vmatpush1.msra.mxu0 0.0
    %4908 = vmatprep.subr.mxu0 0.0
    %4909 = vmatpush1.msra.mxu0 0.0
    %4910 = vmatprep.subr.mxu0 0.0
    %4911 = vmatpush1.msra.mxu0 0.0
    %4912 = vmatprep.subr.mxu0 0.0
    %4913 = vmatpush1.msra.mxu0 0.0
    %4914 = vmatprep.subr.mxu0 0.0
    %4915 = vmatpush1.msra.mxu0 0.0
    %4916 = vmatprep.subr.mxu0 0.0
    %4917 = vmatpush1.msra.mxu0 0.0
    %4918 = vmatprep.subr.mxu0 0.0
    %4919 = vmatpush1.msra.mxu0 0.0
    %4920 = vmatprep.subr.mxu0 0.0
    %4921 = vmatpush1.msra.mxu0 0.0
    %4922 = vmatprep.subr.mxu0 0.0
    %4923 = vmatpush1.msra.mxu0 0.0
    %4924 = vmatprep.subr.mxu0 0.0
    %4925 = vmatpush1.msra.mxu0 0.0
    %4926 = vmatprep.subr.mxu0 0.0
    %4927 = vmatpush1.msra.mxu0 0.0
    %4928 = vmatprep.subr.mxu0 0.0
    %4929 = vmatpush1.msra.mxu0 0.0
    %4930 = vmatprep.subr.mxu0 0.0
    %4931 = vmatpush1.msra.mxu0 0.0
    %4932 = vmatprep.mubr.f32.mxu0 0.0
    %4933 = vmatmul.mubr.f32.gmra.mrb[0].mxu0 %v4866
    %v4934 = vpop.f32.mrb[0].mxu0
    %v4935 = vadd.f32 0.0, %v4934
    %v4936 = vpop.f32.mrb[0].mxu0
    %4937 = vdwg.mxu0
    %4938 = vrot.lane.b32.xlu0 %v3119, 120
    %v4939 = vpop.permute.xlu0 %4938
    %v4942 = vsel %vm647, %v4480, 0
    %4944 = vmatprep.subr.mxu0 0.0
    %4945 = vmatpush1.msra.mxu0 %v4939
    %4946 = vmatprep.subr.mxu0 0.0
    %4947 = vmatpush1.msra.mxu0 0.0
    %4948 = vmatprep.subr.mxu0 0.0
    %4949 = vmatpush1.msra.mxu0 0.0
    %4950 = vmatprep.subr.mxu0 0.0
    %4951 = vmatpush1.msra.mxu0 0.0
    %4952 = vmatprep.subr.mxu0 0.0
    %4953 = vmatpush1.msra.mxu0 0.0
    %4954 = vmatprep.subr.mxu0 0.0
    %4955 = vmatpush1.msra.mxu0 0.0
    %4956 = vmatprep.subr.mxu0 0.0
    %4957 = vmatpush1.msra.mxu0 0.0
    %4958 = vmatprep.subr.mxu0 0.0
    %4959 = vmatpush1.msra.mxu0 0.0
    %4960 = vmatprep.subr.mxu0 0.0
    %4961 = vmatpush1.msra.mxu0 0.0
    %4962 = vmatprep.subr.mxu0 0.0
    %4963 = vmatpush1.msra.mxu0 0.0
    %4964 = vmatprep.subr.mxu0 0.0
    %4965 = vmatpush1.msra.mxu0 0.0
    %4966 = vmatprep.subr.mxu0 0.0
    %4967 = vmatpush1.msra.mxu0 0.0
    %4968 = vmatprep.subr.mxu0 0.0
    %4969 = vmatpush1.msra.mxu0 0.0
    %4970 = vmatprep.subr.mxu0 0.0
    %4971 = vmatpush1.msra.mxu0 0.0
    %4972 = vmatprep.subr.mxu0 0.0
    %4973 = vmatpush1.msra.mxu0 0.0
    %4974 = vmatprep.subr.mxu0 0.0
    %4975 = vmatpush1.msra.mxu0 0.0
    %4976 = vmatprep.subr.mxu0 0.0
    %4977 = vmatpush1.msra.mxu0 0.0
    %4978 = vmatprep.subr.mxu0 0.0
    %4979 = vmatpush1.msra.mxu0 0.0
    %4980 = vmatprep.subr.mxu0 0.0
    %4981 = vmatpush1.msra.mxu0 0.0
    %4982 = vmatprep.subr.mxu0 0.0
    %4983 = vmatpush1.msra.mxu0 0.0
    %4984 = vmatprep.subr.mxu0 0.0
    %4985 = vmatpush1.msra.mxu0 0.0
    %4986 = vmatprep.subr.mxu0 0.0
    %4987 = vmatpush1.msra.mxu0 0.0
    %4988 = vmatprep.subr.mxu0 0.0
    %4989 = vmatpush1.msra.mxu0 0.0
    %4990 = vmatprep.subr.mxu0 0.0
    %4991 = vmatpush1.msra.mxu0 0.0
    %4992 = vmatprep.subr.mxu0 0.0
    %4993 = vmatpush1.msra.mxu0 0.0
    %4994 = vmatprep.subr.mxu0 0.0
    %4995 = vmatpush1.msra.mxu0 0.0
    %4996 = vmatprep.subr.mxu0 0.0
    %4997 = vmatpush1.msra.mxu0 0.0
    %4998 = vmatprep.subr.mxu0 0.0
    %4999 = vmatpush1.msra.mxu0 0.0
    %5000 = vmatprep.subr.mxu0 0.0
    %5001 = vmatpush1.msra.mxu0 0.0
    %5002 = vmatprep.subr.mxu0 0.0
    %5003 = vmatpush1.msra.mxu0 0.0
    %5004 = vmatprep.subr.mxu0 0.0
    %5005 = vmatpush1.msra.mxu0 0.0
    %5006 = vmatprep.subr.mxu0 0.0
    %5007 = vmatpush1.msra.mxu0 0.0
    %5008 = vmatprep.mubr.f32.mxu0 0.0
    %5009 = vmatmul.mubr.f32.gmra.mrb[0].mxu0 %v4942
    %v5010 = vpop.f32.mrb[0].mxu0
    %v5011 = vadd.f32 0.0, %v5010
    %v5012 = vpop.f32.mrb[0].mxu0
    %5013 = vdwg.mxu0
    %5014 = vrot.lane.b32.xlu0 %v3189, 120
    %v5015 = vpop.permute.xlu0 %5014
    %v5018 = vsel %vm647, %v4481, 0
    %5020 = vmatprep.subr.mxu0 0.0
    %5021 = vmatpush1.msra.mxu0 %v5015
    %5022 = vmatprep.subr.mxu0 0.0
    %5023 = vmatpush1.msra.mxu0 0.0
    %5024 = vmatprep.subr.mxu0 0.0
    %5025 = vmatpush1.msra.mxu0 0.0
    %5026 = vmatprep.subr.mxu0 0.0
    %5027 = vmatpush1.msra.mxu0 0.0
    %5028 = vmatprep.subr.mxu0 0.0
    %5029 = vmatpush1.msra.mxu0 0.0
    %5030 = vmatprep.subr.mxu0 0.0
    %5031 = vmatpush1.msra.mxu0 0.0
    %5032 = vmatprep.subr.mxu0 0.0
    %5033 = vmatpush1.msra.mxu0 0.0
    %5034 = vmatprep.subr.mxu0 0.0
    %5035 = vmatpush1.msra.mxu0 0.0
    %5036 = vmatprep.subr.mxu0 0.0
    %5037 = vmatpush1.msra.mxu0 0.0
    %5038 = vmatprep.subr.mxu0 0.0
    %5039 = vmatpush1.msra.mxu0 0.0
    %5040 = vmatprep.subr.mxu0 0.0
    %5041 = vmatpush1.msra.mxu0 0.0
    %5042 = vmatprep.subr.mxu0 0.0
    %5043 = vmatpush1.msra.mxu0 0.0
    %5044 = vmatprep.subr.mxu0 0.0
    %5045 = vmatpush1.msra.mxu0 0.0
    %5046 = vmatprep.subr.mxu0 0.0
    %5047 = vmatpush1.msra.mxu0 0.0
    %5048 = vmatprep.subr.mxu0 0.0
    %5049 = vmatpush1.msra.mxu0 0.0
    %5050 = vmatprep.subr.mxu0 0.0
    %5051 = vmatpush1.msra.mxu0 0.0
    %5052 = vmatprep.subr.mxu0 0.0
    %5053 = vmatpush1.msra.mxu0 0.0
    %5054 = vmatprep.subr.mxu0 0.0
    %5055 = vmatpush1.msra.mxu0 0.0
    %5056 = vmatprep.subr.mxu0 0.0
    %5057 = vmatpush1.msra.mxu0 0.0
    %5058 = vmatprep.subr.mxu0 0.0
    %5059 = vmatpush1.msra.mxu0 0.0
    %5060 = vmatprep.subr.mxu0 0.0
    %5061 = vmatpush1.msra.mxu0 0.0
    %5062 = vmatprep.subr.mxu0 0.0
    %5063 = vmatpush1.msra.mxu0 0.0
    %5064 = vmatprep.subr.mxu0 0.0
    %5065 = vmatpush1.msra.mxu0 0.0
    %5066 = vmatprep.subr.mxu0 0.0
    %5067 = vmatpush1.msra.mxu0 0.0
    %5068 = vmatprep.subr.mxu0 0.0
    %5069 = vmatpush1.msra.mxu0 0.0
    %5070 = vmatprep.subr.mxu0 0.0
    %5071 = vmatpush1.msra.mxu0 0.0
    %5072 = vmatprep.subr.mxu0 0.0
    %5073 = vmatpush1.msra.mxu0 0.0
    %5074 = vmatprep.subr.mxu0 0.0
    %5075 = vmatpush1.msra.mxu0 0.0
    %5076 = vmatprep.subr.mxu0 0.0
    %5077 = vmatpush1.msra.mxu0 0.0
    %5078 = vmatprep.subr.mxu0 0.0
    %5079 = vmatpush1.msra.mxu0 0.0
    %5080 = vmatprep.subr.mxu0 0.0
    %5081 = vmatpush1.msra.mxu0 0.0
    %5082 = vmatprep.subr.mxu0 0.0
    %5083 = vmatpush1.msra.mxu0 0.0
    %5084 = vmatprep.mubr.f32.mxu0 0.0
    %5085 = vmatmul.mubr.f32.gmra.mrb[0].mxu0 %v5018
    %v5086 = vpop.f32.mrb[0].mxu0
    %v5087 = vadd.f32 0.0, %v5086
    %v5088 = vpop.f32.mrb[0].mxu0
    %5089 = vdwg.mxu0
    %v5091 = vsel %vm647, %v4555, 0
    %5093 = vmatprep.subr.mxu0 0.0
    %5094 = vmatpush1.msra.mxu0 %v3774
    %5095 = vmatprep.subr.mxu0 0.0
    %5096 = vmatpush1.msra.mxu0 0.0
    %5097 = vmatprep.subr.mxu0 0.0
    %5098 = vmatpush1.msra.mxu0 0.0
    %5099 = vmatprep.subr.mxu0 0.0
    %5100 = vmatpush1.msra.mxu0 0.0
    %5101 = vmatprep.subr.mxu0 0.0
    %5102 = vmatpush1.msra.mxu0 0.0
    %5103 = vmatprep.subr.mxu0 0.0
    %5104 = vmatpush1.msra.mxu0 0.0
    %5105 = vmatprep.subr.mxu0 0.0
    %5106 = vmatpush1.msra.mxu0 0.0
    %5107 = vmatprep.subr.mxu0 0.0
    %5108 = vmatpush1.msra.mxu0 0.0
    %5109 = vmatprep.subr.mxu0 0.0
    %5110 = vmatpush1.msra.mxu0 0.0
    %5111 = vmatprep.subr.mxu0 0.0
    %5112 = vmatpush1.msra.mxu0 0.0
    %5113 = vmatprep.subr.mxu0 0.0
    %5114 = vmatpush1.msra.mxu0 0.0
    %5115 = vmatprep.subr.mxu0 0.0
    %5116 = vmatpush1.msra.mxu0 0.0
    %5117 = vmatprep.subr.mxu0 0.0
    %5118 = vmatpush1.msra.mxu0 0.0
    %5119 = vmatprep.subr.mxu0 0.0
    %5120 = vmatpush1.msra.mxu0 0.0
    %5121 = vmatprep.subr.mxu0 0.0
    %5122 = vmatpush1.msra.mxu0 0.0
    %5123 = vmatprep.subr.mxu0 0.0
    %5124 = vmatpush1.msra.mxu0 0.0
    %5125 = vmatprep.subr.mxu0 0.0
    %5126 = vmatpush1.msra.mxu0 0.0
    %5127 = vmatprep.subr.mxu0 0.0
    %5128 = vmatpush1.msra.mxu0 0.0
    %5129 = vmatprep.subr.mxu0 0.0
    %5130 = vmatpush1.msra.mxu0 0.0
    %5131 = vmatprep.subr.mxu0 0.0
    %5132 = vmatpush1.msra.mxu0 0.0
    %5133 = vmatprep.subr.mxu0 0.0
    %5134 = vmatpush1.msra.mxu0 0.0
    %5135 = vmatprep.subr.mxu0 0.0
    %5136 = vmatpush1.msra.mxu0 0.0
    %5137 = vmatprep.subr.mxu0 0.0
    %5138 = vmatpush1.msra.mxu0 0.0
    %5139 = vmatprep.subr.mxu0 0.0
    %5140 = vmatpush1.msra.mxu0 0.0
    %5141 = vmatprep.subr.mxu0 0.0
    %5142 = vmatpush1.msra.mxu0 0.0
    %5143 = vmatprep.subr.mxu0 0.0
    %5144 = vmatpush1.msra.mxu0 0.0
    %5145 = vmatprep.subr.mxu0 0.0
    %5146 = vmatpush1.msra.mxu0 0.0
    %5147 = vmatprep.subr.mxu0 0.0
    %5148 = vmatpush1.msra.mxu0 0.0
    %5149 = vmatprep.subr.mxu0 0.0
    %5150 = vmatpush1.msra.mxu0 0.0
    %5151 = vmatprep.subr.mxu0 0.0
    %5152 = vmatpush1.msra.mxu0 0.0
    %5153 = vmatprep.subr.mxu0 0.0
    %5154 = vmatpush1.msra.mxu0 0.0
    %5155 = vmatprep.subr.mxu0 0.0
    %5156 = vmatpush1.msra.mxu0 0.0
    %5157 = vmatprep.mubr.f32.mxu0 0.0
    %5158 = vmatmul.mubr.f32.gmra.mrb[0].mxu0 %v5091
    %v5159 = vpop.f32.mrb[0].mxu0
    %v5160 = vadd.f32 0.0, %v5159
    %v5161 = vpop.f32.mrb[0].mxu0
    %5162 = vdwg.mxu0
    %v5164 = vsel %vm647, %v4631, 0
    %5166 = vmatprep.subr.mxu0 0.0
    %5167 = vmatpush1.msra.mxu0 %v3775
    %5168 = vmatprep.subr.mxu0 0.0
    %5169 = vmatpush1.msra.mxu0 0.0
    %5170 = vmatprep.subr.mxu0 0.0
    %5171 = vmatpush1.msra.mxu0 0.0
    %5172 = vmatprep.subr.mxu0 0.0
    %5173 = vmatpush1.msra.mxu0 0.0
    %5174 = vmatprep.subr.mxu0 0.0
    %5175 = vmatpush1.msra.mxu0 0.0
    %5176 = vmatprep.subr.mxu0 0.0
    %5177 = vmatpush1.msra.mxu0 0.0
    %5178 = vmatprep.subr.mxu0 0.0
    %5179 = vmatpush1.msra.mxu0 0.0
    %5180 = vmatprep.subr.mxu0 0.0
    %5181 = vmatpush1.msra.mxu0 0.0
    %5182 = vmatprep.subr.mxu0 0.0
    %5183 = vmatpush1.msra.mxu0 0.0
    %5184 = vmatprep.subr.mxu0 0.0
    %5185 = vmatpush1.msra.mxu0 0.0
    %5186 = vmatprep.subr.mxu0 0.0
    %5187 = vmatpush1.msra.mxu0 0.0
    %5188 = vmatprep.subr.mxu0 0.0
    %5189 = vmatpush1.msra.mxu0 0.0
    %5190 = vmatprep.subr.mxu0 0.0
    %5191 = vmatpush1.msra.mxu0 0.0
    %5192 = vmatprep.subr.mxu0 0.0
    %5193 = vmatpush1.msra.mxu0 0.0
    %5194 = vmatprep.subr.mxu0 0.0
    %5195 = vmatpush1.msra.mxu0 0.0
    %5196 = vmatprep.subr.mxu0 0.0
    %5197 = vmatpush1.msra.mxu0 0.0
    %5198 = vmatprep.subr.mxu0 0.0
    %5199 = vmatpush1.msra.mxu0 0.0
    %5200 = vmatprep.subr.mxu0 0.0
    %5201 = vmatpush1.msra.mxu0 0.0
    %5202 = vmatprep.subr.mxu0 0.0
    %5203 = vmatpush1.msra.mxu0 0.0
    %5204 = vmatprep.subr.mxu0 0.0
    %5205 = vmatpush1.msra.mxu0 0.0
    %5206 = vmatprep.subr.mxu0 0.0
    %5207 = vmatpush1.msra.mxu0 0.0
    %5208 = vmatprep.subr.mxu0 0.0
    %5209 = vmatpush1.msra.mxu0 0.0
    %5210 = vmatprep.subr.mxu0 0.0
    %5211 = vmatpush1.msra.mxu0 0.0
    %5212 = vmatprep.subr.mxu0 0.0
    %5213 = vmatpush1.msra.mxu0 0.0
    %5214 = vmatprep.subr.mxu0 0.0
    %5215 = vmatpush1.msra.mxu0 0.0
    %5216 = vmatprep.subr.mxu0 0.0
    %5217 = vmatpush1.msra.mxu0 0.0
    %5218 = vmatprep.subr.mxu0 0.0
    %5219 = vmatpush1.msra.mxu0 0.0
    %5220 = vmatprep.subr.mxu0 0.0
    %5221 = vmatpush1.msra.mxu0 0.0
    %5222 = vmatprep.subr.mxu0 0.0
    %5223 = vmatpush1.msra.mxu0 0.0
    %5224 = vmatprep.subr.mxu0 0.0
    %5225 = vmatpush1.msra.mxu0 0.0
    %5226 = vmatprep.subr.mxu0 0.0
    %5227 = vmatpush1.msra.mxu0 0.0
    %5228 = vmatprep.subr.mxu0 0.0
    %5229 = vmatpush1.msra.mxu0 0.0
    %5230 = vmatprep.mubr.f32.mxu0 0.0
    %5231 = vmatmul.mubr.f32.gmra.mrb[0].mxu0 %v5164
    %v5232 = vpop.f32.mrb[0].mxu0
    %v5233 = vadd.f32 0.0, %v5232
    %v5234 = vpop.f32.mrb[0].mxu0
    %5235 = vdwg.mxu0
    %v5237 = vsel %vm647, %v4707, 0
    %5239 = vmatprep.subr.mxu0 0.0
    %5240 = vmatpush1.msra.mxu0 %v3776
    %5241 = vmatprep.subr.mxu0 0.0
    %5242 = vmatpush1.msra.mxu0 0.0
    %5243 = vmatprep.subr.mxu0 0.0
    %5244 = vmatpush1.msra.mxu0 0.0
    %5245 = vmatprep.subr.mxu0 0.0
    %5246 = vmatpush1.msra.mxu0 0.0
    %5247 = vmatprep.subr.mxu0 0.0
    %5248 = vmatpush1.msra.mxu0 0.0
    %5249 = vmatprep.subr.mxu0 0.0
    %5250 = vmatpush1.msra.mxu0 0.0
    %5251 = vmatprep.subr.mxu0 0.0
    %5252 = vmatpush1.msra.mxu0 0.0
    %5253 = vmatprep.subr.mxu0 0.0
    %5254 = vmatpush1.msra.mxu0 0.0
    %5255 = vmatprep.subr.mxu0 0.0
    %5256 = vmatpush1.msra.mxu0 0.0
    %5257 = vmatprep.subr.mxu0 0.0
    %5258 = vmatpush1.msra.mxu0 0.0
    %5259 = vmatprep.subr.mxu0 0.0
    %5260 = vmatpush1.msra.mxu0 0.0
    %5261 = vmatprep.subr.mxu0 0.0
    %5262 = vmatpush1.msra.mxu0 0.0
    %5263 = vmatprep.subr.mxu0 0.0
    %5264 = vmatpush1.msra.mxu0 0.0
    %5265 = vmatprep.subr.mxu0 0.0
    %5266 = vmatpush1.msra.mxu0 0.0
    %5267 = vmatprep.subr.mxu0 0.0
    %5268 = vmatpush1.msra.mxu0 0.0
    %5269 = vmatprep.subr.mxu0 0.0
    %5270 = vmatpush1.msra.mxu0 0.0
    %5271 = vmatprep.subr.mxu0 0.0
    %5272 = vmatpush1.msra.mxu0 0.0
    %5273 = vmatprep.subr.mxu0 0.0
    %5274 = vmatpush1.msra.mxu0 0.0
    %5275 = vmatprep.subr.mxu0 0.0
    %5276 = vmatpush1.msra.mxu0 0.0
    %5277 = vmatprep.subr.mxu0 0.0
    %5278 = vmatpush1.msra.mxu0 0.0
    %5279 = vmatprep.subr.mxu0 0.0
    %5280 = vmatpush1.msra.mxu0 0.0
    %5281 = vmatprep.subr.mxu0 0.0
    %5282 = vmatpush1.msra.mxu0 0.0
    %5283 = vmatprep.subr.mxu0 0.0
    %5284 = vmatpush1.msra.mxu0 0.0
    %5285 = vmatprep.subr.mxu0 0.0
    %5286 = vmatpush1.msra.mxu0 0.0
    %5287 = vmatprep.subr.mxu0 0.0
    %5288 = vmatpush1.msra.mxu0 0.0
    %5289 = vmatprep.subr.mxu0 0.0
    %5290 = vmatpush1.msra.mxu0 0.0
    %5291 = vmatprep.subr.mxu0 0.0
    %5292 = vmatpush1.msra.mxu0 0.0
    %5293 = vmatprep.subr.mxu0 0.0
    %5294 = vmatpush1.msra.mxu0 0.0
    %5295 = vmatprep.subr.mxu0 0.0
    %5296 = vmatpush1.msra.mxu0 0.0
    %5297 = vmatprep.subr.mxu0 0.0
    %5298 = vmatpush1.msra.mxu0 0.0
    %5299 = vmatprep.subr.mxu0 0.0
    %5300 = vmatpush1.msra.mxu0 0.0
    %5301 = vmatprep.subr.mxu0 0.0
    %5302 = vmatpush1.msra.mxu0 0.0
    %5303 = vmatprep.mubr.f32.mxu0 0.0
    %5304 = vmatmul.mubr.f32.gmra.mrb[0].mxu0 %v5237
    %v5305 = vpop.f32.mrb[0].mxu0
    %v5306 = vadd.f32 0.0, %v5305
    %v5307 = vpop.f32.mrb[0].mxu0
    %5308 = vdwg.mxu0
    %v5310 = vsel %vm647, %v4783, 0
    %5312 = vmatprep.subr.mxu0 0.0
    %5313 = vmatpush1.msra.mxu0 %v3777
    %5314 = vmatprep.subr.mxu0 0.0
    %5315 = vmatpush1.msra.mxu0 0.0
    %5316 = vmatprep.subr.mxu0 0.0
    %5317 = vmatpush1.msra.mxu0 0.0
    %5318 = vmatprep.subr.mxu0 0.0
    %5319 = vmatpush1.msra.mxu0 0.0
    %5320 = vmatprep.subr.mxu0 0.0
    %5321 = vmatpush1.msra.mxu0 0.0
    %5322 = vmatprep.subr.mxu0 0.0
    %5323 = vmatpush1.msra.mxu0 0.0
    %5324 = vmatprep.subr.mxu0 0.0
    %5325 = vmatpush1.msra.mxu0 0.0
    %5326 = vmatprep.subr.mxu0 0.0
    %5327 = vmatpush1.msra.mxu0 0.0
    %5328 = vmatprep.subr.mxu0 0.0
    %5329 = vmatpush1.msra.mxu0 0.0
    %5330 = vmatprep.subr.mxu0 0.0
    %5331 = vmatpush1.msra.mxu0 0.0
    %5332 = vmatprep.subr.mxu0 0.0
    %5333 = vmatpush1.msra.mxu0 0.0
    %5334 = vmatprep.subr.mxu0 0.0
    %5335 = vmatpush1.msra.mxu0 0.0
    %5336 = vmatprep.subr.mxu0 0.0
    %5337 = vmatpush1.msra.mxu0 0.0
    %5338 = vmatprep.subr.mxu0 0.0
    %5339 = vmatpush1.msra.mxu0 0.0
    %5340 = vmatprep.subr.mxu0 0.0
    %5341 = vmatpush1.msra.mxu0 0.0
    %5342 = vmatprep.subr.mxu0 0.0
    %5343 = vmatpush1.msra.mxu0 0.0
    %5344 = vmatprep.subr.mxu0 0.0
    %5345 = vmatpush1.msra.mxu0 0.0
    %5346 = vmatprep.subr.mxu0 0.0
    %5347 = vmatpush1.msra.mxu0 0.0
    %5348 = vmatprep.subr.mxu0 0.0
    %5349 = vmatpush1.msra.mxu0 0.0
    %5350 = vmatprep.subr.mxu0 0.0
    %5351 = vmatpush1.msra.mxu0 0.0
    %5352 = vmatprep.subr.mxu0 0.0
    %5353 = vmatpush1.msra.mxu0 0.0
    %5354 = vmatprep.subr.mxu0 0.0
    %5355 = vmatpush1.msra.mxu0 0.0
    %5356 = vmatprep.subr.mxu0 0.0
    %5357 = vmatpush1.msra.mxu0 0.0
    %5358 = vmatprep.subr.mxu0 0.0
    %5359 = vmatpush1.msra.mxu0 0.0
    %5360 = vmatprep.subr.mxu0 0.0
    %5361 = vmatpush1.msra.mxu0 0.0
    %5362 = vmatprep.subr.mxu0 0.0
    %5363 = vmatpush1.msra.mxu0 0.0
    %5364 = vmatprep.subr.mxu0 0.0
    %5365 = vmatpush1.msra.mxu0 0.0
    %5366 = vmatprep.subr.mxu0 0.0
    %5367 = vmatpush1.msra.mxu0 0.0
    %5368 = vmatprep.subr.mxu0 0.0
    %5369 = vmatpush1.msra.mxu0 0.0
    %5370 = vmatprep.subr.mxu0 0.0
    %5371 = vmatpush1.msra.mxu0 0.0
    %5372 = vmatprep.subr.mxu0 0.0
    %5373 = vmatpush1.msra.mxu0 0.0
    %5374 = vmatprep.subr.mxu0 0.0
    %5375 = vmatpush1.msra.mxu0 0.0
    %5376 = vmatprep.mubr.f32.mxu0 0.0
    %5377 = vmatmul.mubr.f32.gmra.mrb[0].mxu0 %v5310
    %v5378 = vpop.f32.mrb[0].mxu0
    %v5379 = vadd.f32 0.0, %v5378
    %v5380 = vpop.f32.mrb[0].mxu0
    %5381 = vdwg.mxu0
    %v5383 = vsel %vm647, %v4859, 0
    %5385 = vmatprep.subr.mxu0 0.0
    %5386 = vmatpush1.msra.mxu0 %v3774
    %5387 = vmatprep.subr.mxu0 0.0
    %5388 = vmatpush1.msra.mxu0 0.0
    %5389 = vmatprep.subr.mxu0 0.0
    %5390 = vmatpush1.msra.mxu0 0.0
    %5391 = vmatprep.subr.mxu0 0.0
    %5392 = vmatpush1.msra.mxu0 0.0
    %5393 = vmatprep.subr.mxu0 0.0
    %5394 = vmatpush1.msra.mxu0 0.0
    %5395 = vmatprep.subr.mxu0 0.0
    %5396 = vmatpush1.msra.mxu0 0.0
    %5397 = vmatprep.subr.mxu0 0.0
    %5398 = vmatpush1.msra.mxu0 0.0
    %5399 = vmatprep.subr.mxu0 0.0
    %5400 = vmatpush1.msra.mxu0 0.0
    %5401 = vmatprep.subr.mxu0 0.0
    %5402 = vmatpush1.msra.mxu0 0.0
    %5403 = vmatprep.subr.mxu0 0.0
    %5404 = vmatpush1.msra.mxu0 0.0
    %5405 = vmatprep.subr.mxu0 0.0
    %5406 = vmatpush1.msra.mxu0 0.0
    %5407 = vmatprep.subr.mxu0 0.0
    %5408 = vmatpush1.msra.mxu0 0.0
    %5409 = vmatprep.subr.mxu0 0.0
    %5410 = vmatpush1.msra.mxu0 0.0
    %5411 = vmatprep.subr.mxu0 0.0
    %5412 = vmatpush1.msra.mxu0 0.0
    %5413 = vmatprep.subr.mxu0 0.0
    %5414 = vmatpush1.msra.mxu0 0.0
    %5415 = vmatprep.subr.mxu0 0.0
    %5416 = vmatpush1.msra.mxu0 0.0
    %5417 = vmatprep.subr.mxu0 0.0
    %5418 = vmatpush1.msra.mxu0 0.0
    %5419 = vmatprep.subr.mxu0 0.0
    %5420 = vmatpush1.msra.mxu0 0.0
    %5421 = vmatprep.subr.mxu0 0.0
    %5422 = vmatpush1.msra.mxu0 0.0
    %5423 = vmatprep.subr.mxu0 0.0
    %5424 = vmatpush1.msra.mxu0 0.0
    %5425 = vmatprep.subr.mxu0 0.0
    %5426 = vmatpush1.msra.mxu0 0.0
    %5427 = vmatprep.subr.mxu0 0.0
    %5428 = vmatpush1.msra.mxu0 0.0
    %5429 = vmatprep.subr.mxu0 0.0
    %5430 = vmatpush1.msra.mxu0 0.0
    %5431 = vmatprep.subr.mxu0 0.0
    %5432 = vmatpush1.msra.mxu0 0.0
    %5433 = vmatprep.subr.mxu0 0.0
    %5434 = vmatpush1.msra.mxu0 0.0
    %5435 = vmatprep.subr.mxu0 0.0
    %5436 = vmatpush1.msra.mxu0 0.0
    %5437 = vmatprep.subr.mxu0 0.0
    %5438 = vmatpush1.msra.mxu0 0.0
    %5439 = vmatprep.subr.mxu0 0.0
    %5440 = vmatpush1.msra.mxu0 0.0
    %5441 = vmatprep.subr.mxu0 0.0
    %5442 = vmatpush1.msra.mxu0 0.0
    %5443 = vmatprep.subr.mxu0 0.0
    %5444 = vmatpush1.msra.mxu0 0.0
    %5445 = vmatprep.subr.mxu0 0.0
    %5446 = vmatpush1.msra.mxu0 0.0
    %5447 = vmatprep.subr.mxu0 0.0
    %5448 = vmatpush1.msra.mxu0 0.0
    %5449 = vmatprep.mubr.f32.mxu0 0.0
    %5450 = vmatmul.mubr.f32.gmra.mrb[0].mxu0 %v5383
    %v5451 = vpop.f32.mrb[0].mxu0
    %v5452 = vadd.f32 0.0, %v5451
    %v5453 = vpop.f32.mrb[0].mxu0
    %5454 = vdwg.mxu0
    %v5456 = vsel %vm647, %v4935, 0
    %5458 = vmatprep.subr.mxu0 0.0
    %5459 = vmatpush1.msra.mxu0 %v3775
    %5460 = vmatprep.subr.mxu0 0.0
    %5461 = vmatpush1.msra.mxu0 0.0
    %5462 = vmatprep.subr.mxu0 0.0
    %5463 = vmatpush1.msra.mxu0 0.0
    %5464 = vmatprep.subr.mxu0 0.0
    %5465 = vmatpush1.msra.mxu0 0.0
    %5466 = vmatprep.subr.mxu0 0.0
    %5467 = vmatpush1.msra.mxu0 0.0
    %5468 = vmatprep.subr.mxu0 0.0
    %5469 = vmatpush1.msra.mxu0 0.0
    %5470 = vmatprep.subr.mxu0 0.0
    %5471 = vmatpush1.msra.mxu0 0.0
    %5472 = vmatprep.subr.mxu0 0.0
    %5473 = vmatpush1.msra.mxu0 0.0
    %5474 = vmatprep.subr.mxu0 0.0
    %5475 = vmatpush1.msra.mxu0 0.0
    %5476 = vmatprep.subr.mxu0 0.0
    %5477 = vmatpush1.msra.mxu0 0.0
    %5478 = vmatprep.subr.mxu0 0.0
    %5479 = vmatpush1.msra.mxu0 0.0
    %5480 = vmatprep.subr.mxu0 0.0
    %5481 = vmatpush1.msra.mxu0 0.0
    %5482 = vmatprep.subr.mxu0 0.0
    %5483 = vmatpush1.msra.mxu0 0.0
    %5484 = vmatprep.subr.mxu0 0.0
    %5485 = vmatpush1.msra.mxu0 0.0
    %5486 = vmatprep.subr.mxu0 0.0
    %5487 = vmatpush1.msra.mxu0 0.0
    %5488 = vmatprep.subr.mxu0 0.0
    %5489 = vmatpush1.msra.mxu0 0.0
    %5490 = vmatprep.subr.mxu0 0.0
    %5491 = vmatpush1.msra.mxu0 0.0
    %5492 = vmatprep.subr.mxu0 0.0
    %5493 = vmatpush1.msra.mxu0 0.0
    %5494 = vmatprep.subr.mxu0 0.0
    %5495 = vmatpush1.msra.mxu0 0.0
    %5496 = vmatprep.subr.mxu0 0.0
    %5497 = vmatpush1.msra.mxu0 0.0
    %5498 = vmatprep.subr.mxu0 0.0
    %5499 = vmatpush1.msra.mxu0 0.0
    %5500 = vmatprep.subr.mxu0 0.0
    %5501 = vmatpush1.msra.mxu0 0.0
    %5502 = vmatprep.subr.mxu0 0.0
    %5503 = vmatpush1.msra.mxu0 0.0
    %5504 = vmatprep.subr.mxu0 0.0
    %5505 = vmatpush1.msra.mxu0 0.0
    %5506 = vmatprep.subr.mxu0 0.0
    %5507 = vmatpush1.msra.mxu0 0.0
    %5508 = vmatprep.subr.mxu0 0.0
    %5509 = vmatpush1.msra.mxu0 0.0
    %5510 = vmatprep.subr.mxu0 0.0
    %5511 = vmatpush1.msra.mxu0 0.0
    %5512 = vmatprep.subr.mxu0 0.0
    %5513 = vmatpush1.msra.mxu0 0.0
    %5514 = vmatprep.subr.mxu0 0.0
    %5515 = vmatpush1.msra.mxu0 0.0
    %5516 = vmatprep.subr.mxu0 0.0
    %5517 = vmatpush1.msra.mxu0 0.0
    %5518 = vmatprep.subr.mxu0 0.0
    %5519 = vmatpush1.msra.mxu0 0.0
    %5520 = vmatprep.subr.mxu0 0.0
    %5521 = vmatpush1.msra.mxu0 0.0
    %5522 = vmatprep.mubr.f32.mxu0 0.0
    %5523 = vmatmul.mubr.f32.gmra.mrb[0].mxu0 %v5456
    %v5524 = vpop.f32.mrb[0].mxu0
    %v5525 = vadd.f32 0.0, %v5524
    %v5526 = vpop.f32.mrb[0].mxu0
    %5527 = vdwg.mxu0
    %v5529 = vsel %vm647, %v5011, 0
    %5531 = vmatprep.subr.mxu0 0.0
    %5532 = vmatpush1.msra.mxu0 %v3776
    %5533 = vmatprep.subr.mxu0 0.0
    %5534 = vmatpush1.msra.mxu0 0.0
    %5535 = vmatprep.subr.mxu0 0.0
    %5536 = vmatpush1.msra.mxu0 0.0
    %5537 = vmatprep.subr.mxu0 0.0
    %5538 = vmatpush1.msra.mxu0 0.0
    %5539 = vmatprep.subr.mxu0 0.0
    %5540 = vmatpush1.msra.mxu0 0.0
    %5541 = vmatprep.subr.mxu0 0.0
    %5542 = vmatpush1.msra.mxu0 0.0
    %5543 = vmatprep.subr.mxu0 0.0
    %5544 = vmatpush1.msra.mxu0 0.0
    %5545 = vmatprep.subr.mxu0 0.0
    %5546 = vmatpush1.msra.mxu0 0.0
    %5547 = vmatprep.subr.mxu0 0.0
    %5548 = vmatpush1.msra.mxu0 0.0
    %5549 = vmatprep.subr.mxu0 0.0
    %5550 = vmatpush1.msra.mxu0 0.0
    %5551 = vmatprep.subr.mxu0 0.0
    %5552 = vmatpush1.msra.mxu0 0.0
    %5553 = vmatprep.subr.mxu0 0.0
    %5554 = vmatpush1.msra.mxu0 0.0
    %5555 = vmatprep.subr.mxu0 0.0
    %5556 = vmatpush1.msra.mxu0 0.0
    %5557 = vmatprep.subr.mxu0 0.0
    %5558 = vmatpush1.msra.mxu0 0.0
    %5559 = vmatprep.subr.mxu0 0.0
    %5560 = vmatpush1.msra.mxu0 0.0
    %5561 = vmatprep.subr.mxu0 0.0
    %5562 = vmatpush1.msra.mxu0 0.0
    %5563 = vmatprep.subr.mxu0 0.0
    %5564 = vmatpush1.msra.mxu0 0.0
    %5565 = vmatprep.subr.mxu0 0.0
    %5566 = vmatpush1.msra.mxu0 0.0
    %5567 = vmatprep.subr.mxu0 0.0
    %5568 = vmatpush1.msra.mxu0 0.0
    %5569 = vmatprep.subr.mxu0 0.0
    %5570 = vmatpush1.msra.mxu0 0.0
    %5571 = vmatprep.subr.mxu0 0.0
    %5572 = vmatpush1.msra.mxu0 0.0
    %5573 = vmatprep.subr.mxu0 0.0
    %5574 = vmatpush1.msra.mxu0 0.0
    %5575 = vmatprep.subr.mxu0 0.0
    %5576 = vmatpush1.msra.mxu0 0.0
    %5577 = vmatprep.subr.mxu0 0.0
    %5578 = vmatpush1.msra.mxu0 0.0
    %5579 = vmatprep.subr.mxu0 0.0
    %5580 = vmatpush1.msra.mxu0 0.0
    %5581 = vmatprep.subr.mxu0 0.0
    %5582 = vmatpush1.msra.mxu0 0.0
    %5583 = vmatprep.subr.mxu0 0.0
    %5584 = vmatpush1.msra.mxu0 0.0
    %5585 = vmatprep.subr.mxu0 0.0
    %5586 = vmatpush1.msra.mxu0 0.0
    %5587 = vmatprep.subr.mxu0 0.0
    %5588 = vmatpush1.msra.mxu0 0.0
    %5589 = vmatprep.subr.mxu0 0.0
    %5590 = vmatpush1.msra.mxu0 0.0
    %5591 = vmatprep.subr.mxu0 0.0
    %5592 = vmatpush1.msra.mxu0 0.0
    %5593 = vmatprep.subr.mxu0 0.0
    %5594 = vmatpush1.msra.mxu0 0.0
    %5595 = vmatprep.mubr.f32.mxu0 0.0
    %5596 = vmatmul.mubr.f32.gmra.mrb[0].mxu0 %v5529
    %v5597 = vpop.f32.mrb[0].mxu0
    %v5598 = vadd.f32 0.0, %v5597
    %v5599 = vpop.f32.mrb[0].mxu0
    %5600 = vdwg.mxu0
    %v5602 = vsel %vm647, %v5087, 0
    %5604 = vmatprep.subr.mxu0 0.0
    %5605 = vmatpush1.msra.mxu0 %v3777
    %5606 = vmatprep.subr.mxu0 0.0
    %5607 = vmatpush1.msra.mxu0 0.0
    %5608 = vmatprep.subr.mxu0 0.0
    %5609 = vmatpush1.msra.mxu0 0.0
    %5610 = vmatprep.subr.mxu0 0.0
    %5611 = vmatpush1.msra.mxu0 0.0
    %5612 = vmatprep.subr.mxu0 0.0
    %5613 = vmatpush1.msra.mxu0 0.0
    %5614 = vmatprep.subr.mxu0 0.0
    %5615 = vmatpush1.msra.mxu0 0.0
    %5616 = vmatprep.subr.mxu0 0.0
    %5617 = vmatpush1.msra.mxu0 0.0
    %5618 = vmatprep.subr.mxu0 0.0
    %5619 = vmatpush1.msra.mxu0 0.0
    %5620 = vmatprep.subr.mxu0 0.0
    %5621 = vmatpush1.msra.mxu0 0.0
    %5622 = vmatprep.subr.mxu0 0.0
    %5623 = vmatpush1.msra.mxu0 0.0
    %5624 = vmatprep.subr.mxu0 0.0
    %5625 = vmatpush1.msra.mxu0 0.0
    %5626 = vmatprep.subr.mxu0 0.0
    %5627 = vmatpush1.msra.mxu0 0.0
    %5628 = vmatprep.subr.mxu0 0.0
    %5629 = vmatpush1.msra.mxu0 0.0
    %5630 = vmatprep.subr.mxu0 0.0
    %5631 = vmatpush1.msra.mxu0 0.0
    %5632 = vmatprep.subr.mxu0 0.0
    %5633 = vmatpush1.msra.mxu0 0.0
    %5634 = vmatprep.subr.mxu0 0.0
    %5635 = vmatpush1.msra.mxu0 0.0
    %5636 = vmatprep.subr.mxu0 0.0
    %5637 = vmatpush1.msra.mxu0 0.0
    %5638 = vmatprep.subr.mxu0 0.0
    %5639 = vmatpush1.msra.mxu0 0.0
    %5640 = vmatprep.subr.mxu0 0.0
    %5641 = vmatpush1.msra.mxu0 0.0
    %5642 = vmatprep.subr.mxu0 0.0
    %5643 = vmatpush1.msra.mxu0 0.0
    %5644 = vmatprep.subr.mxu0 0.0
    %5645 = vmatpush1.msra.mxu0 0.0
    %5646 = vmatprep.subr.mxu0 0.0
    %5647 = vmatpush1.msra.mxu0 0.0
    %5648 = vmatprep.subr.mxu0 0.0
    %5649 = vmatpush1.msra.mxu0 0.0
    %5650 = vmatprep.subr.mxu0 0.0
    %5651 = vmatpush1.msra.mxu0 0.0
    %5652 = vmatprep.subr.mxu0 0.0
    %5653 = vmatpush1.msra.mxu0 0.0
    %5654 = vmatprep.subr.mxu0 0.0
    %5655 = vmatpush1.msra.mxu0 0.0
    %5656 = vmatprep.subr.mxu0 0.0
    %5657 = vmatpush1.msra.mxu0 0.0
    %5658 = vmatprep.subr.mxu0 0.0
    %5659 = vmatpush1.msra.mxu0 0.0
    %5660 = vmatprep.subr.mxu0 0.0
    %5661 = vmatpush1.msra.mxu0 0.0
    %5662 = vmatprep.subr.mxu0 0.0
    %5663 = vmatpush1.msra.mxu0 0.0
    %5664 = vmatprep.subr.mxu0 0.0
    %5665 = vmatpush1.msra.mxu0 0.0
    %5666 = vmatprep.subr.mxu0 0.0
    %5667 = vmatpush1.msra.mxu0 0.0
    %5668 = vmatprep.mubr.f32.mxu0 0.0
    %5669 = vmatmul.mubr.f32.gmra.mrb[0].mxu0 %v5602
    %v5670 = vpop.f32.mrb[0].mxu0
    %v5671 = vadd.f32 0.0, %v5670
    %v5672 = vpop.f32.mrb[0].mxu0
    %5673 = vdwg.mxu0
    %v5674 = vsel %vm73, %v5160, 0.0
    %v5675 = vsel %vm73, %v5233, 0.0
    %v5676 = vadd.f32 %v5674, %v5675
    %v5677 = vsel %vm73, %v5306, 0.0
    %v5678 = vadd.f32 %v5676, %v5677
    %v5679 = vsel %vm73, %v5379, 0.0
    %v5680 = vadd.f32 %v5678, %v5679
    %v5681 = vsel %vm73, %v5452, 0.0
    %v5682 = vsel %vm73, %v5525, 0.0
    %v5683 = vadd.f32 %v5681, %v5682
    %v5684 = vsel %vm73, %v5598, 0.0
    %v5685 = vadd.f32 %v5683, %v5684
    %v5686 = vsel %vm73, %v5671, 0.0
    %v5687 = vadd.f32 %v5685, %v5686
    %v5688 = vlaneseq
    %v5689 = vshrl.u32 %v5688, 7
    %v5690 = vsub.s32 3, %v5689
    %v5691 = vrot.slane %v55, %v5690
    %v5692 = vadd.f32 %v5680, %v5691
    %v5693 = vadd.f32 %v5687, %v5691
    %v5694 = vadd.f32 %v5692, %v2608
    %v5695 = vadd.f32 %v5693, %v2609
    %v5696 = vsel %vm73, %v5694, 0.0
    %5697 = vadd.xlane.f32.xlu0 %v5696
    %v5698 = vpop.xlane.xlu0 %5697
    %v5699 = vsel %vm73, %v5695, 0.0
    %5700 = vadd.xlane.f32.xlu0 %v5699
    %v5701 = vpop.xlane.xlu0 %5700
    %v5702 = vmul.f32 %v5698, %v2577
    %v5703 = vmul.f32 %v5701, %v2577
    %v5704 = vsub.f32 %v5694, %v5702
    %v5705 = vsub.f32 %v5695, %v5703
    %v5706 = vmul.f32 %v5704, %v5704
    %v5707 = vmul.f32 %v5705, %v5705
    %v5708 = vsel %vm73, %v5706, 0.0
    %5709 = vadd.xlane.f32.xlu0 %v5708
    %v5710 = vpop.xlane.xlu0 %5709
    %v5711 = vsel %vm73, %v5707, 0.0
    %5712 = vadd.xlane.f32.xlu0 %v5711
    %v5713 = vpop.xlane.xlu0 %5712
    %v5714 = vmul.f32 %v5710, %v2577
    %v5715 = vmul.f32 %v5713, %v2577
    %v5716 = vadd.f32 %v5714, 1e-05
    %v5717 = vadd.f32 %v5715, 1e-05
    %v5718 = vrsqrt.pop %v5716
    %v5719 = vrsqrt.pop %v5717
    %v5720 = vmul.f32 %v5704, %v5718
    %v5721 = vmul.f32 %v5705, %v5719
    %v5722 = vlaneseq
    %v5723 = vshrl.u32 %v5722, 7
    %v5724 = vsub.s32 4, %v5723
    %v5725 = vrot.slane %v55, %v5724
    %v5726 = vmul.f32 %v5720, %v5725
    %v5727 = vmul.f32 %v5721, %v5725
    %v5728 = vlaneseq
    %v5729 = vshrl.u32 %v5728, 7
    %v5730 = vsub.s32 5, %v5729
    %v5731 = vrot.slane %v55, %v5730
    %v5732 = vadd.f32 %v5726, %v5731
    %v5733 = vadd.f32 %v5727, %v5731
    %v5734 = vld [vmem:[%s8] sm:$0xff]
    %v5735 = vld [vmem:[%s8 + $0x8] sm:$0xff]
    %v5736 = vld [vmem:[%s8 + $0x10] sm:$0xff]
    %v5737 = vld [vmem:[%s8 + $0x18] sm:$0xff]
    %v5738 = vld [vmem:[%s9] sm:$0x1]
    %v5740 = vlaneseq
    %v5741 = vshrl.u32 %v5740, 7
    %v5742 = vsub.s32 0, %v5741
    %v5743 = vrot.slane %v5738, %v5742
    %v5746 = vsel %vm73, %v5732, 0
    %v5749 = vsel %vm73, %v5733, 0
    %5751 = vmatprep.subr.mxu0 0.0
    %5752 = vmatpush1.msra.mxu0 %v5734
    %5753 = vmatprep.subr.mxu0 0.0
    %5754 = vmatpush1.msra.mxu0 %v5735
    %5755 = vmatprep.subr.mxu0 0.0
    %5756 = vmatpush1.msra.mxu0 %v5736
    %5757 = vmatprep.subr.mxu0 0.0
    %5758 = vmatpush1.msra.mxu0 %v5737
    %5759 = vmatprep.subr.mxu0 0.0
    %5760 = vmatpush1.msra.mxu0 0.0
    %5761 = vmatprep.subr.mxu0 0.0
    %5762 = vmatpush1.msra.mxu0 0.0
    %5763 = vmatprep.subr.mxu0 0.0
    %5764 = vmatpush1.msra.mxu0 0.0
    %5765 = vmatprep.subr.mxu0 0.0
    %5766 = vmatpush1.msra.mxu0 0.0
    %5767 = vmatprep.subr.mxu0 0.0
    %5768 = vmatpush1.msra.mxu0 0.0
    %5769 = vmatprep.subr.mxu0 0.0
    %5770 = vmatpush1.msra.mxu0 0.0
    %5771 = vmatprep.subr.mxu0 0.0
    %5772 = vmatpush1.msra.mxu0 0.0
    %5773 = vmatprep.subr.mxu0 0.0
    %5774 = vmatpush1.msra.mxu0 0.0
    %5775 = vmatprep.subr.mxu0 0.0
    %5776 = vmatpush1.msra.mxu0 0.0
    %5777 = vmatprep.subr.mxu0 0.0
    %5778 = vmatpush1.msra.mxu0 0.0
    %5779 = vmatprep.subr.mxu0 0.0
    %5780 = vmatpush1.msra.mxu0 0.0
    %5781 = vmatprep.subr.mxu0 0.0
    %5782 = vmatpush1.msra.mxu0 0.0
    %5783 = vmatprep.subr.mxu0 0.0
    %5784 = vmatpush1.msra.mxu0 0.0
    %5785 = vmatprep.subr.mxu0 0.0
    %5786 = vmatpush1.msra.mxu0 0.0
    %5787 = vmatprep.subr.mxu0 0.0
    %5788 = vmatpush1.msra.mxu0 0.0
    %5789 = vmatprep.subr.mxu0 0.0
    %5790 = vmatpush1.msra.mxu0 0.0
    %5791 = vmatprep.subr.mxu0 0.0
    %5792 = vmatpush1.msra.mxu0 0.0
    %5793 = vmatprep.subr.mxu0 0.0
    %5794 = vmatpush1.msra.mxu0 0.0
    %5795 = vmatprep.subr.mxu0 0.0
    %5796 = vmatpush1.msra.mxu0 0.0
    %5797 = vmatprep.subr.mxu0 0.0
    %5798 = vmatpush1.msra.mxu0 0.0
    %5799 = vmatprep.subr.mxu0 0.0
    %5800 = vmatpush1.msra.mxu0 0.0
    %5801 = vmatprep.subr.mxu0 0.0
    %5802 = vmatpush1.msra.mxu0 0.0
    %5803 = vmatprep.subr.mxu0 0.0
    %5804 = vmatpush1.msra.mxu0 0.0
    %5805 = vmatprep.subr.mxu0 0.0
    %5806 = vmatpush1.msra.mxu0 0.0
    %5807 = vmatprep.subr.mxu0 0.0
    %5808 = vmatpush1.msra.mxu0 0.0
    %5809 = vmatprep.subr.mxu0 0.0
    %5810 = vmatpush1.msra.mxu0 0.0
    %5811 = vmatprep.subr.mxu0 0.0
    %5812 = vmatpush1.msra.mxu0 0.0
    %5813 = vmatprep.subr.mxu0 0.0
    %5814 = vmatpush1.msra.mxu0 0.0
    %5815 = vmatprep.mubr.f32.mxu0 0.0
    %5816 = vmatmul.mubr.f32.gmra.mrb[0].mxu0 %v5746
    %v5817 = vpop.f32.mrb[0].mxu0
    %v5818 = vadd.f32 %v5743, %v5817
    %v5819 = vpop.f32.mrb[0].mxu0
    %5820 = vmatprep.mubr.f32.mxu0 0.0
    %5821 = vmatmul.mubr.f32.gmra.mrb[0].mxu0 %v5749
    %v5822 = vpop.f32.mrb[0].mxu0
    %v5823 = vadd.f32 %v5743, %v5822
    %v5824 = vpop.f32.mrb[0].mxu0
    %5825 = vdwg.mxu0
    %v5826 = vmax.f32 %v5818, 0.0
    %v5827 = vmax.f32 %v5823, 0.0
    %v5828 = vld [vmem:[%s10] sm:$0xff]
    %v5829 = vld [vmem:[%s10 + $0x8] sm:$0xff]
    %v5830 = vld [vmem:[%s10 + $0x10] sm:$0xff]
    %v5831 = vld [vmem:[%s10 + $0x18] sm:$0xff]
    %v5832 = vld [vmem:[%s10 + $0x20] sm:$0xff]
    %v5833 = vld [vmem:[%s10 + $0x28] sm:$0xff]
    %v5834 = vld [vmem:[%s10 + $0x30] sm:$0xff]
    %v5835 = vld [vmem:[%s10 + $0x38] sm:$0xff]
    %v5836 = vld [vmem:[%s10 + $0x40] sm:$0xff]
    %v5837 = vld [vmem:[%s10 + $0x48] sm:$0xff]
    %v5838 = vld [vmem:[%s10 + $0x50] sm:$0xff]
    %v5839 = vld [vmem:[%s10 + $0x58] sm:$0xff]
    %v5840 = vld [vmem:[%s10 + $0x60] sm:$0xff]
    %v5841 = vld [vmem:[%s10 + $0x68] sm:$0xff]
    %v5842 = vld [vmem:[%s10 + $0x70] sm:$0xff]
    %v5843 = vld [vmem:[%s10 + $0x78] sm:$0xff]
    %v5844 = vlaneseq
    %v5845 = vshrl.u32 %v5844, 7
    %v5846 = vsub.s32 6, %v5845
    %v5847 = vrot.slane %v55, %v5846
    %5848 = vmatprep.subr.mxu0 0.0
    %5849 = vmatpush1.msra.mxu0 %v5828
    %5850 = vmatprep.subr.mxu0 0.0
    %5851 = vmatpush1.msra.mxu0 %v5829
    %5852 = vmatprep.subr.mxu0 0.0
    %5853 = vmatpush1.msra.mxu0 %v5830
    %5854 = vmatprep.subr.mxu0 0.0
    %5855 = vmatpush1.msra.mxu0 %v5831
    %5856 = vmatprep.subr.mxu0 0.0
    %5857 = vmatpush1.msra.mxu0 %v5832
    %5858 = vmatprep.subr.mxu0 0.0
    %5859 = vmatpush1.msra.mxu0 %v5833
    %5860 = vmatprep.subr.mxu0 0.0
    %5861 = vmatpush1.msra.mxu0 %v5834
    %5862 = vmatprep.subr.mxu0 0.0
    %5863 = vmatpush1.msra.mxu0 %v5835
    %5864 = vmatprep.subr.mxu0 0.0
    %5865 = vmatpush1.msra.mxu0 %v5836
    %5866 = vmatprep.subr.mxu0 0.0
    %5867 = vmatpush1.msra.mxu0 %v5837
    %5868 = vmatprep.subr.mxu0 0.0
    %5869 = vmatpush1.msra.mxu0 %v5838
    %5870 = vmatprep.subr.mxu0 0.0
    %5871 = vmatpush1.msra.mxu0 %v5839
    %5872 = vmatprep.subr.mxu0 0.0
    %5873 = vmatpush1.msra.mxu0 %v5840
    %5874 = vmatprep.subr.mxu0 0.0
    %5875 = vmatpush1.msra.mxu0 %v5841
    %5876 = vmatprep.subr.mxu0 0.0
    %5877 = vmatpush1.msra.mxu0 %v5842
    %5878 = vmatprep.subr.mxu0 0.0
    %5879 = vmatpush1.msra.mxu0 %v5843
    %5880 = vmatprep.subr.mxu0 0.0
    %5881 = vmatpush1.msra.mxu0 0.0
    %5882 = vmatprep.subr.mxu0 0.0
    %5883 = vmatpush1.msra.mxu0 0.0
    %5884 = vmatprep.subr.mxu0 0.0
    %5885 = vmatpush1.msra.mxu0 0.0
    %5886 = vmatprep.subr.mxu0 0.0
    %5887 = vmatpush1.msra.mxu0 0.0
    %5888 = vmatprep.subr.mxu0 0.0
    %5889 = vmatpush1.msra.mxu0 0.0
    %5890 = vmatprep.subr.mxu0 0.0
    %5891 = vmatpush1.msra.mxu0 0.0
    %5892 = vmatprep.subr.mxu0 0.0
    %5893 = vmatpush1.msra.mxu0 0.0
    %5894 = vmatprep.subr.mxu0 0.0
    %5895 = vmatpush1.msra.mxu0 0.0
    %5896 = vmatprep.subr.mxu0 0.0
    %5897 = vmatpush1.msra.mxu0 0.0
    %5898 = vmatprep.subr.mxu0 0.0
    %5899 = vmatpush1.msra.mxu0 0.0
    %5900 = vmatprep.subr.mxu0 0.0
    %5901 = vmatpush1.msra.mxu0 0.0
    %5902 = vmatprep.subr.mxu0 0.0
    %5903 = vmatpush1.msra.mxu0 0.0
    %5904 = vmatprep.subr.mxu0 0.0
    %5905 = vmatpush1.msra.mxu0 0.0
    %5906 = vmatprep.subr.mxu0 0.0
    %5907 = vmatpush1.msra.mxu0 0.0
    %5908 = vmatprep.subr.mxu0 0.0
    %5909 = vmatpush1.msra.mxu0 0.0
    %5910 = vmatprep.subr.mxu0 0.0
    %5911 = vmatpush1.msra.mxu0 0.0
    %5912 = vmatprep.mubr.f32.mxu0 0.0
    %5913 = vmatmul.mubr.f32.gmra.mrb[0].mxu0 %v5826
    %v5914 = vpop.f32.mrb[0].mxu0
    %v5915 = vadd.f32 %v5847, %v5914
    %v5916 = vpop.f32.mrb[0].mxu0
    %5917 = vmatprep.mubr.f32.mxu0 0.0
    %5918 = vmatmul.mubr.f32.gmra.mrb[0].mxu0 %v5827
    %v5919 = vpop.f32.mrb[0].mxu0
    %v5920 = vadd.f32 %v5847, %v5919
    %v5921 = vpop.f32.mrb[0].mxu0
    %5922 = vdwg.mxu0
    %v5923 = vadd.f32 %v5915, %v5732
    %v5924 = vadd.f32 %v5920, %v5733
    %v5925 = vsel %vm73, %v5923, 0.0
    %5926 = vadd.xlane.f32.xlu0 %v5925
    %v5927 = vpop.xlane.xlu0 %5926
    %v5928 = vsel %vm73, %v5924, 0.0
    %5929 = vadd.xlane.f32.xlu0 %v5928
    %v5930 = vpop.xlane.xlu0 %5929
    %v5931 = vmul.f32 %v5927, %v2577
    %v5932 = vmul.f32 %v5930, %v2577
    %v5933 = vsub.f32 %v5923, %v5931
    %v5934 = vsub.f32 %v5924, %v5932
    %v5935 = vmul.f32 %v5933, %v5933
    %v5936 = vmul.f32 %v5934, %v5934
    %v5937 = vsel %vm73, %v5935, 0.0
    %5938 = vadd.xlane.f32.xlu0 %v5937
    %v5939 = vpop.xlane.xlu0 %5938
    %v5940 = vsel %vm73, %v5936, 0.0
    %5941 = vadd.xlane.f32.xlu0 %v5940
    %v5942 = vpop.xlane.xlu0 %5941
    %v5943 = vmul.f32 %v5939, %v2577
    %v5944 = vmul.f32 %v5942, %v2577
    %v5945 = vadd.f32 %v5943, 1e-05
    %v5946 = vadd.f32 %v5944, 1e-05
    %v5947 = vrsqrt.pop %v5945
    %v5948 = vrsqrt.pop %v5946
    %v5949 = vmul.f32 %v5933, %v5947
    %v5950 = vmul.f32 %v5934, %v5948
    %v5951 = vlaneseq
    %v5952 = vshrl.u32 %v5951, 7
    %v5953 = vsub.s32 7, %v5952
    %v5954 = vrot.slane %v55, %v5953
    %v5955 = vmul.f32 %v5949, %v5954
    %v5956 = vmul.f32 %v5950, %v5954
    %v5957 = vlaneseq
    %v5958 = vshrl.u32 %v5957, 7
    %v5959 = vsub.s32 0, %v5958
    %v5960 = vrot.slane %v56, %v5959
    %v5961 = vadd.f32 %v5955, %v5960
    %v5962 = vadd.f32 %v5956, %v5960
    %s5963 = scalar_lea.vmem %s11, 16
    %v5964 = vld [vmem:[%s5963] sm:$0xff]
    %v5965 = vld [vmem:[%s5963 + $0x8] sm:$0x1]
    %s5966 = scalar_lea.vmem %s3, 128
    %v5967 = vld [vmem:[%s5966] sm:$0xff]
    %v5968 = vld [vmem:[%s5966 + $0x8] sm:$0xff]
    %v5969 = vld [vmem:[%s5966 + $0x10] sm:$0xff]
    %v5970 = vld [vmem:[%s5966 + $0x18] sm:$0xff]
    %v5971 = vld [vmem:[%s5966 + $0x20] sm:$0xff]
    %v5972 = vld [vmem:[%s5966 + $0x28] sm:$0xff]
    %v5973 = vld [vmem:[%s5966 + $0x30] sm:$0xff]
    %v5974 = vld [vmem:[%s5966 + $0x38] sm:$0xff]
    %v5975 = vld [vmem:[%s5966 + $0x40] sm:$0xff]
    %v5976 = vld [vmem:[%s5966 + $0x48] sm:$0xff]
    %v5977 = vld [vmem:[%s5966 + $0x50] sm:$0xff]
    %v5978 = vld [vmem:[%s5966 + $0x58] sm:$0xff]
    %v5979 = vld [vmem:[%s5966 + $0x60] sm:$0xff]
    %v5980 = vld [vmem:[%s5966 + $0x68] sm:$0xff]
    %v5981 = vld [vmem:[%s5966 + $0x70] sm:$0xff]
    %v5982 = vld [vmem:[%s5966 + $0x78] sm:$0xff]
    %v5984 = vsel %vm73, %v5961, 0
    %5986 = vmatprep.subr.mxu0 0.0
    %5987 = vmatpush1.msra.mxu0 %v5967
    %5988 = vmatprep.subr.mxu0 0.0
    %5989 = vmatpush1.msra.mxu0 %v5968
    %5990 = vmatprep.subr.mxu0 0.0
    %5991 = vmatpush1.msra.mxu0 %v5969
    %5992 = vmatprep.subr.mxu0 0.0
    %5993 = vmatpush1.msra.mxu0 %v5970
    %5994 = vmatprep.subr.mxu0 0.0
    %5995 = vmatpush1.msra.mxu0 0.0
    %5996 = vmatprep.subr.mxu0 0.0
    %5997 = vmatpush1.msra.mxu0 0.0
    %5998 = vmatprep.subr.mxu0 0.0
    %5999 = vmatpush1.msra.mxu0 0.0
    %6000 = vmatprep.subr.mxu0 0.0
    %6001 = vmatpush1.msra.mxu0 0.0
    %6002 = vmatprep.subr.mxu0 0.0
    %6003 = vmatpush1.msra.mxu0 0.0
    %6004 = vmatprep.subr.mxu0 0.0
    %6005 = vmatpush1.msra.mxu0 0.0
    %6006 = vmatprep.subr.mxu0 0.0
    %6007 = vmatpush1.msra.mxu0 0.0
    %6008 = vmatprep.subr.mxu0 0.0
    %6009 = vmatpush1.msra.mxu0 0.0
    %6010 = vmatprep.subr.mxu0 0.0
    %6011 = vmatpush1.msra.mxu0 0.0
    %6012 = vmatprep.subr.mxu0 0.0
    %6013 = vmatpush1.msra.mxu0 0.0
    %6014 = vmatprep.subr.mxu0 0.0
    %6015 = vmatpush1.msra.mxu0 0.0
    %6016 = vmatprep.subr.mxu0 0.0
    %6017 = vmatpush1.msra.mxu0 0.0
    %6018 = vmatprep.subr.mxu0 0.0
    %6019 = vmatpush1.msra.mxu0 0.0
    %6020 = vmatprep.subr.mxu0 0.0
    %6021 = vmatpush1.msra.mxu0 0.0
    %6022 = vmatprep.subr.mxu0 0.0
    %6023 = vmatpush1.msra.mxu0 0.0
    %6024 = vmatprep.subr.mxu0 0.0
    %6025 = vmatpush1.msra.mxu0 0.0
    %6026 = vmatprep.subr.mxu0 0.0
    %6027 = vmatpush1.msra.mxu0 0.0
    %6028 = vmatprep.subr.mxu0 0.0
    %6029 = vmatpush1.msra.mxu0 0.0
    %6030 = vmatprep.subr.mxu0 0.0
    %6031 = vmatpush1.msra.mxu0 0.0
    %6032 = vmatprep.subr.mxu0 0.0
    %6033 = vmatpush1.msra.mxu0 0.0
    %6034 = vmatprep.subr.mxu0 0.0
    %6035 = vmatpush1.msra.mxu0 0.0
    %6036 = vmatprep.subr.mxu0 0.0
    %6037 = vmatpush1.msra.mxu0 0.0
    %6038 = vmatprep.subr.mxu0 0.0
    %6039 = vmatpush1.msra.mxu0 0.0
    %6040 = vmatprep.subr.mxu0 0.0
    %6041 = vmatpush1.msra.mxu0 0.0
    %6042 = vmatprep.subr.mxu0 0.0
    %6043 = vmatpush1.msra.mxu0 0.0
    %6044 = vmatprep.subr.mxu0 0.0
    %6045 = vmatpush1.msra.mxu0 0.0
    %6046 = vmatprep.subr.mxu0 0.0
    %6047 = vmatpush1.msra.mxu0 0.0
    %6048 = vmatprep.subr.mxu0 0.0
    %6049 = vmatpush1.msra.mxu0 0.0
    %6050 = vmatprep.mubr.f32.mxu0 0.0
    %6051 = vmatmul.mubr.f32.gmra.mrb[0].mxu0 %v5984
    %v6052 = vpop.f32.mrb[0].mxu0
    %v6053 = vadd.f32 0.0, %v6052
    %v6054 = vpop.f32.mrb[0].mxu0
    %6055 = vdwg.mxu0
    %6056 = vmatprep.subr.mxu0 0.0
    %6057 = vmatpush1.msra.mxu0 %v5971
    %6058 = vmatprep.subr.mxu0 0.0
    %6059 = vmatpush1.msra.mxu0 %v5972
    %6060 = vmatprep.subr.mxu0 0.0
    %6061 = vmatpush1.msra.mxu0 %v5973
    %6062 = vmatprep.subr.mxu0 0.0
    %6063 = vmatpush1.msra.mxu0 %v5974
    %6064 = vmatprep.subr.mxu0 0.0
    %6065 = vmatpush1.msra.mxu0 0.0
    %6066 = vmatprep.subr.mxu0 0.0
    %6067 = vmatpush1.msra.mxu0 0.0
    %6068 = vmatprep.subr.mxu0 0.0
    %6069 = vmatpush1.msra.mxu0 0.0
    %6070 = vmatprep.subr.mxu0 0.0
    %6071 = vmatpush1.msra.mxu0 0.0
    %6072 = vmatprep.subr.mxu0 0.0
    %6073 = vmatpush1.msra.mxu0 0.0
    %6074 = vmatprep.subr.mxu0 0.0
    %6075 = vmatpush1.msra.mxu0 0.0
    %6076 = vmatprep.subr.mxu0 0.0
    %6077 = vmatpush1.msra.mxu0 0.0
    %6078 = vmatprep.subr.mxu0 0.0
    %6079 = vmatpush1.msra.mxu0 0.0
    %6080 = vmatprep.subr.mxu0 0.0
    %6081 = vmatpush1.msra.mxu0 0.0
    %6082 = vmatprep.subr.mxu0 0.0
    %6083 = vmatpush1.msra.mxu0 0.0
    %6084 = vmatprep.subr.mxu0 0.0
    %6085 = vmatpush1.msra.mxu0 0.0
    %6086 = vmatprep.subr.mxu0 0.0
    %6087 = vmatpush1.msra.mxu0 0.0
    %6088 = vmatprep.subr.mxu0 0.0
    %6089 = vmatpush1.msra.mxu0 0.0
    %6090 = vmatprep.subr.mxu0 0.0
    %6091 = vmatpush1.msra.mxu0 0.0
    %6092 = vmatprep.subr.mxu0 0.0
    %6093 = vmatpush1.msra.mxu0 0.0
    %6094 = vmatprep.subr.mxu0 0.0
    %6095 = vmatpush1.msra.mxu0 0.0
    %6096 = vmatprep.subr.mxu0 0.0
    %6097 = vmatpush1.msra.mxu0 0.0
    %6098 = vmatprep.subr.mxu0 0.0
    %6099 = vmatpush1.msra.mxu0 0.0
    %6100 = vmatprep.subr.mxu0 0.0
    %6101 = vmatpush1.msra.mxu0 0.0
    %6102 = vmatprep.subr.mxu0 0.0
    %6103 = vmatpush1.msra.mxu0 0.0
    %6104 = vmatprep.subr.mxu0 0.0
    %6105 = vmatpush1.msra.mxu0 0.0
    %6106 = vmatprep.subr.mxu0 0.0
    %6107 = vmatpush1.msra.mxu0 0.0
    %6108 = vmatprep.subr.mxu0 0.0
    %6109 = vmatpush1.msra.mxu0 0.0
    %6110 = vmatprep.subr.mxu0 0.0
    %6111 = vmatpush1.msra.mxu0 0.0
    %6112 = vmatprep.subr.mxu0 0.0
    %6113 = vmatpush1.msra.mxu0 0.0
    %6114 = vmatprep.subr.mxu0 0.0
    %6115 = vmatpush1.msra.mxu0 0.0
    %6116 = vmatprep.subr.mxu0 0.0
    %6117 = vmatpush1.msra.mxu0 0.0
    %6118 = vmatprep.subr.mxu0 0.0
    %6119 = vmatpush1.msra.mxu0 0.0
    %6120 = vmatprep.mubr.f32.mxu0 0.0
    %6121 = vmatmul.mubr.f32.gmra.mrb[0].mxu0 %v5984
    %v6122 = vpop.f32.mrb[0].mxu0
    %v6123 = vadd.f32 0.0, %v6122
    %v6124 = vpop.f32.mrb[0].mxu0
    %6125 = vdwg.mxu0
    %6126 = vmatprep.subr.mxu0 0.0
    %6127 = vmatpush1.msra.mxu0 %v5975
    %6128 = vmatprep.subr.mxu0 0.0
    %6129 = vmatpush1.msra.mxu0 %v5976
    %6130 = vmatprep.subr.mxu0 0.0
    %6131 = vmatpush1.msra.mxu0 %v5977
    %6132 = vmatprep.subr.mxu0 0.0
    %6133 = vmatpush1.msra.mxu0 %v5978
    %6134 = vmatprep.subr.mxu0 0.0
    %6135 = vmatpush1.msra.mxu0 0.0
    %6136 = vmatprep.subr.mxu0 0.0
    %6137 = vmatpush1.msra.mxu0 0.0
    %6138 = vmatprep.subr.mxu0 0.0
    %6139 = vmatpush1.msra.mxu0 0.0
    %6140 = vmatprep.subr.mxu0 0.0
    %6141 = vmatpush1.msra.mxu0 0.0
    %6142 = vmatprep.subr.mxu0 0.0
    %6143 = vmatpush1.msra.mxu0 0.0
    %6144 = vmatprep.subr.mxu0 0.0
    %6145 = vmatpush1.msra.mxu0 0.0
    %6146 = vmatprep.subr.mxu0 0.0
    %6147 = vmatpush1.msra.mxu0 0.0
    %6148 = vmatprep.subr.mxu0 0.0
    %6149 = vmatpush1.msra.mxu0 0.0
    %6150 = vmatprep.subr.mxu0 0.0
    %6151 = vmatpush1.msra.mxu0 0.0
    %6152 = vmatprep.subr.mxu0 0.0
    %6153 = vmatpush1.msra.mxu0 0.0
    %6154 = vmatprep.subr.mxu0 0.0
    %6155 = vmatpush1.msra.mxu0 0.0
    %6156 = vmatprep.subr.mxu0 0.0
    %6157 = vmatpush1.msra.mxu0 0.0
    %6158 = vmatprep.subr.mxu0 0.0
    %6159 = vmatpush1.msra.mxu0 0.0
    %6160 = vmatprep.subr.mxu0 0.0
    %6161 = vmatpush1.msra.mxu0 0.0
    %6162 = vmatprep.subr.mxu0 0.0
    %6163 = vmatpush1.msra.mxu0 0.0
    %6164 = vmatprep.subr.mxu0 0.0
    %6165 = vmatpush1.msra.mxu0 0.0
    %6166 = vmatprep.subr.mxu0 0.0
    %6167 = vmatpush1.msra.mxu0 0.0
    %6168 = vmatprep.subr.mxu0 0.0
    %6169 = vmatpush1.msra.mxu0 0.0
    %6170 = vmatprep.subr.mxu0 0.0
    %6171 = vmatpush1.msra.mxu0 0.0
    %6172 = vmatprep.subr.mxu0 0.0
    %6173 = vmatpush1.msra.mxu0 0.0
    %6174 = vmatprep.subr.mxu0 0.0
    %6175 = vmatpush1.msra.mxu0 0.0
    %6176 = vmatprep.subr.mxu0 0.0
    %6177 = vmatpush1.msra.mxu0 0.0
    %6178 = vmatprep.subr.mxu0 0.0
    %6179 = vmatpush1.msra.mxu0 0.0
    %6180 = vmatprep.subr.mxu0 0.0
    %6181 = vmatpush1.msra.mxu0 0.0
    %6182 = vmatprep.subr.mxu0 0.0
    %6183 = vmatpush1.msra.mxu0 0.0
    %6184 = vmatprep.subr.mxu0 0.0
    %6185 = vmatpush1.msra.mxu0 0.0
    %6186 = vmatprep.subr.mxu0 0.0
    %6187 = vmatpush1.msra.mxu0 0.0
    %6188 = vmatprep.subr.mxu0 0.0
    %6189 = vmatpush1.msra.mxu0 0.0
    %6190 = vmatprep.mubr.f32.mxu0 0.0
    %6191 = vmatmul.mubr.f32.gmra.mrb[0].mxu0 %v5984
    %v6192 = vpop.f32.mrb[0].mxu0
    %v6193 = vadd.f32 0.0, %v6192
    %v6194 = vpop.f32.mrb[0].mxu0
    %6195 = vdwg.mxu0
    %6196 = vmatprep.subr.mxu0 0.0
    %6197 = vmatpush1.msra.mxu0 %v5979
    %6198 = vmatprep.subr.mxu0 0.0
    %6199 = vmatpush1.msra.mxu0 %v5980
    %6200 = vmatprep.subr.mxu0 0.0
    %6201 = vmatpush1.msra.mxu0 %v5981
    %6202 = vmatprep.subr.mxu0 0.0
    %6203 = vmatpush1.msra.mxu0 %v5982
    %6204 = vmatprep.subr.mxu0 0.0
    %6205 = vmatpush1.msra.mxu0 0.0
    %6206 = vmatprep.subr.mxu0 0.0
    %6207 = vmatpush1.msra.mxu0 0.0
    %6208 = vmatprep.subr.mxu0 0.0
    %6209 = vmatpush1.msra.mxu0 0.0
    %6210 = vmatprep.subr.mxu0 0.0
    %6211 = vmatpush1.msra.mxu0 0.0
    %6212 = vmatprep.subr.mxu0 0.0
    %6213 = vmatpush1.msra.mxu0 0.0
    %6214 = vmatprep.subr.mxu0 0.0
    %6215 = vmatpush1.msra.mxu0 0.0
    %6216 = vmatprep.subr.mxu0 0.0
    %6217 = vmatpush1.msra.mxu0 0.0
    %6218 = vmatprep.subr.mxu0 0.0
    %6219 = vmatpush1.msra.mxu0 0.0
    %6220 = vmatprep.subr.mxu0 0.0
    %6221 = vmatpush1.msra.mxu0 0.0
    %6222 = vmatprep.subr.mxu0 0.0
    %6223 = vmatpush1.msra.mxu0 0.0
    %6224 = vmatprep.subr.mxu0 0.0
    %6225 = vmatpush1.msra.mxu0 0.0
    %6226 = vmatprep.subr.mxu0 0.0
    %6227 = vmatpush1.msra.mxu0 0.0
    %6228 = vmatprep.subr.mxu0 0.0
    %6229 = vmatpush1.msra.mxu0 0.0
    %6230 = vmatprep.subr.mxu0 0.0
    %6231 = vmatpush1.msra.mxu0 0.0
    %6232 = vmatprep.subr.mxu0 0.0
    %6233 = vmatpush1.msra.mxu0 0.0
    %6234 = vmatprep.subr.mxu0 0.0
    %6235 = vmatpush1.msra.mxu0 0.0
    %6236 = vmatprep.subr.mxu0 0.0
    %6237 = vmatpush1.msra.mxu0 0.0
    %6238 = vmatprep.subr.mxu0 0.0
    %6239 = vmatpush1.msra.mxu0 0.0
    %6240 = vmatprep.subr.mxu0 0.0
    %6241 = vmatpush1.msra.mxu0 0.0
    %6242 = vmatprep.subr.mxu0 0.0
    %6243 = vmatpush1.msra.mxu0 0.0
    %6244 = vmatprep.subr.mxu0 0.0
    %6245 = vmatpush1.msra.mxu0 0.0
    %6246 = vmatprep.subr.mxu0 0.0
    %6247 = vmatpush1.msra.mxu0 0.0
    %6248 = vmatprep.subr.mxu0 0.0
    %6249 = vmatpush1.msra.mxu0 0.0
    %6250 = vmatprep.subr.mxu0 0.0
    %6251 = vmatpush1.msra.mxu0 0.0
    %6252 = vmatprep.subr.mxu0 0.0
    %6253 = vmatpush1.msra.mxu0 0.0
    %6254 = vmatprep.subr.mxu0 0.0
    %6255 = vmatpush1.msra.mxu0 0.0
    %6256 = vmatprep.subr.mxu0 0.0
    %6257 = vmatpush1.msra.mxu0 0.0
    %6258 = vmatprep.subr.mxu0 0.0
    %6259 = vmatpush1.msra.mxu0 0.0
    %6260 = vmatprep.mubr.f32.mxu0 0.0
    %6261 = vmatmul.mubr.f32.gmra.mrb[0].mxu0 %v5984
    %v6262 = vpop.f32.mrb[0].mxu0
    %v6263 = vadd.f32 0.0, %v6262
    %v6264 = vpop.f32.mrb[0].mxu0
    %6265 = vdwg.mxu0
    %v6267 = vsel %vm73, %v5962, 0
    %6269 = vmatprep.subr.mxu0 0.0
    %6270 = vmatpush1.msra.mxu0 %v5967
    %6271 = vmatprep.subr.mxu0 0.0
    %6272 = vmatpush1.msra.mxu0 %v5968
    %6273 = vmatprep.subr.mxu0 0.0
    %6274 = vmatpush1.msra.mxu0 %v5969
    %6275 = vmatprep.subr.mxu0 0.0
    %6276 = vmatpush1.msra.mxu0 %v5970
    %6277 = vmatprep.subr.mxu0 0.0
    %6278 = vmatpush1.msra.mxu0 0.0
    %6279 = vmatprep.subr.mxu0 0.0
    %6280 = vmatpush1.msra.mxu0 0.0
    %6281 = vmatprep.subr.mxu0 0.0
    %6282 = vmatpush1.msra.mxu0 0.0
    %6283 = vmatprep.subr.mxu0 0.0
    %6284 = vmatpush1.msra.mxu0 0.0
    %6285 = vmatprep.subr.mxu0 0.0
    %6286 = vmatpush1.msra.mxu0 0.0
    %6287 = vmatprep.subr.mxu0 0.0
    %6288 = vmatpush1.msra.mxu0 0.0
    %6289 = vmatprep.subr.mxu0 0.0
    %6290 = vmatpush1.msra.mxu0 0.0
    %6291 = vmatprep.subr.mxu0 0.0
    %6292 = vmatpush1.msra.mxu0 0.0
    %6293 = vmatprep.subr.mxu0 0.0
    %6294 = vmatpush1.msra.mxu0 0.0
    %6295 = vmatprep.subr.mxu0 0.0
    %6296 = vmatpush1.msra.mxu0 0.0
    %6297 = vmatprep.subr.mxu0 0.0
    %6298 = vmatpush1.msra.mxu0 0.0
    %6299 = vmatprep.subr.mxu0 0.0
    %6300 = vmatpush1.msra.mxu0 0.0
    %6301 = vmatprep.subr.mxu0 0.0
    %6302 = vmatpush1.msra.mxu0 0.0
    %6303 = vmatprep.subr.mxu0 0.0
    %6304 = vmatpush1.msra.mxu0 0.0
    %6305 = vmatprep.subr.mxu0 0.0
    %6306 = vmatpush1.msra.mxu0 0.0
    %6307 = vmatprep.subr.mxu0 0.0
    %6308 = vmatpush1.msra.mxu0 0.0
    %6309 = vmatprep.subr.mxu0 0.0
    %6310 = vmatpush1.msra.mxu0 0.0
    %6311 = vmatprep.subr.mxu0 0.0
    %6312 = vmatpush1.msra.mxu0 0.0
    %6313 = vmatprep.subr.mxu0 0.0
    %6314 = vmatpush1.msra.mxu0 0.0
    %6315 = vmatprep.subr.mxu0 0.0
    %6316 = vmatpush1.msra.mxu0 0.0
    %6317 = vmatprep.subr.mxu0 0.0
    %6318 = vmatpush1.msra.mxu0 0.0
    %6319 = vmatprep.subr.mxu0 0.0
    %6320 = vmatpush1.msra.mxu0 0.0
    %6321 = vmatprep.subr.mxu0 0.0
    %6322 = vmatpush1.msra.mxu0 0.0
    %6323 = vmatprep.subr.mxu0 0.0
    %6324 = vmatpush1.msra.mxu0 0.0
    %6325 = vmatprep.subr.mxu0 0.0
    %6326 = vmatpush1.msra.mxu0 0.0
    %6327 = vmatprep.subr.mxu0 0.0
    %6328 = vmatpush1.msra.mxu0 0.0
    %6329 = vmatprep.subr.mxu0 0.0
    %6330 = vmatpush1.msra.mxu0 0.0
    %6331 = vmatprep.subr.mxu0 0.0
    %6332 = vmatpush1.msra.mxu0 0.0
    %6333 = vmatprep.mubr.f32.mxu0 0.0
    %6334 = vmatmul.mubr.f32.gmra.mrb[0].mxu0 %v6267
    %v6335 = vpop.f32.mrb[0].mxu0
    %v6336 = vadd.f32 0.0, %v6335
    %v6337 = vpop.f32.mrb[0].mxu0
    %6338 = vdwg.mxu0
    %6339 = vmatprep.subr.mxu0 0.0
    %6340 = vmatpush1.msra.mxu0 %v5971
    %6341 = vmatprep.subr.mxu0 0.0
    %6342 = vmatpush1.msra.mxu0 %v5972
    %6343 = vmatprep.subr.mxu0 0.0
    %6344 = vmatpush1.msra.mxu0 %v5973
    %6345 = vmatprep.subr.mxu0 0.0
    %6346 = vmatpush1.msra.mxu0 %v5974
    %6347 = vmatprep.subr.mxu0 0.0
    %6348 = vmatpush1.msra.mxu0 0.0
    %6349 = vmatprep.subr.mxu0 0.0
    %6350 = vmatpush1.msra.mxu0 0.0
    %6351 = vmatprep.subr.mxu0 0.0
    %6352 = vmatpush1.msra.mxu0 0.0
    %6353 = vmatprep.subr.mxu0 0.0
    %6354 = vmatpush1.msra.mxu0 0.0
    %6355 = vmatprep.subr.mxu0 0.0
    %6356 = vmatpush1.msra.mxu0 0.0
    %6357 = vmatprep.subr.mxu0 0.0
    %6358 = vmatpush1.msra.mxu0 0.0
    %6359 = vmatprep.subr.mxu0 0.0
    %6360 = vmatpush1.msra.mxu0 0.0
    %6361 = vmatprep.subr.mxu0 0.0
    %6362 = vmatpush1.msra.mxu0 0.0
    %6363 = vmatprep.subr.mxu0 0.0
    %6364 = vmatpush1.msra.mxu0 0.0
    %6365 = vmatprep.subr.mxu0 0.0
    %6366 = vmatpush1.msra.mxu0 0.0
    %6367 = vmatprep.subr.mxu0 0.0
    %6368 = vmatpush1.msra.mxu0 0.0
    %6369 = vmatprep.subr.mxu0 0.0
    %6370 = vmatpush1.msra.mxu0 0.0
    %6371 = vmatprep.subr.mxu0 0.0
    %6372 = vmatpush1.msra.mxu0 0.0
    %6373 = vmatprep.subr.mxu0 0.0
    %6374 = vmatpush1.msra.mxu0 0.0
    %6375 = vmatprep.subr.mxu0 0.0
    %6376 = vmatpush1.msra.mxu0 0.0
    %6377 = vmatprep.subr.mxu0 0.0
    %6378 = vmatpush1.msra.mxu0 0.0
    %6379 = vmatprep.subr.mxu0 0.0
    %6380 = vmatpush1.msra.mxu0 0.0
    %6381 = vmatprep.subr.mxu0 0.0
    %6382 = vmatpush1.msra.mxu0 0.0
    %6383 = vmatprep.subr.mxu0 0.0
    %6384 = vmatpush1.msra.mxu0 0.0
    %6385 = vmatprep.subr.mxu0 0.0
    %6386 = vmatpush1.msra.mxu0 0.0
    %6387 = vmatprep.subr.mxu0 0.0
    %6388 = vmatpush1.msra.mxu0 0.0
    %6389 = vmatprep.subr.mxu0 0.0
    %6390 = vmatpush1.msra.mxu0 0.0
    %6391 = vmatprep.subr.mxu0 0.0
    %6392 = vmatpush1.msra.mxu0 0.0
    %6393 = vmatprep.subr.mxu0 0.0
    %6394 = vmatpush1.msra.mxu0 0.0
    %6395 = vmatprep.subr.mxu0 0.0
    %6396 = vmatpush1.msra.mxu0 0.0
    %6397 = vmatprep.subr.mxu0 0.0
    %6398 = vmatpush1.msra.mxu0 0.0
    %6399 = vmatprep.subr.mxu0 0.0
    %6400 = vmatpush1.msra.mxu0 0.0
    %6401 = vmatprep.subr.mxu0 0.0
    %6402 = vmatpush1.msra.mxu0 0.0
    %6403 = vmatprep.mubr.f32.mxu0 0.0
    %6404 = vmatmul.mubr.f32.gmra.mrb[0].mxu0 %v6267
    %v6405 = vpop.f32.mrb[0].mxu0
    %v6406 = vadd.f32 0.0, %v6405
    %v6407 = vpop.f32.mrb[0].mxu0
    %6408 = vdwg.mxu0
    %6409 = vmatprep.subr.mxu0 0.0
    %6410 = vmatpush1.msra.mxu0 %v5975
    %6411 = vmatprep.subr.mxu0 0.0
    %6412 = vmatpush1.msra.mxu0 %v5976
    %6413 = vmatprep.subr.mxu0 0.0
    %6414 = vmatpush1.msra.mxu0 %v5977
    %6415 = vmatprep.subr.mxu0 0.0
    %6416 = vmatpush1.msra.mxu0 %v5978
    %6417 = vmatprep.subr.mxu0 0.0
    %6418 = vmatpush1.msra.mxu0 0.0
    %6419 = vmatprep.subr.mxu0 0.0
    %6420 = vmatpush1.msra.mxu0 0.0
    %6421 = vmatprep.subr.mxu0 0.0
    %6422 = vmatpush1.msra.mxu0 0.0
    %6423 = vmatprep.subr.mxu0 0.0
    %6424 = vmatpush1.msra.mxu0 0.0
    %6425 = vmatprep.subr.mxu0 0.0
    %6426 = vmatpush1.msra.mxu0 0.0
    %6427 = vmatprep.subr.mxu0 0.0
    %6428 = vmatpush1.msra.mxu0 0.0
    %6429 = vmatprep.subr.mxu0 0.0
    %6430 = vmatpush1.msra.mxu0 0.0
    %6431 = vmatprep.subr.mxu0 0.0
    %6432 = vmatpush1.msra.mxu0 0.0
    %6433 = vmatprep.subr.mxu0 0.0
    %6434 = vmatpush1.msra.mxu0 0.0
    %6435 = vmatprep.subr.mxu0 0.0
    %6436 = vmatpush1.msra.mxu0 0.0
    %6437 = vmatprep.subr.mxu0 0.0
    %6438 = vmatpush1.msra.mxu0 0.0
    %6439 = vmatprep.subr.mxu0 0.0
    %6440 = vmatpush1.msra.mxu0 0.0
    %6441 = vmatprep.subr.mxu0 0.0
    %6442 = vmatpush1.msra.mxu0 0.0
    %6443 = vmatprep.subr.mxu0 0.0
    %6444 = vmatpush1.msra.mxu0 0.0
    %6445 = vmatprep.subr.mxu0 0.0
    %6446 = vmatpush1.msra.mxu0 0.0
    %6447 = vmatprep.subr.mxu0 0.0
    %6448 = vmatpush1.msra.mxu0 0.0
    %6449 = vmatprep.subr.mxu0 0.0
    %6450 = vmatpush1.msra.mxu0 0.0
    %6451 = vmatprep.subr.mxu0 0.0
    %6452 = vmatpush1.msra.mxu0 0.0
    %6453 = vmatprep.subr.mxu0 0.0
    %6454 = vmatpush1.msra.mxu0 0.0
    %6455 = vmatprep.subr.mxu0 0.0
    %6456 = vmatpush1.msra.mxu0 0.0
    %6457 = vmatprep.subr.mxu0 0.0
    %6458 = vmatpush1.msra.mxu0 0.0
    %6459 = vmatprep.subr.mxu0 0.0
    %6460 = vmatpush1.msra.mxu0 0.0
    %6461 = vmatprep.subr.mxu0 0.0
    %6462 = vmatpush1.msra.mxu0 0.0
    %6463 = vmatprep.subr.mxu0 0.0
    %6464 = vmatpush1.msra.mxu0 0.0
    %6465 = vmatprep.subr.mxu0 0.0
    %6466 = vmatpush1.msra.mxu0 0.0
    %6467 = vmatprep.subr.mxu0 0.0
    %6468 = vmatpush1.msra.mxu0 0.0
    %6469 = vmatprep.subr.mxu0 0.0
    %6470 = vmatpush1.msra.mxu0 0.0
    %6471 = vmatprep.subr.mxu0 0.0
    %6472 = vmatpush1.msra.mxu0 0.0
    %6473 = vmatprep.mubr.f32.mxu0 0.0
    %6474 = vmatmul.mubr.f32.gmra.mrb[0].mxu0 %v6267
    %v6475 = vpop.f32.mrb[0].mxu0
    %v6476 = vadd.f32 0.0, %v6475
    %v6477 = vpop.f32.mrb[0].mxu0
    %6478 = vdwg.mxu0
    %6479 = vmatprep.subr.mxu0 0.0
    %6480 = vmatpush1.msra.mxu0 %v5979
    %6481 = vmatprep.subr.mxu0 0.0
    %6482 = vmatpush1.msra.mxu0 %v5980
    %6483 = vmatprep.subr.mxu0 0.0
    %6484 = vmatpush1.msra.mxu0 %v5981
    %6485 = vmatprep.subr.mxu0 0.0
    %6486 = vmatpush1.msra.mxu0 %v5982
    %6487 = vmatprep.subr.mxu0 0.0
    %6488 = vmatpush1.msra.mxu0 0.0
    %6489 = vmatprep.subr.mxu0 0.0
    %6490 = vmatpush1.msra.mxu0 0.0
    %6491 = vmatprep.subr.mxu0 0.0
    %6492 = vmatpush1.msra.mxu0 0.0
    %6493 = vmatprep.subr.mxu0 0.0
    %6494 = vmatpush1.msra.mxu0 0.0
    %6495 = vmatprep.subr.mxu0 0.0
    %6496 = vmatpush1.msra.mxu0 0.0
    %6497 = vmatprep.subr.mxu0 0.0
    %6498 = vmatpush1.msra.mxu0 0.0
    %6499 = vmatprep.subr.mxu0 0.0
    %6500 = vmatpush1.msra.mxu0 0.0
    %6501 = vmatprep.subr.mxu0 0.0
    %6502 = vmatpush1.msra.mxu0 0.0
    %6503 = vmatprep.subr.mxu0 0.0
    %6504 = vmatpush1.msra.mxu0 0.0
    %6505 = vmatprep.subr.mxu0 0.0
    %6506 = vmatpush1.msra.mxu0 0.0
    %6507 = vmatprep.subr.mxu0 0.0
    %6508 = vmatpush1.msra.mxu0 0.0
    %6509 = vmatprep.subr.mxu0 0.0
    %6510 = vmatpush1.msra.mxu0 0.0
    %6511 = vmatprep.subr.mxu0 0.0
    %6512 = vmatpush1.msra.mxu0 0.0
    %6513 = vmatprep.subr.mxu0 0.0
    %6514 = vmatpush1.msra.mxu0 0.0
    %6515 = vmatprep.subr.mxu0 0.0
    %6516 = vmatpush1.msra.mxu0 0.0
    %6517 = vmatprep.subr.mxu0 0.0
    %6518 = vmatpush1.msra.mxu0 0.0
    %6519 = vmatprep.subr.mxu0 0.0
    %6520 = vmatpush1.msra.mxu0 0.0
    %6521 = vmatprep.subr.mxu0 0.0
    %6522 = vmatpush1.msra.mxu0 0.0
    %6523 = vmatprep.subr.mxu0 0.0
    %6524 = vmatpush1.msra.mxu0 0.0
    %6525 = vmatprep.subr.mxu0 0.0
    %6526 = vmatpush1.msra.mxu0 0.0
    %6527 = vmatprep.subr.mxu0 0.0
    %6528 = vmatpush1.msra.mxu0 0.0
    %6529 = vmatprep.subr.mxu0 0.0
    %6530 = vmatpush1.msra.mxu0 0.0
    %6531 = vmatprep.subr.mxu0 0.0
    %6532 = vmatpush1.msra.mxu0 0.0
    %6533 = vmatprep.subr.mxu0 0.0
    %6534 = vmatpush1.msra.mxu0 0.0
    %6535 = vmatprep.subr.mxu0 0.0
    %6536 = vmatpush1.msra.mxu0 0.0
    %6537 = vmatprep.subr.mxu0 0.0
    %6538 = vmatpush1.msra.mxu0 0.0
    %6539 = vmatprep.subr.mxu0 0.0
    %6540 = vmatpush1.msra.mxu0 0.0
    %6541 = vmatprep.subr.mxu0 0.0
    %6542 = vmatpush1.msra.mxu0 0.0
    %6543 = vmatprep.mubr.f32.mxu0 0.0
    %6544 = vmatmul.mubr.f32.gmra.mrb[0].mxu0 %v6267
    %v6545 = vpop.f32.mrb[0].mxu0
    %v6546 = vadd.f32 0.0, %v6545
    %v6547 = vpop.f32.mrb[0].mxu0
    %6548 = vdwg.mxu0
    %s6549 = scalar_lea.vmem %s4, 32
    %v6550 = vld [vmem:[%s6549] sm:$0xff]
    %v6551 = vld [vmem:[%s6549 + $0x8] sm:$0xff]
    %v6552 = vld [vmem:[%s6549 + $0x10] sm:$0xff]
    %v6553 = vld [vmem:[%s6549 + $0x18] sm:$0xff]
    %6555 = vrot.lane.b32.xlu0 %v6053, 120
    %v6556 = vpop.permute.xlu0 %6555
    %v6557 = vsel %vm647, %v6053, 0
    %v6559 = vsel %vm647, %v6556, 0
    %6561 = vmatprep.subr.mxu0 0.0
    %6562 = vmatpush1.xpose.msra.mxu0 %v6559
    %6563 = vmatprep.subr.mxu0 0.0
    %6564 = vmatpush1.xpose.msra.mxu0 0.0
    %6565 = vmatprep.subr.mxu0 0.0
    %6566 = vmatpush1.xpose.msra.mxu0 0.0
    %6567 = vmatprep.subr.mxu0 0.0
    %6568 = vmatpush1.xpose.msra.mxu0 0.0
    %6569 = vmatprep.subr.mxu0 0.0
    %6570 = vmatpush1.xpose.msra.mxu0 0.0
    %6571 = vmatprep.subr.mxu0 0.0
    %6572 = vmatpush1.xpose.msra.mxu0 0.0
    %6573 = vmatprep.subr.mxu0 0.0
    %6574 = vmatpush1.xpose.msra.mxu0 0.0
    %6575 = vmatprep.subr.mxu0 0.0
    %6576 = vmatpush1.xpose.msra.mxu0 0.0
    %6577 = vmatprep.subr.mxu0 0.0
    %6578 = vmatpush1.xpose.msra.mxu0 0.0
    %6579 = vmatprep.subr.mxu0 0.0
    %6580 = vmatpush1.xpose.msra.mxu0 0.0
    %6581 = vmatprep.subr.mxu0 0.0
    %6582 = vmatpush1.xpose.msra.mxu0 0.0
    %6583 = vmatprep.subr.mxu0 0.0
    %6584 = vmatpush1.xpose.msra.mxu0 0.0
    %6585 = vmatprep.subr.mxu0 0.0
    %6586 = vmatpush1.xpose.msra.mxu0 0.0
    %6587 = vmatprep.subr.mxu0 0.0
    %6588 = vmatpush1.xpose.msra.mxu0 0.0
    %6589 = vmatprep.subr.mxu0 0.0
    %6590 = vmatpush1.xpose.msra.mxu0 0.0
    %6591 = vmatprep.subr.mxu0 0.0
    %6592 = vmatpush1.xpose.msra.mxu0 0.0
    %6593 = vmatprep.subr.mxu0 0.0
    %6594 = vmatpush1.xpose.msra.mxu0 0.0
    %6595 = vmatprep.subr.mxu0 0.0
    %6596 = vmatpush1.xpose.msra.mxu0 0.0
    %6597 = vmatprep.subr.mxu0 0.0
    %6598 = vmatpush1.xpose.msra.mxu0 0.0
    %6599 = vmatprep.subr.mxu0 0.0
    %6600 = vmatpush1.xpose.msra.mxu0 0.0
    %6601 = vmatprep.subr.mxu0 0.0
    %6602 = vmatpush1.xpose.msra.mxu0 0.0
    %6603 = vmatprep.subr.mxu0 0.0
    %6604 = vmatpush1.xpose.msra.mxu0 0.0
    %6605 = vmatprep.subr.mxu0 0.0
    %6606 = vmatpush1.xpose.msra.mxu0 0.0
    %6607 = vmatprep.subr.mxu0 0.0
    %6608 = vmatpush1.xpose.msra.mxu0 0.0
    %6609 = vmatprep.subr.mxu0 0.0
    %6610 = vmatpush1.xpose.msra.mxu0 0.0
    %6611 = vmatprep.subr.mxu0 0.0
    %6612 = vmatpush1.xpose.msra.mxu0 0.0
    %6613 = vmatprep.subr.mxu0 0.0
    %6614 = vmatpush1.xpose.msra.mxu0 0.0
    %6615 = vmatprep.subr.mxu0 0.0
    %6616 = vmatpush1.xpose.msra.mxu0 0.0
    %6617 = vmatprep.subr.mxu0 0.0
    %6618 = vmatpush1.xpose.msra.mxu0 0.0
    %6619 = vmatprep.subr.mxu0 0.0
    %6620 = vmatpush1.xpose.msra.mxu0 0.0
    %6621 = vmatprep.subr.mxu0 0.0
    %6622 = vmatpush1.xpose.msra.mxu0 0.0
    %6623 = vmatprep.subr.mxu0 0.0
    %6624 = vmatpush1.xpose.msra.mxu0 0.0
    %6625 = vmatprep.mubr.f32.mxu0 0.0
    %6626 = vmatmul.mubr.f32.gmra.mrb[0].mxu0 %v6557
    %v6627 = vpop.f32.mrb[0].mxu0
    %v6628 = vadd.f32 0.0, %v6627
    %v6629 = vpop.f32.mrb[0].mxu0
    %6630 = vdwg.mxu0
    %6632 = vrot.lane.b32.xlu0 %v6123, 120
    %v6633 = vpop.permute.xlu0 %6632
    %v6634 = vsel %vm647, %v6123, 0
    %v6636 = vsel %vm647, %v6633, 0
    %6638 = vmatprep.subr.mxu0 0.0
    %6639 = vmatpush1.xpose.msra.mxu0 %v6636
    %6640 = vmatprep.subr.mxu0 0.0
    %6641 = vmatpush1.xpose.msra.mxu0 0.0
    %6642 = vmatprep.subr.mxu0 0.0
    %6643 = vmatpush1.xpose.msra.mxu0 0.0
    %6644 = vmatprep.subr.mxu0 0.0
    %6645 = vmatpush1.xpose.msra.mxu0 0.0
    %6646 = vmatprep.subr.mxu0 0.0
    %6647 = vmatpush1.xpose.msra.mxu0 0.0
    %6648 = vmatprep.subr.mxu0 0.0
    %6649 = vmatpush1.xpose.msra.mxu0 0.0
    %6650 = vmatprep.subr.mxu0 0.0
    %6651 = vmatpush1.xpose.msra.mxu0 0.0
    %6652 = vmatprep.subr.mxu0 0.0
    %6653 = vmatpush1.xpose.msra.mxu0 0.0
    %6654 = vmatprep.subr.mxu0 0.0
    %6655 = vmatpush1.xpose.msra.mxu0 0.0
    %6656 = vmatprep.subr.mxu0 0.0
    %6657 = vmatpush1.xpose.msra.mxu0 0.0
    %6658 = vmatprep.subr.mxu0 0.0
    %6659 = vmatpush1.xpose.msra.mxu0 0.0
    %6660 = vmatprep.subr.mxu0 0.0
    %6661 = vmatpush1.xpose.msra.mxu0 0.0
    %6662 = vmatprep.subr.mxu0 0.0
    %6663 = vmatpush1.xpose.msra.mxu0 0.0
    %6664 = vmatprep.subr.mxu0 0.0
    %6665 = vmatpush1.xpose.msra.mxu0 0.0
    %6666 = vmatprep.subr.mxu0 0.0
    %6667 = vmatpush1.xpose.msra.mxu0 0.0
    %6668 = vmatprep.subr.mxu0 0.0
    %6669 = vmatpush1.xpose.msra.mxu0 0.0
    %6670 = vmatprep.subr.mxu0 0.0
    %6671 = vmatpush1.xpose.msra.mxu0 0.0
    %6672 = vmatprep.subr.mxu0 0.0
    %6673 = vmatpush1.xpose.msra.mxu0 0.0
    %6674 = vmatprep.subr.mxu0 0.0
    %6675 = vmatpush1.xpose.msra.mxu0 0.0
    %6676 = vmatprep.subr.mxu0 0.0
    %6677 = vmatpush1.xpose.msra.mxu0 0.0
    %6678 = vmatprep.subr.mxu0 0.0
    %6679 = vmatpush1.xpose.msra.mxu0 0.0
    %6680 = vmatprep.subr.mxu0 0.0
    %6681 = vmatpush1.xpose.msra.mxu0 0.0
    %6682 = vmatprep.subr.mxu0 0.0
    %6683 = vmatpush1.xpose.msra.mxu0 0.0
    %6684 = vmatprep.subr.mxu0 0.0
    %6685 = vmatpush1.xpose.msra.mxu0 0.0
    %6686 = vmatprep.subr.mxu0 0.0
    %6687 = vmatpush1.xpose.msra.mxu0 0.0
    %6688 = vmatprep.subr.mxu0 0.0
    %6689 = vmatpush1.xpose.msra.mxu0 0.0
    %6690 = vmatprep.subr.mxu0 0.0
    %6691 = vmatpush1.xpose.msra.mxu0 0.0
    %6692 = vmatprep.subr.mxu0 0.0
    %6693 = vmatpush1.xpose.msra.mxu0 0.0
    %6694 = vmatprep.subr.mxu0 0.0
    %6695 = vmatpush1.xpose.msra.mxu0 0.0
    %6696 = vmatprep.subr.mxu0 0.0
    %6697 = vmatpush1.xpose.msra.mxu0 0.0
    %6698 = vmatprep.subr.mxu0 0.0
    %6699 = vmatpush1.xpose.msra.mxu0 0.0
    %6700 = vmatprep.subr.mxu0 0.0
    %6701 = vmatpush1.xpose.msra.mxu0 0.0
    %6702 = vmatprep.mubr.f32.mxu0 0.0
    %6703 = vmatmul.mubr.f32.gmra.mrb[0].mxu0 %v6634
    %v6704 = vpop.f32.mrb[0].mxu0
    %v6705 = vadd.f32 0.0, %v6704
    %v6706 = vpop.f32.mrb[0].mxu0
    %6707 = vdwg.mxu0
    %6709 = vrot.lane.b32.xlu0 %v6193, 120
    %v6710 = vpop.permute.xlu0 %6709
    %v6711 = vsel %vm647, %v6193, 0
    %v6713 = vsel %vm647, %v6710, 0
    %6715 = vmatprep.subr.mxu0 0.0
    %6716 = vmatpush1.xpose.msra.mxu0 %v6713
    %6717 = vmatprep.subr.mxu0 0.0
    %6718 = vmatpush1.xpose.msra.mxu0 0.0
    %6719 = vmatprep.subr.mxu0 0.0
    %6720 = vmatpush1.xpose.msra.mxu0 0.0
    %6721 = vmatprep.subr.mxu0 0.0
    %6722 = vmatpush1.xpose.msra.mxu0 0.0
    %6723 = vmatprep.subr.mxu0 0.0
    %6724 = vmatpush1.xpose.msra.mxu0 0.0
    %6725 = vmatprep.subr.mxu0 0.0
    %6726 = vmatpush1.xpose.msra.mxu0 0.0
    %6727 = vmatprep.subr.mxu0 0.0
    %6728 = vmatpush1.xpose.msra.mxu0 0.0
    %6729 = vmatprep.subr.mxu0 0.0
    %6730 = vmatpush1.xpose.msra.mxu0 0.0
    %6731 = vmatprep.subr.mxu0 0.0
    %6732 = vmatpush1.xpose.msra.mxu0 0.0
    %6733 = vmatprep.subr.mxu0 0.0
    %6734 = vmatpush1.xpose.msra.mxu0 0.0
    %6735 = vmatprep.subr.mxu0 0.0
    %6736 = vmatpush1.xpose.msra.mxu0 0.0
    %6737 = vmatprep.subr.mxu0 0.0
    %6738 = vmatpush1.xpose.msra.mxu0 0.0
    %6739 = vmatprep.subr.mxu0 0.0
    %6740 = vmatpush1.xpose.msra.mxu0 0.0
    %6741 = vmatprep.subr.mxu0 0.0
    %6742 = vmatpush1.xpose.msra.mxu0 0.0
    %6743 = vmatprep.subr.mxu0 0.0
    %6744 = vmatpush1.xpose.msra.mxu0 0.0
    %6745 = vmatprep.subr.mxu0 0.0
    %6746 = vmatpush1.xpose.msra.mxu0 0.0
    %6747 = vmatprep.subr.mxu0 0.0
    %6748 = vmatpush1.xpose.msra.mxu0 0.0
    %6749 = vmatprep.subr.mxu0 0.0
    %6750 = vmatpush1.xpose.msra.mxu0 0.0
    %6751 = vmatprep.subr.mxu0 0.0
    %6752 = vmatpush1.xpose.msra.mxu0 0.0
    %6753 = vmatprep.subr.mxu0 0.0
    %6754 = vmatpush1.xpose.msra.mxu0 0.0
    %6755 = vmatprep.subr.mxu0 0.0
    %6756 = vmatpush1.xpose.msra.mxu0 0.0
    %6757 = vmatprep.subr.mxu0 0.0
    %6758 = vmatpush1.xpose.msra.mxu0 0.0
    %6759 = vmatprep.subr.mxu0 0.0
    %6760 = vmatpush1.xpose.msra.mxu0 0.0
    %6761 = vmatprep.subr.mxu0 0.0
    %6762 = vmatpush1.xpose.msra.mxu0 0.0
    %6763 = vmatprep.subr.mxu0 0.0
    %6764 = vmatpush1.xpose.msra.mxu0 0.0
    %6765 = vmatprep.subr.mxu0 0.0
    %6766 = vmatpush1.xpose.msra.mxu0 0.0
    %6767 = vmatprep.subr.mxu0 0.0
    %6768 = vmatpush1.xpose.msra.mxu0 0.0
    %6769 = vmatprep.subr.mxu0 0.0
    %6770 = vmatpush1.xpose.msra.mxu0 0.0
    %6771 = vmatprep.subr.mxu0 0.0
    %6772 = vmatpush1.xpose.msra.mxu0 0.0
    %6773 = vmatprep.subr.mxu0 0.0
    %6774 = vmatpush1.xpose.msra.mxu0 0.0
    %6775 = vmatprep.subr.mxu0 0.0
    %6776 = vmatpush1.xpose.msra.mxu0 0.0
    %6777 = vmatprep.subr.mxu0 0.0
    %6778 = vmatpush1.xpose.msra.mxu0 0.0
    %6779 = vmatprep.mubr.f32.mxu0 0.0
    %6780 = vmatmul.mubr.f32.gmra.mrb[0].mxu0 %v6711
    %v6781 = vpop.f32.mrb[0].mxu0
    %v6782 = vadd.f32 0.0, %v6781
    %v6783 = vpop.f32.mrb[0].mxu0
    %6784 = vdwg.mxu0
    %6786 = vrot.lane.b32.xlu0 %v6263, 120
    %v6787 = vpop.permute.xlu0 %6786
    %v6788 = vsel %vm647, %v6263, 0
    %v6790 = vsel %vm647, %v6787, 0
    %6792 = vmatprep.subr.mxu0 0.0
    %6793 = vmatpush1.xpose.msra.mxu0 %v6790
    %6794 = vmatprep.subr.mxu0 0.0
    %6795 = vmatpush1.xpose.msra.mxu0 0.0
    %6796 = vmatprep.subr.mxu0 0.0
    %6797 = vmatpush1.xpose.msra.mxu0 0.0
    %6798 = vmatprep.subr.mxu0 0.0
    %6799 = vmatpush1.xpose.msra.mxu0 0.0
    %6800 = vmatprep.subr.mxu0 0.0
    %6801 = vmatpush1.xpose.msra.mxu0 0.0
    %6802 = vmatprep.subr.mxu0 0.0
    %6803 = vmatpush1.xpose.msra.mxu0 0.0
    %6804 = vmatprep.subr.mxu0 0.0
    %6805 = vmatpush1.xpose.msra.mxu0 0.0
    %6806 = vmatprep.subr.mxu0 0.0
    %6807 = vmatpush1.xpose.msra.mxu0 0.0
    %6808 = vmatprep.subr.mxu0 0.0
    %6809 = vmatpush1.xpose.msra.mxu0 0.0
    %6810 = vmatprep.subr.mxu0 0.0
    %6811 = vmatpush1.xpose.msra.mxu0 0.0
    %6812 = vmatprep.subr.mxu0 0.0
    %6813 = vmatpush1.xpose.msra.mxu0 0.0
    %6814 = vmatprep.subr.mxu0 0.0
    %6815 = vmatpush1.xpose.msra.mxu0 0.0
    %6816 = vmatprep.subr.mxu0 0.0
    %6817 = vmatpush1.xpose.msra.mxu0 0.0
    %6818 = vmatprep.subr.mxu0 0.0
    %6819 = vmatpush1.xpose.msra.mxu0 0.0
    %6820 = vmatprep.subr.mxu0 0.0
    %6821 = vmatpush1.xpose.msra.mxu0 0.0
    %6822 = vmatprep.subr.mxu0 0.0
    %6823 = vmatpush1.xpose.msra.mxu0 0.0
    %6824 = vmatprep.subr.mxu0 0.0
    %6825 = vmatpush1.xpose.msra.mxu0 0.0
    %6826 = vmatprep.subr.mxu0 0.0
    %6827 = vmatpush1.xpose.msra.mxu0 0.0
    %6828 = vmatprep.subr.mxu0 0.0
    %6829 = vmatpush1.xpose.msra.mxu0 0.0
    %6830 = vmatprep.subr.mxu0 0.0
    %6831 = vmatpush1.xpose.msra.mxu0 0.0
    %6832 = vmatprep.subr.mxu0 0.0
    %6833 = vmatpush1.xpose.msra.mxu0 0.0
    %6834 = vmatprep.subr.mxu0 0.0
    %6835 = vmatpush1.xpose.msra.mxu0 0.0
    %6836 = vmatprep.subr.mxu0 0.0
    %6837 = vmatpush1.xpose.msra.mxu0 0.0
    %6838 = vmatprep.subr.mxu0 0.0
    %6839 = vmatpush1.xpose.msra.mxu0 0.0
    %6840 = vmatprep.subr.mxu0 0.0
    %6841 = vmatpush1.xpose.msra.mxu0 0.0
    %6842 = vmatprep.subr.mxu0 0.0
    %6843 = vmatpush1.xpose.msra.mxu0 0.0
    %6844 = vmatprep.subr.mxu0 0.0
    %6845 = vmatpush1.xpose.msra.mxu0 0.0
    %6846 = vmatprep.subr.mxu0 0.0
    %6847 = vmatpush1.xpose.msra.mxu0 0.0
    %6848 = vmatprep.subr.mxu0 0.0
    %6849 = vmatpush1.xpose.msra.mxu0 0.0
    %6850 = vmatprep.subr.mxu0 0.0
    %6851 = vmatpush1.xpose.msra.mxu0 0.0
    %6852 = vmatprep.subr.mxu0 0.0
    %6853 = vmatpush1.xpose.msra.mxu0 0.0
    %6854 = vmatprep.subr.mxu0 0.0
    %6855 = vmatpush1.xpose.msra.mxu0 0.0
    %6856 = vmatprep.mubr.f32.mxu0 0.0
    %6857 = vmatmul.mubr.f32.gmra.mrb[0].mxu0 %v6788
    %v6858 = vpop.f32.mrb[0].mxu0
    %v6859 = vadd.f32 0.0, %v6858
    %v6860 = vpop.f32.mrb[0].mxu0
    %6861 = vdwg.mxu0
    %6863 = vrot.lane.b32.xlu0 %v6336, 120
    %v6864 = vpop.permute.xlu0 %6863
    %v6865 = vsel %vm647, %v6336, 0
    %v6867 = vsel %vm647, %v6864, 0
    %6869 = vmatprep.subr.mxu0 0.0
    %6870 = vmatpush1.xpose.msra.mxu0 %v6867
    %6871 = vmatprep.subr.mxu0 0.0
    %6872 = vmatpush1.xpose.msra.mxu0 0.0
    %6873 = vmatprep.subr.mxu0 0.0
    %6874 = vmatpush1.xpose.msra.mxu0 0.0
    %6875 = vmatprep.subr.mxu0 0.0
    %6876 = vmatpush1.xpose.msra.mxu0 0.0
    %6877 = vmatprep.subr.mxu0 0.0
    %6878 = vmatpush1.xpose.msra.mxu0 0.0
    %6879 = vmatprep.subr.mxu0 0.0
    %6880 = vmatpush1.xpose.msra.mxu0 0.0
    %6881 = vmatprep.subr.mxu0 0.0
    %6882 = vmatpush1.xpose.msra.mxu0 0.0
    %6883 = vmatprep.subr.mxu0 0.0
    %6884 = vmatpush1.xpose.msra.mxu0 0.0
    %6885 = vmatprep.subr.mxu0 0.0
    %6886 = vmatpush1.xpose.msra.mxu0 0.0
    %6887 = vmatprep.subr.mxu0 0.0
    %6888 = vmatpush1.xpose.msra.mxu0 0.0
    %6889 = vmatprep.subr.mxu0 0.0
    %6890 = vmatpush1.xpose.msra.mxu0 0.0
    %6891 = vmatprep.subr.mxu0 0.0
    %6892 = vmatpush1.xpose.msra.mxu0 0.0
    %6893 = vmatprep.subr.mxu0 0.0
    %6894 = vmatpush1.xpose.msra.mxu0 0.0
    %6895 = vmatprep.subr.mxu0 0.0
    %6896 = vmatpush1.xpose.msra.mxu0 0.0
    %6897 = vmatprep.subr.mxu0 0.0
    %6898 = vmatpush1.xpose.msra.mxu0 0.0
    %6899 = vmatprep.subr.mxu0 0.0
    %6900 = vmatpush1.xpose.msra.mxu0 0.0
    %6901 = vmatprep.subr.mxu0 0.0
    %6902 = vmatpush1.xpose.msra.mxu0 0.0
    %6903 = vmatprep.subr.mxu0 0.0
    %6904 = vmatpush1.xpose.msra.mxu0 0.0
    %6905 = vmatprep.subr.mxu0 0.0
    %6906 = vmatpush1.xpose.msra.mxu0 0.0
    %6907 = vmatprep.subr.mxu0 0.0
    %6908 = vmatpush1.xpose.msra.mxu0 0.0
    %6909 = vmatprep.subr.mxu0 0.0
    %6910 = vmatpush1.xpose.msra.mxu0 0.0
    %6911 = vmatprep.subr.mxu0 0.0
    %6912 = vmatpush1.xpose.msra.mxu0 0.0
    %6913 = vmatprep.subr.mxu0 0.0
    %6914 = vmatpush1.xpose.msra.mxu0 0.0
    %6915 = vmatprep.subr.mxu0 0.0
    %6916 = vmatpush1.xpose.msra.mxu0 0.0
    %6917 = vmatprep.subr.mxu0 0.0
    %6918 = vmatpush1.xpose.msra.mxu0 0.0
    %6919 = vmatprep.subr.mxu0 0.0
    %6920 = vmatpush1.xpose.msra.mxu0 0.0
    %6921 = vmatprep.subr.mxu0 0.0
    %6922 = vmatpush1.xpose.msra.mxu0 0.0
    %6923 = vmatprep.subr.mxu0 0.0
    %6924 = vmatpush1.xpose.msra.mxu0 0.0
    %6925 = vmatprep.subr.mxu0 0.0
    %6926 = vmatpush1.xpose.msra.mxu0 0.0
    %6927 = vmatprep.subr.mxu0 0.0
    %6928 = vmatpush1.xpose.msra.mxu0 0.0
    %6929 = vmatprep.subr.mxu0 0.0
    %6930 = vmatpush1.xpose.msra.mxu0 0.0
    %6931 = vmatprep.subr.mxu0 0.0
    %6932 = vmatpush1.xpose.msra.mxu0 0.0
    %6933 = vmatprep.mubr.f32.mxu0 0.0
    %6934 = vmatmul.mubr.f32.gmra.mrb[0].mxu0 %v6865
    %v6935 = vpop.f32.mrb[0].mxu0
    %v6936 = vadd.f32 0.0, %v6935
    %v6937 = vpop.f32.mrb[0].mxu0
    %6938 = vdwg.mxu0
    %6940 = vrot.lane.b32.xlu0 %v6406, 120
    %v6941 = vpop.permute.xlu0 %6940
    %v6942 = vsel %vm647, %v6406, 0
    %v6944 = vsel %vm647, %v6941, 0
    %6946 = vmatprep.subr.mxu0 0.0
    %6947 = vmatpush1.xpose.msra.mxu0 %v6944
    %6948 = vmatprep.subr.mxu0 0.0
    %6949 = vmatpush1.xpose.msra.mxu0 0.0
    %6950 = vmatprep.subr.mxu0 0.0
    %6951 = vmatpush1.xpose.msra.mxu0 0.0
    %6952 = vmatprep.subr.mxu0 0.0
    %6953 = vmatpush1.xpose.msra.mxu0 0.0
    %6954 = vmatprep.subr.mxu0 0.0
    %6955 = vmatpush1.xpose.msra.mxu0 0.0
    %6956 = vmatprep.subr.mxu0 0.0
    %6957 = vmatpush1.xpose.msra.mxu0 0.0
    %6958 = vmatprep.subr.mxu0 0.0
    %6959 = vmatpush1.xpose.msra.mxu0 0.0
    %6960 = vmatprep.subr.mxu0 0.0
    %6961 = vmatpush1.xpose.msra.mxu0 0.0
    %6962 = vmatprep.subr.mxu0 0.0
    %6963 = vmatpush1.xpose.msra.mxu0 0.0
    %6964 = vmatprep.subr.mxu0 0.0
    %6965 = vmatpush1.xpose.msra.mxu0 0.0
    %6966 = vmatprep.subr.mxu0 0.0
    %6967 = vmatpush1.xpose.msra.mxu0 0.0
    %6968 = vmatprep.subr.mxu0 0.0
    %6969 = vmatpush1.xpose.msra.mxu0 0.0
    %6970 = vmatprep.subr.mxu0 0.0
    %6971 = vmatpush1.xpose.msra.mxu0 0.0
    %6972 = vmatprep.subr.mxu0 0.0
    %6973 = vmatpush1.xpose.msra.mxu0 0.0
    %6974 = vmatprep.subr.mxu0 0.0
    %6975 = vmatpush1.xpose.msra.mxu0 0.0
    %6976 = vmatprep.subr.mxu0 0.0
    %6977 = vmatpush1.xpose.msra.mxu0 0.0
    %6978 = vmatprep.subr.mxu0 0.0
    %6979 = vmatpush1.xpose.msra.mxu0 0.0
    %6980 = vmatprep.subr.mxu0 0.0
    %6981 = vmatpush1.xpose.msra.mxu0 0.0
    %6982 = vmatprep.subr.mxu0 0.0
    %6983 = vmatpush1.xpose.msra.mxu0 0.0
    %6984 = vmatprep.subr.mxu0 0.0
    %6985 = vmatpush1.xpose.msra.mxu0 0.0
    %6986 = vmatprep.subr.mxu0 0.0
    %6987 = vmatpush1.xpose.msra.mxu0 0.0
    %6988 = vmatprep.subr.mxu0 0.0
    %6989 = vmatpush1.xpose.msra.mxu0 0.0
    %6990 = vmatprep.subr.mxu0 0.0
    %6991 = vmatpush1.xpose.msra.mxu0 0.0
    %6992 = vmatprep.subr.mxu0 0.0
    %6993 = vmatpush1.xpose.msra.mxu0 0.0
    %6994 = vmatprep.subr.mxu0 0.0
    %6995 = vmatpush1.xpose.msra.mxu0 0.0
    %6996 = vmatprep.subr.mxu0 0.0
    %6997 = vmatpush1.xpose.msra.mxu0 0.0
    %6998 = vmatprep.subr.mxu0 0.0
    %6999 = vmatpush1.xpose.msra.mxu0 0.0
    %7000 = vmatprep.subr.mxu0 0.0
    %7001 = vmatpush1.xpose.msra.mxu0 0.0
    %7002 = vmatprep.subr.mxu0 0.0
    %7003 = vmatpush1.xpose.msra.mxu0 0.0
    %7004 = vmatprep.subr.mxu0 0.0
    %7005 = vmatpush1.xpose.msra.mxu0 0.0
    %7006 = vmatprep.subr.mxu0 0.0
    %7007 = vmatpush1.xpose.msra.mxu0 0.0
    %7008 = vmatprep.subr.mxu0 0.0
    %7009 = vmatpush1.xpose.msra.mxu0 0.0
    %7010 = vmatprep.mubr.f32.mxu0 0.0
    %7011 = vmatmul.mubr.f32.gmra.mrb[0].mxu0 %v6942
    %v7012 = vpop.f32.mrb[0].mxu0
    %v7013 = vadd.f32 0.0, %v7012
    %v7014 = vpop.f32.mrb[0].mxu0
    %7015 = vdwg.mxu0
    %7017 = vrot.lane.b32.xlu0 %v6476, 120
    %v7018 = vpop.permute.xlu0 %7017
    %v7019 = vsel %vm647, %v6476, 0
    %v7021 = vsel %vm647, %v7018, 0
    %7023 = vmatprep.subr.mxu0 0.0
    %7024 = vmatpush1.xpose.msra.mxu0 %v7021
    %7025 = vmatprep.subr.mxu0 0.0
    %7026 = vmatpush1.xpose.msra.mxu0 0.0
    %7027 = vmatprep.subr.mxu0 0.0
    %7028 = vmatpush1.xpose.msra.mxu0 0.0
    %7029 = vmatprep.subr.mxu0 0.0
    %7030 = vmatpush1.xpose.msra.mxu0 0.0
    %7031 = vmatprep.subr.mxu0 0.0
    %7032 = vmatpush1.xpose.msra.mxu0 0.0
    %7033 = vmatprep.subr.mxu0 0.0
    %7034 = vmatpush1.xpose.msra.mxu0 0.0
    %7035 = vmatprep.subr.mxu0 0.0
    %7036 = vmatpush1.xpose.msra.mxu0 0.0
    %7037 = vmatprep.subr.mxu0 0.0
    %7038 = vmatpush1.xpose.msra.mxu0 0.0
    %7039 = vmatprep.subr.mxu0 0.0
    %7040 = vmatpush1.xpose.msra.mxu0 0.0
    %7041 = vmatprep.subr.mxu0 0.0
    %7042 = vmatpush1.xpose.msra.mxu0 0.0
    %7043 = vmatprep.subr.mxu0 0.0
    %7044 = vmatpush1.xpose.msra.mxu0 0.0
    %7045 = vmatprep.subr.mxu0 0.0
    %7046 = vmatpush1.xpose.msra.mxu0 0.0
    %7047 = vmatprep.subr.mxu0 0.0
    %7048 = vmatpush1.xpose.msra.mxu0 0.0
    %7049 = vmatprep.subr.mxu0 0.0
    %7050 = vmatpush1.xpose.msra.mxu0 0.0
    %7051 = vmatprep.subr.mxu0 0.0
    %7052 = vmatpush1.xpose.msra.mxu0 0.0
    %7053 = vmatprep.subr.mxu0 0.0
    %7054 = vmatpush1.xpose.msra.mxu0 0.0
    %7055 = vmatprep.subr.mxu0 0.0
    %7056 = vmatpush1.xpose.msra.mxu0 0.0
    %7057 = vmatprep.subr.mxu0 0.0
    %7058 = vmatpush1.xpose.msra.mxu0 0.0
    %7059 = vmatprep.subr.mxu0 0.0
    %7060 = vmatpush1.xpose.msra.mxu0 0.0
    %7061 = vmatprep.subr.mxu0 0.0
    %7062 = vmatpush1.xpose.msra.mxu0 0.0
    %7063 = vmatprep.subr.mxu0 0.0
    %7064 = vmatpush1.xpose.msra.mxu0 0.0
    %7065 = vmatprep.subr.mxu0 0.0
    %7066 = vmatpush1.xpose.msra.mxu0 0.0
    %7067 = vmatprep.subr.mxu0 0.0
    %7068 = vmatpush1.xpose.msra.mxu0 0.0
    %7069 = vmatprep.subr.mxu0 0.0
    %7070 = vmatpush1.xpose.msra.mxu0 0.0
    %7071 = vmatprep.subr.mxu0 0.0
    %7072 = vmatpush1.xpose.msra.mxu0 0.0
    %7073 = vmatprep.subr.mxu0 0.0
    %7074 = vmatpush1.xpose.msra.mxu0 0.0
    %7075 = vmatprep.subr.mxu0 0.0
    %7076 = vmatpush1.xpose.msra.mxu0 0.0
    %7077 = vmatprep.subr.mxu0 0.0
    %7078 = vmatpush1.xpose.msra.mxu0 0.0
    %7079 = vmatprep.subr.mxu0 0.0
    %7080 = vmatpush1.xpose.msra.mxu0 0.0
    %7081 = vmatprep.subr.mxu0 0.0
    %7082 = vmatpush1.xpose.msra.mxu0 0.0
    %7083 = vmatprep.subr.mxu0 0.0
    %7084 = vmatpush1.xpose.msra.mxu0 0.0
    %7085 = vmatprep.subr.mxu0 0.0
    %7086 = vmatpush1.xpose.msra.mxu0 0.0
    %7087 = vmatprep.mubr.f32.mxu0 0.0
    %7088 = vmatmul.mubr.f32.gmra.mrb[0].mxu0 %v7019
    %v7089 = vpop.f32.mrb[0].mxu0
    %v7090 = vadd.f32 0.0, %v7089
    %v7091 = vpop.f32.mrb[0].mxu0
    %7092 = vdwg.mxu0
    %7094 = vrot.lane.b32.xlu0 %v6546, 120
    %v7095 = vpop.permute.xlu0 %7094
    %v7096 = vsel %vm647, %v6546, 0
    %v7098 = vsel %vm647, %v7095, 0
    %7100 = vmatprep.subr.mxu0 0.0
    %7101 = vmatpush1.xpose.msra.mxu0 %v7098
    %7102 = vmatprep.subr.mxu0 0.0
    %7103 = vmatpush1.xpose.msra.mxu0 0.0
    %7104 = vmatprep.subr.mxu0 0.0
    %7105 = vmatpush1.xpose.msra.mxu0 0.0
    %7106 = vmatprep.subr.mxu0 0.0
    %7107 = vmatpush1.xpose.msra.mxu0 0.0
    %7108 = vmatprep.subr.mxu0 0.0
    %7109 = vmatpush1.xpose.msra.mxu0 0.0
    %7110 = vmatprep.subr.mxu0 0.0
    %7111 = vmatpush1.xpose.msra.mxu0 0.0
    %7112 = vmatprep.subr.mxu0 0.0
    %7113 = vmatpush1.xpose.msra.mxu0 0.0
    %7114 = vmatprep.subr.mxu0 0.0
    %7115 = vmatpush1.xpose.msra.mxu0 0.0
    %7116 = vmatprep.subr.mxu0 0.0
    %7117 = vmatpush1.xpose.msra.mxu0 0.0
    %7118 = vmatprep.subr.mxu0 0.0
    %7119 = vmatpush1.xpose.msra.mxu0 0.0
    %7120 = vmatprep.subr.mxu0 0.0
    %7121 = vmatpush1.xpose.msra.mxu0 0.0
    %7122 = vmatprep.subr.mxu0 0.0
    %7123 = vmatpush1.xpose.msra.mxu0 0.0
    %7124 = vmatprep.subr.mxu0 0.0
    %7125 = vmatpush1.xpose.msra.mxu0 0.0
    %7126 = vmatprep.subr.mxu0 0.0
    %7127 = vmatpush1.xpose.msra.mxu0 0.0
    %7128 = vmatprep.subr.mxu0 0.0
    %7129 = vmatpush1.xpose.msra.mxu0 0.0
    %7130 = vmatprep.subr.mxu0 0.0
    %7131 = vmatpush1.xpose.msra.mxu0 0.0
    %7132 = vmatprep.subr.mxu0 0.0
    %7133 = vmatpush1.xpose.msra.mxu0 0.0
    %7134 = vmatprep.subr.mxu0 0.0
    %7135 = vmatpush1.xpose.msra.mxu0 0.0
    %7136 = vmatprep.subr.mxu0 0.0
    %7137 = vmatpush1.xpose.msra.mxu0 0.0
    %7138 = vmatprep.subr.mxu0 0.0
    %7139 = vmatpush1.xpose.msra.mxu0 0.0
    %7140 = vmatprep.subr.mxu0 0.0
    %7141 = vmatpush1.xpose.msra.mxu0 0.0
    %7142 = vmatprep.subr.mxu0 0.0
    %7143 = vmatpush1.xpose.msra.mxu0 0.0
    %7144 = vmatprep.subr.mxu0 0.0
    %7145 = vmatpush1.xpose.msra.mxu0 0.0
    %7146 = vmatprep.subr.mxu0 0.0
    %7147 = vmatpush1.xpose.msra.mxu0 0.0
    %7148 = vmatprep.subr.mxu0 0.0
    %7149 = vmatpush1.xpose.msra.mxu0 0.0
    %7150 = vmatprep.subr.mxu0 0.0
    %7151 = vmatpush1.xpose.msra.mxu0 0.0
    %7152 = vmatprep.subr.mxu0 0.0
    %7153 = vmatpush1.xpose.msra.mxu0 0.0
    %7154 = vmatprep.subr.mxu0 0.0
    %7155 = vmatpush1.xpose.msra.mxu0 0.0
    %7156 = vmatprep.subr.mxu0 0.0
    %7157 = vmatpush1.xpose.msra.mxu0 0.0
    %7158 = vmatprep.subr.mxu0 0.0
    %7159 = vmatpush1.xpose.msra.mxu0 0.0
    %7160 = vmatprep.subr.mxu0 0.0
    %7161 = vmatpush1.xpose.msra.mxu0 0.0
    %7162 = vmatprep.subr.mxu0 0.0
    %7163 = vmatpush1.xpose.msra.mxu0 0.0
    %7164 = vmatprep.mubr.f32.mxu0 0.0
    %7165 = vmatmul.mubr.f32.gmra.mrb[0].mxu0 %v7096
    %v7166 = vpop.f32.mrb[0].mxu0
    %v7167 = vadd.f32 0.0, %v7166
    %v7168 = vpop.f32.mrb[0].mxu0
    %7169 = vdwg.mxu0
    %v7170 = vmul.f32 %v6628, 0.35355338
    %v7171 = vmul.f32 %v6705, 0.35355338
    %v7172 = vmul.f32 %v6782, 0.35355338
    %v7173 = vmul.f32 %v6859, 0.35355338
    %v7174 = vmul.f32 %v6936, 0.35355338
    %v7175 = vmul.f32 %v7013, 0.35355338
    %v7176 = vmul.f32 %v7090, 0.35355338
    %v7177 = vmul.f32 %v7167, 0.35355338
    %v7178 = vsel %vm647, %v7170, -inf
    %7179 = vmax.xlane.f32.xlu0 %v7178
    %v7180 = vpop.xlane.xlu0 %7179
    %v7181 = vsel %vm647, %v7171, -inf
    %7182 = vmax.xlane.f32.xlu0 %v7181
    %v7183 = vpop.xlane.xlu0 %7182
    %v7184 = vsel %vm647, %v7172, -inf
    %7185 = vmax.xlane.f32.xlu0 %v7184
    %v7186 = vpop.xlane.xlu0 %7185
    %v7187 = vsel %vm647, %v7173, -inf
    %7188 = vmax.xlane.f32.xlu0 %v7187
    %v7189 = vpop.xlane.xlu0 %7188
    %v7190 = vsel %vm647, %v7174, -inf
    %7191 = vmax.xlane.f32.xlu0 %v7190
    %v7192 = vpop.xlane.xlu0 %7191
    %v7193 = vsel %vm647, %v7175, -inf
    %7194 = vmax.xlane.f32.xlu0 %v7193
    %v7195 = vpop.xlane.xlu0 %7194
    %v7196 = vsel %vm647, %v7176, -inf
    %7197 = vmax.xlane.f32.xlu0 %v7196
    %v7198 = vpop.xlane.xlu0 %7197
    %v7199 = vsel %vm647, %v7177, -inf
    %7200 = vmax.xlane.f32.xlu0 %v7199
    %v7201 = vpop.xlane.xlu0 %7200
    %v7202 = vsub.f32 %v7170, %v7180
    %v7203 = vsub.f32 %v7171, %v7183
    %v7204 = vsub.f32 %v7172, %v7186
    %v7205 = vsub.f32 %v7173, %v7189
    %v7206 = vsub.f32 %v7174, %v7192
    %v7207 = vsub.f32 %v7175, %v7195
    %v7208 = vsub.f32 %v7176, %v7198
    %v7209 = vsub.f32 %v7177, %v7201
    %v7210 = vmul.f32 %v7202, 1.442695
    %v7211 = vpow.pop %v7210
    %v7212 = vmul.f32 %v7203, 1.442695
    %v7213 = vpow.pop %v7212
    %v7214 = vmul.f32 %v7204, 1.442695
    %v7215 = vpow.pop %v7214
    %v7216 = vmul.f32 %v7205, 1.442695
    %v7217 = vpow.pop %v7216
    %v7218 = vmul.f32 %v7206, 1.442695
    %v7219 = vpow.pop %v7218
    %v7220 = vmul.f32 %v7207, 1.442695
    %v7221 = vpow.pop %v7220
    %v7222 = vmul.f32 %v7208, 1.442695
    %v7223 = vpow.pop %v7222
    %v7224 = vmul.f32 %v7209, 1.442695
    %v7225 = vpow.pop %v7224
    %v7226 = vsel %vm647, %v7211, 0.0
    %7227 = vadd.xlane.f32.xlu0 %v7226
    %v7228 = vpop.xlane.xlu0 %7227
    %v7229 = vsel %vm647, %v7213, 0.0
    %7230 = vadd.xlane.f32.xlu0 %v7229
    %v7231 = vpop.xlane.xlu0 %7230
    %v7232 = vsel %vm647, %v7215, 0.0
    %7233 = vadd.xlane.f32.xlu0 %v7232
    %v7234 = vpop.xlane.xlu0 %7233
    %v7235 = vsel %vm647, %v7217, 0.0
    %7236 = vadd.xlane.f32.xlu0 %v7235
    %v7237 = vpop.xlane.xlu0 %7236
    %v7238 = vsel %vm647, %v7219, 0.0
    %7239 = vadd.xlane.f32.xlu0 %v7238
    %v7240 = vpop.xlane.xlu0 %7239
    %v7241 = vsel %vm647, %v7221, 0.0
    %7242 = vadd.xlane.f32.xlu0 %v7241
    %v7243 = vpop.xlane.xlu0 %7242
    %v7244 = vsel %vm647, %v7223, 0.0
    %7245 = vadd.xlane.f32.xlu0 %v7244
    %v7246 = vpop.xlane.xlu0 %7245
    %v7247 = vsel %vm647, %v7225, 0.0
    %7248 = vadd.xlane.f32.xlu0 %v7247
    %v7249 = vpop.xlane.xlu0 %7248
    %v7250 = vrcp.pop %v7228
    %v7251 = vrcp.pop %v7231
    %v7252 = vrcp.pop %v7234
    %v7253 = vrcp.pop %v7237
    %v7254 = vrcp.pop %v7240
    %v7255 = vrcp.pop %v7243
    %v7256 = vrcp.pop %v7246
    %v7257 = vrcp.pop %v7249
    %v7258 = vmul.f32 %v7211, %v7250
    %v7259 = vmul.f32 %v7213, %v7251
    %v7260 = vmul.f32 %v7215, %v7252
    %v7261 = vmul.f32 %v7217, %v7253
    %v7262 = vmul.f32 %v7219, %v7254
    %v7263 = vmul.f32 %v7221, %v7255
    %v7264 = vmul.f32 %v7223, %v7256
    %v7265 = vmul.f32 %v7225, %v7257
    %7266 = vrot.lane.b32.xlu0 %v6053, 112
    %v7267 = vpop.permute.xlu0 %7266
    %v7270 = vsel %vm647, %v7258, 0
    %7272 = vmatprep.subr.mxu0 0.0
    %7273 = vmatpush1.msra.mxu0 %v7267
    %7274 = vmatprep.subr.mxu0 0.0
    %7275 = vmatpush1.msra.mxu0 0.0
    %7276 = vmatprep.subr.mxu0 0.0
    %7277 = vmatpush1.msra.mxu0 0.0
    %7278 = vmatprep.subr.mxu0 0.0
    %7279 = vmatpush1.msra.mxu0 0.0
    %7280 = vmatprep.subr.mxu0 0.0
    %7281 = vmatpush1.msra.mxu0 0.0
    %7282 = vmatprep.subr.mxu0 0.0
    %7283 = vmatpush1.msra.mxu0 0.0
    %7284 = vmatprep.subr.mxu0 0.0
    %7285 = vmatpush1.msra.mxu0 0.0
    %7286 = vmatprep.subr.mxu0 0.0
    %7287 = vmatpush1.msra.mxu0 0.0
    %7288 = vmatprep.subr.mxu0 0.0
    %7289 = vmatpush1.msra.mxu0 0.0
    %7290 = vmatprep.subr.mxu0 0.0
    %7291 = vmatpush1.msra.mxu0 0.0
    %7292 = vmatprep.subr.mxu0 0.0
    %7293 = vmatpush1.msra.mxu0 0.0
    %7294 = vmatprep.subr.mxu0 0.0
    %7295 = vmatpush1.msra.mxu0 0.0
    %7296 = vmatprep.subr.mxu0 0.0
    %7297 = vmatpush1.msra.mxu0 0.0
    %7298 = vmatprep.subr.mxu0 0.0
    %7299 = vmatpush1.msra.mxu0 0.0
    %7300 = vmatprep.subr.mxu0 0.0
    %7301 = vmatpush1.msra.mxu0 0.0
    %7302 = vmatprep.subr.mxu0 0.0
    %7303 = vmatpush1.msra.mxu0 0.0
    %7304 = vmatprep.subr.mxu0 0.0
    %7305 = vmatpush1.msra.mxu0 0.0
    %7306 = vmatprep.subr.mxu0 0.0
    %7307 = vmatpush1.msra.mxu0 0.0
    %7308 = vmatprep.subr.mxu0 0.0
    %7309 = vmatpush1.msra.mxu0 0.0
    %7310 = vmatprep.subr.mxu0 0.0
    %7311 = vmatpush1.msra.mxu0 0.0
    %7312 = vmatprep.subr.mxu0 0.0
    %7313 = vmatpush1.msra.mxu0 0.0
    %7314 = vmatprep.subr.mxu0 0.0
    %7315 = vmatpush1.msra.mxu0 0.0
    %7316 = vmatprep.subr.mxu0 0.0
    %7317 = vmatpush1.msra.mxu0 0.0
    %7318 = vmatprep.subr.mxu0 0.0
    %7319 = vmatpush1.msra.mxu0 0.0
    %7320 = vmatprep.subr.mxu0 0.0
    %7321 = vmatpush1.msra.mxu0 0.0
    %7322 = vmatprep.subr.mxu0 0.0
    %7323 = vmatpush1.msra.mxu0 0.0
    %7324 = vmatprep.subr.mxu0 0.0
    %7325 = vmatpush1.msra.mxu0 0.0
    %7326 = vmatprep.subr.mxu0 0.0
    %7327 = vmatpush1.msra.mxu0 0.0
    %7328 = vmatprep.subr.mxu0 0.0
    %7329 = vmatpush1.msra.mxu0 0.0
    %7330 = vmatprep.subr.mxu0 0.0
    %7331 = vmatpush1.msra.mxu0 0.0
    %7332 = vmatprep.subr.mxu0 0.0
    %7333 = vmatpush1.msra.mxu0 0.0
    %7334 = vmatprep.subr.mxu0 0.0
    %7335 = vmatpush1.msra.mxu0 0.0
    %7336 = vmatprep.mubr.f32.mxu0 0.0
    %7337 = vmatmul.mubr.f32.gmra.mrb[0].mxu0 %v7270
    %v7338 = vpop.f32.mrb[0].mxu0
    %v7339 = vadd.f32 0.0, %v7338
    %v7340 = vpop.f32.mrb[0].mxu0
    %7341 = vdwg.mxu0
    %7342 = vrot.lane.b32.xlu0 %v6123, 112
    %v7343 = vpop.permute.xlu0 %7342
    %v7346 = vsel %vm647, %v7259, 0
    %7348 = vmatprep.subr.mxu0 0.0
    %7349 = vmatpush1.msra.mxu0 %v7343
    %7350 = vmatprep.subr.mxu0 0.0
    %7351 = vmatpush1.msra.mxu0 0.0
    %7352 = vmatprep.subr.mxu0 0.0
    %7353 = vmatpush1.msra.mxu0 0.0
    %7354 = vmatprep.subr.mxu0 0.0
    %7355 = vmatpush1.msra.mxu0 0.0
    %7356 = vmatprep.subr.mxu0 0.0
    %7357 = vmatpush1.msra.mxu0 0.0
    %7358 = vmatprep.subr.mxu0 0.0
    %7359 = vmatpush1.msra.mxu0 0.0
    %7360 = vmatprep.subr.mxu0 0.0
    %7361 = vmatpush1.msra.mxu0 0.0
    %7362 = vmatprep.subr.mxu0 0.0
    %7363 = vmatpush1.msra.mxu0 0.0
    %7364 = vmatprep.subr.mxu0 0.0
    %7365 = vmatpush1.msra.mxu0 0.0
    %7366 = vmatprep.subr.mxu0 0.0
    %7367 = vmatpush1.msra.mxu0 0.0
    %7368 = vmatprep.subr.mxu0 0.0
    %7369 = vmatpush1.msra.mxu0 0.0
    %7370 = vmatprep.subr.mxu0 0.0
    %7371 = vmatpush1.msra.mxu0 0.0
    %7372 = vmatprep.subr.mxu0 0.0
    %7373 = vmatpush1.msra.mxu0 0.0
    %7374 = vmatprep.subr.mxu0 0.0
    %7375 = vmatpush1.msra.mxu0 0.0
    %7376 = vmatprep.subr.mxu0 0.0
    %7377 = vmatpush1.msra.mxu0 0.0
    %7378 = vmatprep.subr.mxu0 0.0
    %7379 = vmatpush1.msra.mxu0 0.0
    %7380 = vmatprep.subr.mxu0 0.0
    %7381 = vmatpush1.msra.mxu0 0.0
    %7382 = vmatprep.subr.mxu0 0.0
    %7383 = vmatpush1.msra.mxu0 0.0
    %7384 = vmatprep.subr.mxu0 0.0
    %7385 = vmatpush1.msra.mxu0 0.0
    %7386 = vmatprep.subr.mxu0 0.0
    %7387 = vmatpush1.msra.mxu0 0.0
    %7388 = vmatprep.subr.mxu0 0.0
    %7389 = vmatpush1.msra.mxu0 0.0
    %7390 = vmatprep.subr.mxu0 0.0
    %7391 = vmatpush1.msra.mxu0 0.0
    %7392 = vmatprep.subr.mxu0 0.0
    %7393 = vmatpush1.msra.mxu0 0.0
    %7394 = vmatprep.subr.mxu0 0.0
    %7395 = vmatpush1.msra.mxu0 0.0
    %7396 = vmatprep.subr.mxu0 0.0
    %7397 = vmatpush1.msra.mxu0 0.0
    %7398 = vmatprep.subr.mxu0 0.0
    %7399 = vmatpush1.msra.mxu0 0.0
    %7400 = vmatprep.subr.mxu0 0.0
    %7401 = vmatpush1.msra.mxu0 0.0
    %7402 = vmatprep.subr.mxu0 0.0
    %7403 = vmatpush1.msra.mxu0 0.0
    %7404 = vmatprep.subr.mxu0 0.0
    %7405 = vmatpush1.msra.mxu0 0.0
    %7406 = vmatprep.subr.mxu0 0.0
    %7407 = vmatpush1.msra.mxu0 0.0
    %7408 = vmatprep.subr.mxu0 0.0
    %7409 = vmatpush1.msra.mxu0 0.0
    %7410 = vmatprep.subr.mxu0 0.0
    %7411 = vmatpush1.msra.mxu0 0.0
    %7412 = vmatprep.mubr.f32.mxu0 0.0
    %7413 = vmatmul.mubr.f32.gmra.mrb[0].mxu0 %v7346
    %v7414 = vpop.f32.mrb[0].mxu0
    %v7415 = vadd.f32 0.0, %v7414
    %v7416 = vpop.f32.mrb[0].mxu0
    %7417 = vdwg.mxu0
    %7418 = vrot.lane.b32.xlu0 %v6193, 112
    %v7419 = vpop.permute.xlu0 %7418
    %v7422 = vsel %vm647, %v7260, 0
    %7424 = vmatprep.subr.mxu0 0.0
    %7425 = vmatpush1.msra.mxu0 %v7419
    %7426 = vmatprep.subr.mxu0 0.0
    %7427 = vmatpush1.msra.mxu0 0.0
    %7428 = vmatprep.subr.mxu0 0.0
    %7429 = vmatpush1.msra.mxu0 0.0
    %7430 = vmatprep.subr.mxu0 0.0
    %7431 = vmatpush1.msra.mxu0 0.0
    %7432 = vmatprep.subr.mxu0 0.0
    %7433 = vmatpush1.msra.mxu0 0.0
    %7434 = vmatprep.subr.mxu0 0.0
    %7435 = vmatpush1.msra.mxu0 0.0
    %7436 = vmatprep.subr.mxu0 0.0
    %7437 = vmatpush1.msra.mxu0 0.0
    %7438 = vmatprep.subr.mxu0 0.0
    %7439 = vmatpush1.msra.mxu0 0.0
    %7440 = vmatprep.subr.mxu0 0.0
    %7441 = vmatpush1.msra.mxu0 0.0
    %7442 = vmatprep.subr.mxu0 0.0
    %7443 = vmatpush1.msra.mxu0 0.0
    %7444 = vmatprep.subr.mxu0 0.0
    %7445 = vmatpush1.msra.mxu0 0.0
    %7446 = vmatprep.subr.mxu0 0.0
    %7447 = vmatpush1.msra.mxu0 0.0
    %7448 = vmatprep.subr.mxu0 0.0
    %7449 = vmatpush1.msra.mxu0 0.0
    %7450 = vmatprep.subr.mxu0 0.0
    %7451 = vmatpush1.msra.mxu0 0.0
    %7452 = vmatprep.subr.mxu0 0.0
    %7453 = vmatpush1.msra.mxu0 0.0
    %7454 = vmatprep.subr.mxu0 0.0
    %7455 = vmatpush1.msra.mxu0 0.0
    %7456 = vmatprep.subr.mxu0 0.0
    %7457 = vmatpush1.msra.mxu0 0.0
    %7458 = vmatprep.subr.mxu0 0.0
    %7459 = vmatpush1.msra.mxu0 0.0
    %7460 = vmatprep.subr.mxu0 0.0
    %7461 = vmatpush1.msra.mxu0 0.0
    %7462 = vmatprep.subr.mxu0 0.0
    %7463 = vmatpush1.msra.mxu0 0.0
    %7464 = vmatprep.subr.mxu0 0.0
    %7465 = vmatpush1.msra.mxu0 0.0
    %7466 = vmatprep.subr.mxu0 0.0
    %7467 = vmatpush1.msra.mxu0 0.0
    %7468 = vmatprep.subr.mxu0 0.0
    %7469 = vmatpush1.msra.mxu0 0.0
    %7470 = vmatprep.subr.mxu0 0.0
    %7471 = vmatpush1.msra.mxu0 0.0
    %7472 = vmatprep.subr.mxu0 0.0
    %7473 = vmatpush1.msra.mxu0 0.0
    %7474 = vmatprep.subr.mxu0 0.0
    %7475 = vmatpush1.msra.mxu0 0.0
    %7476 = vmatprep.subr.mxu0 0.0
    %7477 = vmatpush1.msra.mxu0 0.0
    %7478 = vmatprep.subr.mxu0 0.0
    %7479 = vmatpush1.msra.mxu0 0.0
    %7480 = vmatprep.subr.mxu0 0.0
    %7481 = vmatpush1.msra.mxu0 0.0
    %7482 = vmatprep.subr.mxu0 0.0
    %7483 = vmatpush1.msra.mxu0 0.0
    %7484 = vmatprep.subr.mxu0 0.0
    %7485 = vmatpush1.msra.mxu0 0.0
    %7486 = vmatprep.subr.mxu0 0.0
    %7487 = vmatpush1.msra.mxu0 0.0
    %7488 = vmatprep.mubr.f32.mxu0 0.0
    %7489 = vmatmul.mubr.f32.gmra.mrb[0].mxu0 %v7422
    %v7490 = vpop.f32.mrb[0].mxu0
    %v7491 = vadd.f32 0.0, %v7490
    %v7492 = vpop.f32.mrb[0].mxu0
    %7493 = vdwg.mxu0
    %7494 = vrot.lane.b32.xlu0 %v6263, 112
    %v7495 = vpop.permute.xlu0 %7494
    %v7498 = vsel %vm647, %v7261, 0
    %7500 = vmatprep.subr.mxu0 0.0
    %7501 = vmatpush1.msra.mxu0 %v7495
    %7502 = vmatprep.subr.mxu0 0.0
    %7503 = vmatpush1.msra.mxu0 0.0
    %7504 = vmatprep.subr.mxu0 0.0
    %7505 = vmatpush1.msra.mxu0 0.0
    %7506 = vmatprep.subr.mxu0 0.0
    %7507 = vmatpush1.msra.mxu0 0.0
    %7508 = vmatprep.subr.mxu0 0.0
    %7509 = vmatpush1.msra.mxu0 0.0
    %7510 = vmatprep.subr.mxu0 0.0
    %7511 = vmatpush1.msra.mxu0 0.0
    %7512 = vmatprep.subr.mxu0 0.0
    %7513 = vmatpush1.msra.mxu0 0.0
    %7514 = vmatprep.subr.mxu0 0.0
    %7515 = vmatpush1.msra.mxu0 0.0
    %7516 = vmatprep.subr.mxu0 0.0
    %7517 = vmatpush1.msra.mxu0 0.0
    %7518 = vmatprep.subr.mxu0 0.0
    %7519 = vmatpush1.msra.mxu0 0.0
    %7520 = vmatprep.subr.mxu0 0.0
    %7521 = vmatpush1.msra.mxu0 0.0
    %7522 = vmatprep.subr.mxu0 0.0
    %7523 = vmatpush1.msra.mxu0 0.0
    %7524 = vmatprep.subr.mxu0 0.0
    %7525 = vmatpush1.msra.mxu0 0.0
    %7526 = vmatprep.subr.mxu0 0.0
    %7527 = vmatpush1.msra.mxu0 0.0
    %7528 = vmatprep.subr.mxu0 0.0
    %7529 = vmatpush1.msra.mxu0 0.0
    %7530 = vmatprep.subr.mxu0 0.0
    %7531 = vmatpush1.msra.mxu0 0.0
    %7532 = vmatprep.subr.mxu0 0.0
    %7533 = vmatpush1.msra.mxu0 0.0
    %7534 = vmatprep.subr.mxu0 0.0
    %7535 = vmatpush1.msra.mxu0 0.0
    %7536 = vmatprep.subr.mxu0 0.0
    %7537 = vmatpush1.msra.mxu0 0.0
    %7538 = vmatprep.subr.mxu0 0.0
    %7539 = vmatpush1.msra.mxu0 0.0
    %7540 = vmatprep.subr.mxu0 0.0
    %7541 = vmatpush1.msra.mxu0 0.0
    %7542 = vmatprep.subr.mxu0 0.0
    %7543 = vmatpush1.msra.mxu0 0.0
    %7544 = vmatprep.subr.mxu0 0.0
    %7545 = vmatpush1.msra.mxu0 0.0
    %7546 = vmatprep.subr.mxu0 0.0
    %7547 = vmatpush1.msra.mxu0 0.0
    %7548 = vmatprep.subr.mxu0 0.0
    %7549 = vmatpush1.msra.mxu0 0.0
    %7550 = vmatprep.subr.mxu0 0.0
    %7551 = vmatpush1.msra.mxu0 0.0
    %7552 = vmatprep.subr.mxu0 0.0
    %7553 = vmatpush1.msra.mxu0 0.0
    %7554 = vmatprep.subr.mxu0 0.0
    %7555 = vmatpush1.msra.mxu0 0.0
    %7556 = vmatprep.subr.mxu0 0.0
    %7557 = vmatpush1.msra.mxu0 0.0
    %7558 = vmatprep.subr.mxu0 0.0
    %7559 = vmatpush1.msra.mxu0 0.0
    %7560 = vmatprep.subr.mxu0 0.0
    %7561 = vmatpush1.msra.mxu0 0.0
    %7562 = vmatprep.subr.mxu0 0.0
    %7563 = vmatpush1.msra.mxu0 0.0
    %7564 = vmatprep.mubr.f32.mxu0 0.0
    %7565 = vmatmul.mubr.f32.gmra.mrb[0].mxu0 %v7498
    %v7566 = vpop.f32.mrb[0].mxu0
    %v7567 = vadd.f32 0.0, %v7566
    %v7568 = vpop.f32.mrb[0].mxu0
    %7569 = vdwg.mxu0
    %7570 = vrot.lane.b32.xlu0 %v6336, 112
    %v7571 = vpop.permute.xlu0 %7570
    %v7574 = vsel %vm647, %v7262, 0
    %7576 = vmatprep.subr.mxu0 0.0
    %7577 = vmatpush1.msra.mxu0 %v7571
    %7578 = vmatprep.subr.mxu0 0.0
    %7579 = vmatpush1.msra.mxu0 0.0
    %7580 = vmatprep.subr.mxu0 0.0
    %7581 = vmatpush1.msra.mxu0 0.0
    %7582 = vmatprep.subr.mxu0 0.0
    %7583 = vmatpush1.msra.mxu0 0.0
    %7584 = vmatprep.subr.mxu0 0.0
    %7585 = vmatpush1.msra.mxu0 0.0
    %7586 = vmatprep.subr.mxu0 0.0
    %7587 = vmatpush1.msra.mxu0 0.0
    %7588 = vmatprep.subr.mxu0 0.0
    %7589 = vmatpush1.msra.mxu0 0.0
    %7590 = vmatprep.subr.mxu0 0.0
    %7591 = vmatpush1.msra.mxu0 0.0
    %7592 = vmatprep.subr.mxu0 0.0
    %7593 = vmatpush1.msra.mxu0 0.0
    %7594 = vmatprep.subr.mxu0 0.0
    %7595 = vmatpush1.msra.mxu0 0.0
    %7596 = vmatprep.subr.mxu0 0.0
    %7597 = vmatpush1.msra.mxu0 0.0
    %7598 = vmatprep.subr.mxu0 0.0
    %7599 = vmatpush1.msra.mxu0 0.0
    %7600 = vmatprep.subr.mxu0 0.0
    %7601 = vmatpush1.msra.mxu0 0.0
    %7602 = vmatprep.subr.mxu0 0.0
    %7603 = vmatpush1.msra.mxu0 0.0
    %7604 = vmatprep.subr.mxu0 0.0
    %7605 = vmatpush1.msra.mxu0 0.0
    %7606 = vmatprep.subr.mxu0 0.0
    %7607 = vmatpush1.msra.mxu0 0.0
    %7608 = vmatprep.subr.mxu0 0.0
    %7609 = vmatpush1.msra.mxu0 0.0
    %7610 = vmatprep.subr.mxu0 0.0
    %7611 = vmatpush1.msra.mxu0 0.0
    %7612 = vmatprep.subr.mxu0 0.0
    %7613 = vmatpush1.msra.mxu0 0.0
    %7614 = vmatprep.subr.mxu0 0.0
    %7615 = vmatpush1.msra.mxu0 0.0
    %7616 = vmatprep.subr.mxu0 0.0
    %7617 = vmatpush1.msra.mxu0 0.0
    %7618 = vmatprep.subr.mxu0 0.0
    %7619 = vmatpush1.msra.mxu0 0.0
    %7620 = vmatprep.subr.mxu0 0.0
    %7621 = vmatpush1.msra.mxu0 0.0
    %7622 = vmatprep.subr.mxu0 0.0
    %7623 = vmatpush1.msra.mxu0 0.0
    %7624 = vmatprep.subr.mxu0 0.0
    %7625 = vmatpush1.msra.mxu0 0.0
    %7626 = vmatprep.subr.mxu0 0.0
    %7627 = vmatpush1.msra.mxu0 0.0
    %7628 = vmatprep.subr.mxu0 0.0
    %7629 = vmatpush1.msra.mxu0 0.0
    %7630 = vmatprep.subr.mxu0 0.0
    %7631 = vmatpush1.msra.mxu0 0.0
    %7632 = vmatprep.subr.mxu0 0.0
    %7633 = vmatpush1.msra.mxu0 0.0
    %7634 = vmatprep.subr.mxu0 0.0
    %7635 = vmatpush1.msra.mxu0 0.0
    %7636 = vmatprep.subr.mxu0 0.0
    %7637 = vmatpush1.msra.mxu0 0.0
    %7638 = vmatprep.subr.mxu0 0.0
    %7639 = vmatpush1.msra.mxu0 0.0
    %7640 = vmatprep.mubr.f32.mxu0 0.0
    %7641 = vmatmul.mubr.f32.gmra.mrb[0].mxu0 %v7574
    %v7642 = vpop.f32.mrb[0].mxu0
    %v7643 = vadd.f32 0.0, %v7642
    %v7644 = vpop.f32.mrb[0].mxu0
    %7645 = vdwg.mxu0
    %7646 = vrot.lane.b32.xlu0 %v6406, 112
    %v7647 = vpop.permute.xlu0 %7646
    %v7650 = vsel %vm647, %v7263, 0
    %7652 = vmatprep.subr.mxu0 0.0
    %7653 = vmatpush1.msra.mxu0 %v7647
    %7654 = vmatprep.subr.mxu0 0.0
    %7655 = vmatpush1.msra.mxu0 0.0
    %7656 = vmatprep.subr.mxu0 0.0
    %7657 = vmatpush1.msra.mxu0 0.0
    %7658 = vmatprep.subr.mxu0 0.0
    %7659 = vmatpush1.msra.mxu0 0.0
    %7660 = vmatprep.subr.mxu0 0.0
    %7661 = vmatpush1.msra.mxu0 0.0
    %7662 = vmatprep.subr.mxu0 0.0
    %7663 = vmatpush1.msra.mxu0 0.0
    %7664 = vmatprep.subr.mxu0 0.0
    %7665 = vmatpush1.msra.mxu0 0.0
    %7666 = vmatprep.subr.mxu0 0.0
    %7667 = vmatpush1.msra.mxu0 0.0
    %7668 = vmatprep.subr.mxu0 0.0
    %7669 = vmatpush1.msra.mxu0 0.0
    %7670 = vmatprep.subr.mxu0 0.0
    %7671 = vmatpush1.msra.mxu0 0.0
    %7672 = vmatprep.subr.mxu0 0.0
    %7673 = vmatpush1.msra.mxu0 0.0
    %7674 = vmatprep.subr.mxu0 0.0
    %7675 = vmatpush1.msra.mxu0 0.0
    %7676 = vmatprep.subr.mxu0 0.0
    %7677 = vmatpush1.msra.mxu0 0.0
    %7678 = vmatprep.subr.mxu0 0.0
    %7679 = vmatpush1.msra.mxu0 0.0
    %7680 = vmatprep.subr.mxu0 0.0
    %7681 = vmatpush1.msra.mxu0 0.0
    %7682 = vmatprep.subr.mxu0 0.0
    %7683 = vmatpush1.msra.mxu0 0.0
    %7684 = vmatprep.subr.mxu0 0.0
    %7685 = vmatpush1.msra.mxu0 0.0
    %7686 = vmatprep.subr.mxu0 0.0
    %7687 = vmatpush1.msra.mxu0 0.0
    %7688 = vmatprep.subr.mxu0 0.0
    %7689 = vmatpush1.msra.mxu0 0.0
    %7690 = vmatprep.subr.mxu0 0.0
    %7691 = vmatpush1.msra.mxu0 0.0
    %7692 = vmatprep.subr.mxu0 0.0
    %7693 = vmatpush1.msra.mxu0 0.0
    %7694 = vmatprep.subr.mxu0 0.0
    %7695 = vmatpush1.msra.mxu0 0.0
    %7696 = vmatprep.subr.mxu0 0.0
    %7697 = vmatpush1.msra.mxu0 0.0
    %7698 = vmatprep.subr.mxu0 0.0
    %7699 = vmatpush1.msra.mxu0 0.0
    %7700 = vmatprep.subr.mxu0 0.0
    %7701 = vmatpush1.msra.mxu0 0.0
    %7702 = vmatprep.subr.mxu0 0.0
    %7703 = vmatpush1.msra.mxu0 0.0
    %7704 = vmatprep.subr.mxu0 0.0
    %7705 = vmatpush1.msra.mxu0 0.0
    %7706 = vmatprep.subr.mxu0 0.0
    %7707 = vmatpush1.msra.mxu0 0.0
    %7708 = vmatprep.subr.mxu0 0.0
    %7709 = vmatpush1.msra.mxu0 0.0
    %7710 = vmatprep.subr.mxu0 0.0
    %7711 = vmatpush1.msra.mxu0 0.0
    %7712 = vmatprep.subr.mxu0 0.0
    %7713 = vmatpush1.msra.mxu0 0.0
    %7714 = vmatprep.subr.mxu0 0.0
    %7715 = vmatpush1.msra.mxu0 0.0
    %7716 = vmatprep.mubr.f32.mxu0 0.0
    %7717 = vmatmul.mubr.f32.gmra.mrb[0].mxu0 %v7650
    %v7718 = vpop.f32.mrb[0].mxu0
    %v7719 = vadd.f32 0.0, %v7718
    %v7720 = vpop.f32.mrb[0].mxu0
    %7721 = vdwg.mxu0
    %7722 = vrot.lane.b32.xlu0 %v6476, 112
    %v7723 = vpop.permute.xlu0 %7722
    %v7726 = vsel %vm647, %v7264, 0
    %7728 = vmatprep.subr.mxu0 0.0
    %7729 = vmatpush1.msra.mxu0 %v7723
    %7730 = vmatprep.subr.mxu0 0.0
    %7731 = vmatpush1.msra.mxu0 0.0
    %7732 = vmatprep.subr.mxu0 0.0
    %7733 = vmatpush1.msra.mxu0 0.0
    %7734 = vmatprep.subr.mxu0 0.0
    %7735 = vmatpush1.msra.mxu0 0.0
    %7736 = vmatprep.subr.mxu0 0.0
    %7737 = vmatpush1.msra.mxu0 0.0
    %7738 = vmatprep.subr.mxu0 0.0
    %7739 = vmatpush1.msra.mxu0 0.0
    %7740 = vmatprep.subr.mxu0 0.0
    %7741 = vmatpush1.msra.mxu0 0.0
    %7742 = vmatprep.subr.mxu0 0.0
    %7743 = vmatpush1.msra.mxu0 0.0
    %7744 = vmatprep.subr.mxu0 0.0
    %7745 = vmatpush1.msra.mxu0 0.0
    %7746 = vmatprep.subr.mxu0 0.0
    %7747 = vmatpush1.msra.mxu0 0.0
    %7748 = vmatprep.subr.mxu0 0.0
    %7749 = vmatpush1.msra.mxu0 0.0
    %7750 = vmatprep.subr.mxu0 0.0
    %7751 = vmatpush1.msra.mxu0 0.0
    %7752 = vmatprep.subr.mxu0 0.0
    %7753 = vmatpush1.msra.mxu0 0.0
    %7754 = vmatprep.subr.mxu0 0.0
    %7755 = vmatpush1.msra.mxu0 0.0
    %7756 = vmatprep.subr.mxu0 0.0
    %7757 = vmatpush1.msra.mxu0 0.0
    %7758 = vmatprep.subr.mxu0 0.0
    %7759 = vmatpush1.msra.mxu0 0.0
    %7760 = vmatprep.subr.mxu0 0.0
    %7761 = vmatpush1.msra.mxu0 0.0
    %7762 = vmatprep.subr.mxu0 0.0
    %7763 = vmatpush1.msra.mxu0 0.0
    %7764 = vmatprep.subr.mxu0 0.0
    %7765 = vmatpush1.msra.mxu0 0.0
    %7766 = vmatprep.subr.mxu0 0.0
    %7767 = vmatpush1.msra.mxu0 0.0
    %7768 = vmatprep.subr.mxu0 0.0
    %7769 = vmatpush1.msra.mxu0 0.0
    %7770 = vmatprep.subr.mxu0 0.0
    %7771 = vmatpush1.msra.mxu0 0.0
    %7772 = vmatprep.subr.mxu0 0.0
    %7773 = vmatpush1.msra.mxu0 0.0
    %7774 = vmatprep.subr.mxu0 0.0
    %7775 = vmatpush1.msra.mxu0 0.0
    %7776 = vmatprep.subr.mxu0 0.0
    %7777 = vmatpush1.msra.mxu0 0.0
    %7778 = vmatprep.subr.mxu0 0.0
    %7779 = vmatpush1.msra.mxu0 0.0
    %7780 = vmatprep.subr.mxu0 0.0
    %7781 = vmatpush1.msra.mxu0 0.0
    %7782 = vmatprep.subr.mxu0 0.0
    %7783 = vmatpush1.msra.mxu0 0.0
    %7784 = vmatprep.subr.mxu0 0.0
    %7785 = vmatpush1.msra.mxu0 0.0
    %7786 = vmatprep.subr.mxu0 0.0
    %7787 = vmatpush1.msra.mxu0 0.0
    %7788 = vmatprep.subr.mxu0 0.0
    %7789 = vmatpush1.msra.mxu0 0.0
    %7790 = vmatprep.subr.mxu0 0.0
    %7791 = vmatpush1.msra.mxu0 0.0
    %7792 = vmatprep.mubr.f32.mxu0 0.0
    %7793 = vmatmul.mubr.f32.gmra.mrb[0].mxu0 %v7726
    %v7794 = vpop.f32.mrb[0].mxu0
    %v7795 = vadd.f32 0.0, %v7794
    %v7796 = vpop.f32.mrb[0].mxu0
    %7797 = vdwg.mxu0
    %7798 = vrot.lane.b32.xlu0 %v6546, 112
    %v7799 = vpop.permute.xlu0 %7798
    %v7802 = vsel %vm647, %v7265, 0
    %7804 = vmatprep.subr.mxu0 0.0
    %7805 = vmatpush1.msra.mxu0 %v7799
    %7806 = vmatprep.subr.mxu0 0.0
    %7807 = vmatpush1.msra.mxu0 0.0
    %7808 = vmatprep.subr.mxu0 0.0
    %7809 = vmatpush1.msra.mxu0 0.0
    %7810 = vmatprep.subr.mxu0 0.0
    %7811 = vmatpush1.msra.mxu0 0.0
    %7812 = vmatprep.subr.mxu0 0.0
    %7813 = vmatpush1.msra.mxu0 0.0
    %7814 = vmatprep.subr.mxu0 0.0
    %7815 = vmatpush1.msra.mxu0 0.0
    %7816 = vmatprep.subr.mxu0 0.0
    %7817 = vmatpush1.msra.mxu0 0.0
    %7818 = vmatprep.subr.mxu0 0.0
    %7819 = vmatpush1.msra.mxu0 0.0
    %7820 = vmatprep.subr.mxu0 0.0
    %7821 = vmatpush1.msra.mxu0 0.0
    %7822 = vmatprep.subr.mxu0 0.0
    %7823 = vmatpush1.msra.mxu0 0.0
    %7824 = vmatprep.subr.mxu0 0.0
    %7825 = vmatpush1.msra.mxu0 0.0
    %7826 = vmatprep.subr.mxu0 0.0
    %7827 = vmatpush1.msra.mxu0 0.0
    %7828 = vmatprep.subr.mxu0 0.0
    %7829 = vmatpush1.msra.mxu0 0.0
    %7830 = vmatprep.subr.mxu0 0.0
    %7831 = vmatpush1.msra.mxu0 0.0
    %7832 = vmatprep.subr.mxu0 0.0
    %7833 = vmatpush1.msra.mxu0 0.0
    %7834 = vmatprep.subr.mxu0 0.0
    %7835 = vmatpush1.msra.mxu0 0.0
    %7836 = vmatprep.subr.mxu0 0.0
    %7837 = vmatpush1.msra.mxu0 0.0
    %7838 = vmatprep.subr.mxu0 0.0
    %7839 = vmatpush1.msra.mxu0 0.0
    %7840 = vmatprep.subr.mxu0 0.0
    %7841 = vmatpush1.msra.mxu0 0.0
    %7842 = vmatprep.subr.mxu0 0.0
    %7843 = vmatpush1.msra.mxu0 0.0
    %7844 = vmatprep.subr.mxu0 0.0
    %7845 = vmatpush1.msra.mxu0 0.0
    %7846 = vmatprep.subr.mxu0 0.0
    %7847 = vmatpush1.msra.mxu0 0.0
    %7848 = vmatprep.subr.mxu0 0.0
    %7849 = vmatpush1.msra.mxu0 0.0
    %7850 = vmatprep.subr.mxu0 0.0
    %7851 = vmatpush1.msra.mxu0 0.0
    %7852 = vmatprep.subr.mxu0 0.0
    %7853 = vmatpush1.msra.mxu0 0.0
    %7854 = vmatprep.subr.mxu0 0.0
    %7855 = vmatpush1.msra.mxu0 0.0
    %7856 = vmatprep.subr.mxu0 0.0
    %7857 = vmatpush1.msra.mxu0 0.0
    %7858 = vmatprep.subr.mxu0 0.0
    %7859 = vmatpush1.msra.mxu0 0.0
    %7860 = vmatprep.subr.mxu0 0.0
    %7861 = vmatpush1.msra.mxu0 0.0
    %7862 = vmatprep.subr.mxu0 0.0
    %7863 = vmatpush1.msra.mxu0 0.0
    %7864 = vmatprep.subr.mxu0 0.0
    %7865 = vmatpush1.msra.mxu0 0.0
    %7866 = vmatprep.subr.mxu0 0.0
    %7867 = vmatpush1.msra.mxu0 0.0
    %7868 = vmatprep.mubr.f32.mxu0 0.0
    %7869 = vmatmul.mubr.f32.gmra.mrb[0].mxu0 %v7802
    %v7870 = vpop.f32.mrb[0].mxu0
    %v7871 = vadd.f32 0.0, %v7870
    %v7872 = vpop.f32.mrb[0].mxu0
    %7873 = vdwg.mxu0
    %v7875 = vsel %vm647, %v7339, 0
    %7877 = vmatprep.subr.mxu0 0.0
    %7878 = vmatpush1.msra.mxu0 %v6550
    %7879 = vmatprep.subr.mxu0 0.0
    %7880 = vmatpush1.msra.mxu0 0.0
    %7881 = vmatprep.subr.mxu0 0.0
    %7882 = vmatpush1.msra.mxu0 0.0
    %7883 = vmatprep.subr.mxu0 0.0
    %7884 = vmatpush1.msra.mxu0 0.0
    %7885 = vmatprep.subr.mxu0 0.0
    %7886 = vmatpush1.msra.mxu0 0.0
    %7887 = vmatprep.subr.mxu0 0.0
    %7888 = vmatpush1.msra.mxu0 0.0
    %7889 = vmatprep.subr.mxu0 0.0
    %7890 = vmatpush1.msra.mxu0 0.0
    %7891 = vmatprep.subr.mxu0 0.0
    %7892 = vmatpush1.msra.mxu0 0.0
    %7893 = vmatprep.subr.mxu0 0.0
    %7894 = vmatpush1.msra.mxu0 0.0
    %7895 = vmatprep.subr.mxu0 0.0
    %7896 = vmatpush1.msra.mxu0 0.0
    %7897 = vmatprep.subr.mxu0 0.0
    %7898 = vmatpush1.msra.mxu0 0.0
    %7899 = vmatprep.subr.mxu0 0.0
    %7900 = vmatpush1.msra.mxu0 0.0
    %7901 = vmatprep.subr.mxu0 0.0
    %7902 = vmatpush1.msra.mxu0 0.0
    %7903 = vmatprep.subr.mxu0 0.0
    %7904 = vmatpush1.msra.mxu0 0.0
    %7905 = vmatprep.subr.mxu0 0.0
    %7906 = vmatpush1.msra.mxu0 0.0
    %7907 = vmatprep.subr.mxu0 0.0
    %7908 = vmatpush1.msra.mxu0 0.0
    %7909 = vmatprep.subr.mxu0 0.0
    %7910 = vmatpush1.msra.mxu0 0.0
    %7911 = vmatprep.subr.mxu0 0.0
    %7912 = vmatpush1.msra.mxu0 0.0
    %7913 = vmatprep.subr.mxu0 0.0
    %7914 = vmatpush1.msra.mxu0 0.0
    %7915 = vmatprep.subr.mxu0 0.0
    %7916 = vmatpush1.msra.mxu0 0.0
    %7917 = vmatprep.subr.mxu0 0.0
    %7918 = vmatpush1.msra.mxu0 0.0
    %7919 = vmatprep.subr.mxu0 0.0
    %7920 = vmatpush1.msra.mxu0 0.0
    %7921 = vmatprep.subr.mxu0 0.0
    %7922 = vmatpush1.msra.mxu0 0.0
    %7923 = vmatprep.subr.mxu0 0.0
    %7924 = vmatpush1.msra.mxu0 0.0
    %7925 = vmatprep.subr.mxu0 0.0
    %7926 = vmatpush1.msra.mxu0 0.0
    %7927 = vmatprep.subr.mxu0 0.0
    %7928 = vmatpush1.msra.mxu0 0.0
    %7929 = vmatprep.subr.mxu0 0.0
    %7930 = vmatpush1.msra.mxu0 0.0
    %7931 = vmatprep.subr.mxu0 0.0
    %7932 = vmatpush1.msra.mxu0 0.0
    %7933 = vmatprep.subr.mxu0 0.0
    %7934 = vmatpush1.msra.mxu0 0.0
    %7935 = vmatprep.subr.mxu0 0.0
    %7936 = vmatpush1.msra.mxu0 0.0
    %7937 = vmatprep.subr.mxu0 0.0
    %7938 = vmatpush1.msra.mxu0 0.0
    %7939 = vmatprep.subr.mxu0 0.0
    %7940 = vmatpush1.msra.mxu0 0.0
    %7941 = vmatprep.mubr.f32.mxu0 0.0
    %7942 = vmatmul.mubr.f32.gmra.mrb[0].mxu0 %v7875
    %v7943 = vpop.f32.mrb[0].mxu0
    %v7944 = vadd.f32 0.0, %v7943
    %v7945 = vpop.f32.mrb[0].mxu0
    %7946 = vdwg.mxu0
    %v7948 = vsel %vm647, %v7415, 0
    %7950 = vmatprep.subr.mxu0 0.0
    %7951 = vmatpush1.msra.mxu0 %v6551
    %7952 = vmatprep.subr.mxu0 0.0
    %7953 = vmatpush1.msra.mxu0 0.0
    %7954 = vmatprep.subr.mxu0 0.0
    %7955 = vmatpush1.msra.mxu0 0.0
    %7956 = vmatprep.subr.mxu0 0.0
    %7957 = vmatpush1.msra.mxu0 0.0
    %7958 = vmatprep.subr.mxu0 0.0
    %7959 = vmatpush1.msra.mxu0 0.0
    %7960 = vmatprep.subr.mxu0 0.0
    %7961 = vmatpush1.msra.mxu0 0.0
    %7962 = vmatprep.subr.mxu0 0.0
    %7963 = vmatpush1.msra.mxu0 0.0
    %7964 = vmatprep.subr.mxu0 0.0
    %7965 = vmatpush1.msra.mxu0 0.0
    %7966 = vmatprep.subr.mxu0 0.0
    %7967 = vmatpush1.msra.mxu0 0.0
    %7968 = vmatprep.subr.mxu0 0.0
    %7969 = vmatpush1.msra.mxu0 0.0
    %7970 = vmatprep.subr.mxu0 0.0
    %7971 = vmatpush1.msra.mxu0 0.0
    %7972 = vmatprep.subr.mxu0 0.0
    %7973 = vmatpush1.msra.mxu0 0.0
    %7974 = vmatprep.subr.mxu0 0.0
    %7975 = vmatpush1.msra.mxu0 0.0
    %7976 = vmatprep.subr.mxu0 0.0
    %7977 = vmatpush1.msra.mxu0 0.0
    %7978 = vmatprep.subr.mxu0 0.0
    %7979 = vmatpush1.msra.mxu0 0.0
    %7980 = vmatprep.subr.mxu0 0.0
    %7981 = vmatpush1.msra.mxu0 0.0
    %7982 = vmatprep.subr.mxu0 0.0
    %7983 = vmatpush1.msra.mxu0 0.0
    %7984 = vmatprep.subr.mxu0 0.0
    %7985 = vmatpush1.msra.mxu0 0.0
    %7986 = vmatprep.subr.mxu0 0.0
    %7987 = vmatpush1.msra.mxu0 0.0
    %7988 = vmatprep.subr.mxu0 0.0
    %7989 = vmatpush1.msra.mxu0 0.0
    %7990 = vmatprep.subr.mxu0 0.0
    %7991 = vmatpush1.msra.mxu0 0.0
    %7992 = vmatprep.subr.mxu0 0.0
    %7993 = vmatpush1.msra.mxu0 0.0
    %7994 = vmatprep.subr.mxu0 0.0
    %7995 = vmatpush1.msra.mxu0 0.0
    %7996 = vmatprep.subr.mxu0 0.0
    %7997 = vmatpush1.msra.mxu0 0.0
    %7998 = vmatprep.subr.mxu0 0.0
    %7999 = vmatpush1.msra.mxu0 0.0
    %8000 = vmatprep.subr.mxu0 0.0
    %8001 = vmatpush1.msra.mxu0 0.0
    %8002 = vmatprep.subr.mxu0 0.0
    %8003 = vmatpush1.msra.mxu0 0.0
    %8004 = vmatprep.subr.mxu0 0.0
    %8005 = vmatpush1.msra.mxu0 0.0
    %8006 = vmatprep.subr.mxu0 0.0
    %8007 = vmatpush1.msra.mxu0 0.0
    %8008 = vmatprep.subr.mxu0 0.0
    %8009 = vmatpush1.msra.mxu0 0.0
    %8010 = vmatprep.subr.mxu0 0.0
    %8011 = vmatpush1.msra.mxu0 0.0
    %8012 = vmatprep.subr.mxu0 0.0
    %8013 = vmatpush1.msra.mxu0 0.0
    %8014 = vmatprep.mubr.f32.mxu0 0.0
    %8015 = vmatmul.mubr.f32.gmra.mrb[0].mxu0 %v7948
    %v8016 = vpop.f32.mrb[0].mxu0
    %v8017 = vadd.f32 0.0, %v8016
    %v8018 = vpop.f32.mrb[0].mxu0
    %8019 = vdwg.mxu0
    %v8021 = vsel %vm647, %v7491, 0
    %8023 = vmatprep.subr.mxu0 0.0
    %8024 = vmatpush1.msra.mxu0 %v6552
    %8025 = vmatprep.subr.mxu0 0.0
    %8026 = vmatpush1.msra.mxu0 0.0
    %8027 = vmatprep.subr.mxu0 0.0
    %8028 = vmatpush1.msra.mxu0 0.0
    %8029 = vmatprep.subr.mxu0 0.0
    %8030 = vmatpush1.msra.mxu0 0.0
    %8031 = vmatprep.subr.mxu0 0.0
    %8032 = vmatpush1.msra.mxu0 0.0
    %8033 = vmatprep.subr.mxu0 0.0
    %8034 = vmatpush1.msra.mxu0 0.0
    %8035 = vmatprep.subr.mxu0 0.0
    %8036 = vmatpush1.msra.mxu0 0.0
    %8037 = vmatprep.subr.mxu0 0.0
    %8038 = vmatpush1.msra.mxu0 0.0
    %8039 = vmatprep.subr.mxu0 0.0
    %8040 = vmatpush1.msra.mxu0 0.0
    %8041 = vmatprep.subr.mxu0 0.0
    %8042 = vmatpush1.msra.mxu0 0.0
    %8043 = vmatprep.subr.mxu0 0.0
    %8044 = vmatpush1.msra.mxu0 0.0
    %8045 = vmatprep.subr.mxu0 0.0
    %8046 = vmatpush1.msra.mxu0 0.0
    %8047 = vmatprep.subr.mxu0 0.0
    %8048 = vmatpush1.msra.mxu0 0.0
    %8049 = vmatprep.subr.mxu0 0.0
    %8050 = vmatpush1.msra.mxu0 0.0
    %8051 = vmatprep.subr.mxu0 0.0
    %8052 = vmatpush1.msra.mxu0 0.0
    %8053 = vmatprep.subr.mxu0 0.0
    %8054 = vmatpush1.msra.mxu0 0.0
    %8055 = vmatprep.subr.mxu0 0.0
    %8056 = vmatpush1.msra.mxu0 0.0
    %8057 = vmatprep.subr.mxu0 0.0
    %8058 = vmatpush1.msra.mxu0 0.0
    %8059 = vmatprep.subr.mxu0 0.0
    %8060 = vmatpush1.msra.mxu0 0.0
    %8061 = vmatprep.subr.mxu0 0.0
    %8062 = vmatpush1.msra.mxu0 0.0
    %8063 = vmatprep.subr.mxu0 0.0
    %8064 = vmatpush1.msra.mxu0 0.0
    %8065 = vmatprep.subr.mxu0 0.0
    %8066 = vmatpush1.msra.mxu0 0.0
    %8067 = vmatprep.subr.mxu0 0.0
    %8068 = vmatpush1.msra.mxu0 0.0
    %8069 = vmatprep.subr.mxu0 0.0
    %8070 = vmatpush1.msra.mxu0 0.0
    %8071 = vmatprep.subr.mxu0 0.0
    %8072 = vmatpush1.msra.mxu0 0.0
    %8073 = vmatprep.subr.mxu0 0.0
    %8074 = vmatpush1.msra.mxu0 0.0
    %8075 = vmatprep.subr.mxu0 0.0
    %8076 = vmatpush1.msra.mxu0 0.0
    %8077 = vmatprep.subr.mxu0 0.0
    %8078 = vmatpush1.msra.mxu0 0.0
    %8079 = vmatprep.subr.mxu0 0.0
    %8080 = vmatpush1.msra.mxu0 0.0
    %8081 = vmatprep.subr.mxu0 0.0
    %8082 = vmatpush1.msra.mxu0 0.0
    %8083 = vmatprep.subr.mxu0 0.0
    %8084 = vmatpush1.msra.mxu0 0.0
    %8085 = vmatprep.subr.mxu0 0.0
    %8086 = vmatpush1.msra.mxu0 0.0
    %8087 = vmatprep.mubr.f32.mxu0 0.0
    %8088 = vmatmul.mubr.f32.gmra.mrb[0].mxu0 %v8021
    %v8089 = vpop.f32.mrb[0].mxu0
    %v8090 = vadd.f32 0.0, %v8089
    %v8091 = vpop.f32.mrb[0].mxu0
    %8092 = vdwg.mxu0
    %v8094 = vsel %vm647, %v7567, 0
    %8096 = vmatprep.subr.mxu0 0.0
    %8097 = vmatpush1.msra.mxu0 %v6553
    %8098 = vmatprep.subr.mxu0 0.0
    %8099 = vmatpush1.msra.mxu0 0.0
    %8100 = vmatprep.subr.mxu0 0.0
    %8101 = vmatpush1.msra.mxu0 0.0
    %8102 = vmatprep.subr.mxu0 0.0
    %8103 = vmatpush1.msra.mxu0 0.0
    %8104 = vmatprep.subr.mxu0 0.0
    %8105 = vmatpush1.msra.mxu0 0.0
    %8106 = vmatprep.subr.mxu0 0.0
    %8107 = vmatpush1.msra.mxu0 0.0
    %8108 = vmatprep.subr.mxu0 0.0
    %8109 = vmatpush1.msra.mxu0 0.0
    %8110 = vmatprep.subr.mxu0 0.0
    %8111 = vmatpush1.msra.mxu0 0.0
    %8112 = vmatprep.subr.mxu0 0.0
    %8113 = vmatpush1.msra.mxu0 0.0
    %8114 = vmatprep.subr.mxu0 0.0
    %8115 = vmatpush1.msra.mxu0 0.0
    %8116 = vmatprep.subr.mxu0 0.0
    %8117 = vmatpush1.msra.mxu0 0.0
    %8118 = vmatprep.subr.mxu0 0.0
    %8119 = vmatpush1.msra.mxu0 0.0
    %8120 = vmatprep.subr.mxu0 0.0
    %8121 = vmatpush1.msra.mxu0 0.0
    %8122 = vmatprep.subr.mxu0 0.0
    %8123 = vmatpush1.msra.mxu0 0.0
    %8124 = vmatprep.subr.mxu0 0.0
    %8125 = vmatpush1.msra.mxu0 0.0
    %8126 = vmatprep.subr.mxu0 0.0
    %8127 = vmatpush1.msra.mxu0 0.0
    %8128 = vmatprep.subr.mxu0 0.0
    %8129 = vmatpush1.msra.mxu0 0.0
    %8130 = vmatprep.subr.mxu0 0.0
    %8131 = vmatpush1.msra.mxu0 0.0
    %8132 = vmatprep.subr.mxu0 0.0
    %8133 = vmatpush1.msra.mxu0 0.0
    %8134 = vmatprep.subr.mxu0 0.0
    %8135 = vmatpush1.msra.mxu0 0.0
    %8136 = vmatprep.subr.mxu0 0.0
    %8137 = vmatpush1.msra.mxu0 0.0
    %8138 = vmatprep.subr.mxu0 0.0
    %8139 = vmatpush1.msra.mxu0 0.0
    %8140 = vmatprep.subr.mxu0 0.0
    %8141 = vmatpush1.msra.mxu0 0.0
    %8142 = vmatprep.subr.mxu0 0.0
    %8143 = vmatpush1.msra.mxu0 0.0
    %8144 = vmatprep.subr.mxu0 0.0
    %8145 = vmatpush1.msra.mxu0 0.0
    %8146 = vmatprep.subr.mxu0 0.0
    %8147 = vmatpush1.msra.mxu0 0.0
    %8148 = vmatprep.subr.mxu0 0.0
    %8149 = vmatpush1.msra.mxu0 0.0
    %8150 = vmatprep.subr.mxu0 0.0
    %8151 = vmatpush1.msra.mxu0 0.0
    %8152 = vmatprep.subr.mxu0 0.0
    %8153 = vmatpush1.msra.mxu0 0.0
    %8154 = vmatprep.subr.mxu0 0.0
    %8155 = vmatpush1.msra.mxu0 0.0
    %8156 = vmatprep.subr.mxu0 0.0
    %8157 = vmatpush1.msra.mxu0 0.0
    %8158 = vmatprep.subr.mxu0 0.0
    %8159 = vmatpush1.msra.mxu0 0.0
    %8160 = vmatprep.mubr.f32.mxu0 0.0
    %8161 = vmatmul.mubr.f32.gmra.mrb[0].mxu0 %v8094
    %v8162 = vpop.f32.mrb[0].mxu0
    %v8163 = vadd.f32 0.0, %v8162
    %v8164 = vpop.f32.mrb[0].mxu0
    %8165 = vdwg.mxu0
    %v8167 = vsel %vm647, %v7643, 0
    %8169 = vmatprep.subr.mxu0 0.0
    %8170 = vmatpush1.msra.mxu0 %v6550
    %8171 = vmatprep.subr.mxu0 0.0
    %8172 = vmatpush1.msra.mxu0 0.0
    %8173 = vmatprep.subr.mxu0 0.0
    %8174 = vmatpush1.msra.mxu0 0.0
    %8175 = vmatprep.subr.mxu0 0.0
    %8176 = vmatpush1.msra.mxu0 0.0
    %8177 = vmatprep.subr.mxu0 0.0
    %8178 = vmatpush1.msra.mxu0 0.0
    %8179 = vmatprep.subr.mxu0 0.0
    %8180 = vmatpush1.msra.mxu0 0.0
    %8181 = vmatprep.subr.mxu0 0.0
    %8182 = vmatpush1.msra.mxu0 0.0
    %8183 = vmatprep.subr.mxu0 0.0
    %8184 = vmatpush1.msra.mxu0 0.0
    %8185 = vmatprep.subr.mxu0 0.0
    %8186 = vmatpush1.msra.mxu0 0.0
    %8187 = vmatprep.subr.mxu0 0.0
    %8188 = vmatpush1.msra.mxu0 0.0
    %8189 = vmatprep.subr.mxu0 0.0
    %8190 = vmatpush1.msra.mxu0 0.0
    %8191 = vmatprep.subr.mxu0 0.0
    %8192 = vmatpush1.msra.mxu0 0.0
    %8193 = vmatprep.subr.mxu0 0.0
    %8194 = vmatpush1.msra.mxu0 0.0
    %8195 = vmatprep.subr.mxu0 0.0
    %8196 = vmatpush1.msra.mxu0 0.0
    %8197 = vmatprep.subr.mxu0 0.0
    %8198 = vmatpush1.msra.mxu0 0.0
    %8199 = vmatprep.subr.mxu0 0.0
    %8200 = vmatpush1.msra.mxu0 0.0
    %8201 = vmatprep.subr.mxu0 0.0
    %8202 = vmatpush1.msra.mxu0 0.0
    %8203 = vmatprep.subr.mxu0 0.0
    %8204 = vmatpush1.msra.mxu0 0.0
    %8205 = vmatprep.subr.mxu0 0.0
    %8206 = vmatpush1.msra.mxu0 0.0
    %8207 = vmatprep.subr.mxu0 0.0
    %8208 = vmatpush1.msra.mxu0 0.0
    %8209 = vmatprep.subr.mxu0 0.0
    %8210 = vmatpush1.msra.mxu0 0.0
    %8211 = vmatprep.subr.mxu0 0.0
    %8212 = vmatpush1.msra.mxu0 0.0
    %8213 = vmatprep.subr.mxu0 0.0
    %8214 = vmatpush1.msra.mxu0 0.0
    %8215 = vmatprep.subr.mxu0 0.0
    %8216 = vmatpush1.msra.mxu0 0.0
    %8217 = vmatprep.subr.mxu0 0.0
    %8218 = vmatpush1.msra.mxu0 0.0
    %8219 = vmatprep.subr.mxu0 0.0
    %8220 = vmatpush1.msra.mxu0 0.0
    %8221 = vmatprep.subr.mxu0 0.0
    %8222 = vmatpush1.msra.mxu0 0.0
    %8223 = vmatprep.subr.mxu0 0.0
    %8224 = vmatpush1.msra.mxu0 0.0
    %8225 = vmatprep.subr.mxu0 0.0
    %8226 = vmatpush1.msra.mxu0 0.0
    %8227 = vmatprep.subr.mxu0 0.0
    %8228 = vmatpush1.msra.mxu0 0.0
    %8229 = vmatprep.subr.mxu0 0.0
    %8230 = vmatpush1.msra.mxu0 0.0
    %8231 = vmatprep.subr.mxu0 0.0
    %8232 = vmatpush1.msra.mxu0 0.0
    %8233 = vmatprep.mubr.f32.mxu0 0.0
    %8234 = vmatmul.mubr.f32.gmra.mrb[0].mxu0 %v8167
    %v8235 = vpop.f32.mrb[0].mxu0
    %v8236 = vadd.f32 0.0, %v8235
    %v8237 = vpop.f32.mrb[0].mxu0
    %8238 = vdwg.mxu0
    %v8240 = vsel %vm647, %v7719, 0
    %8242 = vmatprep.subr.mxu0 0.0
    %8243 = vmatpush1.msra.mxu0 %v6551
    %8244 = vmatprep.subr.mxu0 0.0
    %8245 = vmatpush1.msra.mxu0 0.0
    %8246 = vmatprep.subr.mxu0 0.0
    %8247 = vmatpush1.msra.mxu0 0.0
    %8248 = vmatprep.subr.mxu0 0.0
    %8249 = vmatpush1.msra.mxu0 0.0
    %8250 = vmatprep.subr.mxu0 0.0
    %8251 = vmatpush1.msra.mxu0 0.0
    %8252 = vmatprep.subr.mxu0 0.0
    %8253 = vmatpush1.msra.mxu0 0.0
    %8254 = vmatprep.subr.mxu0 0.0
    %8255 = vmatpush1.msra.mxu0 0.0
    %8256 = vmatprep.subr.mxu0 0.0
    %8257 = vmatpush1.msra.mxu0 0.0
    %8258 = vmatprep.subr.mxu0 0.0
    %8259 = vmatpush1.msra.mxu0 0.0
    %8260 = vmatprep.subr.mxu0 0.0
    %8261 = vmatpush1.msra.mxu0 0.0
    %8262 = vmatprep.subr.mxu0 0.0
    %8263 = vmatpush1.msra.mxu0 0.0
    %8264 = vmatprep.subr.mxu0 0.0
    %8265 = vmatpush1.msra.mxu0 0.0
    %8266 = vmatprep.subr.mxu0 0.0
    %8267 = vmatpush1.msra.mxu0 0.0
    %8268 = vmatprep.subr.mxu0 0.0
    %8269 = vmatpush1.msra.mxu0 0.0
    %8270 = vmatprep.subr.mxu0 0.0
    %8271 = vmatpush1.msra.mxu0 0.0
    %8272 = vmatprep.subr.mxu0 0.0
    %8273 = vmatpush1.msra.mxu0 0.0
    %8274 = vmatprep.subr.mxu0 0.0
    %8275 = vmatpush1.msra.mxu0 0.0
    %8276 = vmatprep.subr.mxu0 0.0
    %8277 = vmatpush1.msra.mxu0 0.0
    %8278 = vmatprep.subr.mxu0 0.0
    %8279 = vmatpush1.msra.mxu0 0.0
    %8280 = vmatprep.subr.mxu0 0.0
    %8281 = vmatpush1.msra.mxu0 0.0
    %8282 = vmatprep.subr.mxu0 0.0
    %8283 = vmatpush1.msra.mxu0 0.0
    %8284 = vmatprep.subr.mxu0 0.0
    %8285 = vmatpush1.msra.mxu0 0.0
    %8286 = vmatprep.subr.mxu0 0.0
    %8287 = vmatpush1.msra.mxu0 0.0
    %8288 = vmatprep.subr.mxu0 0.0
    %8289 = vmatpush1.msra.mxu0 0.0
    %8290 = vmatprep.subr.mxu0 0.0
    %8291 = vmatpush1.msra.mxu0 0.0
    %8292 = vmatprep.subr.mxu0 0.0
    %8293 = vmatpush1.msra.mxu0 0.0
    %8294 = vmatprep.subr.mxu0 0.0
    %8295 = vmatpush1.msra.mxu0 0.0
    %8296 = vmatprep.subr.mxu0 0.0
    %8297 = vmatpush1.msra.mxu0 0.0
    %8298 = vmatprep.subr.mxu0 0.0
    %8299 = vmatpush1.msra.mxu0 0.0
    %8300 = vmatprep.subr.mxu0 0.0
    %8301 = vmatpush1.msra.mxu0 0.0
    %8302 = vmatprep.subr.mxu0 0.0
    %8303 = vmatpush1.msra.mxu0 0.0
    %8304 = vmatprep.subr.mxu0 0.0
    %8305 = vmatpush1.msra.mxu0 0.0
    %8306 = vmatprep.mubr.f32.mxu0 0.0
    %8307 = vmatmul.mubr.f32.gmra.mrb[0].mxu0 %v8240
    %v8308 = vpop.f32.mrb[0].mxu0
    %v8309 = vadd.f32 0.0, %v8308
    %v8310 = vpop.f32.mrb[0].mxu0
    %8311 = vdwg.mxu0
    %v8313 = vsel %vm647, %v7795, 0
    %8315 = vmatprep.subr.mxu0 0.0
    %8316 = vmatpush1.msra.mxu0 %v6552
    %8317 = vmatprep.subr.mxu0 0.0
    %8318 = vmatpush1.msra.mxu0 0.0
    %8319 = vmatprep.subr.mxu0 0.0
    %8320 = vmatpush1.msra.mxu0 0.0
    %8321 = vmatprep.subr.mxu0 0.0
    %8322 = vmatpush1.msra.mxu0 0.0
    %8323 = vmatprep.subr.mxu0 0.0
    %8324 = vmatpush1.msra.mxu0 0.0
    %8325 = vmatprep.subr.mxu0 0.0
    %8326 = vmatpush1.msra.mxu0 0.0
    %8327 = vmatprep.subr.mxu0 0.0
    %8328 = vmatpush1.msra.mxu0 0.0
    %8329 = vmatprep.subr.mxu0 0.0
    %8330 = vmatpush1.msra.mxu0 0.0
    %8331 = vmatprep.subr.mxu0 0.0
    %8332 = vmatpush1.msra.mxu0 0.0
    %8333 = vmatprep.subr.mxu0 0.0
    %8334 = vmatpush1.msra.mxu0 0.0
    %8335 = vmatprep.subr.mxu0 0.0
    %8336 = vmatpush1.msra.mxu0 0.0
    %8337 = vmatprep.subr.mxu0 0.0
    %8338 = vmatpush1.msra.mxu0 0.0
    %8339 = vmatprep.subr.mxu0 0.0
    %8340 = vmatpush1.msra.mxu0 0.0
    %8341 = vmatprep.subr.mxu0 0.0
    %8342 = vmatpush1.msra.mxu0 0.0
    %8343 = vmatprep.subr.mxu0 0.0
    %8344 = vmatpush1.msra.mxu0 0.0
    %8345 = vmatprep.subr.mxu0 0.0
    %8346 = vmatpush1.msra.mxu0 0.0
    %8347 = vmatprep.subr.mxu0 0.0
    %8348 = vmatpush1.msra.mxu0 0.0
    %8349 = vmatprep.subr.mxu0 0.0
    %8350 = vmatpush1.msra.mxu0 0.0
    %8351 = vmatprep.subr.mxu0 0.0
    %8352 = vmatpush1.msra.mxu0 0.0
    %8353 = vmatprep.subr.mxu0 0.0
    %8354 = vmatpush1.msra.mxu0 0.0
    %8355 = vmatprep.subr.mxu0 0.0
    %8356 = vmatpush1.msra.mxu0 0.0
    %8357 = vmatprep.subr.mxu0 0.0
    %8358 = vmatpush1.msra.mxu0 0.0
    %8359 = vmatprep.subr.mxu0 0.0
    %8360 = vmatpush1.msra.mxu0 0.0
    %8361 = vmatprep.subr.mxu0 0.0
    %8362 = vmatpush1.msra.mxu0 0.0
    %8363 = vmatprep.subr.mxu0 0.0
    %8364 = vmatpush1.msra.mxu0 0.0
    %8365 = vmatprep.subr.mxu0 0.0
    %8366 = vmatpush1.msra.mxu0 0.0
    %8367 = vmatprep.subr.mxu0 0.0
    %8368 = vmatpush1.msra.mxu0 0.0
    %8369 = vmatprep.subr.mxu0 0.0
    %8370 = vmatpush1.msra.mxu0 0.0
    %8371 = vmatprep.subr.mxu0 0.0
    %8372 = vmatpush1.msra.mxu0 0.0
    %8373 = vmatprep.subr.mxu0 0.0
    %8374 = vmatpush1.msra.mxu0 0.0
    %8375 = vmatprep.subr.mxu0 0.0
    %8376 = vmatpush1.msra.mxu0 0.0
    %8377 = vmatprep.subr.mxu0 0.0
    %8378 = vmatpush1.msra.mxu0 0.0
    %8379 = vmatprep.mubr.f32.mxu0 0.0
    %8380 = vmatmul.mubr.f32.gmra.mrb[0].mxu0 %v8313
    %v8381 = vpop.f32.mrb[0].mxu0
    %v8382 = vadd.f32 0.0, %v8381
    %v8383 = vpop.f32.mrb[0].mxu0
    %8384 = vdwg.mxu0
    %v8386 = vsel %vm647, %v7871, 0
    %8388 = vmatprep.subr.mxu0 0.0
    %8389 = vmatpush1.msra.mxu0 %v6553
    %8390 = vmatprep.subr.mxu0 0.0
    %8391 = vmatpush1.msra.mxu0 0.0
    %8392 = vmatprep.subr.mxu0 0.0
    %8393 = vmatpush1.msra.mxu0 0.0
    %8394 = vmatprep.subr.mxu0 0.0
    %8395 = vmatpush1.msra.mxu0 0.0
    %8396 = vmatprep.subr.mxu0 0.0
    %8397 = vmatpush1.msra.mxu0 0.0
    %8398 = vmatprep.subr.mxu0 0.0
    %8399 = vmatpush1.msra.mxu0 0.0
    %8400 = vmatprep.subr.mxu0 0.0
    %8401 = vmatpush1.msra.mxu0 0.0
    %8402 = vmatprep.subr.mxu0 0.0
    %8403 = vmatpush1.msra.mxu0 0.0
    %8404 = vmatprep.subr.mxu0 0.0
    %8405 = vmatpush1.msra.mxu0 0.0
    %8406 = vmatprep.subr.mxu0 0.0
    %8407 = vmatpush1.msra.mxu0 0.0
    %8408 = vmatprep.subr.mxu0 0.0
    %8409 = vmatpush1.msra.mxu0 0.0
    %8410 = vmatprep.subr.mxu0 0.0
    %8411 = vmatpush1.msra.mxu0 0.0
    %8412 = vmatprep.subr.mxu0 0.0
    %8413 = vmatpush1.msra.mxu0 0.0
    %8414 = vmatprep.subr.mxu0 0.0
    %8415 = vmatpush1.msra.mxu0 0.0
    %8416 = vmatprep.subr.mxu0 0.0
    %8417 = vmatpush1.msra.mxu0 0.0
    %8418 = vmatprep.subr.mxu0 0.0
    %8419 = vmatpush1.msra.mxu0 0.0
    %8420 = vmatprep.subr.mxu0 0.0
    %8421 = vmatpush1.msra.mxu0 0.0
    %8422 = vmatprep.subr.mxu0 0.0
    %8423 = vmatpush1.msra.mxu0 0.0
    %8424 = vmatprep.subr.mxu0 0.0
    %8425 = vmatpush1.msra.mxu0 0.0
    %8426 = vmatprep.subr.mxu0 0.0
    %8427 = vmatpush1.msra.mxu0 0.0
    %8428 = vmatprep.subr.mxu0 0.0
    %8429 = vmatpush1.msra.mxu0 0.0
    %8430 = vmatprep.subr.mxu0 0.0
    %8431 = vmatpush1.msra.mxu0 0.0
    %8432 = vmatprep.subr.mxu0 0.0
    %8433 = vmatpush1.msra.mxu0 0.0
    %8434 = vmatprep.subr.mxu0 0.0
    %8435 = vmatpush1.msra.mxu0 0.0
    %8436 = vmatprep.subr.mxu0 0.0
    %8437 = vmatpush1.msra.mxu0 0.0
    %8438 = vmatprep.subr.mxu0 0.0
    %8439 = vmatpush1.msra.mxu0 0.0
    %8440 = vmatprep.subr.mxu0 0.0
    %8441 = vmatpush1.msra.mxu0 0.0
    %8442 = vmatprep.subr.mxu0 0.0
    %8443 = vmatpush1.msra.mxu0 0.0
    %8444 = vmatprep.subr.mxu0 0.0
    %8445 = vmatpush1.msra.mxu0 0.0
    %8446 = vmatprep.subr.mxu0 0.0
    %8447 = vmatpush1.msra.mxu0 0.0
    %8448 = vmatprep.subr.mxu0 0.0
    %8449 = vmatpush1.msra.mxu0 0.0
    %8450 = vmatprep.subr.mxu0 0.0
    %8451 = vmatpush1.msra.mxu0 0.0
    %8452 = vmatprep.mubr.f32.mxu0 0.0
    %8453 = vmatmul.mubr.f32.gmra.mrb[0].mxu0 %v8386
    %v8454 = vpop.f32.mrb[0].mxu0
    %v8455 = vadd.f32 0.0, %v8454
    %v8456 = vpop.f32.mrb[0].mxu0
    %8457 = vdwg.mxu0
    %v8458 = vsel %vm73, %v7944, 0.0
    %v8459 = vsel %vm73, %v8017, 0.0
    %v8460 = vadd.f32 %v8458, %v8459
    %v8461 = vsel %vm73, %v8090, 0.0
    %v8462 = vadd.f32 %v8460, %v8461
    %v8463 = vsel %vm73, %v8163, 0.0
    %v8464 = vadd.f32 %v8462, %v8463
    %v8465 = vsel %vm73, %v8236, 0.0
    %v8466 = vsel %vm73, %v8309, 0.0
    %v8467 = vadd.f32 %v8465, %v8466
    %v8468 = vsel %vm73, %v8382, 0.0
    %v8469 = vadd.f32 %v8467, %v8468
    %v8470 = vsel %vm73, %v8455, 0.0
    %v8471 = vadd.f32 %v8469, %v8470
    %v8472 = vlaneseq
    %v8473 = vshrl.u32 %v8472, 7
    %v8474 = vsub.s32 0, %v8473
    %v8475 = vrot.slane %v5964, %v8474
    %v8476 = vadd.f32 %v8464, %v8475
    %v8477 = vadd.f32 %v8471, %v8475
    %v8478 = vadd.f32 %v8476, %v5961
    %v8479 = vadd.f32 %v8477, %v5962
    %v8480 = vsel %vm73, %v8478, 0.0
    %8481 = vadd.xlane.f32.xlu0 %v8480
    %v8482 = vpop.xlane.xlu0 %8481
    %v8483 = vsel %vm73, %v8479, 0.0
    %8484 = vadd.xlane.f32.xlu0 %v8483
    %v8485 = vpop.xlane.xlu0 %8484
    %v8486 = vmul.f32 %v8482, %v2577
    %v8487 = vmul.f32 %v8485, %v2577
    %v8488 = vsub.f32 %v8478, %v8486
    %v8489 = vsub.f32 %v8479, %v8487
    %v8490 = vmul.f32 %v8488, %v8488
    %v8491 = vmul.f32 %v8489, %v8489
    %v8492 = vsel %vm73, %v8490, 0.0
    %8493 = vadd.xlane.f32.xlu0 %v8492
    %v8494 = vpop.xlane.xlu0 %8493
    %v8495 = vsel %vm73, %v8491, 0.0
    %8496 = vadd.xlane.f32.xlu0 %v8495
    %v8497 = vpop.xlane.xlu0 %8496
    %v8498 = vmul.f32 %v8494, %v2577
    %v8499 = vmul.f32 %v8497, %v2577
    %v8500 = vadd.f32 %v8498, 1e-05
    %v8501 = vadd.f32 %v8499, 1e-05
    %v8502 = vrsqrt.pop %v8500
    %v8503 = vrsqrt.pop %v8501
    %v8504 = vmul.f32 %v8488, %v8502
    %v8505 = vmul.f32 %v8489, %v8503
    %v8506 = vlaneseq
    %v8507 = vshrl.u32 %v8506, 7
    %v8508 = vsub.s32 1, %v8507
    %v8509 = vrot.slane %v5964, %v8508
    %v8510 = vmul.f32 %v8504, %v8509
    %v8511 = vmul.f32 %v8505, %v8509
    %v8512 = vlaneseq
    %v8513 = vshrl.u32 %v8512, 7
    %v8514 = vsub.s32 2, %v8513
    %v8515 = vrot.slane %v5964, %v8514
    %v8516 = vadd.f32 %v8510, %v8515
    %v8517 = vadd.f32 %v8511, %v8515
    %s8518 = scalar_lea.vmem %s6, 128
    %v8519 = vld [vmem:[%s8518] sm:$0xff]
    %v8520 = vld [vmem:[%s8518 + $0x8] sm:$0xff]
    %v8521 = vld [vmem:[%s8518 + $0x10] sm:$0xff]
    %v8522 = vld [vmem:[%s8518 + $0x18] sm:$0xff]
    %v8523 = vld [vmem:[%s8518 + $0x20] sm:$0xff]
    %v8524 = vld [vmem:[%s8518 + $0x28] sm:$0xff]
    %v8525 = vld [vmem:[%s8518 + $0x30] sm:$0xff]
    %v8526 = vld [vmem:[%s8518 + $0x38] sm:$0xff]
    %v8527 = vld [vmem:[%s8518 + $0x40] sm:$0xff]
    %v8528 = vld [vmem:[%s8518 + $0x48] sm:$0xff]
    %v8529 = vld [vmem:[%s8518 + $0x50] sm:$0xff]
    %v8530 = vld [vmem:[%s8518 + $0x58] sm:$0xff]
    %v8531 = vld [vmem:[%s8518 + $0x60] sm:$0xff]
    %v8532 = vld [vmem:[%s8518 + $0x68] sm:$0xff]
    %v8533 = vld [vmem:[%s8518 + $0x70] sm:$0xff]
    %v8534 = vld [vmem:[%s8518 + $0x78] sm:$0xff]
    %8535 = vmatprep.subr.mxu0 0.0
    %8536 = vmatpush1.msra.mxu0 %v8519
    %8537 = vmatprep.subr.mxu0 0.0
    %8538 = vmatpush1.msra.mxu0 %v8520
    %8539 = vmatprep.subr.mxu0 0.0
    %8540 = vmatpush1.msra.mxu0 %v8521
    %8541 = vmatprep.subr.mxu0 0.0
    %8542 = vmatpush1.msra.mxu0 %v8522
    %8543 = vmatprep.subr.mxu0 0.0
    %8544 = vmatpush1.msra.mxu0 0.0
    %8545 = vmatprep.subr.mxu0 0.0
    %8546 = vmatpush1.msra.mxu0 0.0
    %8547 = vmatprep.subr.mxu0 0.0
    %8548 = vmatpush1.msra.mxu0 0.0
    %8549 = vmatprep.subr.mxu0 0.0
    %8550 = vmatpush1.msra.mxu0 0.0
    %8551 = vmatprep.subr.mxu0 0.0
    %8552 = vmatpush1.msra.mxu0 0.0
    %8553 = vmatprep.subr.mxu0 0.0
    %8554 = vmatpush1.msra.mxu0 0.0
    %8555 = vmatprep.subr.mxu0 0.0
    %8556 = vmatpush1.msra.mxu0 0.0
    %8557 = vmatprep.subr.mxu0 0.0
    %8558 = vmatpush1.msra.mxu0 0.0
    %8559 = vmatprep.subr.mxu0 0.0
    %8560 = vmatpush1.msra.mxu0 0.0
    %8561 = vmatprep.subr.mxu0 0.0
    %8562 = vmatpush1.msra.mxu0 0.0
    %8563 = vmatprep.subr.mxu0 0.0
    %8564 = vmatpush1.msra.mxu0 0.0
    %8565 = vmatprep.subr.mxu0 0.0
    %8566 = vmatpush1.msra.mxu0 0.0
    %8567 = vmatprep.subr.mxu0 0.0
    %8568 = vmatpush1.msra.mxu0 0.0
    %8569 = vmatprep.subr.mxu0 0.0
    %8570 = vmatpush1.msra.mxu0 0.0
    %8571 = vmatprep.subr.mxu0 0.0
    %8572 = vmatpush1.msra.mxu0 0.0
    %8573 = vmatprep.subr.mxu0 0.0
    %8574 = vmatpush1.msra.mxu0 0.0
    %8575 = vmatprep.subr.mxu0 0.0
    %8576 = vmatpush1.msra.mxu0 0.0
    %8577 = vmatprep.subr.mxu0 0.0
    %8578 = vmatpush1.msra.mxu0 0.0
    %8579 = vmatprep.subr.mxu0 0.0
    %8580 = vmatpush1.msra.mxu0 0.0
    %8581 = vmatprep.subr.mxu0 0.0
    %8582 = vmatpush1.msra.mxu0 0.0
    %8583 = vmatprep.subr.mxu0 0.0
    %8584 = vmatpush1.msra.mxu0 0.0
    %8585 = vmatprep.subr.mxu0 0.0
    %8586 = vmatpush1.msra.mxu0 0.0
    %8587 = vmatprep.subr.mxu0 0.0
    %8588 = vmatpush1.msra.mxu0 0.0
    %8589 = vmatprep.subr.mxu0 0.0
    %8590 = vmatpush1.msra.mxu0 0.0
    %8591 = vmatprep.subr.mxu0 0.0
    %8592 = vmatpush1.msra.mxu0 0.0
    %8593 = vmatprep.subr.mxu0 0.0
    %8594 = vmatpush1.msra.mxu0 0.0
    %8595 = vmatprep.subr.mxu0 0.0
    %8596 = vmatpush1.msra.mxu0 0.0
    %8597 = vmatprep.subr.mxu0 0.0
    %8598 = vmatpush1.msra.mxu0 0.0
    %8599 = vmatprep.mubr.f32.mxu0 0.0
    %8600 = vmatmul.mubr.f32.gmra.mrb[0].mxu0 %v2627
    %v8601 = vpop.f32.mrb[0].mxu0
    %v8602 = vadd.f32 0.0, %v8601
    %v8603 = vpop.f32.mrb[0].mxu0
    %8604 = vdwg.mxu0
    %8605 = vmatprep.subr.mxu0 0.0
    %8606 = vmatpush1.msra.mxu0 %v8523
    %8607 = vmatprep.subr.mxu0 0.0
    %8608 = vmatpush1.msra.mxu0 %v8524
    %8609 = vmatprep.subr.mxu0 0.0
    %8610 = vmatpush1.msra.mxu0 %v8525
    %8611 = vmatprep.subr.mxu0 0.0
    %8612 = vmatpush1.msra.mxu0 %v8526
    %8613 = vmatprep.subr.mxu0 0.0
    %8614 = vmatpush1.msra.mxu0 0.0
    %8615 = vmatprep.subr.mxu0 0.0
    %8616 = vmatpush1.msra.mxu0 0.0
    %8617 = vmatprep.subr.mxu0 0.0
    %8618 = vmatpush1.msra.mxu0 0.0
    %8619 = vmatprep.subr.mxu0 0.0
    %8620 = vmatpush1.msra.mxu0 0.0
    %8621 = vmatprep.subr.mxu0 0.0
    %8622 = vmatpush1.msra.mxu0 0.0
    %8623 = vmatprep.subr.mxu0 0.0
    %8624 = vmatpush1.msra.mxu0 0.0
    %8625 = vmatprep.subr.mxu0 0.0
    %8626 = vmatpush1.msra.mxu0 0.0
    %8627 = vmatprep.subr.mxu0 0.0
    %8628 = vmatpush1.msra.mxu0 0.0
    %8629 = vmatprep.subr.mxu0 0.0
    %8630 = vmatpush1.msra.mxu0 0.0
    %8631 = vmatprep.subr.mxu0 0.0
    %8632 = vmatpush1.msra.mxu0 0.0
    %8633 = vmatprep.subr.mxu0 0.0
    %8634 = vmatpush1.msra.mxu0 0.0
    %8635 = vmatprep.subr.mxu0 0.0
    %8636 = vmatpush1.msra.mxu0 0.0
    %8637 = vmatprep.subr.mxu0 0.0
    %8638 = vmatpush1.msra.mxu0 0.0
    %8639 = vmatprep.subr.mxu0 0.0
    %8640 = vmatpush1.msra.mxu0 0.0
    %8641 = vmatprep.subr.mxu0 0.0
    %8642 = vmatpush1.msra.mxu0 0.0
    %8643 = vmatprep.subr.mxu0 0.0
    %8644 = vmatpush1.msra.mxu0 0.0
    %8645 = vmatprep.subr.mxu0 0.0
    %8646 = vmatpush1.msra.mxu0 0.0
    %8647 = vmatprep.subr.mxu0 0.0
    %8648 = vmatpush1.msra.mxu0 0.0
    %8649 = vmatprep.subr.mxu0 0.0
    %8650 = vmatpush1.msra.mxu0 0.0
    %8651 = vmatprep.subr.mxu0 0.0
    %8652 = vmatpush1.msra.mxu0 0.0
    %8653 = vmatprep.subr.mxu0 0.0
    %8654 = vmatpush1.msra.mxu0 0.0
    %8655 = vmatprep.subr.mxu0 0.0
    %8656 = vmatpush1.msra.mxu0 0.0
    %8657 = vmatprep.subr.mxu0 0.0
    %8658 = vmatpush1.msra.mxu0 0.0
    %8659 = vmatprep.subr.mxu0 0.0
    %8660 = vmatpush1.msra.mxu0 0.0
    %8661 = vmatprep.subr.mxu0 0.0
    %8662 = vmatpush1.msra.mxu0 0.0
    %8663 = vmatprep.subr.mxu0 0.0
    %8664 = vmatpush1.msra.mxu0 0.0
    %8665 = vmatprep.subr.mxu0 0.0
    %8666 = vmatpush1.msra.mxu0 0.0
    %8667 = vmatprep.subr.mxu0 0.0
    %8668 = vmatpush1.msra.mxu0 0.0
    %8669 = vmatprep.mubr.f32.mxu0 0.0
    %8670 = vmatmul.mubr.f32.gmra.mrb[0].mxu0 %v2627
    %v8671 = vpop.f32.mrb[0].mxu0
    %v8672 = vadd.f32 0.0, %v8671
    %v8673 = vpop.f32.mrb[0].mxu0
    %8674 = vdwg.mxu0
    %8675 = vmatprep.subr.mxu0 0.0
    %8676 = vmatpush1.msra.mxu0 %v8527
    %8677 = vmatprep.subr.mxu0 0.0
    %8678 = vmatpush1.msra.mxu0 %v8528
    %8679 = vmatprep.subr.mxu0 0.0
    %8680 = vmatpush1.msra.mxu0 %v8529
    %8681 = vmatprep.subr.mxu0 0.0
    %8682 = vmatpush1.msra.mxu0 %v8530
    %8683 = vmatprep.subr.mxu0 0.0
    %8684 = vmatpush1.msra.mxu0 0.0
    %8685 = vmatprep.subr.mxu0 0.0
    %8686 = vmatpush1.msra.mxu0 0.0
    %8687 = vmatprep.subr.mxu0 0.0
    %8688 = vmatpush1.msra.mxu0 0.0
    %8689 = vmatprep.subr.mxu0 0.0
    %8690 = vmatpush1.msra.mxu0 0.0
    %8691 = vmatprep.subr.mxu0 0.0
    %8692 = vmatpush1.msra.mxu0 0.0
    %8693 = vmatprep.subr.mxu0 0.0
    %8694 = vmatpush1.msra.mxu0 0.0
    %8695 = vmatprep.subr.mxu0 0.0
    %8696 = vmatpush1.msra.mxu0 0.0
    %8697 = vmatprep.subr.mxu0 0.0
    %8698 = vmatpush1.msra.mxu0 0.0
    %8699 = vmatprep.subr.mxu0 0.0
    %8700 = vmatpush1.msra.mxu0 0.0
    %8701 = vmatprep.subr.mxu0 0.0
    %8702 = vmatpush1.msra.mxu0 0.0
    %8703 = vmatprep.subr.mxu0 0.0
    %8704 = vmatpush1.msra.mxu0 0.0
    %8705 = vmatprep.subr.mxu0 0.0
    %8706 = vmatpush1.msra.mxu0 0.0
    %8707 = vmatprep.subr.mxu0 0.0
    %8708 = vmatpush1.msra.mxu0 0.0
    %8709 = vmatprep.subr.mxu0 0.0
    %8710 = vmatpush1.msra.mxu0 0.0
    %8711 = vmatprep.subr.mxu0 0.0
    %8712 = vmatpush1.msra.mxu0 0.0
    %8713 = vmatprep.subr.mxu0 0.0
    %8714 = vmatpush1.msra.mxu0 0.0
    %8715 = vmatprep.subr.mxu0 0.0
    %8716 = vmatpush1.msra.mxu0 0.0
    %8717 = vmatprep.subr.mxu0 0.0
    %8718 = vmatpush1.msra.mxu0 0.0
    %8719 = vmatprep.subr.mxu0 0.0
    %8720 = vmatpush1.msra.mxu0 0.0
    %8721 = vmatprep.subr.mxu0 0.0
    %8722 = vmatpush1.msra.mxu0 0.0
    %8723 = vmatprep.subr.mxu0 0.0
    %8724 = vmatpush1.msra.mxu0 0.0
    %8725 = vmatprep.subr.mxu0 0.0
    %8726 = vmatpush1.msra.mxu0 0.0
    %8727 = vmatprep.subr.mxu0 0.0
    %8728 = vmatpush1.msra.mxu0 0.0
    %8729 = vmatprep.subr.mxu0 0.0
    %8730 = vmatpush1.msra.mxu0 0.0
    %8731 = vmatprep.subr.mxu0 0.0
    %8732 = vmatpush1.msra.mxu0 0.0
    %8733 = vmatprep.subr.mxu0 0.0
    %8734 = vmatpush1.msra.mxu0 0.0
    %8735 = vmatprep.subr.mxu0 0.0
    %8736 = vmatpush1.msra.mxu0 0.0
    %8737 = vmatprep.subr.mxu0 0.0
    %8738 = vmatpush1.msra.mxu0 0.0
    %8739 = vmatprep.mubr.f32.mxu0 0.0
    %8740 = vmatmul.mubr.f32.gmra.mrb[0].mxu0 %v2627
    %v8741 = vpop.f32.mrb[0].mxu0
    %v8742 = vadd.f32 0.0, %v8741
    %v8743 = vpop.f32.mrb[0].mxu0
    %8744 = vdwg.mxu0
    %8745 = vmatprep.subr.mxu0 0.0
    %8746 = vmatpush1.msra.mxu0 %v8531
    %8747 = vmatprep.subr.mxu0 0.0
    %8748 = vmatpush1.msra.mxu0 %v8532
    %8749 = vmatprep.subr.mxu0 0.0
    %8750 = vmatpush1.msra.mxu0 %v8533
    %8751 = vmatprep.subr.mxu0 0.0
    %8752 = vmatpush1.msra.mxu0 %v8534
    %8753 = vmatprep.subr.mxu0 0.0
    %8754 = vmatpush1.msra.mxu0 0.0
    %8755 = vmatprep.subr.mxu0 0.0
    %8756 = vmatpush1.msra.mxu0 0.0
    %8757 = vmatprep.subr.mxu0 0.0
    %8758 = vmatpush1.msra.mxu0 0.0
    %8759 = vmatprep.subr.mxu0 0.0
    %8760 = vmatpush1.msra.mxu0 0.0
    %8761 = vmatprep.subr.mxu0 0.0
    %8762 = vmatpush1.msra.mxu0 0.0
    %8763 = vmatprep.subr.mxu0 0.0
    %8764 = vmatpush1.msra.mxu0 0.0
    %8765 = vmatprep.subr.mxu0 0.0
    %8766 = vmatpush1.msra.mxu0 0.0
    %8767 = vmatprep.subr.mxu0 0.0
    %8768 = vmatpush1.msra.mxu0 0.0
    %8769 = vmatprep.subr.mxu0 0.0
    %8770 = vmatpush1.msra.mxu0 0.0
    %8771 = vmatprep.subr.mxu0 0.0
    %8772 = vmatpush1.msra.mxu0 0.0
    %8773 = vmatprep.subr.mxu0 0.0
    %8774 = vmatpush1.msra.mxu0 0.0
    %8775 = vmatprep.subr.mxu0 0.0
    %8776 = vmatpush1.msra.mxu0 0.0
    %8777 = vmatprep.subr.mxu0 0.0
    %8778 = vmatpush1.msra.mxu0 0.0
    %8779 = vmatprep.subr.mxu0 0.0
    %8780 = vmatpush1.msra.mxu0 0.0
    %8781 = vmatprep.subr.mxu0 0.0
    %8782 = vmatpush1.msra.mxu0 0.0
    %8783 = vmatprep.subr.mxu0 0.0
    %8784 = vmatpush1.msra.mxu0 0.0
    %8785 = vmatprep.subr.mxu0 0.0
    %8786 = vmatpush1.msra.mxu0 0.0
    %8787 = vmatprep.subr.mxu0 0.0
    %8788 = vmatpush1.msra.mxu0 0.0
    %8789 = vmatprep.subr.mxu0 0.0
    %8790 = vmatpush1.msra.mxu0 0.0
    %8791 = vmatprep.subr.mxu0 0.0
    %8792 = vmatpush1.msra.mxu0 0.0
    %8793 = vmatprep.subr.mxu0 0.0
    %8794 = vmatpush1.msra.mxu0 0.0
    %8795 = vmatprep.subr.mxu0 0.0
    %8796 = vmatpush1.msra.mxu0 0.0
    %8797 = vmatprep.subr.mxu0 0.0
    %8798 = vmatpush1.msra.mxu0 0.0
    %8799 = vmatprep.subr.mxu0 0.0
    %8800 = vmatpush1.msra.mxu0 0.0
    %8801 = vmatprep.subr.mxu0 0.0
    %8802 = vmatpush1.msra.mxu0 0.0
    %8803 = vmatprep.subr.mxu0 0.0
    %8804 = vmatpush1.msra.mxu0 0.0
    %8805 = vmatprep.subr.mxu0 0.0
    %8806 = vmatpush1.msra.mxu0 0.0
    %8807 = vmatprep.subr.mxu0 0.0
    %8808 = vmatpush1.msra.mxu0 0.0
    %8809 = vmatprep.mubr.f32.mxu0 0.0
    %8810 = vmatmul.mubr.f32.gmra.mrb[0].mxu0 %v2627
    %v8811 = vpop.f32.mrb[0].mxu0
    %v8812 = vadd.f32 0.0, %v8811
    %v8813 = vpop.f32.mrb[0].mxu0
    %8814 = vdwg.mxu0
    %8815 = vmatprep.subr.mxu0 0.0
    %8816 = vmatpush1.msra.mxu0 %v8519
    %8817 = vmatprep.subr.mxu0 0.0
    %8818 = vmatpush1.msra.mxu0 %v8520
    %8819 = vmatprep.subr.mxu0 0.0
    %8820 = vmatpush1.msra.mxu0 %v8521
    %8821 = vmatprep.subr.mxu0 0.0
    %8822 = vmatpush1.msra.mxu0 %v8522
    %8823 = vmatprep.subr.mxu0 0.0
    %8824 = vmatpush1.msra.mxu0 0.0
    %8825 = vmatprep.subr.mxu0 0.0
    %8826 = vmatpush1.msra.mxu0 0.0
    %8827 = vmatprep.subr.mxu0 0.0
    %8828 = vmatpush1.msra.mxu0 0.0
    %8829 = vmatprep.subr.mxu0 0.0
    %8830 = vmatpush1.msra.mxu0 0.0
    %8831 = vmatprep.subr.mxu0 0.0
    %8832 = vmatpush1.msra.mxu0 0.0
    %8833 = vmatprep.subr.mxu0 0.0
    %8834 = vmatpush1.msra.mxu0 0.0
    %8835 = vmatprep.subr.mxu0 0.0
    %8836 = vmatpush1.msra.mxu0 0.0
    %8837 = vmatprep.subr.mxu0 0.0
    %8838 = vmatpush1.msra.mxu0 0.0
    %8839 = vmatprep.subr.mxu0 0.0
    %8840 = vmatpush1.msra.mxu0 0.0
    %8841 = vmatprep.subr.mxu0 0.0
    %8842 = vmatpush1.msra.mxu0 0.0
    %8843 = vmatprep.subr.mxu0 0.0
    %8844 = vmatpush1.msra.mxu0 0.0
    %8845 = vmatprep.subr.mxu0 0.0
    %8846 = vmatpush1.msra.mxu0 0.0
    %8847 = vmatprep.subr.mxu0 0.0
    %8848 = vmatpush1.msra.mxu0 0.0
    %8849 = vmatprep.subr.mxu0 0.0
    %8850 = vmatpush1.msra.mxu0 0.0
    %8851 = vmatprep.subr.mxu0 0.0
    %8852 = vmatpush1.msra.mxu0 0.0
    %8853 = vmatprep.subr.mxu0 0.0
    %8854 = vmatpush1.msra.mxu0 0.0
    %8855 = vmatprep.subr.mxu0 0.0
    %8856 = vmatpush1.msra.mxu0 0.0
    %8857 = vmatprep.subr.mxu0 0.0
    %8858 = vmatpush1.msra.mxu0 0.0
    %8859 = vmatprep.subr.mxu0 0.0
    %8860 = vmatpush1.msra.mxu0 0.0
    %8861 = vmatprep.subr.mxu0 0.0
    %8862 = vmatpush1.msra.mxu0 0.0
    %8863 = vmatprep.subr.mxu0 0.0
    %8864 = vmatpush1.msra.mxu0 0.0
    %8865 = vmatprep.subr.mxu0 0.0
    %8866 = vmatpush1.msra.mxu0 0.0
    %8867 = vmatprep.subr.mxu0 0.0
    %8868 = vmatpush1.msra.mxu0 0.0
    %8869 = vmatprep.subr.mxu0 0.0
    %8870 = vmatpush1.msra.mxu0 0.0
    %8871 = vmatprep.subr.mxu0 0.0
    %8872 = vmatpush1.msra.mxu0 0.0
    %8873 = vmatprep.subr.mxu0 0.0
    %8874 = vmatpush1.msra.mxu0 0.0
    %8875 = vmatprep.subr.mxu0 0.0
    %8876 = vmatpush1.msra.mxu0 0.0
    %8877 = vmatprep.subr.mxu0 0.0
    %8878 = vmatpush1.msra.mxu0 0.0
    %8879 = vmatprep.mubr.f32.mxu0 0.0
    %8880 = vmatmul.mubr.f32.gmra.mrb[0].mxu0 %v2910
    %v8881 = vpop.f32.mrb[0].mxu0
    %v8882 = vadd.f32 0.0, %v8881
    %v8883 = vpop.f32.mrb[0].mxu0
    %8884 = vdwg.mxu0
    %8885 = vmatprep.subr.mxu0 0.0
    %8886 = vmatpush1.msra.mxu0 %v8523
    %8887 = vmatprep.subr.mxu0 0.0
    %8888 = vmatpush1.msra.mxu0 %v8524
    %8889 = vmatprep.subr.mxu0 0.0
    %8890 = vmatpush1.msra.mxu0 %v8525
    %8891 = vmatprep.subr.mxu0 0.0
    %8892 = vmatpush1.msra.mxu0 %v8526
    %8893 = vmatprep.subr.mxu0 0.0
    %8894 = vmatpush1.msra.mxu0 0.0
    %8895 = vmatprep.subr.mxu0 0.0
    %8896 = vmatpush1.msra.mxu0 0.0
    %8897 = vmatprep.subr.mxu0 0.0
    %8898 = vmatpush1.msra.mxu0 0.0
    %8899 = vmatprep.subr.mxu0 0.0
    %8900 = vmatpush1.msra.mxu0 0.0
    %8901 = vmatprep.subr.mxu0 0.0
    %8902 = vmatpush1.msra.mxu0 0.0
    %8903 = vmatprep.subr.mxu0 0.0
    %8904 = vmatpush1.msra.mxu0 0.0
    %8905 = vmatprep.subr.mxu0 0.0
    %8906 = vmatpush1.msra.mxu0 0.0
    %8907 = vmatprep.subr.mxu0 0.0
    %8908 = vmatpush1.msra.mxu0 0.0
    %8909 = vmatprep.subr.mxu0 0.0
    %8910 = vmatpush1.msra.mxu0 0.0
    %8911 = vmatprep.subr.mxu0 0.0
    %8912 = vmatpush1.msra.mxu0 0.0
    %8913 = vmatprep.subr.mxu0 0.0
    %8914 = vmatpush1.msra.mxu0 0.0
    %8915 = vmatprep.subr.mxu0 0.0
    %8916 = vmatpush1.msra.mxu0 0.0
    %8917 = vmatprep.subr.mxu0 0.0
    %8918 = vmatpush1.msra.mxu0 0.0
    %8919 = vmatprep.subr.mxu0 0.0
    %8920 = vmatpush1.msra.mxu0 0.0
    %8921 = vmatprep.subr.mxu0 0.0
    %8922 = vmatpush1.msra.mxu0 0.0
    %8923 = vmatprep.subr.mxu0 0.0
    %8924 = vmatpush1.msra.mxu0 0.0
    %8925 = vmatprep.subr.mxu0 0.0
    %8926 = vmatpush1.msra.mxu0 0.0
    %8927 = vmatprep.subr.mxu0 0.0
    %8928 = vmatpush1.msra.mxu0 0.0
    %8929 = vmatprep.subr.mxu0 0.0
    %8930 = vmatpush1.msra.mxu0 0.0
    %8931 = vmatprep.subr.mxu0 0.0
    %8932 = vmatpush1.msra.mxu0 0.0
    %8933 = vmatprep.subr.mxu0 0.0
    %8934 = vmatpush1.msra.mxu0 0.0
    %8935 = vmatprep.subr.mxu0 0.0
    %8936 = vmatpush1.msra.mxu0 0.0
    %8937 = vmatprep.subr.mxu0 0.0
    %8938 = vmatpush1.msra.mxu0 0.0
    %8939 = vmatprep.subr.mxu0 0.0
    %8940 = vmatpush1.msra.mxu0 0.0
    %8941 = vmatprep.subr.mxu0 0.0
    %8942 = vmatpush1.msra.mxu0 0.0
    %8943 = vmatprep.subr.mxu0 0.0
    %8944 = vmatpush1.msra.mxu0 0.0
    %8945 = vmatprep.subr.mxu0 0.0
    %8946 = vmatpush1.msra.mxu0 0.0
    %8947 = vmatprep.subr.mxu0 0.0
    %8948 = vmatpush1.msra.mxu0 0.0
    %8949 = vmatprep.mubr.f32.mxu0 0.0
    %8950 = vmatmul.mubr.f32.gmra.mrb[0].mxu0 %v2910
    %v8951 = vpop.f32.mrb[0].mxu0
    %v8952 = vadd.f32 0.0, %v8951
    %v8953 = vpop.f32.mrb[0].mxu0
    %8954 = vdwg.mxu0
    %8955 = vmatprep.subr.mxu0 0.0
    %8956 = vmatpush1.msra.mxu0 %v8527
    %8957 = vmatprep.subr.mxu0 0.0
    %8958 = vmatpush1.msra.mxu0 %v8528
    %8959 = vmatprep.subr.mxu0 0.0
    %8960 = vmatpush1.msra.mxu0 %v8529
    %8961 = vmatprep.subr.mxu0 0.0
    %8962 = vmatpush1.msra.mxu0 %v8530
    %8963 = vmatprep.subr.mxu0 0.0
    %8964 = vmatpush1.msra.mxu0 0.0
    %8965 = vmatprep.subr.mxu0 0.0
    %8966 = vmatpush1.msra.mxu0 0.0
    %8967 = vmatprep.subr.mxu0 0.0
    %8968 = vmatpush1.msra.mxu0 0.0
    %8969 = vmatprep.subr.mxu0 0.0
    %8970 = vmatpush1.msra.mxu0 0.0
    %8971 = vmatprep.subr.mxu0 0.0
    %8972 = vmatpush1.msra.mxu0 0.0
    %8973 = vmatprep.subr.mxu0 0.0
    %8974 = vmatpush1.msra.mxu0 0.0
    %8975 = vmatprep.subr.mxu0 0.0
    %8976 = vmatpush1.msra.mxu0 0.0
    %8977 = vmatprep.subr.mxu0 0.0
    %8978 = vmatpush1.msra.mxu0 0.0
    %8979 = vmatprep.subr.mxu0 0.0
    %8980 = vmatpush1.msra.mxu0 0.0
    %8981 = vmatprep.subr.mxu0 0.0
    %8982 = vmatpush1.msra.mxu0 0.0
    %8983 = vmatprep.subr.mxu0 0.0
    %8984 = vmatpush1.msra.mxu0 0.0
    %8985 = vmatprep.subr.mxu0 0.0
    %8986 = vmatpush1.msra.mxu0 0.0
    %8987 = vmatprep.subr.mxu0 0.0
    %8988 = vmatpush1.msra.mxu0 0.0
    %8989 = vmatprep.subr.mxu0 0.0
    %8990 = vmatpush1.msra.mxu0 0.0
    %8991 = vmatprep.subr.mxu0 0.0
    %8992 = vmatpush1.msra.mxu0 0.0
    %8993 = vmatprep.subr.mxu0 0.0
    %8994 = vmatpush1.msra.mxu0 0.0
    %8995 = vmatprep.subr.mxu0 0.0
    %8996 = vmatpush1.msra.mxu0 0.0
    %8997 = vmatprep.subr.mxu0 0.0
    %8998 = vmatpush1.msra.mxu0 0.0
    %8999 = vmatprep.subr.mxu0 0.0
    %9000 = vmatpush1.msra.mxu0 0.0
    %9001 = vmatprep.subr.mxu0 0.0
    %9002 = vmatpush1.msra.mxu0 0.0
    %9003 = vmatprep.subr.mxu0 0.0
    %9004 = vmatpush1.msra.mxu0 0.0
    %9005 = vmatprep.subr.mxu0 0.0
    %9006 = vmatpush1.msra.mxu0 0.0
    %9007 = vmatprep.subr.mxu0 0.0
    %9008 = vmatpush1.msra.mxu0 0.0
    %9009 = vmatprep.subr.mxu0 0.0
    %9010 = vmatpush1.msra.mxu0 0.0
    %9011 = vmatprep.subr.mxu0 0.0
    %9012 = vmatpush1.msra.mxu0 0.0
    %9013 = vmatprep.subr.mxu0 0.0
    %9014 = vmatpush1.msra.mxu0 0.0
    %9015 = vmatprep.subr.mxu0 0.0
    %9016 = vmatpush1.msra.mxu0 0.0
    %9017 = vmatprep.subr.mxu0 0.0
    %9018 = vmatpush1.msra.mxu0 0.0
    %9019 = vmatprep.mubr.f32.mxu0 0.0
    %9020 = vmatmul.mubr.f32.gmra.mrb[0].mxu0 %v2910
    %v9021 = vpop.f32.mrb[0].mxu0
    %v9022 = vadd.f32 0.0, %v9021
    %v9023 = vpop.f32.mrb[0].mxu0
    %9024 = vdwg.mxu0
    %9025 = vmatprep.subr.mxu0 0.0
    %9026 = vmatpush1.msra.mxu0 %v8531
    %9027 = vmatprep.subr.mxu0 0.0
    %9028 = vmatpush1.msra.mxu0 %v8532
    %9029 = vmatprep.subr.mxu0 0.0
    %9030 = vmatpush1.msra.mxu0 %v8533
    %9031 = vmatprep.subr.mxu0 0.0
    %9032 = vmatpush1.msra.mxu0 %v8534
    %9033 = vmatprep.subr.mxu0 0.0
    %9034 = vmatpush1.msra.mxu0 0.0
    %9035 = vmatprep.subr.mxu0 0.0
    %9036 = vmatpush1.msra.mxu0 0.0
    %9037 = vmatprep.subr.mxu0 0.0
    %9038 = vmatpush1.msra.mxu0 0.0
    %9039 = vmatprep.subr.mxu0 0.0
    %9040 = vmatpush1.msra.mxu0 0.0
    %9041 = vmatprep.subr.mxu0 0.0
    %9042 = vmatpush1.msra.mxu0 0.0
    %9043 = vmatprep.subr.mxu0 0.0
    %9044 = vmatpush1.msra.mxu0 0.0
    %9045 = vmatprep.subr.mxu0 0.0
    %9046 = vmatpush1.msra.mxu0 0.0
    %9047 = vmatprep.subr.mxu0 0.0
    %9048 = vmatpush1.msra.mxu0 0.0
    %9049 = vmatprep.subr.mxu0 0.0
    %9050 = vmatpush1.msra.mxu0 0.0
    %9051 = vmatprep.subr.mxu0 0.0
    %9052 = vmatpush1.msra.mxu0 0.0
    %9053 = vmatprep.subr.mxu0 0.0
    %9054 = vmatpush1.msra.mxu0 0.0
    %9055 = vmatprep.subr.mxu0 0.0
    %9056 = vmatpush1.msra.mxu0 0.0
    %9057 = vmatprep.subr.mxu0 0.0
    %9058 = vmatpush1.msra.mxu0 0.0
    %9059 = vmatprep.subr.mxu0 0.0
    %9060 = vmatpush1.msra.mxu0 0.0
    %9061 = vmatprep.subr.mxu0 0.0
    %9062 = vmatpush1.msra.mxu0 0.0
    %9063 = vmatprep.subr.mxu0 0.0
    %9064 = vmatpush1.msra.mxu0 0.0
    %9065 = vmatprep.subr.mxu0 0.0
    %9066 = vmatpush1.msra.mxu0 0.0
    %9067 = vmatprep.subr.mxu0 0.0
    %9068 = vmatpush1.msra.mxu0 0.0
    %9069 = vmatprep.subr.mxu0 0.0
    %9070 = vmatpush1.msra.mxu0 0.0
    %9071 = vmatprep.subr.mxu0 0.0
    %9072 = vmatpush1.msra.mxu0 0.0
    %9073 = vmatprep.subr.mxu0 0.0
    %9074 = vmatpush1.msra.mxu0 0.0
    %9075 = vmatprep.subr.mxu0 0.0
    %9076 = vmatpush1.msra.mxu0 0.0
    %9077 = vmatprep.subr.mxu0 0.0
    %9078 = vmatpush1.msra.mxu0 0.0
    %9079 = vmatprep.subr.mxu0 0.0
    %9080 = vmatpush1.msra.mxu0 0.0
    %9081 = vmatprep.subr.mxu0 0.0
    %9082 = vmatpush1.msra.mxu0 0.0
    %9083 = vmatprep.subr.mxu0 0.0
    %9084 = vmatpush1.msra.mxu0 0.0
    %9085 = vmatprep.subr.mxu0 0.0
    %9086 = vmatpush1.msra.mxu0 0.0
    %9087 = vmatprep.subr.mxu0 0.0
    %9088 = vmatpush1.msra.mxu0 0.0
    %9089 = vmatprep.mubr.f32.mxu0 0.0
    %9090 = vmatmul.mubr.f32.gmra.mrb[0].mxu0 %v2910
    %v9091 = vpop.f32.mrb[0].mxu0
    %v9092 = vadd.f32 0.0, %v9091
    %v9093 = vpop.f32.mrb[0].mxu0
    %9094 = vdwg.mxu0
    %s9095 = scalar_lea.vmem %s5, 128
    %v9096 = vld [vmem:[%s9095] sm:$0xff]
    %v9097 = vld [vmem:[%s9095 + $0x8] sm:$0xff]
    %v9098 = vld [vmem:[%s9095 + $0x10] sm:$0xff]
    %v9099 = vld [vmem:[%s9095 + $0x18] sm:$0xff]
    %v9100 = vld [vmem:[%s9095 + $0x20] sm:$0xff]
    %v9101 = vld [vmem:[%s9095 + $0x28] sm:$0xff]
    %v9102 = vld [vmem:[%s9095 + $0x30] sm:$0xff]
    %v9103 = vld [vmem:[%s9095 + $0x38] sm:$0xff]
    %v9104 = vld [vmem:[%s9095 + $0x40] sm:$0xff]
    %v9105 = vld [vmem:[%s9095 + $0x48] sm:$0xff]
    %v9106 = vld [vmem:[%s9095 + $0x50] sm:$0xff]
    %v9107 = vld [vmem:[%s9095 + $0x58] sm:$0xff]
    %v9108 = vld [vmem:[%s9095 + $0x60] sm:$0xff]
    %v9109 = vld [vmem:[%s9095 + $0x68] sm:$0xff]
    %v9110 = vld [vmem:[%s9095 + $0x70] sm:$0xff]
    %v9111 = vld [vmem:[%s9095 + $0x78] sm:$0xff]
    %v9113 = vsel %vm73, %v8516, 0
    %9115 = vmatprep.subr.mxu0 0.0
    %9116 = vmatpush1.msra.mxu0 %v9096
    %9117 = vmatprep.subr.mxu0 0.0
    %9118 = vmatpush1.msra.mxu0 %v9097
    %9119 = vmatprep.subr.mxu0 0.0
    %9120 = vmatpush1.msra.mxu0 %v9098
    %9121 = vmatprep.subr.mxu0 0.0
    %9122 = vmatpush1.msra.mxu0 %v9099
    %9123 = vmatprep.subr.mxu0 0.0
    %9124 = vmatpush1.msra.mxu0 0.0
    %9125 = vmatprep.subr.mxu0 0.0
    %9126 = vmatpush1.msra.mxu0 0.0
    %9127 = vmatprep.subr.mxu0 0.0
    %9128 = vmatpush1.msra.mxu0 0.0
    %9129 = vmatprep.subr.mxu0 0.0
    %9130 = vmatpush1.msra.mxu0 0.0
    %9131 = vmatprep.subr.mxu0 0.0
    %9132 = vmatpush1.msra.mxu0 0.0
    %9133 = vmatprep.subr.mxu0 0.0
    %9134 = vmatpush1.msra.mxu0 0.0
    %9135 = vmatprep.subr.mxu0 0.0
    %9136 = vmatpush1.msra.mxu0 0.0
    %9137 = vmatprep.subr.mxu0 0.0
    %9138 = vmatpush1.msra.mxu0 0.0
    %9139 = vmatprep.subr.mxu0 0.0
    %9140 = vmatpush1.msra.mxu0 0.0
    %9141 = vmatprep.subr.mxu0 0.0
    %9142 = vmatpush1.msra.mxu0 0.0
    %9143 = vmatprep.subr.mxu0 0.0
    %9144 = vmatpush1.msra.mxu0 0.0
    %9145 = vmatprep.subr.mxu0 0.0
    %9146 = vmatpush1.msra.mxu0 0.0
    %9147 = vmatprep.subr.mxu0 0.0
    %9148 = vmatpush1.msra.mxu0 0.0
    %9149 = vmatprep.subr.mxu0 0.0
    %9150 = vmatpush1.msra.mxu0 0.0
    %9151 = vmatprep.subr.mxu0 0.0
    %9152 = vmatpush1.msra.mxu0 0.0
    %9153 = vmatprep.subr.mxu0 0.0
    %9154 = vmatpush1.msra.mxu0 0.0
    %9155 = vmatprep.subr.mxu0 0.0
    %9156 = vmatpush1.msra.mxu0 0.0
    %9157 = vmatprep.subr.mxu0 0.0
    %9158 = vmatpush1.msra.mxu0 0.0
    %9159 = vmatprep.subr.mxu0 0.0
    %9160 = vmatpush1.msra.mxu0 0.0
    %9161 = vmatprep.subr.mxu0 0.0
    %9162 = vmatpush1.msra.mxu0 0.0
    %9163 = vmatprep.subr.mxu0 0.0
    %9164 = vmatpush1.msra.mxu0 0.0
    %9165 = vmatprep.subr.mxu0 0.0
    %9166 = vmatpush1.msra.mxu0 0.0
    %9167 = vmatprep.subr.mxu0 0.0
    %9168 = vmatpush1.msra.mxu0 0.0
    %9169 = vmatprep.subr.mxu0 0.0
    %9170 = vmatpush1.msra.mxu0 0.0
    %9171 = vmatprep.subr.mxu0 0.0
    %9172 = vmatpush1.msra.mxu0 0.0
    %9173 = vmatprep.subr.mxu0 0.0
    %9174 = vmatpush1.msra.mxu0 0.0
    %9175 = vmatprep.subr.mxu0 0.0
    %9176 = vmatpush1.msra.mxu0 0.0
    %9177 = vmatprep.subr.mxu0 0.0
    %9178 = vmatpush1.msra.mxu0 0.0
    %9179 = vmatprep.mubr.f32.mxu0 0.0
    %9180 = vmatmul.mubr.f32.gmra.mrb[0].mxu0 %v9113
    %v9181 = vpop.f32.mrb[0].mxu0
    %v9182 = vadd.f32 0.0, %v9181
    %v9183 = vpop.f32.mrb[0].mxu0
    %9184 = vdwg.mxu0
    %9185 = vmatprep.subr.mxu0 0.0
    %9186 = vmatpush1.msra.mxu0 %v9100
    %9187 = vmatprep.subr.mxu0 0.0
    %9188 = vmatpush1.msra.mxu0 %v9101
    %9189 = vmatprep.subr.mxu0 0.0
    %9190 = vmatpush1.msra.mxu0 %v9102
    %9191 = vmatprep.subr.mxu0 0.0
    %9192 = vmatpush1.msra.mxu0 %v9103
    %9193 = vmatprep.subr.mxu0 0.0
    %9194 = vmatpush1.msra.mxu0 0.0
    %9195 = vmatprep.subr.mxu0 0.0
    %9196 = vmatpush1.msra.mxu0 0.0
    %9197 = vmatprep.subr.mxu0 0.0
    %9198 = vmatpush1.msra.mxu0 0.0
    %9199 = vmatprep.subr.mxu0 0.0
    %9200 = vmatpush1.msra.mxu0 0.0
    %9201 = vmatprep.subr.mxu0 0.0
    %9202 = vmatpush1.msra.mxu0 0.0
    %9203 = vmatprep.subr.mxu0 0.0
    %9204 = vmatpush1.msra.mxu0 0.0
    %9205 = vmatprep.subr.mxu0 0.0
    %9206 = vmatpush1.msra.mxu0 0.0
    %9207 = vmatprep.subr.mxu0 0.0
    %9208 = vmatpush1.msra.mxu0 0.0
    %9209 = vmatprep.subr.mxu0 0.0
    %9210 = vmatpush1.msra.mxu0 0.0
    %9211 = vmatprep.subr.mxu0 0.0
    %9212 = vmatpush1.msra.mxu0 0.0
    %9213 = vmatprep.subr.mxu0 0.0
    %9214 = vmatpush1.msra.mxu0 0.0
    %9215 = vmatprep.subr.mxu0 0.0
    %9216 = vmatpush1.msra.mxu0 0.0
    %9217 = vmatprep.subr.mxu0 0.0
    %9218 = vmatpush1.msra.mxu0 0.0
    %9219 = vmatprep.subr.mxu0 0.0
    %9220 = vmatpush1.msra.mxu0 0.0
    %9221 = vmatprep.subr.mxu0 0.0
    %9222 = vmatpush1.msra.mxu0 0.0
    %9223 = vmatprep.subr.mxu0 0.0
    %9224 = vmatpush1.msra.mxu0 0.0
    %9225 = vmatprep.subr.mxu0 0.0
    %9226 = vmatpush1.msra.mxu0 0.0
    %9227 = vmatprep.subr.mxu0 0.0
    %9228 = vmatpush1.msra.mxu0 0.0
    %9229 = vmatprep.subr.mxu0 0.0
    %9230 = vmatpush1.msra.mxu0 0.0
    %9231 = vmatprep.subr.mxu0 0.0
    %9232 = vmatpush1.msra.mxu0 0.0
    %9233 = vmatprep.subr.mxu0 0.0
    %9234 = vmatpush1.msra.mxu0 0.0
    %9235 = vmatprep.subr.mxu0 0.0
    %9236 = vmatpush1.msra.mxu0 0.0
    %9237 = vmatprep.subr.mxu0 0.0
    %9238 = vmatpush1.msra.mxu0 0.0
    %9239 = vmatprep.subr.mxu0 0.0
    %9240 = vmatpush1.msra.mxu0 0.0
    %9241 = vmatprep.subr.mxu0 0.0
    %9242 = vmatpush1.msra.mxu0 0.0
    %9243 = vmatprep.subr.mxu0 0.0
    %9244 = vmatpush1.msra.mxu0 0.0
    %9245 = vmatprep.subr.mxu0 0.0
    %9246 = vmatpush1.msra.mxu0 0.0
    %9247 = vmatprep.subr.mxu0 0.0
    %9248 = vmatpush1.msra.mxu0 0.0
    %9249 = vmatprep.mubr.f32.mxu0 0.0
    %9250 = vmatmul.mubr.f32.gmra.mrb[0].mxu0 %v9113
    %v9251 = vpop.f32.mrb[0].mxu0
    %v9252 = vadd.f32 0.0, %v9251
    %v9253 = vpop.f32.mrb[0].mxu0
    %9254 = vdwg.mxu0
    %9255 = vmatprep.subr.mxu0 0.0
    %9256 = vmatpush1.msra.mxu0 %v9104
    %9257 = vmatprep.subr.mxu0 0.0
    %9258 = vmatpush1.msra.mxu0 %v9105
    %9259 = vmatprep.subr.mxu0 0.0
    %9260 = vmatpush1.msra.mxu0 %v9106
    %9261 = vmatprep.subr.mxu0 0.0
    %9262 = vmatpush1.msra.mxu0 %v9107
    %9263 = vmatprep.subr.mxu0 0.0
    %9264 = vmatpush1.msra.mxu0 0.0
    %9265 = vmatprep.subr.mxu0 0.0
    %9266 = vmatpush1.msra.mxu0 0.0
    %9267 = vmatprep.subr.mxu0 0.0
    %9268 = vmatpush1.msra.mxu0 0.0
    %9269 = vmatprep.subr.mxu0 0.0
    %9270 = vmatpush1.msra.mxu0 0.0
    %9271 = vmatprep.subr.mxu0 0.0
    %9272 = vmatpush1.msra.mxu0 0.0
    %9273 = vmatprep.subr.mxu0 0.0
    %9274 = vmatpush1.msra.mxu0 0.0
    %9275 = vmatprep.subr.mxu0 0.0
    %9276 = vmatpush1.msra.mxu0 0.0
    %9277 = vmatprep.subr.mxu0 0.0
    %9278 = vmatpush1.msra.mxu0 0.0
    %9279 = vmatprep.subr.mxu0 0.0
    %9280 = vmatpush1.msra.mxu0 0.0
    %9281 = vmatprep.subr.mxu0 0.0
    %9282 = vmatpush1.msra.mxu0 0.0
    %9283 = vmatprep.subr.mxu0 0.0
    %9284 = vmatpush1.msra.mxu0 0.0
    %9285 = vmatprep.subr.mxu0 0.0
    %9286 = vmatpush1.msra.mxu0 0.0
    %9287 = vmatprep.subr.mxu0 0.0
    %9288 = vmatpush1.msra.mxu0 0.0
    %9289 = vmatprep.subr.mxu0 0.0
    %9290 = vmatpush1.msra.mxu0 0.0
    %9291 = vmatprep.subr.mxu0 0.0
    %9292 = vmatpush1.msra.mxu0 0.0
    %9293 = vmatprep.subr.mxu0 0.0
    %9294 = vmatpush1.msra.mxu0 0.0
    %9295 = vmatprep.subr.mxu0 0.0
    %9296 = vmatpush1.msra.mxu0 0.0
    %9297 = vmatprep.subr.mxu0 0.0
    %9298 = vmatpush1.msra.mxu0 0.0
    %9299 = vmatprep.subr.mxu0 0.0
    %9300 = vmatpush1.msra.mxu0 0.0
    %9301 = vmatprep.subr.mxu0 0.0
    %9302 = vmatpush1.msra.mxu0 0.0
    %9303 = vmatprep.subr.mxu0 0.0
    %9304 = vmatpush1.msra.mxu0 0.0
    %9305 = vmatprep.subr.mxu0 0.0
    %9306 = vmatpush1.msra.mxu0 0.0
    %9307 = vmatprep.subr.mxu0 0.0
    %9308 = vmatpush1.msra.mxu0 0.0
    %9309 = vmatprep.subr.mxu0 0.0
    %9310 = vmatpush1.msra.mxu0 0.0
    %9311 = vmatprep.subr.mxu0 0.0
    %9312 = vmatpush1.msra.mxu0 0.0
    %9313 = vmatprep.subr.mxu0 0.0
    %9314 = vmatpush1.msra.mxu0 0.0
    %9315 = vmatprep.subr.mxu0 0.0
    %9316 = vmatpush1.msra.mxu0 0.0
    %9317 = vmatprep.subr.mxu0 0.0
    %9318 = vmatpush1.msra.mxu0 0.0
    %9319 = vmatprep.mubr.f32.mxu0 0.0
    %9320 = vmatmul.mubr.f32.gmra.mrb[0].mxu0 %v9113
    %v9321 = vpop.f32.mrb[0].mxu0
    %v9322 = vadd.f32 0.0, %v9321
    %v9323 = vpop.f32.mrb[0].mxu0
    %9324 = vdwg.mxu0
    %9325 = vmatprep.subr.mxu0 0.0
    %9326 = vmatpush1.msra.mxu0 %v9108
    %9327 = vmatprep.subr.mxu0 0.0
    %9328 = vmatpush1.msra.mxu0 %v9109
    %9329 = vmatprep.subr.mxu0 0.0
    %9330 = vmatpush1.msra.mxu0 %v9110
    %9331 = vmatprep.subr.mxu0 0.0
    %9332 = vmatpush1.msra.mxu0 %v9111
    %9333 = vmatprep.subr.mxu0 0.0
    %9334 = vmatpush1.msra.mxu0 0.0
    %9335 = vmatprep.subr.mxu0 0.0
    %9336 = vmatpush1.msra.mxu0 0.0
    %9337 = vmatprep.subr.mxu0 0.0
    %9338 = vmatpush1.msra.mxu0 0.0
    %9339 = vmatprep.subr.mxu0 0.0
    %9340 = vmatpush1.msra.mxu0 0.0
    %9341 = vmatprep.subr.mxu0 0.0
    %9342 = vmatpush1.msra.mxu0 0.0
    %9343 = vmatprep.subr.mxu0 0.0
    %9344 = vmatpush1.msra.mxu0 0.0
    %9345 = vmatprep.subr.mxu0 0.0
    %9346 = vmatpush1.msra.mxu0 0.0
    %9347 = vmatprep.subr.mxu0 0.0
    %9348 = vmatpush1.msra.mxu0 0.0
    %9349 = vmatprep.subr.mxu0 0.0
    %9350 = vmatpush1.msra.mxu0 0.0
    %9351 = vmatprep.subr.mxu0 0.0
    %9352 = vmatpush1.msra.mxu0 0.0
    %9353 = vmatprep.subr.mxu0 0.0
    %9354 = vmatpush1.msra.mxu0 0.0
    %9355 = vmatprep.subr.mxu0 0.0
    %9356 = vmatpush1.msra.mxu0 0.0
    %9357 = vmatprep.subr.mxu0 0.0
    %9358 = vmatpush1.msra.mxu0 0.0
    %9359 = vmatprep.subr.mxu0 0.0
    %9360 = vmatpush1.msra.mxu0 0.0
    %9361 = vmatprep.subr.mxu0 0.0
    %9362 = vmatpush1.msra.mxu0 0.0
    %9363 = vmatprep.subr.mxu0 0.0
    %9364 = vmatpush1.msra.mxu0 0.0
    %9365 = vmatprep.subr.mxu0 0.0
    %9366 = vmatpush1.msra.mxu0 0.0
    %9367 = vmatprep.subr.mxu0 0.0
    %9368 = vmatpush1.msra.mxu0 0.0
    %9369 = vmatprep.subr.mxu0 0.0
    %9370 = vmatpush1.msra.mxu0 0.0
    %9371 = vmatprep.subr.mxu0 0.0
    %9372 = vmatpush1.msra.mxu0 0.0
    %9373 = vmatprep.subr.mxu0 0.0
    %9374 = vmatpush1.msra.mxu0 0.0
    %9375 = vmatprep.subr.mxu0 0.0
    %9376 = vmatpush1.msra.mxu0 0.0
    %9377 = vmatprep.subr.mxu0 0.0
    %9378 = vmatpush1.msra.mxu0 0.0
    %9379 = vmatprep.subr.mxu0 0.0
    %9380 = vmatpush1.msra.mxu0 0.0
    %9381 = vmatprep.subr.mxu0 0.0
    %9382 = vmatpush1.msra.mxu0 0.0
    %9383 = vmatprep.subr.mxu0 0.0
    %9384 = vmatpush1.msra.mxu0 0.0
    %9385 = vmatprep.subr.mxu0 0.0
    %9386 = vmatpush1.msra.mxu0 0.0
    %9387 = vmatprep.subr.mxu0 0.0
    %9388 = vmatpush1.msra.mxu0 0.0
    %9389 = vmatprep.mubr.f32.mxu0 0.0
    %9390 = vmatmul.mubr.f32.gmra.mrb[0].mxu0 %v9113
    %v9391 = vpop.f32.mrb[0].mxu0
    %v9392 = vadd.f32 0.0, %v9391
    %v9393 = vpop.f32.mrb[0].mxu0
    %9394 = vdwg.mxu0
    %v9396 = vsel %vm73, %v8517, 0
    %9398 = vmatprep.subr.mxu0 0.0
    %9399 = vmatpush1.msra.mxu0 %v9096
    %9400 = vmatprep.subr.mxu0 0.0
    %9401 = vmatpush1.msra.mxu0 %v9097
    %9402 = vmatprep.subr.mxu0 0.0
    %9403 = vmatpush1.msra.mxu0 %v9098
    %9404 = vmatprep.subr.mxu0 0.0
    %9405 = vmatpush1.msra.mxu0 %v9099
    %9406 = vmatprep.subr.mxu0 0.0
    %9407 = vmatpush1.msra.mxu0 0.0
    %9408 = vmatprep.subr.mxu0 0.0
    %9409 = vmatpush1.msra.mxu0 0.0
    %9410 = vmatprep.subr.mxu0 0.0
    %9411 = vmatpush1.msra.mxu0 0.0
    %9412 = vmatprep.subr.mxu0 0.0
    %9413 = vmatpush1.msra.mxu0 0.0
    %9414 = vmatprep.subr.mxu0 0.0
    %9415 = vmatpush1.msra.mxu0 0.0
    %9416 = vmatprep.subr.mxu0 0.0
    %9417 = vmatpush1.msra.mxu0 0.0
    %9418 = vmatprep.subr.mxu0 0.0
    %9419 = vmatpush1.msra.mxu0 0.0
    %9420 = vmatprep.subr.mxu0 0.0
    %9421 = vmatpush1.msra.mxu0 0.0
    %9422 = vmatprep.subr.mxu0 0.0
    %9423 = vmatpush1.msra.mxu0 0.0
    %9424 = vmatprep.subr.mxu0 0.0
    %9425 = vmatpush1.msra.mxu0 0.0
    %9426 = vmatprep.subr.mxu0 0.0
    %9427 = vmatpush1.msra.mxu0 0.0
    %9428 = vmatprep.subr.mxu0 0.0
    %9429 = vmatpush1.msra.mxu0 0.0
    %9430 = vmatprep.subr.mxu0 0.0
    %9431 = vmatpush1.msra.mxu0 0.0
    %9432 = vmatprep.subr.mxu0 0.0
    %9433 = vmatpush1.msra.mxu0 0.0
    %9434 = vmatprep.subr.mxu0 0.0
    %9435 = vmatpush1.msra.mxu0 0.0
    %9436 = vmatprep.subr.mxu0 0.0
    %9437 = vmatpush1.msra.mxu0 0.0
    %9438 = vmatprep.subr.mxu0 0.0
    %9439 = vmatpush1.msra.mxu0 0.0
    %9440 = vmatprep.subr.mxu0 0.0
    %9441 = vmatpush1.msra.mxu0 0.0
    %9442 = vmatprep.subr.mxu0 0.0
    %9443 = vmatpush1.msra.mxu0 0.0
    %9444 = vmatprep.subr.mxu0 0.0
    %9445 = vmatpush1.msra.mxu0 0.0
    %9446 = vmatprep.subr.mxu0 0.0
    %9447 = vmatpush1.msra.mxu0 0.0
    %9448 = vmatprep.subr.mxu0 0.0
    %9449 = vmatpush1.msra.mxu0 0.0
    %9450 = vmatprep.subr.mxu0 0.0
    %9451 = vmatpush1.msra.mxu0 0.0
    %9452 = vmatprep.subr.mxu0 0.0
    %9453 = vmatpush1.msra.mxu0 0.0
    %9454 = vmatprep.subr.mxu0 0.0
    %9455 = vmatpush1.msra.mxu0 0.0
    %9456 = vmatprep.subr.mxu0 0.0
    %9457 = vmatpush1.msra.mxu0 0.0
    %9458 = vmatprep.subr.mxu0 0.0
    %9459 = vmatpush1.msra.mxu0 0.0
    %9460 = vmatprep.subr.mxu0 0.0
    %9461 = vmatpush1.msra.mxu0 0.0
    %9462 = vmatprep.mubr.f32.mxu0 0.0
    %9463 = vmatmul.mubr.f32.gmra.mrb[0].mxu0 %v9396
    %v9464 = vpop.f32.mrb[0].mxu0
    %v9465 = vadd.f32 0.0, %v9464
    %v9466 = vpop.f32.mrb[0].mxu0
    %9467 = vdwg.mxu0
    %9468 = vmatprep.subr.mxu0 0.0
    %9469 = vmatpush1.msra.mxu0 %v9100
    %9470 = vmatprep.subr.mxu0 0.0
    %9471 = vmatpush1.msra.mxu0 %v9101
    %9472 = vmatprep.subr.mxu0 0.0
    %9473 = vmatpush1.msra.mxu0 %v9102
    %9474 = vmatprep.subr.mxu0 0.0
    %9475 = vmatpush1.msra.mxu0 %v9103
    %9476 = vmatprep.subr.mxu0 0.0
    %9477 = vmatpush1.msra.mxu0 0.0
    %9478 = vmatprep.subr.mxu0 0.0
    %9479 = vmatpush1.msra.mxu0 0.0
    %9480 = vmatprep.subr.mxu0 0.0
    %9481 = vmatpush1.msra.mxu0 0.0
    %9482 = vmatprep.subr.mxu0 0.0
    %9483 = vmatpush1.msra.mxu0 0.0
    %9484 = vmatprep.subr.mxu0 0.0
    %9485 = vmatpush1.msra.mxu0 0.0
    %9486 = vmatprep.subr.mxu0 0.0
    %9487 = vmatpush1.msra.mxu0 0.0
    %9488 = vmatprep.subr.mxu0 0.0
    %9489 = vmatpush1.msra.mxu0 0.0
    %9490 = vmatprep.subr.mxu0 0.0
    %9491 = vmatpush1.msra.mxu0 0.0
    %9492 = vmatprep.subr.mxu0 0.0
    %9493 = vmatpush1.msra.mxu0 0.0
    %9494 = vmatprep.subr.mxu0 0.0
    %9495 = vmatpush1.msra.mxu0 0.0
    %9496 = vmatprep.subr.mxu0 0.0
    %9497 = vmatpush1.msra.mxu0 0.0
    %9498 = vmatprep.subr.mxu0 0.0
    %9499 = vmatpush1.msra.mxu0 0.0
    %9500 = vmatprep.subr.mxu0 0.0
    %9501 = vmatpush1.msra.mxu0 0.0
    %9502 = vmatprep.subr.mxu0 0.0
    %9503 = vmatpush1.msra.mxu0 0.0
    %9504 = vmatprep.subr.mxu0 0.0
    %9505 = vmatpush1.msra.mxu0 0.0
    %9506 = vmatprep.subr.mxu0 0.0
    %9507 = vmatpush1.msra.mxu0 0.0
    %9508 = vmatprep.subr.mxu0 0.0
    %9509 = vmatpush1.msra.mxu0 0.0
    %9510 = vmatprep.subr.mxu0 0.0
    %9511 = vmatpush1.msra.mxu0 0.0
    %9512 = vmatprep.subr.mxu0 0.0
    %9513 = vmatpush1.msra.mxu0 0.0
    %9514 = vmatprep.subr.mxu0 0.0
    %9515 = vmatpush1.msra.mxu0 0.0
    %9516 = vmatprep.subr.mxu0 0.0
    %9517 = vmatpush1.msra.mxu0 0.0
    %9518 = vmatprep.subr.mxu0 0.0
    %9519 = vmatpush1.msra.mxu0 0.0
    %9520 = vmatprep.subr.mxu0 0.0
    %9521 = vmatpush1.msra.mxu0 0.0
    %9522 = vmatprep.subr.mxu0 0.0
    %9523 = vmatpush1.msra.mxu0 0.0
    %9524 = vmatprep.subr.mxu0 0.0
    %9525 = vmatpush1.msra.mxu0 0.0
    %9526 = vmatprep.subr.mxu0 0.0
    %9527 = vmatpush1.msra.mxu0 0.0
    %9528 = vmatprep.subr.mxu0 0.0
    %9529 = vmatpush1.msra.mxu0 0.0
    %9530 = vmatprep.subr.mxu0 0.0
    %9531 = vmatpush1.msra.mxu0 0.0
    %9532 = vmatprep.mubr.f32.mxu0 0.0
    %9533 = vmatmul.mubr.f32.gmra.mrb[0].mxu0 %v9396
    %v9534 = vpop.f32.mrb[0].mxu0
    %v9535 = vadd.f32 0.0, %v9534
    %v9536 = vpop.f32.mrb[0].mxu0
    %9537 = vdwg.mxu0
    %9538 = vmatprep.subr.mxu0 0.0
    %9539 = vmatpush1.msra.mxu0 %v9104
    %9540 = vmatprep.subr.mxu0 0.0
    %9541 = vmatpush1.msra.mxu0 %v9105
    %9542 = vmatprep.subr.mxu0 0.0
    %9543 = vmatpush1.msra.mxu0 %v9106
    %9544 = vmatprep.subr.mxu0 0.0
    %9545 = vmatpush1.msra.mxu0 %v9107
    %9546 = vmatprep.subr.mxu0 0.0
    %9547 = vmatpush1.msra.mxu0 0.0
    %9548 = vmatprep.subr.mxu0 0.0
    %9549 = vmatpush1.msra.mxu0 0.0
    %9550 = vmatprep.subr.mxu0 0.0
    %9551 = vmatpush1.msra.mxu0 0.0
    %9552 = vmatprep.subr.mxu0 0.0
    %9553 = vmatpush1.msra.mxu0 0.0
    %9554 = vmatprep.subr.mxu0 0.0
    %9555 = vmatpush1.msra.mxu0 0.0
    %9556 = vmatprep.subr.mxu0 0.0
    %9557 = vmatpush1.msra.mxu0 0.0
    %9558 = vmatprep.subr.mxu0 0.0
    %9559 = vmatpush1.msra.mxu0 0.0
    %9560 = vmatprep.subr.mxu0 0.0
    %9561 = vmatpush1.msra.mxu0 0.0
    %9562 = vmatprep.subr.mxu0 0.0
    %9563 = vmatpush1.msra.mxu0 0.0
    %9564 = vmatprep.subr.mxu0 0.0
    %9565 = vmatpush1.msra.mxu0 0.0
    %9566 = vmatprep.subr.mxu0 0.0
    %9567 = vmatpush1.msra.mxu0 0.0
    %9568 = vmatprep.subr.mxu0 0.0
    %9569 = vmatpush1.msra.mxu0 0.0
    %9570 = vmatprep.subr.mxu0 0.0
    %9571 = vmatpush1.msra.mxu0 0.0
    %9572 = vmatprep.subr.mxu0 0.0
    %9573 = vmatpush1.msra.mxu0 0.0
    %9574 = vmatprep.subr.mxu0 0.0
    %9575 = vmatpush1.msra.mxu0 0.0
    %9576 = vmatprep.subr.mxu0 0.0
    %9577 = vmatpush1.msra.mxu0 0.0
    %9578 = vmatprep.subr.mxu0 0.0
    %9579 = vmatpush1.msra.mxu0 0.0
    %9580 = vmatprep.subr.mxu0 0.0
    %9581 = vmatpush1.msra.mxu0 0.0
    %9582 = vmatprep.subr.mxu0 0.0
    %9583 = vmatpush1.msra.mxu0 0.0
    %9584 = vmatprep.subr.mxu0 0.0
    %9585 = vmatpush1.msra.mxu0 0.0
    %9586 = vmatprep.subr.mxu0 0.0
    %9587 = vmatpush1.msra.mxu0 0.0
    %9588 = vmatprep.subr.mxu0 0.0
    %9589 = vmatpush1.msra.mxu0 0.0
    %9590 = vmatprep.subr.mxu0 0.0
    %9591 = vmatpush1.msra.mxu0 0.0
    %9592 = vmatprep.subr.mxu0 0.0
    %9593 = vmatpush1.msra.mxu0 0.0
    %9594 = vmatprep.subr.mxu0 0.0
    %9595 = vmatpush1.msra.mxu0 0.0
    %9596 = vmatprep.subr.mxu0 0.0
    %9597 = vmatpush1.msra.mxu0 0.0
    %9598 = vmatprep.subr.mxu0 0.0
    %9599 = vmatpush1.msra.mxu0 0.0
    %9600 = vmatprep.subr.mxu0 0.0
    %9601 = vmatpush1.msra.mxu0 0.0
    %9602 = vmatprep.mubr.f32.mxu0 0.0
    %9603 = vmatmul.mubr.f32.gmra.mrb[0].mxu0 %v9396
    %v9604 = vpop.f32.mrb[0].mxu0
    %v9605 = vadd.f32 0.0, %v9604
    %v9606 = vpop.f32.mrb[0].mxu0
    %9607 = vdwg.mxu0
    %9608 = vmatprep.subr.mxu0 0.0
    %9609 = vmatpush1.msra.mxu0 %v9108
    %9610 = vmatprep.subr.mxu0 0.0
    %9611 = vmatpush1.msra.mxu0 %v9109
    %9612 = vmatprep.subr.mxu0 0.0
    %9613 = vmatpush1.msra.mxu0 %v9110
    %9614 = vmatprep.subr.mxu0 0.0
    %9615 = vmatpush1.msra.mxu0 %v9111
    %9616 = vmatprep.subr.mxu0 0.0
    %9617 = vmatpush1.msra.mxu0 0.0
    %9618 = vmatprep.subr.mxu0 0.0
    %9619 = vmatpush1.msra.mxu0 0.0
    %9620 = vmatprep.subr.mxu0 0.0
    %9621 = vmatpush1.msra.mxu0 0.0
    %9622 = vmatprep.subr.mxu0 0.0
    %9623 = vmatpush1.msra.mxu0 0.0
    %9624 = vmatprep.subr.mxu0 0.0
    %9625 = vmatpush1.msra.mxu0 0.0
    %9626 = vmatprep.subr.mxu0 0.0
    %9627 = vmatpush1.msra.mxu0 0.0
    %9628 = vmatprep.subr.mxu0 0.0
    %9629 = vmatpush1.msra.mxu0 0.0
    %9630 = vmatprep.subr.mxu0 0.0
    %9631 = vmatpush1.msra.mxu0 0.0
    %9632 = vmatprep.subr.mxu0 0.0
    %9633 = vmatpush1.msra.mxu0 0.0
    %9634 = vmatprep.subr.mxu0 0.0
    %9635 = vmatpush1.msra.mxu0 0.0
    %9636 = vmatprep.subr.mxu0 0.0
    %9637 = vmatpush1.msra.mxu0 0.0
    %9638 = vmatprep.subr.mxu0 0.0
    %9639 = vmatpush1.msra.mxu0 0.0
    %9640 = vmatprep.subr.mxu0 0.0
    %9641 = vmatpush1.msra.mxu0 0.0
    %9642 = vmatprep.subr.mxu0 0.0
    %9643 = vmatpush1.msra.mxu0 0.0
    %9644 = vmatprep.subr.mxu0 0.0
    %9645 = vmatpush1.msra.mxu0 0.0
    %9646 = vmatprep.subr.mxu0 0.0
    %9647 = vmatpush1.msra.mxu0 0.0
    %9648 = vmatprep.subr.mxu0 0.0
    %9649 = vmatpush1.msra.mxu0 0.0
    %9650 = vmatprep.subr.mxu0 0.0
    %9651 = vmatpush1.msra.mxu0 0.0
    %9652 = vmatprep.subr.mxu0 0.0
    %9653 = vmatpush1.msra.mxu0 0.0
    %9654 = vmatprep.subr.mxu0 0.0
    %9655 = vmatpush1.msra.mxu0 0.0
    %9656 = vmatprep.subr.mxu0 0.0
    %9657 = vmatpush1.msra.mxu0 0.0
    %9658 = vmatprep.subr.mxu0 0.0
    %9659 = vmatpush1.msra.mxu0 0.0
    %9660 = vmatprep.subr.mxu0 0.0
    %9661 = vmatpush1.msra.mxu0 0.0
    %9662 = vmatprep.subr.mxu0 0.0
    %9663 = vmatpush1.msra.mxu0 0.0
    %9664 = vmatprep.subr.mxu0 0.0
    %9665 = vmatpush1.msra.mxu0 0.0
    %9666 = vmatprep.subr.mxu0 0.0
    %9667 = vmatpush1.msra.mxu0 0.0
    %9668 = vmatprep.subr.mxu0 0.0
    %9669 = vmatpush1.msra.mxu0 0.0
    %9670 = vmatprep.subr.mxu0 0.0
    %9671 = vmatpush1.msra.mxu0 0.0
    %9672 = vmatprep.mubr.f32.mxu0 0.0
    %9673 = vmatmul.mubr.f32.gmra.mrb[0].mxu0 %v9396
    %v9674 = vpop.f32.mrb[0].mxu0
    %v9675 = vadd.f32 0.0, %v9674
    %v9676 = vpop.f32.mrb[0].mxu0
    %9677 = vdwg.mxu0
    %s9678 = scalar_lea.vmem %s7, 32
    %v9679 = vld [vmem:[%s9678] sm:$0xff]
    %v9680 = vld [vmem:[%s9678 + $0x8] sm:$0xff]
    %v9681 = vld [vmem:[%s9678 + $0x10] sm:$0xff]
    %v9682 = vld [vmem:[%s9678 + $0x18] sm:$0xff]
    %v9684 = vsel %vm647, %v9182, 0
    %v9687 = vsel %vm647, %v8602, 0
    %9689 = vmatprep.subr.mxu0 0.0
    %9690 = vmatpush1.xpose.msra.mxu0 %v9687
    %9691 = vmatprep.subr.mxu0 0.0
    %9692 = vmatpush1.xpose.msra.mxu0 0.0
    %9693 = vmatprep.subr.mxu0 0.0
    %9694 = vmatpush1.xpose.msra.mxu0 0.0
    %9695 = vmatprep.subr.mxu0 0.0
    %9696 = vmatpush1.xpose.msra.mxu0 0.0
    %9697 = vmatprep.subr.mxu0 0.0
    %9698 = vmatpush1.xpose.msra.mxu0 0.0
    %9699 = vmatprep.subr.mxu0 0.0
    %9700 = vmatpush1.xpose.msra.mxu0 0.0
    %9701 = vmatprep.subr.mxu0 0.0
    %9702 = vmatpush1.xpose.msra.mxu0 0.0
    %9703 = vmatprep.subr.mxu0 0.0
    %9704 = vmatpush1.xpose.msra.mxu0 0.0
    %9705 = vmatprep.subr.mxu0 0.0
    %9706 = vmatpush1.xpose.msra.mxu0 0.0
    %9707 = vmatprep.subr.mxu0 0.0
    %9708 = vmatpush1.xpose.msra.mxu0 0.0
    %9709 = vmatprep.subr.mxu0 0.0
    %9710 = vmatpush1.xpose.msra.mxu0 0.0
    %9711 = vmatprep.subr.mxu0 0.0
    %9712 = vmatpush1.xpose.msra.mxu0 0.0
    %9713 = vmatprep.subr.mxu0 0.0
    %9714 = vmatpush1.xpose.msra.mxu0 0.0
    %9715 = vmatprep.subr.mxu0 0.0
    %9716 = vmatpush1.xpose.msra.mxu0 0.0
    %9717 = vmatprep.subr.mxu0 0.0
    %9718 = vmatpush1.xpose.msra.mxu0 0.0
    %9719 = vmatprep.subr.mxu0 0.0
    %9720 = vmatpush1.xpose.msra.mxu0 0.0
    %9721 = vmatprep.subr.mxu0 0.0
    %9722 = vmatpush1.xpose.msra.mxu0 0.0
    %9723 = vmatprep.subr.mxu0 0.0
    %9724 = vmatpush1.xpose.msra.mxu0 0.0
    %9725 = vmatprep.subr.mxu0 0.0
    %9726 = vmatpush1.xpose.msra.mxu0 0.0
    %9727 = vmatprep.subr.mxu0 0.0
    %9728 = vmatpush1.xpose.msra.mxu0 0.0
    %9729 = vmatprep.subr.mxu0 0.0
    %9730 = vmatpush1.xpose.msra.mxu0 0.0
    %9731 = vmatprep.subr.mxu0 0.0
    %9732 = vmatpush1.xpose.msra.mxu0 0.0
    %9733 = vmatprep.subr.mxu0 0.0
    %9734 = vmatpush1.xpose.msra.mxu0 0.0
    %9735 = vmatprep.subr.mxu0 0.0
    %9736 = vmatpush1.xpose.msra.mxu0 0.0
    %9737 = vmatprep.subr.mxu0 0.0
    %9738 = vmatpush1.xpose.msra.mxu0 0.0
    %9739 = vmatprep.subr.mxu0 0.0
    %9740 = vmatpush1.xpose.msra.mxu0 0.0
    %9741 = vmatprep.subr.mxu0 0.0
    %9742 = vmatpush1.xpose.msra.mxu0 0.0
    %9743 = vmatprep.subr.mxu0 0.0
    %9744 = vmatpush1.xpose.msra.mxu0 0.0
    %9745 = vmatprep.subr.mxu0 0.0
    %9746 = vmatpush1.xpose.msra.mxu0 0.0
    %9747 = vmatprep.subr.mxu0 0.0
    %9748 = vmatpush1.xpose.msra.mxu0 0.0
    %9749 = vmatprep.subr.mxu0 0.0
    %9750 = vmatpush1.xpose.msra.mxu0 0.0
    %9751 = vmatprep.subr.mxu0 0.0
    %9752 = vmatpush1.xpose.msra.mxu0 0.0
    %9753 = vmatprep.mubr.f32.mxu0 0.0
    %9754 = vmatmul.mubr.f32.gmra.mrb[0].mxu0 %v9684
    %v9755 = vpop.f32.mrb[0].mxu0
    %v9756 = vadd.f32 0.0, %v9755
    %v9757 = vpop.f32.mrb[0].mxu0
    %9758 = vdwg.mxu0
    %v9760 = vsel %vm647, %v9252, 0
    %v9763 = vsel %vm647, %v8672, 0
    %9765 = vmatprep.subr.mxu0 0.0
    %9766 = vmatpush1.xpose.msra.mxu0 %v9763
    %9767 = vmatprep.subr.mxu0 0.0
    %9768 = vmatpush1.xpose.msra.mxu0 0.0
    %9769 = vmatprep.subr.mxu0 0.0
    %9770 = vmatpush1.xpose.msra.mxu0 0.0
    %9771 = vmatprep.subr.mxu0 0.0
    %9772 = vmatpush1.xpose.msra.mxu0 0.0
    %9773 = vmatprep.subr.mxu0 0.0
    %9774 = vmatpush1.xpose.msra.mxu0 0.0
    %9775 = vmatprep.subr.mxu0 0.0
    %9776 = vmatpush1.xpose.msra.mxu0 0.0
    %9777 = vmatprep.subr.mxu0 0.0
    %9778 = vmatpush1.xpose.msra.mxu0 0.0
    %9779 = vmatprep.subr.mxu0 0.0
    %9780 = vmatpush1.xpose.msra.mxu0 0.0
    %9781 = vmatprep.subr.mxu0 0.0
    %9782 = vmatpush1.xpose.msra.mxu0 0.0
    %9783 = vmatprep.subr.mxu0 0.0
    %9784 = vmatpush1.xpose.msra.mxu0 0.0
    %9785 = vmatprep.subr.mxu0 0.0
    %9786 = vmatpush1.xpose.msra.mxu0 0.0
    %9787 = vmatprep.subr.mxu0 0.0
    %9788 = vmatpush1.xpose.msra.mxu0 0.0
    %9789 = vmatprep.subr.mxu0 0.0
    %9790 = vmatpush1.xpose.msra.mxu0 0.0
    %9791 = vmatprep.subr.mxu0 0.0
    %9792 = vmatpush1.xpose.msra.mxu0 0.0
    %9793 = vmatprep.subr.mxu0 0.0
    %9794 = vmatpush1.xpose.msra.mxu0 0.0
    %9795 = vmatprep.subr.mxu0 0.0
    %9796 = vmatpush1.xpose.msra.mxu0 0.0
    %9797 = vmatprep.subr.mxu0 0.0
    %9798 = vmatpush1.xpose.msra.mxu0 0.0
    %9799 = vmatprep.subr.mxu0 0.0
    %9800 = vmatpush1.xpose.msra.mxu0 0.0
    %9801 = vmatprep.subr.mxu0 0.0
    %9802 = vmatpush1.xpose.msra.mxu0 0.0
    %9803 = vmatprep.subr.mxu0 0.0
    %9804 = vmatpush1.xpose.msra.mxu0 0.0
    %9805 = vmatprep.subr.mxu0 0.0
    %9806 = vmatpush1.xpose.msra.mxu0 0.0
    %9807 = vmatprep.subr.mxu0 0.0
    %9808 = vmatpush1.xpose.msra.mxu0 0.0
    %9809 = vmatprep.subr.mxu0 0.0
    %9810 = vmatpush1.xpose.msra.mxu0 0.0
    %9811 = vmatprep.subr.mxu0 0.0
    %9812 = vmatpush1.xpose.msra.mxu0 0.0
    %9813 = vmatprep.subr.mxu0 0.0
    %9814 = vmatpush1.xpose.msra.mxu0 0.0
    %9815 = vmatprep.subr.mxu0 0.0
    %9816 = vmatpush1.xpose.msra.mxu0 0.0
    %9817 = vmatprep.subr.mxu0 0.0
    %9818 = vmatpush1.xpose.msra.mxu0 0.0
    %9819 = vmatprep.subr.mxu0 0.0
    %9820 = vmatpush1.xpose.msra.mxu0 0.0
    %9821 = vmatprep.subr.mxu0 0.0
    %9822 = vmatpush1.xpose.msra.mxu0 0.0
    %9823 = vmatprep.subr.mxu0 0.0
    %9824 = vmatpush1.xpose.msra.mxu0 0.0
    %9825 = vmatprep.subr.mxu0 0.0
    %9826 = vmatpush1.xpose.msra.mxu0 0.0
    %9827 = vmatprep.subr.mxu0 0.0
    %9828 = vmatpush1.xpose.msra.mxu0 0.0
    %9829 = vmatprep.mubr.f32.mxu0 0.0
    %9830 = vmatmul.mubr.f32.gmra.mrb[0].mxu0 %v9760
    %v9831 = vpop.f32.mrb[0].mxu0
    %v9832 = vadd.f32 0.0, %v9831
    %v9833 = vpop.f32.mrb[0].mxu0
    %9834 = vdwg.mxu0
    %v9836 = vsel %vm647, %v9322, 0
    %v9839 = vsel %vm647, %v8742, 0
    %9841 = vmatprep.subr.mxu0 0.0
    %9842 = vmatpush1.xpose.msra.mxu0 %v9839
    %9843 = vmatprep.subr.mxu0 0.0
    %9844 = vmatpush1.xpose.msra.mxu0 0.0
    %9845 = vmatprep.subr.mxu0 0.0
    %9846 = vmatpush1.xpose.msra.mxu0 0.0
    %9847 = vmatprep.subr.mxu0 0.0
    %9848 = vmatpush1.xpose.msra.mxu0 0.0
    %9849 = vmatprep.subr.mxu0 0.0
    %9850 = vmatpush1.xpose.msra.mxu0 0.0
    %9851 = vmatprep.subr.mxu0 0.0
    %9852 = vmatpush1.xpose.msra.mxu0 0.0
    %9853 = vmatprep.subr.mxu0 0.0
    %9854 = vmatpush1.xpose.msra.mxu0 0.0
    %9855 = vmatprep.subr.mxu0 0.0
    %9856 = vmatpush1.xpose.msra.mxu0 0.0
    %9857 = vmatprep.subr.mxu0 0.0
    %9858 = vmatpush1.xpose.msra.mxu0 0.0
    %9859 = vmatprep.subr.mxu0 0.0
    %9860 = vmatpush1.xpose.msra.mxu0 0.0
    %9861 = vmatprep.subr.mxu0 0.0
    %9862 = vmatpush1.xpose.msra.mxu0 0.0
    %9863 = vmatprep.subr.mxu0 0.0
    %9864 = vmatpush1.xpose.msra.mxu0 0.0
    %9865 = vmatprep.subr.mxu0 0.0
    %9866 = vmatpush1.xpose.msra.mxu0 0.0
    %9867 = vmatprep.subr.mxu0 0.0
    %9868 = vmatpush1.xpose.msra.mxu0 0.0
    %9869 = vmatprep.subr.mxu0 0.0
    %9870 = vmatpush1.xpose.msra.mxu0 0.0
    %9871 = vmatprep.subr.mxu0 0.0
    %9872 = vmatpush1.xpose.msra.mxu0 0.0
    %9873 = vmatprep.subr.mxu0 0.0
    %9874 = vmatpush1.xpose.msra.mxu0 0.0
    %9875 = vmatprep.subr.mxu0 0.0
    %9876 = vmatpush1.xpose.msra.mxu0 0.0
    %9877 = vmatprep.subr.mxu0 0.0
    %9878 = vmatpush1.xpose.msra.mxu0 0.0
    %9879 = vmatprep.subr.mxu0 0.0
    %9880 = vmatpush1.xpose.msra.mxu0 0.0
    %9881 = vmatprep.subr.mxu0 0.0
    %9882 = vmatpush1.xpose.msra.mxu0 0.0
    %9883 = vmatprep.subr.mxu0 0.0
    %9884 = vmatpush1.xpose.msra.mxu0 0.0
    %9885 = vmatprep.subr.mxu0 0.0
    %9886 = vmatpush1.xpose.msra.mxu0 0.0
    %9887 = vmatprep.subr.mxu0 0.0
    %9888 = vmatpush1.xpose.msra.mxu0 0.0
    %9889 = vmatprep.subr.mxu0 0.0
    %9890 = vmatpush1.xpose.msra.mxu0 0.0
    %9891 = vmatprep.subr.mxu0 0.0
    %9892 = vmatpush1.xpose.msra.mxu0 0.0
    %9893 = vmatprep.subr.mxu0 0.0
    %9894 = vmatpush1.xpose.msra.mxu0 0.0
    %9895 = vmatprep.subr.mxu0 0.0
    %9896 = vmatpush1.xpose.msra.mxu0 0.0
    %9897 = vmatprep.subr.mxu0 0.0
    %9898 = vmatpush1.xpose.msra.mxu0 0.0
    %9899 = vmatprep.subr.mxu0 0.0
    %9900 = vmatpush1.xpose.msra.mxu0 0.0
    %9901 = vmatprep.subr.mxu0 0.0
    %9902 = vmatpush1.xpose.msra.mxu0 0.0
    %9903 = vmatprep.subr.mxu0 0.0
    %9904 = vmatpush1.xpose.msra.mxu0 0.0
    %9905 = vmatprep.mubr.f32.mxu0 0.0
    %9906 = vmatmul.mubr.f32.gmra.mrb[0].mxu0 %v9836
    %v9907 = vpop.f32.mrb[0].mxu0
    %v9908 = vadd.f32 0.0, %v9907
    %v9909 = vpop.f32.mrb[0].mxu0
    %9910 = vdwg.mxu0
    %v9912 = vsel %vm647, %v9392, 0
    %v9915 = vsel %vm647, %v8812, 0
    %9917 = vmatprep.subr.mxu0 0.0
    %9918 = vmatpush1.xpose.msra.mxu0 %v9915
    %9919 = vmatprep.subr.mxu0 0.0
    %9920 = vmatpush1.xpose.msra.mxu0 0.0
    %9921 = vmatprep.subr.mxu0 0.0
    %9922 = vmatpush1.xpose.msra.mxu0 0.0
    %9923 = vmatprep.subr.mxu0 0.0
    %9924 = vmatpush1.xpose.msra.mxu0 0.0
    %9925 = vmatprep.subr.mxu0 0.0
    %9926 = vmatpush1.xpose.msra.mxu0 0.0
    %9927 = vmatprep.subr.mxu0 0.0
    %9928 = vmatpush1.xpose.msra.mxu0 0.0
    %9929 = vmatprep.subr.mxu0 0.0
    %9930 = vmatpush1.xpose.msra.mxu0 0.0
    %9931 = vmatprep.subr.mxu0 0.0
    %9932 = vmatpush1.xpose.msra.mxu0 0.0
    %9933 = vmatprep.subr.mxu0 0.0
    %9934 = vmatpush1.xpose.msra.mxu0 0.0
    %9935 = vmatprep.subr.mxu0 0.0
    %9936 = vmatpush1.xpose.msra.mxu0 0.0
    %9937 = vmatprep.subr.mxu0 0.0
    %9938 = vmatpush1.xpose.msra.mxu0 0.0
    %9939 = vmatprep.subr.mxu0 0.0
    %9940 = vmatpush1.xpose.msra.mxu0 0.0
    %9941 = vmatprep.subr.mxu0 0.0
    %9942 = vmatpush1.xpose.msra.mxu0 0.0
    %9943 = vmatprep.subr.mxu0 0.0
    %9944 = vmatpush1.xpose.msra.mxu0 0.0
    %9945 = vmatprep.subr.mxu0 0.0
    %9946 = vmatpush1.xpose.msra.mxu0 0.0
    %9947 = vmatprep.subr.mxu0 0.0
    %9948 = vmatpush1.xpose.msra.mxu0 0.0
    %9949 = vmatprep.subr.mxu0 0.0
    %9950 = vmatpush1.xpose.msra.mxu0 0.0
    %9951 = vmatprep.subr.mxu0 0.0
    %9952 = vmatpush1.xpose.msra.mxu0 0.0
    %9953 = vmatprep.subr.mxu0 0.0
    %9954 = vmatpush1.xpose.msra.mxu0 0.0
    %9955 = vmatprep.subr.mxu0 0.0
    %9956 = vmatpush1.xpose.msra.mxu0 0.0
    %9957 = vmatprep.subr.mxu0 0.0
    %9958 = vmatpush1.xpose.msra.mxu0 0.0
    %9959 = vmatprep.subr.mxu0 0.0
    %9960 = vmatpush1.xpose.msra.mxu0 0.0
    %9961 = vmatprep.subr.mxu0 0.0
    %9962 = vmatpush1.xpose.msra.mxu0 0.0
    %9963 = vmatprep.subr.mxu0 0.0
    %9964 = vmatpush1.xpose.msra.mxu0 0.0
    %9965 = vmatprep.subr.mxu0 0.0
    %9966 = vmatpush1.xpose.msra.mxu0 0.0
    %9967 = vmatprep.subr.mxu0 0.0
    %9968 = vmatpush1.xpose.msra.mxu0 0.0
    %9969 = vmatprep.subr.mxu0 0.0
    %9970 = vmatpush1.xpose.msra.mxu0 0.0
    %9971 = vmatprep.subr.mxu0 0.0
    %9972 = vmatpush1.xpose.msra.mxu0 0.0
    %9973 = vmatprep.subr.mxu0 0.0
    %9974 = vmatpush1.xpose.msra.mxu0 0.0
    %9975 = vmatprep.subr.mxu0 0.0
    %9976 = vmatpush1.xpose.msra.mxu0 0.0
    %9977 = vmatprep.subr.mxu0 0.0
    %9978 = vmatpush1.xpose.msra.mxu0 0.0
    %9979 = vmatprep.subr.mxu0 0.0
    %9980 = vmatpush1.xpose.msra.mxu0 0.0
    %9981 = vmatprep.mubr.f32.mxu0 0.0
    %9982 = vmatmul.mubr.f32.gmra.mrb[0].mxu0 %v9912
    %v9983 = vpop.f32.mrb[0].mxu0
    %v9984 = vadd.f32 0.0, %v9983
    %v9985 = vpop.f32.mrb[0].mxu0
    %9986 = vdwg.mxu0
    %v9988 = vsel %vm647, %v9465, 0
    %v9991 = vsel %vm647, %v8882, 0
    %9993 = vmatprep.subr.mxu0 0.0
    %9994 = vmatpush1.xpose.msra.mxu0 %v9991
    %9995 = vmatprep.subr.mxu0 0.0
    %9996 = vmatpush1.xpose.msra.mxu0 0.0
    %9997 = vmatprep.subr.mxu0 0.0
    %9998 = vmatpush1.xpose.msra.mxu0 0.0
    %9999 = vmatprep.subr.mxu0 0.0
    %10000 = vmatpush1.xpose.msra.mxu0 0.0
    %10001 = vmatprep.subr.mxu0 0.0
    %10002 = vmatpush1.xpose.msra.mxu0 0.0
    %10003 = vmatprep.subr.mxu0 0.0
    %10004 = vmatpush1.xpose.msra.mxu0 0.0
    %10005 = vmatprep.subr.mxu0 0.0
    %10006 = vmatpush1.xpose.msra.mxu0 0.0
    %10007 = vmatprep.subr.mxu0 0.0
    %10008 = vmatpush1.xpose.msra.mxu0 0.0
    %10009 = vmatprep.subr.mxu0 0.0
    %10010 = vmatpush1.xpose.msra.mxu0 0.0
    %10011 = vmatprep.subr.mxu0 0.0
    %10012 = vmatpush1.xpose.msra.mxu0 0.0
    %10013 = vmatprep.subr.mxu0 0.0
    %10014 = vmatpush1.xpose.msra.mxu0 0.0
    %10015 = vmatprep.subr.mxu0 0.0
    %10016 = vmatpush1.xpose.msra.mxu0 0.0
    %10017 = vmatprep.subr.mxu0 0.0
    %10018 = vmatpush1.xpose.msra.mxu0 0.0
    %10019 = vmatprep.subr.mxu0 0.0
    %10020 = vmatpush1.xpose.msra.mxu0 0.0
    %10021 = vmatprep.subr.mxu0 0.0
    %10022 = vmatpush1.xpose.msra.mxu0 0.0
    %10023 = vmatprep.subr.mxu0 0.0
    %10024 = vmatpush1.xpose.msra.mxu0 0.0
    %10025 = vmatprep.subr.mxu0 0.0
    %10026 = vmatpush1.xpose.msra.mxu0 0.0
    %10027 = vmatprep.subr.mxu0 0.0
    %10028 = vmatpush1.xpose.msra.mxu0 0.0
    %10029 = vmatprep.subr.mxu0 0.0
    %10030 = vmatpush1.xpose.msra.mxu0 0.0
    %10031 = vmatprep.subr.mxu0 0.0
    %10032 = vmatpush1.xpose.msra.mxu0 0.0
    %10033 = vmatprep.subr.mxu0 0.0
    %10034 = vmatpush1.xpose.msra.mxu0 0.0
    %10035 = vmatprep.subr.mxu0 0.0
    %10036 = vmatpush1.xpose.msra.mxu0 0.0
    %10037 = vmatprep.subr.mxu0 0.0
    %10038 = vmatpush1.xpose.msra.mxu0 0.0
    %10039 = vmatprep.subr.mxu0 0.0
    %10040 = vmatpush1.xpose.msra.mxu0 0.0
    %10041 = vmatprep.subr.mxu0 0.0
    %10042 = vmatpush1.xpose.msra.mxu0 0.0
    %10043 = vmatprep.subr.mxu0 0.0
    %10044 = vmatpush1.xpose.msra.mxu0 0.0
    %10045 = vmatprep.subr.mxu0 0.0
    %10046 = vmatpush1.xpose.msra.mxu0 0.0
    %10047 = vmatprep.subr.mxu0 0.0
    %10048 = vmatpush1.xpose.msra.mxu0 0.0
    %10049 = vmatprep.subr.mxu0 0.0
    %10050 = vmatpush1.xpose.msra.mxu0 0.0
    %10051 = vmatprep.subr.mxu0 0.0
    %10052 = vmatpush1.xpose.msra.mxu0 0.0
    %10053 = vmatprep.subr.mxu0 0.0
    %10054 = vmatpush1.xpose.msra.mxu0 0.0
    %10055 = vmatprep.subr.mxu0 0.0
    %10056 = vmatpush1.xpose.msra.mxu0 0.0
    %10057 = vmatprep.mubr.f32.mxu0 0.0
    %10058 = vmatmul.mubr.f32.gmra.mrb[0].mxu0 %v9988
    %v10059 = vpop.f32.mrb[0].mxu0
    %v10060 = vadd.f32 0.0, %v10059
    %v10061 = vpop.f32.mrb[0].mxu0
    %10062 = vdwg.mxu0
    %v10064 = vsel %vm647, %v9535, 0
    %v10067 = vsel %vm647, %v8952, 0
    %10069 = vmatprep.subr.mxu0 0.0
    %10070 = vmatpush1.xpose.msra.mxu0 %v10067
    %10071 = vmatprep.subr.mxu0 0.0
    %10072 = vmatpush1.xpose.msra.mxu0 0.0
    %10073 = vmatprep.subr.mxu0 0.0
    %10074 = vmatpush1.xpose.msra.mxu0 0.0
    %10075 = vmatprep.subr.mxu0 0.0
    %10076 = vmatpush1.xpose.msra.mxu0 0.0
    %10077 = vmatprep.subr.mxu0 0.0
    %10078 = vmatpush1.xpose.msra.mxu0 0.0
    %10079 = vmatprep.subr.mxu0 0.0
    %10080 = vmatpush1.xpose.msra.mxu0 0.0
    %10081 = vmatprep.subr.mxu0 0.0
    %10082 = vmatpush1.xpose.msra.mxu0 0.0
    %10083 = vmatprep.subr.mxu0 0.0
    %10084 = vmatpush1.xpose.msra.mxu0 0.0
    %10085 = vmatprep.subr.mxu0 0.0
    %10086 = vmatpush1.xpose.msra.mxu0 0.0
    %10087 = vmatprep.subr.mxu0 0.0
    %10088 = vmatpush1.xpose.msra.mxu0 0.0
    %10089 = vmatprep.subr.mxu0 0.0
    %10090 = vmatpush1.xpose.msra.mxu0 0.0
    %10091 = vmatprep.subr.mxu0 0.0
    %10092 = vmatpush1.xpose.msra.mxu0 0.0
    %10093 = vmatprep.subr.mxu0 0.0
    %10094 = vmatpush1.xpose.msra.mxu0 0.0
    %10095 = vmatprep.subr.mxu0 0.0
    %10096 = vmatpush1.xpose.msra.mxu0 0.0
    %10097 = vmatprep.subr.mxu0 0.0
    %10098 = vmatpush1.xpose.msra.mxu0 0.0
    %10099 = vmatprep.subr.mxu0 0.0
    %10100 = vmatpush1.xpose.msra.mxu0 0.0
    %10101 = vmatprep.subr.mxu0 0.0
    %10102 = vmatpush1.xpose.msra.mxu0 0.0
    %10103 = vmatprep.subr.mxu0 0.0
    %10104 = vmatpush1.xpose.msra.mxu0 0.0
    %10105 = vmatprep.subr.mxu0 0.0
    %10106 = vmatpush1.xpose.msra.mxu0 0.0
    %10107 = vmatprep.subr.mxu0 0.0
    %10108 = vmatpush1.xpose.msra.mxu0 0.0
    %10109 = vmatprep.subr.mxu0 0.0
    %10110 = vmatpush1.xpose.msra.mxu0 0.0
    %10111 = vmatprep.subr.mxu0 0.0
    %10112 = vmatpush1.xpose.msra.mxu0 0.0
    %10113 = vmatprep.subr.mxu0 0.0
    %10114 = vmatpush1.xpose.msra.mxu0 0.0
    %10115 = vmatprep.subr.mxu0 0.0
    %10116 = vmatpush1.xpose.msra.mxu0 0.0
    %10117 = vmatprep.subr.mxu0 0.0
    %10118 = vmatpush1.xpose.msra.mxu0 0.0
    %10119 = vmatprep.subr.mxu0 0.0
    %10120 = vmatpush1.xpose.msra.mxu0 0.0
    %10121 = vmatprep.subr.mxu0 0.0
    %10122 = vmatpush1.xpose.msra.mxu0 0.0
    %10123 = vmatprep.subr.mxu0 0.0
    %10124 = vmatpush1.xpose.msra.mxu0 0.0
    %10125 = vmatprep.subr.mxu0 0.0
    %10126 = vmatpush1.xpose.msra.mxu0 0.0
    %10127 = vmatprep.subr.mxu0 0.0
    %10128 = vmatpush1.xpose.msra.mxu0 0.0
    %10129 = vmatprep.subr.mxu0 0.0
    %10130 = vmatpush1.xpose.msra.mxu0 0.0
    %10131 = vmatprep.subr.mxu0 0.0
    %10132 = vmatpush1.xpose.msra.mxu0 0.0
    %10133 = vmatprep.mubr.f32.mxu0 0.0
    %10134 = vmatmul.mubr.f32.gmra.mrb[0].mxu0 %v10064
    %v10135 = vpop.f32.mrb[0].mxu0
    %v10136 = vadd.f32 0.0, %v10135
    %v10137 = vpop.f32.mrb[0].mxu0
    %10138 = vdwg.mxu0
    %v10140 = vsel %vm647, %v9605, 0
    %v10143 = vsel %vm647, %v9022, 0
    %10145 = vmatprep.subr.mxu0 0.0
    %10146 = vmatpush1.xpose.msra.mxu0 %v10143
    %10147 = vmatprep.subr.mxu0 0.0
    %10148 = vmatpush1.xpose.msra.mxu0 0.0
    %10149 = vmatprep.subr.mxu0 0.0
    %10150 = vmatpush1.xpose.msra.mxu0 0.0
    %10151 = vmatprep.subr.mxu0 0.0
    %10152 = vmatpush1.xpose.msra.mxu0 0.0
    %10153 = vmatprep.subr.mxu0 0.0
    %10154 = vmatpush1.xpose.msra.mxu0 0.0
    %10155 = vmatprep.subr.mxu0 0.0
    %10156 = vmatpush1.xpose.msra.mxu0 0.0
    %10157 = vmatprep.subr.mxu0 0.0
    %10158 = vmatpush1.xpose.msra.mxu0 0.0
    %10159 = vmatprep.subr.mxu0 0.0
    %10160 = vmatpush1.xpose.msra.mxu0 0.0
    %10161 = vmatprep.subr.mxu0 0.0
    %10162 = vmatpush1.xpose.msra.mxu0 0.0
    %10163 = vmatprep.subr.mxu0 0.0
    %10164 = vmatpush1.xpose.msra.mxu0 0.0
    %10165 = vmatprep.subr.mxu0 0.0
    %10166 = vmatpush1.xpose.msra.mxu0 0.0
    %10167 = vmatprep.subr.mxu0 0.0
    %10168 = vmatpush1.xpose.msra.mxu0 0.0
    %10169 = vmatprep.subr.mxu0 0.0
    %10170 = vmatpush1.xpose.msra.mxu0 0.0
    %10171 = vmatprep.subr.mxu0 0.0
    %10172 = vmatpush1.xpose.msra.mxu0 0.0
    %10173 = vmatprep.subr.mxu0 0.0
    %10174 = vmatpush1.xpose.msra.mxu0 0.0
    %10175 = vmatprep.subr.mxu0 0.0
    %10176 = vmatpush1.xpose.msra.mxu0 0.0
    %10177 = vmatprep.subr.mxu0 0.0
    %10178 = vmatpush1.xpose.msra.mxu0 0.0
    %10179 = vmatprep.subr.mxu0 0.0
    %10180 = vmatpush1.xpose.msra.mxu0 0.0
    %10181 = vmatprep.subr.mxu0 0.0
    %10182 = vmatpush1.xpose.msra.mxu0 0.0
    %10183 = vmatprep.subr.mxu0 0.0
    %10184 = vmatpush1.xpose.msra.mxu0 0.0
    %10185 = vmatprep.subr.mxu0 0.0
    %10186 = vmatpush1.xpose.msra.mxu0 0.0
    %10187 = vmatprep.subr.mxu0 0.0
    %10188 = vmatpush1.xpose.msra.mxu0 0.0
    %10189 = vmatprep.subr.mxu0 0.0
    %10190 = vmatpush1.xpose.msra.mxu0 0.0
    %10191 = vmatprep.subr.mxu0 0.0
    %10192 = vmatpush1.xpose.msra.mxu0 0.0
    %10193 = vmatprep.subr.mxu0 0.0
    %10194 = vmatpush1.xpose.msra.mxu0 0.0
    %10195 = vmatprep.subr.mxu0 0.0
    %10196 = vmatpush1.xpose.msra.mxu0 0.0
    %10197 = vmatprep.subr.mxu0 0.0
    %10198 = vmatpush1.xpose.msra.mxu0 0.0
    %10199 = vmatprep.subr.mxu0 0.0
    %10200 = vmatpush1.xpose.msra.mxu0 0.0
    %10201 = vmatprep.subr.mxu0 0.0
    %10202 = vmatpush1.xpose.msra.mxu0 0.0
    %10203 = vmatprep.subr.mxu0 0.0
    %10204 = vmatpush1.xpose.msra.mxu0 0.0
    %10205 = vmatprep.subr.mxu0 0.0
    %10206 = vmatpush1.xpose.msra.mxu0 0.0
    %10207 = vmatprep.subr.mxu0 0.0
    %10208 = vmatpush1.xpose.msra.mxu0 0.0
    %10209 = vmatprep.mubr.f32.mxu0 0.0
    %10210 = vmatmul.mubr.f32.gmra.mrb[0].mxu0 %v10140
    %v10211 = vpop.f32.mrb[0].mxu0
    %v10212 = vadd.f32 0.0, %v10211
    %v10213 = vpop.f32.mrb[0].mxu0
    %10214 = vdwg.mxu0
    %v10216 = vsel %vm647, %v9675, 0
    %v10219 = vsel %vm647, %v9092, 0
    %10221 = vmatprep.subr.mxu0 0.0
    %10222 = vmatpush1.xpose.msra.mxu0 %v10219
    %10223 = vmatprep.subr.mxu0 0.0
    %10224 = vmatpush1.xpose.msra.mxu0 0.0
    %10225 = vmatprep.subr.mxu0 0.0
    %10226 = vmatpush1.xpose.msra.mxu0 0.0
    %10227 = vmatprep.subr.mxu0 0.0
    %10228 = vmatpush1.xpose.msra.mxu0 0.0
    %10229 = vmatprep.subr.mxu0 0.0
    %10230 = vmatpush1.xpose.msra.mxu0 0.0
    %10231 = vmatprep.subr.mxu0 0.0
    %10232 = vmatpush1.xpose.msra.mxu0 0.0
    %10233 = vmatprep.subr.mxu0 0.0
    %10234 = vmatpush1.xpose.msra.mxu0 0.0
    %10235 = vmatprep.subr.mxu0 0.0
    %10236 = vmatpush1.xpose.msra.mxu0 0.0
    %10237 = vmatprep.subr.mxu0 0.0
    %10238 = vmatpush1.xpose.msra.mxu0 0.0
    %10239 = vmatprep.subr.mxu0 0.0
    %10240 = vmatpush1.xpose.msra.mxu0 0.0
    %10241 = vmatprep.subr.mxu0 0.0
    %10242 = vmatpush1.xpose.msra.mxu0 0.0
    %10243 = vmatprep.subr.mxu0 0.0
    %10244 = vmatpush1.xpose.msra.mxu0 0.0
    %10245 = vmatprep.subr.mxu0 0.0
    %10246 = vmatpush1.xpose.msra.mxu0 0.0
    %10247 = vmatprep.subr.mxu0 0.0
    %10248 = vmatpush1.xpose.msra.mxu0 0.0
    %10249 = vmatprep.subr.mxu0 0.0
    %10250 = vmatpush1.xpose.msra.mxu0 0.0
    %10251 = vmatprep.subr.mxu0 0.0
    %10252 = vmatpush1.xpose.msra.mxu0 0.0
    %10253 = vmatprep.subr.mxu0 0.0
    %10254 = vmatpush1.xpose.msra.mxu0 0.0
    %10255 = vmatprep.subr.mxu0 0.0
    %10256 = vmatpush1.xpose.msra.mxu0 0.0
    %10257 = vmatprep.subr.mxu0 0.0
    %10258 = vmatpush1.xpose.msra.mxu0 0.0
    %10259 = vmatprep.subr.mxu0 0.0
    %10260 = vmatpush1.xpose.msra.mxu0 0.0
    %10261 = vmatprep.subr.mxu0 0.0
    %10262 = vmatpush1.xpose.msra.mxu0 0.0
    %10263 = vmatprep.subr.mxu0 0.0
    %10264 = vmatpush1.xpose.msra.mxu0 0.0
    %10265 = vmatprep.subr.mxu0 0.0
    %10266 = vmatpush1.xpose.msra.mxu0 0.0
    %10267 = vmatprep.subr.mxu0 0.0
    %10268 = vmatpush1.xpose.msra.mxu0 0.0
    %10269 = vmatprep.subr.mxu0 0.0
    %10270 = vmatpush1.xpose.msra.mxu0 0.0
    %10271 = vmatprep.subr.mxu0 0.0
    %10272 = vmatpush1.xpose.msra.mxu0 0.0
    %10273 = vmatprep.subr.mxu0 0.0
    %10274 = vmatpush1.xpose.msra.mxu0 0.0
    %10275 = vmatprep.subr.mxu0 0.0
    %10276 = vmatpush1.xpose.msra.mxu0 0.0
    %10277 = vmatprep.subr.mxu0 0.0
    %10278 = vmatpush1.xpose.msra.mxu0 0.0
    %10279 = vmatprep.subr.mxu0 0.0
    %10280 = vmatpush1.xpose.msra.mxu0 0.0
    %10281 = vmatprep.subr.mxu0 0.0
    %10282 = vmatpush1.xpose.msra.mxu0 0.0
    %10283 = vmatprep.subr.mxu0 0.0
    %10284 = vmatpush1.xpose.msra.mxu0 0.0
    %10285 = vmatprep.mubr.f32.mxu0 0.0
    %10286 = vmatmul.mubr.f32.gmra.mrb[0].mxu0 %v10216
    %v10287 = vpop.f32.mrb[0].mxu0
    %v10288 = vadd.f32 0.0, %v10287
    %v10289 = vpop.f32.mrb[0].mxu0
    %10290 = vdwg.mxu0
    %v10291 = vmul.f32 %v9756, 0.35355338
    %v10292 = vmul.f32 %v9832, 0.35355338
    %v10293 = vmul.f32 %v9908, 0.35355338
    %v10294 = vmul.f32 %v9984, 0.35355338
    %v10295 = vmul.f32 %v10060, 0.35355338
    %v10296 = vmul.f32 %v10136, 0.35355338
    %v10297 = vmul.f32 %v10212, 0.35355338
    %v10298 = vmul.f32 %v10288, 0.35355338
    %v10299 = vsel %vm647, %v10291, -inf
    %10300 = vmax.xlane.f32.xlu0 %v10299
    %v10301 = vpop.xlane.xlu0 %10300
    %v10302 = vsel %vm647, %v10292, -inf
    %10303 = vmax.xlane.f32.xlu0 %v10302
    %v10304 = vpop.xlane.xlu0 %10303
    %v10305 = vsel %vm647, %v10293, -inf
    %10306 = vmax.xlane.f32.xlu0 %v10305
    %v10307 = vpop.xlane.xlu0 %10306
    %v10308 = vsel %vm647, %v10294, -inf
    %10309 = vmax.xlane.f32.xlu0 %v10308
    %v10310 = vpop.xlane.xlu0 %10309
    %v10311 = vsel %vm647, %v10295, -inf
    %10312 = vmax.xlane.f32.xlu0 %v10311
    %v10313 = vpop.xlane.xlu0 %10312
    %v10314 = vsel %vm647, %v10296, -inf
    %10315 = vmax.xlane.f32.xlu0 %v10314
    %v10316 = vpop.xlane.xlu0 %10315
    %v10317 = vsel %vm647, %v10297, -inf
    %10318 = vmax.xlane.f32.xlu0 %v10317
    %v10319 = vpop.xlane.xlu0 %10318
    %v10320 = vsel %vm647, %v10298, -inf
    %10321 = vmax.xlane.f32.xlu0 %v10320
    %v10322 = vpop.xlane.xlu0 %10321
    %v10323 = vsub.f32 %v10291, %v10301
    %v10324 = vsub.f32 %v10292, %v10304
    %v10325 = vsub.f32 %v10293, %v10307
    %v10326 = vsub.f32 %v10294, %v10310
    %v10327 = vsub.f32 %v10295, %v10313
    %v10328 = vsub.f32 %v10296, %v10316
    %v10329 = vsub.f32 %v10297, %v10319
    %v10330 = vsub.f32 %v10298, %v10322
    %v10331 = vmul.f32 %v10323, 1.442695
    %v10332 = vpow.pop %v10331
    %v10333 = vmul.f32 %v10324, 1.442695
    %v10334 = vpow.pop %v10333
    %v10335 = vmul.f32 %v10325, 1.442695
    %v10336 = vpow.pop %v10335
    %v10337 = vmul.f32 %v10326, 1.442695
    %v10338 = vpow.pop %v10337
    %v10339 = vmul.f32 %v10327, 1.442695
    %v10340 = vpow.pop %v10339
    %v10341 = vmul.f32 %v10328, 1.442695
    %v10342 = vpow.pop %v10341
    %v10343 = vmul.f32 %v10329, 1.442695
    %v10344 = vpow.pop %v10343
    %v10345 = vmul.f32 %v10330, 1.442695
    %v10346 = vpow.pop %v10345
    %v10347 = vsel %vm647, %v10332, 0.0
    %10348 = vadd.xlane.f32.xlu0 %v10347
    %v10349 = vpop.xlane.xlu0 %10348
    %v10350 = vsel %vm647, %v10334, 0.0
    %10351 = vadd.xlane.f32.xlu0 %v10350
    %v10352 = vpop.xlane.xlu0 %10351
    %v10353 = vsel %vm647, %v10336, 0.0
    %10354 = vadd.xlane.f32.xlu0 %v10353
    %v10355 = vpop.xlane.xlu0 %10354
    %v10356 = vsel %vm647, %v10338, 0.0
    %10357 = vadd.xlane.f32.xlu0 %v10356
    %v10358 = vpop.xlane.xlu0 %10357
    %v10359 = vsel %vm647, %v10340, 0.0
    %10360 = vadd.xlane.f32.xlu0 %v10359
    %v10361 = vpop.xlane.xlu0 %10360
    %v10362 = vsel %vm647, %v10342, 0.0
    %10363 = vadd.xlane.f32.xlu0 %v10362
    %v10364 = vpop.xlane.xlu0 %10363
    %v10365 = vsel %vm647, %v10344, 0.0
    %10366 = vadd.xlane.f32.xlu0 %v10365
    %v10367 = vpop.xlane.xlu0 %10366
    %v10368 = vsel %vm647, %v10346, 0.0
    %10369 = vadd.xlane.f32.xlu0 %v10368
    %v10370 = vpop.xlane.xlu0 %10369
    %v10371 = vrcp.pop %v10349
    %v10372 = vrcp.pop %v10352
    %v10373 = vrcp.pop %v10355
    %v10374 = vrcp.pop %v10358
    %v10375 = vrcp.pop %v10361
    %v10376 = vrcp.pop %v10364
    %v10377 = vrcp.pop %v10367
    %v10378 = vrcp.pop %v10370
    %v10379 = vmul.f32 %v10332, %v10371
    %v10380 = vmul.f32 %v10334, %v10372
    %v10381 = vmul.f32 %v10336, %v10373
    %v10382 = vmul.f32 %v10338, %v10374
    %v10383 = vmul.f32 %v10340, %v10375
    %v10384 = vmul.f32 %v10342, %v10376
    %v10385 = vmul.f32 %v10344, %v10377
    %v10386 = vmul.f32 %v10346, %v10378
    %10387 = vrot.lane.b32.xlu0 %v8602, 120
    %v10388 = vpop.permute.xlu0 %10387
    %v10391 = vsel %vm647, %v10379, 0
    %10393 = vmatprep.subr.mxu0 0.0
    %10394 = vmatpush1.msra.mxu0 %v10388
    %10395 = vmatprep.subr.mxu0 0.0
    %10396 = vmatpush1.msra.mxu0 0.0
    %10397 = vmatprep.subr.mxu0 0.0
    %10398 = vmatpush1.msra.mxu0 0.0
    %10399 = vmatprep.subr.mxu0 0.0
    %10400 = vmatpush1.msra.mxu0 0.0
    %10401 = vmatprep.subr.mxu0 0.0
    %10402 = vmatpush1.msra.mxu0 0.0
    %10403 = vmatprep.subr.mxu0 0.0
    %10404 = vmatpush1.msra.mxu0 0.0
    %10405 = vmatprep.subr.mxu0 0.0
    %10406 = vmatpush1.msra.mxu0 0.0
    %10407 = vmatprep.subr.mxu0 0.0
    %10408 = vmatpush1.msra.mxu0 0.0
    %10409 = vmatprep.subr.mxu0 0.0
    %10410 = vmatpush1.msra.mxu0 0.0
    %10411 = vmatprep.subr.mxu0 0.0
    %10412 = vmatpush1.msra.mxu0 0.0
    %10413 = vmatprep.subr.mxu0 0.0
    %10414 = vmatpush1.msra.mxu0 0.0
    %10415 = vmatprep.subr.mxu0 0.0
    %10416 = vmatpush1.msra.mxu0 0.0
    %10417 = vmatprep.subr.mxu0 0.0
    %10418 = vmatpush1.msra.mxu0 0.0
    %10419 = vmatprep.subr.mxu0 0.0
    %10420 = vmatpush1.msra.mxu0 0.0
    %10421 = vmatprep.subr.mxu0 0.0
    %10422 = vmatpush1.msra.mxu0 0.0
    %10423 = vmatprep.subr.mxu0 0.0
    %10424 = vmatpush1.msra.mxu0 0.0
    %10425 = vmatprep.subr.mxu0 0.0
    %10426 = vmatpush1.msra.mxu0 0.0
    %10427 = vmatprep.subr.mxu0 0.0
    %10428 = vmatpush1.msra.mxu0 0.0
    %10429 = vmatprep.subr.mxu0 0.0
    %10430 = vmatpush1.msra.mxu0 0.0
    %10431 = vmatprep.subr.mxu0 0.0
    %10432 = vmatpush1.msra.mxu0 0.0
    %10433 = vmatprep.subr.mxu0 0.0
    %10434 = vmatpush1.msra.mxu0 0.0
    %10435 = vmatprep.subr.mxu0 0.0
    %10436 = vmatpush1.msra.mxu0 0.0
    %10437 = vmatprep.subr.mxu0 0.0
    %10438 = vmatpush1.msra.mxu0 0.0
    %10439 = vmatprep.subr.mxu0 0.0
    %10440 = vmatpush1.msra.mxu0 0.0
    %10441 = vmatprep.subr.mxu0 0.0
    %10442 = vmatpush1.msra.mxu0 0.0
    %10443 = vmatprep.subr.mxu0 0.0
    %10444 = vmatpush1.msra.mxu0 0.0
    %10445 = vmatprep.subr.mxu0 0.0
    %10446 = vmatpush1.msra.mxu0 0.0
    %10447 = vmatprep.subr.mxu0 0.0
    %10448 = vmatpush1.msra.mxu0 0.0
    %10449 = vmatprep.subr.mxu0 0.0
    %10450 = vmatpush1.msra.mxu0 0.0
    %10451 = vmatprep.subr.mxu0 0.0
    %10452 = vmatpush1.msra.mxu0 0.0
    %10453 = vmatprep.subr.mxu0 0.0
    %10454 = vmatpush1.msra.mxu0 0.0
    %10455 = vmatprep.subr.mxu0 0.0
    %10456 = vmatpush1.msra.mxu0 0.0
    %10457 = vmatprep.mubr.f32.mxu0 0.0
    %10458 = vmatmul.mubr.f32.gmra.mrb[0].mxu0 %v10391
    %v10459 = vpop.f32.mrb[0].mxu0
    %v10460 = vadd.f32 0.0, %v10459
    %v10461 = vpop.f32.mrb[0].mxu0
    %10462 = vdwg.mxu0
    %10463 = vrot.lane.b32.xlu0 %v8672, 120
    %v10464 = vpop.permute.xlu0 %10463
    %v10467 = vsel %vm647, %v10380, 0
    %10469 = vmatprep.subr.mxu0 0.0
    %10470 = vmatpush1.msra.mxu0 %v10464
    %10471 = vmatprep.subr.mxu0 0.0
    %10472 = vmatpush1.msra.mxu0 0.0
    %10473 = vmatprep.subr.mxu0 0.0
    %10474 = vmatpush1.msra.mxu0 0.0
    %10475 = vmatprep.subr.mxu0 0.0
    %10476 = vmatpush1.msra.mxu0 0.0
    %10477 = vmatprep.subr.mxu0 0.0
    %10478 = vmatpush1.msra.mxu0 0.0
    %10479 = vmatprep.subr.mxu0 0.0
    %10480 = vmatpush1.msra.mxu0 0.0
    %10481 = vmatprep.subr.mxu0 0.0
    %10482 = vmatpush1.msra.mxu0 0.0
    %10483 = vmatprep.subr.mxu0 0.0
    %10484 = vmatpush1.msra.mxu0 0.0
    %10485 = vmatprep.subr.mxu0 0.0
    %10486 = vmatpush1.msra.mxu0 0.0
    %10487 = vmatprep.subr.mxu0 0.0
    %10488 = vmatpush1.msra.mxu0 0.0
    %10489 = vmatprep.subr.mxu0 0.0
    %10490 = vmatpush1.msra.mxu0 0.0
    %10491 = vmatprep.subr.mxu0 0.0
    %10492 = vmatpush1.msra.mxu0 0.0
    %10493 = vmatprep.subr.mxu0 0.0
    %10494 = vmatpush1.msra.mxu0 0.0
    %10495 = vmatprep.subr.mxu0 0.0
    %10496 = vmatpush1.msra.mxu0 0.0
    %10497 = vmatprep.subr.mxu0 0.0
    %10498 = vmatpush1.msra.mxu0 0.0
    %10499 = vmatprep.subr.mxu0 0.0
    %10500 = vmatpush1.msra.mxu0 0.0
    %10501 = vmatprep.subr.mxu0 0.0
    %10502 = vmatpush1.msra.mxu0 0.0
    %10503 = vmatprep.subr.mxu0 0.0
    %10504 = vmatpush1.msra.mxu0 0.0
    %10505 = vmatprep.subr.mxu0 0.0
    %10506 = vmatpush1.msra.mxu0 0.0
    %10507 = vmatprep.subr.mxu0 0.0
    %10508 = vmatpush1.msra.mxu0 0.0
    %10509 = vmatprep.subr.mxu0 0.0
    %10510 = vmatpush1.msra.mxu0 0.0
    %10511 = vmatprep.subr.mxu0 0.0
    %10512 = vmatpush1.msra.mxu0 0.0
    %10513 = vmatprep.subr.mxu0 0.0
    %10514 = vmatpush1.msra.mxu0 0.0
    %10515 = vmatprep.subr.mxu0 0.0
    %10516 = vmatpush1.msra.mxu0 0.0
    %10517 = vmatprep.subr.mxu0 0.0
    %10518 = vmatpush1.msra.mxu0 0.0
    %10519 = vmatprep.subr.mxu0 0.0
    %10520 = vmatpush1.msra.mxu0 0.0
    %10521 = vmatprep.subr.mxu0 0.0
    %10522 = vmatpush1.msra.mxu0 0.0
    %10523 = vmatprep.subr.mxu0 0.0
    %10524 = vmatpush1.msra.mxu0 0.0
    %10525 = vmatprep.subr.mxu0 0.0
    %10526 = vmatpush1.msra.mxu0 0.0
    %10527 = vmatprep.subr.mxu0 0.0
    %10528 = vmatpush1.msra.mxu0 0.0
    %10529 = vmatprep.subr.mxu0 0.0
    %10530 = vmatpush1.msra.mxu0 0.0
    %10531 = vmatprep.subr.mxu0 0.0
    %10532 = vmatpush1.msra.mxu0 0.0
    %10533 = vmatprep.mubr.f32.mxu0 0.0
    %10534 = vmatmul.mubr.f32.gmra.mrb[0].mxu0 %v10467
    %v10535 = vpop.f32.mrb[0].mxu0
    %v10536 = vadd.f32 0.0, %v10535
    %v10537 = vpop.f32.mrb[0].mxu0
    %10538 = vdwg.mxu0
    %10539 = vrot.lane.b32.xlu0 %v8742, 120
    %v10540 = vpop.permute.xlu0 %10539
    %v10543 = vsel %vm647, %v10381, 0
    %10545 = vmatprep.subr.mxu0 0.0
    %10546 = vmatpush1.msra.mxu0 %v10540
    %10547 = vmatprep.subr.mxu0 0.0
    %10548 = vmatpush1.msra.mxu0 0.0
    %10549 = vmatprep.subr.mxu0 0.0
    %10550 = vmatpush1.msra.mxu0 0.0
    %10551 = vmatprep.subr.mxu0 0.0
    %10552 = vmatpush1.msra.mxu0 0.0
    %10553 = vmatprep.subr.mxu0 0.0
    %10554 = vmatpush1.msra.mxu0 0.0
    %10555 = vmatprep.subr.mxu0 0.0
    %10556 = vmatpush1.msra.mxu0 0.0
    %10557 = vmatprep.subr.mxu0 0.0
    %10558 = vmatpush1.msra.mxu0 0.0
    %10559 = vmatprep.subr.mxu0 0.0
    %10560 = vmatpush1.msra.mxu0 0.0
    %10561 = vmatprep.subr.mxu0 0.0
    %10562 = vmatpush1.msra.mxu0 0.0
    %10563 = vmatprep.subr.mxu0 0.0
    %10564 = vmatpush1.msra.mxu0 0.0
    %10565 = vmatprep.subr.mxu0 0.0
    %10566 = vmatpush1.msra.mxu0 0.0
    %10567 = vmatprep.subr.mxu0 0.0
    %10568 = vmatpush1.msra.mxu0 0.0
    %10569 = vmatprep.subr.mxu0 0.0
    %10570 = vmatpush1.msra.mxu0 0.0
    %10571 = vmatprep.subr.mxu0 0.0
    %10572 = vmatpush1.msra.mxu0 0.0
    %10573 = vmatprep.subr.mxu0 0.0
    %10574 = vmatpush1.msra.mxu0 0.0
    %10575 = vmatprep.subr.mxu0 0.0
    %10576 = vmatpush1.msra.mxu0 0.0
    %10577 = vmatprep.subr.mxu0 0.0
    %10578 = vmatpush1.msra.mxu0 0.0
    %10579 = vmatprep.subr.mxu0 0.0
    %10580 = vmatpush1.msra.mxu0 0.0
    %10581 = vmatprep.subr.mxu0 0.0
    %10582 = vmatpush1.msra.mxu0 0.0
    %10583 = vmatprep.subr.mxu0 0.0
    %10584 = vmatpush1.msra.mxu0 0.0
    %10585 = vmatprep.subr.mxu0 0.0
    %10586 = vmatpush1.msra.mxu0 0.0
    %10587 = vmatprep.subr.mxu0 0.0
    %10588 = vmatpush1.msra.mxu0 0.0
    %10589 = vmatprep.subr.mxu0 0.0
    %10590 = vmatpush1.msra.mxu0 0.0
    %10591 = vmatprep.subr.mxu0 0.0
    %10592 = vmatpush1.msra.mxu0 0.0
    %10593 = vmatprep.subr.mxu0 0.0
    %10594 = vmatpush1.msra.mxu0 0.0
    %10595 = vmatprep.subr.mxu0 0.0
    %10596 = vmatpush1.msra.mxu0 0.0
    %10597 = vmatprep.subr.mxu0 0.0
    %10598 = vmatpush1.msra.mxu0 0.0
    %10599 = vmatprep.subr.mxu0 0.0
    %10600 = vmatpush1.msra.mxu0 0.0
    %10601 = vmatprep.subr.mxu0 0.0
    %10602 = vmatpush1.msra.mxu0 0.0
    %10603 = vmatprep.subr.mxu0 0.0
    %10604 = vmatpush1.msra.mxu0 0.0
    %10605 = vmatprep.subr.mxu0 0.0
    %10606 = vmatpush1.msra.mxu0 0.0
    %10607 = vmatprep.subr.mxu0 0.0
    %10608 = vmatpush1.msra.mxu0 0.0
    %10609 = vmatprep.mubr.f32.mxu0 0.0
    %10610 = vmatmul.mubr.f32.gmra.mrb[0].mxu0 %v10543
    %v10611 = vpop.f32.mrb[0].mxu0
    %v10612 = vadd.f32 0.0, %v10611
    %v10613 = vpop.f32.mrb[0].mxu0
    %10614 = vdwg.mxu0
    %10615 = vrot.lane.b32.xlu0 %v8812, 120
    %v10616 = vpop.permute.xlu0 %10615
    %v10619 = vsel %vm647, %v10382, 0
    %10621 = vmatprep.subr.mxu0 0.0
    %10622 = vmatpush1.msra.mxu0 %v10616
    %10623 = vmatprep.subr.mxu0 0.0
    %10624 = vmatpush1.msra.mxu0 0.0
    %10625 = vmatprep.subr.mxu0 0.0
    %10626 = vmatpush1.msra.mxu0 0.0
    %10627 = vmatprep.subr.mxu0 0.0
    %10628 = vmatpush1.msra.mxu0 0.0
    %10629 = vmatprep.subr.mxu0 0.0
    %10630 = vmatpush1.msra.mxu0 0.0
    %10631 = vmatprep.subr.mxu0 0.0
    %10632 = vmatpush1.msra.mxu0 0.0
    %10633 = vmatprep.subr.mxu0 0.0
    %10634 = vmatpush1.msra.mxu0 0.0
    %10635 = vmatprep.subr.mxu0 0.0
    %10636 = vmatpush1.msra.mxu0 0.0
    %10637 = vmatprep.subr.mxu0 0.0
    %10638 = vmatpush1.msra.mxu0 0.0
    %10639 = vmatprep.subr.mxu0 0.0
    %10640 = vmatpush1.msra.mxu0 0.0
    %10641 = vmatprep.subr.mxu0 0.0
    %10642 = vmatpush1.msra.mxu0 0.0
    %10643 = vmatprep.subr.mxu0 0.0
    %10644 = vmatpush1.msra.mxu0 0.0
    %10645 = vmatprep.subr.mxu0 0.0
    %10646 = vmatpush1.msra.mxu0 0.0
    %10647 = vmatprep.subr.mxu0 0.0
    %10648 = vmatpush1.msra.mxu0 0.0
    %10649 = vmatprep.subr.mxu0 0.0
    %10650 = vmatpush1.msra.mxu0 0.0
    %10651 = vmatprep.subr.mxu0 0.0
    %10652 = vmatpush1.msra.mxu0 0.0
    %10653 = vmatprep.subr.mxu0 0.0
    %10654 = vmatpush1.msra.mxu0 0.0
    %10655 = vmatprep.subr.mxu0 0.0
    %10656 = vmatpush1.msra.mxu0 0.0
    %10657 = vmatprep.subr.mxu0 0.0
    %10658 = vmatpush1.msra.mxu0 0.0
    %10659 = vmatprep.subr.mxu0 0.0
    %10660 = vmatpush1.msra.mxu0 0.0
    %10661 = vmatprep.subr.mxu0 0.0
    %10662 = vmatpush1.msra.mxu0 0.0
    %10663 = vmatprep.subr.mxu0 0.0
    %10664 = vmatpush1.msra.mxu0 0.0
    %10665 = vmatprep.subr.mxu0 0.0
    %10666 = vmatpush1.msra.mxu0 0.0
    %10667 = vmatprep.subr.mxu0 0.0
    %10668 = vmatpush1.msra.mxu0 0.0
    %10669 = vmatprep.subr.mxu0 0.0
    %10670 = vmatpush1.msra.mxu0 0.0
    %10671 = vmatprep.subr.mxu0 0.0
    %10672 = vmatpush1.msra.mxu0 0.0
    %10673 = vmatprep.subr.mxu0 0.0
    %10674 = vmatpush1.msra.mxu0 0.0
    %10675 = vmatprep.subr.mxu0 0.0
    %10676 = vmatpush1.msra.mxu0 0.0
    %10677 = vmatprep.subr.mxu0 0.0
    %10678 = vmatpush1.msra.mxu0 0.0
    %10679 = vmatprep.subr.mxu0 0.0
    %10680 = vmatpush1.msra.mxu0 0.0
    %10681 = vmatprep.subr.mxu0 0.0
    %10682 = vmatpush1.msra.mxu0 0.0
    %10683 = vmatprep.subr.mxu0 0.0
    %10684 = vmatpush1.msra.mxu0 0.0
    %10685 = vmatprep.mubr.f32.mxu0 0.0
    %10686 = vmatmul.mubr.f32.gmra.mrb[0].mxu0 %v10619
    %v10687 = vpop.f32.mrb[0].mxu0
    %v10688 = vadd.f32 0.0, %v10687
    %v10689 = vpop.f32.mrb[0].mxu0
    %10690 = vdwg.mxu0
    %10691 = vrot.lane.b32.xlu0 %v8882, 120
    %v10692 = vpop.permute.xlu0 %10691
    %v10695 = vsel %vm647, %v10383, 0
    %10697 = vmatprep.subr.mxu0 0.0
    %10698 = vmatpush1.msra.mxu0 %v10692
    %10699 = vmatprep.subr.mxu0 0.0
    %10700 = vmatpush1.msra.mxu0 0.0
    %10701 = vmatprep.subr.mxu0 0.0
    %10702 = vmatpush1.msra.mxu0 0.0
    %10703 = vmatprep.subr.mxu0 0.0
    %10704 = vmatpush1.msra.mxu0 0.0
    %10705 = vmatprep.subr.mxu0 0.0
    %10706 = vmatpush1.msra.mxu0 0.0
    %10707 = vmatprep.subr.mxu0 0.0
    %10708 = vmatpush1.msra.mxu0 0.0
    %10709 = vmatprep.subr.mxu0 0.0
    %10710 = vmatpush1.msra.mxu0 0.0
    %10711 = vmatprep.subr.mxu0 0.0
    %10712 = vmatpush1.msra.mxu0 0.0
    %10713 = vmatprep.subr.mxu0 0.0
    %10714 = vmatpush1.msra.mxu0 0.0
    %10715 = vmatprep.subr.mxu0 0.0
    %10716 = vmatpush1.msra.mxu0 0.0
    %10717 = vmatprep.subr.mxu0 0.0
    %10718 = vmatpush1.msra.mxu0 0.0
    %10719 = vmatprep.subr.mxu0 0.0
    %10720 = vmatpush1.msra.mxu0 0.0
    %10721 = vmatprep.subr.mxu0 0.0
    %10722 = vmatpush1.msra.mxu0 0.0
    %10723 = vmatprep.subr.mxu0 0.0
    %10724 = vmatpush1.msra.mxu0 0.0
    %10725 = vmatprep.subr.mxu0 0.0
    %10726 = vmatpush1.msra.mxu0 0.0
    %10727 = vmatprep.subr.mxu0 0.0
    %10728 = vmatpush1.msra.mxu0 0.0
    %10729 = vmatprep.subr.mxu0 0.0
    %10730 = vmatpush1.msra.mxu0 0.0
    %10731 = vmatprep.subr.mxu0 0.0
    %10732 = vmatpush1.msra.mxu0 0.0
    %10733 = vmatprep.subr.mxu0 0.0
    %10734 = vmatpush1.msra.mxu0 0.0
    %10735 = vmatprep.subr.mxu0 0.0
    %10736 = vmatpush1.msra.mxu0 0.0
    %10737 = vmatprep.subr.mxu0 0.0
    %10738 = vmatpush1.msra.mxu0 0.0
    %10739 = vmatprep.subr.mxu0 0.0
    %10740 = vmatpush1.msra.mxu0 0.0
    %10741 = vmatprep.subr.mxu0 0.0
    %10742 = vmatpush1.msra.mxu0 0.0
    %10743 = vmatprep.subr.mxu0 0.0
    %10744 = vmatpush1.msra.mxu0 0.0
    %10745 = vmatprep.subr.mxu0 0.0
    %10746 = vmatpush1.msra.mxu0 0.0
    %10747 = vmatprep.subr.mxu0 0.0
    %10748 = vmatpush1.msra.mxu0 0.0
    %10749 = vmatprep.subr.mxu0 0.0
    %10750 = vmatpush1.msra.mxu0 0.0
    %10751 = vmatprep.subr.mxu0 0.0
    %10752 = vmatpush1.msra.mxu0 0.0
    %10753 = vmatprep.subr.mxu0 0.0
    %10754 = vmatpush1.msra.mxu0 0.0
    %10755 = vmatprep.subr.mxu0 0.0
    %10756 = vmatpush1.msra.mxu0 0.0
    %10757 = vmatprep.subr.mxu0 0.0
    %10758 = vmatpush1.msra.mxu0 0.0
    %10759 = vmatprep.subr.mxu0 0.0
    %10760 = vmatpush1.msra.mxu0 0.0
    %10761 = vmatprep.mubr.f32.mxu0 0.0
    %10762 = vmatmul.mubr.f32.gmra.mrb[0].mxu0 %v10695
    %v10763 = vpop.f32.mrb[0].mxu0
    %v10764 = vadd.f32 0.0, %v10763
    %v10765 = vpop.f32.mrb[0].mxu0
    %10766 = vdwg.mxu0
    %10767 = vrot.lane.b32.xlu0 %v8952, 120
    %v10768 = vpop.permute.xlu0 %10767
    %v10771 = vsel %vm647, %v10384, 0
    %10773 = vmatprep.subr.mxu0 0.0
    %10774 = vmatpush1.msra.mxu0 %v10768
    %10775 = vmatprep.subr.mxu0 0.0
    %10776 = vmatpush1.msra.mxu0 0.0
    %10777 = vmatprep.subr.mxu0 0.0
    %10778 = vmatpush1.msra.mxu0 0.0
    %10779 = vmatprep.subr.mxu0 0.0
    %10780 = vmatpush1.msra.mxu0 0.0
    %10781 = vmatprep.subr.mxu0 0.0
    %10782 = vmatpush1.msra.mxu0 0.0
    %10783 = vmatprep.subr.mxu0 0.0
    %10784 = vmatpush1.msra.mxu0 0.0
    %10785 = vmatprep.subr.mxu0 0.0
    %10786 = vmatpush1.msra.mxu0 0.0
    %10787 = vmatprep.subr.mxu0 0.0
    %10788 = vmatpush1.msra.mxu0 0.0
    %10789 = vmatprep.subr.mxu0 0.0
    %10790 = vmatpush1.msra.mxu0 0.0
    %10791 = vmatprep.subr.mxu0 0.0
    %10792 = vmatpush1.msra.mxu0 0.0
    %10793 = vmatprep.subr.mxu0 0.0
    %10794 = vmatpush1.msra.mxu0 0.0
    %10795 = vmatprep.subr.mxu0 0.0
    %10796 = vmatpush1.msra.mxu0 0.0
    %10797 = vmatprep.subr.mxu0 0.0
    %10798 = vmatpush1.msra.mxu0 0.0
    %10799 = vmatprep.subr.mxu0 0.0
    %10800 = vmatpush1.msra.mxu0 0.0
    %10801 = vmatprep.subr.mxu0 0.0
    %10802 = vmatpush1.msra.mxu0 0.0
    %10803 = vmatprep.subr.mxu0 0.0
    %10804 = vmatpush1.msra.mxu0 0.0
    %10805 = vmatprep.subr.mxu0 0.0
    %10806 = vmatpush1.msra.mxu0 0.0
    %10807 = vmatprep.subr.mxu0 0.0
    %10808 = vmatpush1.msra.mxu0 0.0
    %10809 = vmatprep.subr.mxu0 0.0
    %10810 = vmatpush1.msra.mxu0 0.0
    %10811 = vmatprep.subr.mxu0 0.0
    %10812 = vmatpush1.msra.mxu0 0.0
    %10813 = vmatprep.subr.mxu0 0.0
    %10814 = vmatpush1.msra.mxu0 0.0
    %10815 = vmatprep.subr.mxu0 0.0
    %10816 = vmatpush1.msra.mxu0 0.0
    %10817 = vmatprep.subr.mxu0 0.0
    %10818 = vmatpush1.msra.mxu0 0.0
    %10819 = vmatprep.subr.mxu0 0.0
    %10820 = vmatpush1.msra.mxu0 0.0
    %10821 = vmatprep.subr.mxu0 0.0
    %10822 = vmatpush1.msra.mxu0 0.0
    %10823 = vmatprep.subr.mxu0 0.0
    %10824 = vmatpush1.msra.mxu0 0.0
    %10825 = vmatprep.subr.mxu0 0.0
    %10826 = vmatpush1.msra.mxu0 0.0
    %10827 = vmatprep.subr.mxu0 0.0
    %10828 = vmatpush1.msra.mxu0 0.0
    %10829 = vmatprep.subr.mxu0 0.0
    %10830 = vmatpush1.msra.mxu0 0.0
    %10831 = vmatprep.subr.mxu0 0.0
    %10832 = vmatpush1.msra.mxu0 0.0
    %10833 = vmatprep.subr.mxu0 0.0
    %10834 = vmatpush1.msra.mxu0 0.0
    %10835 = vmatprep.subr.mxu0 0.0
    %10836 = vmatpush1.msra.mxu0 0.0
    %10837 = vmatprep.mubr.f32.mxu0 0.0
    %10838 = vmatmul.mubr.f32.gmra.mrb[0].mxu0 %v10771
    %v10839 = vpop.f32.mrb[0].mxu0
    %v10840 = vadd.f32 0.0, %v10839
    %v10841 = vpop.f32.mrb[0].mxu0
    %10842 = vdwg.mxu0
    %10843 = vrot.lane.b32.xlu0 %v9022, 120
    %v10844 = vpop.permute.xlu0 %10843
    %v10847 = vsel %vm647, %v10385, 0
    %10849 = vmatprep.subr.mxu0 0.0
    %10850 = vmatpush1.msra.mxu0 %v10844
    %10851 = vmatprep.subr.mxu0 0.0
    %10852 = vmatpush1.msra.mxu0 0.0
    %10853 = vmatprep.subr.mxu0 0.0
    %10854 = vmatpush1.msra.mxu0 0.0
    %10855 = vmatprep.subr.mxu0 0.0
    %10856 = vmatpush1.msra.mxu0 0.0
    %10857 = vmatprep.subr.mxu0 0.0
    %10858 = vmatpush1.msra.mxu0 0.0
    %10859 = vmatprep.subr.mxu0 0.0
    %10860 = vmatpush1.msra.mxu0 0.0
    %10861 = vmatprep.subr.mxu0 0.0
    %10862 = vmatpush1.msra.mxu0 0.0
    %10863 = vmatprep.subr.mxu0 0.0
    %10864 = vmatpush1.msra.mxu0 0.0
    %10865 = vmatprep.subr.mxu0 0.0
    %10866 = vmatpush1.msra.mxu0 0.0
    %10867 = vmatprep.subr.mxu0 0.0
    %10868 = vmatpush1.msra.mxu0 0.0
    %10869 = vmatprep.subr.mxu0 0.0
    %10870 = vmatpush1.msra.mxu0 0.0
    %10871 = vmatprep.subr.mxu0 0.0
    %10872 = vmatpush1.msra.mxu0 0.0
    %10873 = vmatprep.subr.mxu0 0.0
    %10874 = vmatpush1.msra.mxu0 0.0
    %10875 = vmatprep.subr.mxu0 0.0
    %10876 = vmatpush1.msra.mxu0 0.0
    %10877 = vmatprep.subr.mxu0 0.0
    %10878 = vmatpush1.msra.mxu0 0.0
    %10879 = vmatprep.subr.mxu0 0.0
    %10880 = vmatpush1.msra.mxu0 0.0
    %10881 = vmatprep.subr.mxu0 0.0
    %10882 = vmatpush1.msra.mxu0 0.0
    %10883 = vmatprep.subr.mxu0 0.0
    %10884 = vmatpush1.msra.mxu0 0.0
    %10885 = vmatprep.subr.mxu0 0.0
    %10886 = vmatpush1.msra.mxu0 0.0
    %10887 = vmatprep.subr.mxu0 0.0
    %10888 = vmatpush1.msra.mxu0 0.0
    %10889 = vmatprep.subr.mxu0 0.0
    %10890 = vmatpush1.msra.mxu0 0.0
    %10891 = vmatprep.subr.mxu0 0.0
    %10892 = vmatpush1.msra.mxu0 0.0
    %10893 = vmatprep.subr.mxu0 0.0
    %10894 = vmatpush1.msra.mxu0 0.0
    %10895 = vmatprep.subr.mxu0 0.0
    %10896 = vmatpush1.msra.mxu0 0.0
    %10897 = vmatprep.subr.mxu0 0.0
    %10898 = vmatpush1.msra.mxu0 0.0
    %10899 = vmatprep.subr.mxu0 0.0
    %10900 = vmatpush1.msra.mxu0 0.0
    %10901 = vmatprep.subr.mxu0 0.0
    %10902 = vmatpush1.msra.mxu0 0.0
    %10903 = vmatprep.subr.mxu0 0.0
    %10904 = vmatpush1.msra.mxu0 0.0
    %10905 = vmatprep.subr.mxu0 0.0
    %10906 = vmatpush1.msra.mxu0 0.0
    %10907 = vmatprep.subr.mxu0 0.0
    %10908 = vmatpush1.msra.mxu0 0.0
    %10909 = vmatprep.subr.mxu0 0.0
    %10910 = vmatpush1.msra.mxu0 0.0
    %10911 = vmatprep.subr.mxu0 0.0
    %10912 = vmatpush1.msra.mxu0 0.0
    %10913 = vmatprep.mubr.f32.mxu0 0.0
    %10914 = vmatmul.mubr.f32.gmra.mrb[0].mxu0 %v10847
    %v10915 = vpop.f32.mrb[0].mxu0
    %v10916 = vadd.f32 0.0, %v10915
    %v10917 = vpop.f32.mrb[0].mxu0
    %10918 = vdwg.mxu0
    %10919 = vrot.lane.b32.xlu0 %v9092, 120
    %v10920 = vpop.permute.xlu0 %10919
    %v10923 = vsel %vm647, %v10386, 0
    %10925 = vmatprep.subr.mxu0 0.0
    %10926 = vmatpush1.msra.mxu0 %v10920
    %10927 = vmatprep.subr.mxu0 0.0
    %10928 = vmatpush1.msra.mxu0 0.0
    %10929 = vmatprep.subr.mxu0 0.0
    %10930 = vmatpush1.msra.mxu0 0.0
    %10931 = vmatprep.subr.mxu0 0.0
    %10932 = vmatpush1.msra.mxu0 0.0
    %10933 = vmatprep.subr.mxu0 0.0
    %10934 = vmatpush1.msra.mxu0 0.0
    %10935 = vmatprep.subr.mxu0 0.0
    %10936 = vmatpush1.msra.mxu0 0.0
    %10937 = vmatprep.subr.mxu0 0.0
    %10938 = vmatpush1.msra.mxu0 0.0
    %10939 = vmatprep.subr.mxu0 0.0
    %10940 = vmatpush1.msra.mxu0 0.0
    %10941 = vmatprep.subr.mxu0 0.0
    %10942 = vmatpush1.msra.mxu0 0.0
    %10943 = vmatprep.subr.mxu0 0.0
    %10944 = vmatpush1.msra.mxu0 0.0
    %10945 = vmatprep.subr.mxu0 0.0
    %10946 = vmatpush1.msra.mxu0 0.0
    %10947 = vmatprep.subr.mxu0 0.0
    %10948 = vmatpush1.msra.mxu0 0.0
    %10949 = vmatprep.subr.mxu0 0.0
    %10950 = vmatpush1.msra.mxu0 0.0
    %10951 = vmatprep.subr.mxu0 0.0
    %10952 = vmatpush1.msra.mxu0 0.0
    %10953 = vmatprep.subr.mxu0 0.0
    %10954 = vmatpush1.msra.mxu0 0.0
    %10955 = vmatprep.subr.mxu0 0.0
    %10956 = vmatpush1.msra.mxu0 0.0
    %10957 = vmatprep.subr.mxu0 0.0
    %10958 = vmatpush1.msra.mxu0 0.0
    %10959 = vmatprep.subr.mxu0 0.0
    %10960 = vmatpush1.msra.mxu0 0.0
    %10961 = vmatprep.subr.mxu0 0.0
    %10962 = vmatpush1.msra.mxu0 0.0
    %10963 = vmatprep.subr.mxu0 0.0
    %10964 = vmatpush1.msra.mxu0 0.0
    %10965 = vmatprep.subr.mxu0 0.0
    %10966 = vmatpush1.msra.mxu0 0.0
    %10967 = vmatprep.subr.mxu0 0.0
    %10968 = vmatpush1.msra.mxu0 0.0
    %10969 = vmatprep.subr.mxu0 0.0
    %10970 = vmatpush1.msra.mxu0 0.0
    %10971 = vmatprep.subr.mxu0 0.0
    %10972 = vmatpush1.msra.mxu0 0.0
    %10973 = vmatprep.subr.mxu0 0.0
    %10974 = vmatpush1.msra.mxu0 0.0
    %10975 = vmatprep.subr.mxu0 0.0
    %10976 = vmatpush1.msra.mxu0 0.0
    %10977 = vmatprep.subr.mxu0 0.0
    %10978 = vmatpush1.msra.mxu0 0.0
    %10979 = vmatprep.subr.mxu0 0.0
    %10980 = vmatpush1.msra.mxu0 0.0
    %10981 = vmatprep.subr.mxu0 0.0
    %10982 = vmatpush1.msra.mxu0 0.0
    %10983 = vmatprep.subr.mxu0 0.0
    %10984 = vmatpush1.msra.mxu0 0.0
    %10985 = vmatprep.subr.mxu0 0.0
    %10986 = vmatpush1.msra.mxu0 0.0
    %10987 = vmatprep.subr.mxu0 0.0
    %10988 = vmatpush1.msra.mxu0 0.0
    %10989 = vmatprep.mubr.f32.mxu0 0.0
    %10990 = vmatmul.mubr.f32.gmra.mrb[0].mxu0 %v10923
    %v10991 = vpop.f32.mrb[0].mxu0
    %v10992 = vadd.f32 0.0, %v10991
    %v10993 = vpop.f32.mrb[0].mxu0
    %10994 = vdwg.mxu0
    %v10996 = vsel %vm647, %v10460, 0
    %10998 = vmatprep.subr.mxu0 0.0
    %10999 = vmatpush1.msra.mxu0 %v9679
    %11000 = vmatprep.subr.mxu0 0.0
    %11001 = vmatpush1.msra.mxu0 0.0
    %11002 = vmatprep.subr.mxu0 0.0
    %11003 = vmatpush1.msra.mxu0 0.0
    %11004 = vmatprep.subr.mxu0 0.0
    %11005 = vmatpush1.msra.mxu0 0.0
    %11006 = vmatprep.subr.mxu0 0.0
    %11007 = vmatpush1.msra.mxu0 0.0
    %11008 = vmatprep.subr.mxu0 0.0
    %11009 = vmatpush1.msra.mxu0 0.0
    %11010 = vmatprep.subr.mxu0 0.0
    %11011 = vmatpush1.msra.mxu0 0.0
    %11012 = vmatprep.subr.mxu0 0.0
    %11013 = vmatpush1.msra.mxu0 0.0
    %11014 = vmatprep.subr.mxu0 0.0
    %11015 = vmatpush1.msra.mxu0 0.0
    %11016 = vmatprep.subr.mxu0 0.0
    %11017 = vmatpush1.msra.mxu0 0.0
    %11018 = vmatprep.subr.mxu0 0.0
    %11019 = vmatpush1.msra.mxu0 0.0
    %11020 = vmatprep.subr.mxu0 0.0
    %11021 = vmatpush1.msra.mxu0 0.0
    %11022 = vmatprep.subr.mxu0 0.0
    %11023 = vmatpush1.msra.mxu0 0.0
    %11024 = vmatprep.subr.mxu0 0.0
    %11025 = vmatpush1.msra.mxu0 0.0
    %11026 = vmatprep.subr.mxu0 0.0
    %11027 = vmatpush1.msra.mxu0 0.0
    %11028 = vmatprep.subr.mxu0 0.0
    %11029 = vmatpush1.msra.mxu0 0.0
    %11030 = vmatprep.subr.mxu0 0.0
    %11031 = vmatpush1.msra.mxu0 0.0
    %11032 = vmatprep.subr.mxu0 0.0
    %11033 = vmatpush1.msra.mxu0 0.0
    %11034 = vmatprep.subr.mxu0 0.0
    %11035 = vmatpush1.msra.mxu0 0.0
    %11036 = vmatprep.subr.mxu0 0.0
    %11037 = vmatpush1.msra.mxu0 0.0
    %11038 = vmatprep.subr.mxu0 0.0
    %11039 = vmatpush1.msra.mxu0 0.0
    %11040 = vmatprep.subr.mxu0 0.0
    %11041 = vmatpush1.msra.mxu0 0.0
    %11042 = vmatprep.subr.mxu0 0.0
    %11043 = vmatpush1.msra.mxu0 0.0
    %11044 = vmatprep.subr.mxu0 0.0
    %11045 = vmatpush1.msra.mxu0 0.0
    %11046 = vmatprep.subr.mxu0 0.0
    %11047 = vmatpush1.msra.mxu0 0.0
    %11048 = vmatprep.subr.mxu0 0.0
    %11049 = vmatpush1.msra.mxu0 0.0
    %11050 = vmatprep.subr.mxu0 0.0
    %11051 = vmatpush1.msra.mxu0 0.0
    %11052 = vmatprep.subr.mxu0 0.0
    %11053 = vmatpush1.msra.mxu0 0.0
    %11054 = vmatprep.subr.mxu0 0.0
    %11055 = vmatpush1.msra.mxu0 0.0
    %11056 = vmatprep.subr.mxu0 0.0
    %11057 = vmatpush1.msra.mxu0 0.0
    %11058 = vmatprep.subr.mxu0 0.0
    %11059 = vmatpush1.msra.mxu0 0.0
    %11060 = vmatprep.subr.mxu0 0.0
    %11061 = vmatpush1.msra.mxu0 0.0
    %11062 = vmatprep.mubr.f32.mxu0 0.0
    %11063 = vmatmul.mubr.f32.gmra.mrb[0].mxu0 %v10996
    %v11064 = vpop.f32.mrb[0].mxu0
    %v11065 = vadd.f32 0.0, %v11064
    %v11066 = vpop.f32.mrb[0].mxu0
    %11067 = vdwg.mxu0
    %v11069 = vsel %vm647, %v10536, 0
    %11071 = vmatprep.subr.mxu0 0.0
    %11072 = vmatpush1.msra.mxu0 %v9680
    %11073 = vmatprep.subr.mxu0 0.0
    %11074 = vmatpush1.msra.mxu0 0.0
    %11075 = vmatprep.subr.mxu0 0.0
    %11076 = vmatpush1.msra.mxu0 0.0
    %11077 = vmatprep.subr.mxu0 0.0
    %11078 = vmatpush1.msra.mxu0 0.0
    %11079 = vmatprep.subr.mxu0 0.0
    %11080 = vmatpush1.msra.mxu0 0.0
    %11081 = vmatprep.subr.mxu0 0.0
    %11082 = vmatpush1.msra.mxu0 0.0
    %11083 = vmatprep.subr.mxu0 0.0
    %11084 = vmatpush1.msra.mxu0 0.0
    %11085 = vmatprep.subr.mxu0 0.0
    %11086 = vmatpush1.msra.mxu0 0.0
    %11087 = vmatprep.subr.mxu0 0.0
    %11088 = vmatpush1.msra.mxu0 0.0
    %11089 = vmatprep.subr.mxu0 0.0
    %11090 = vmatpush1.msra.mxu0 0.0
    %11091 = vmatprep.subr.mxu0 0.0
    %11092 = vmatpush1.msra.mxu0 0.0
    %11093 = vmatprep.subr.mxu0 0.0
    %11094 = vmatpush1.msra.mxu0 0.0
    %11095 = vmatprep.subr.mxu0 0.0
    %11096 = vmatpush1.msra.mxu0 0.0
    %11097 = vmatprep.subr.mxu0 0.0
    %11098 = vmatpush1.msra.mxu0 0.0
    %11099 = vmatprep.subr.mxu0 0.0
    %11100 = vmatpush1.msra.mxu0 0.0
    %11101 = vmatprep.subr.mxu0 0.0
    %11102 = vmatpush1.msra.mxu0 0.0
    %11103 = vmatprep.subr.mxu0 0.0
    %11104 = vmatpush1.msra.mxu0 0.0
    %11105 = vmatprep.subr.mxu0 0.0
    %11106 = vmatpush1.msra.mxu0 0.0
    %11107 = vmatprep.subr.mxu0 0.0
    %11108 = vmatpush1.msra.mxu0 0.0
    %11109 = vmatprep.subr.mxu0 0.0
    %11110 = vmatpush1.msra.mxu0 0.0
    %11111 = vmatprep.subr.mxu0 0.0
    %11112 = vmatpush1.msra.mxu0 0.0
    %11113 = vmatprep.subr.mxu0 0.0
    %11114 = vmatpush1.msra.mxu0 0.0
    %11115 = vmatprep.subr.mxu0 0.0
    %11116 = vmatpush1.msra.mxu0 0.0
    %11117 = vmatprep.subr.mxu0 0.0
    %11118 = vmatpush1.msra.mxu0 0.0
    %11119 = vmatprep.subr.mxu0 0.0
    %11120 = vmatpush1.msra.mxu0 0.0
    %11121 = vmatprep.subr.mxu0 0.0
    %11122 = vmatpush1.msra.mxu0 0.0
    %11123 = vmatprep.subr.mxu0 0.0
    %11124 = vmatpush1.msra.mxu0 0.0
    %11125 = vmatprep.subr.mxu0 0.0
    %11126 = vmatpush1.msra.mxu0 0.0
    %11127 = vmatprep.subr.mxu0 0.0
    %11128 = vmatpush1.msra.mxu0 0.0
    %11129 = vmatprep.subr.mxu0 0.0
    %11130 = vmatpush1.msra.mxu0 0.0
    %11131 = vmatprep.subr.mxu0 0.0
    %11132 = vmatpush1.msra.mxu0 0.0
    %11133 = vmatprep.subr.mxu0 0.0
    %11134 = vmatpush1.msra.mxu0 0.0
    %11135 = vmatprep.mubr.f32.mxu0 0.0
    %11136 = vmatmul.mubr.f32.gmra.mrb[0].mxu0 %v11069
    %v11137 = vpop.f32.mrb[0].mxu0
    %v11138 = vadd.f32 0.0, %v11137
    %v11139 = vpop.f32.mrb[0].mxu0
    %11140 = vdwg.mxu0
    %v11142 = vsel %vm647, %v10612, 0
    %11144 = vmatprep.subr.mxu0 0.0
    %11145 = vmatpush1.msra.mxu0 %v9681
    %11146 = vmatprep.subr.mxu0 0.0
    %11147 = vmatpush1.msra.mxu0 0.0
    %11148 = vmatprep.subr.mxu0 0.0
    %11149 = vmatpush1.msra.mxu0 0.0
    %11150 = vmatprep.subr.mxu0 0.0
    %11151 = vmatpush1.msra.mxu0 0.0
    %11152 = vmatprep.subr.mxu0 0.0
    %11153 = vmatpush1.msra.mxu0 0.0
    %11154 = vmatprep.subr.mxu0 0.0
    %11155 = vmatpush1.msra.mxu0 0.0
    %11156 = vmatprep.subr.mxu0 0.0
    %11157 = vmatpush1.msra.mxu0 0.0
    %11158 = vmatprep.subr.mxu0 0.0
    %11159 = vmatpush1.msra.mxu0 0.0
    %11160 = vmatprep.subr.mxu0 0.0
    %11161 = vmatpush1.msra.mxu0 0.0
    %11162 = vmatprep.subr.mxu0 0.0
    %11163 = vmatpush1.msra.mxu0 0.0
    %11164 = vmatprep.subr.mxu0 0.0
    %11165 = vmatpush1.msra.mxu0 0.0
    %11166 = vmatprep.subr.mxu0 0.0
    %11167 = vmatpush1.msra.mxu0 0.0
    %11168 = vmatprep.subr.mxu0 0.0
    %11169 = vmatpush1.msra.mxu0 0.0
    %11170 = vmatprep.subr.mxu0 0.0
    %11171 = vmatpush1.msra.mxu0 0.0
    %11172 = vmatprep.subr.mxu0 0.0
    %11173 = vmatpush1.msra.mxu0 0.0
    %11174 = vmatprep.subr.mxu0 0.0
    %11175 = vmatpush1.msra.mxu0 0.0
    %11176 = vmatprep.subr.mxu0 0.0
    %11177 = vmatpush1.msra.mxu0 0.0
    %11178 = vmatprep.subr.mxu0 0.0
    %11179 = vmatpush1.msra.mxu0 0.0
    %11180 = vmatprep.subr.mxu0 0.0
    %11181 = vmatpush1.msra.mxu0 0.0
    %11182 = vmatprep.subr.mxu0 0.0
    %11183 = vmatpush1.msra.mxu0 0.0
    %11184 = vmatprep.subr.mxu0 0.0
    %11185 = vmatpush1.msra.mxu0 0.0
    %11186 = vmatprep.subr.mxu0 0.0
    %11187 = vmatpush1.msra.mxu0 0.0
    %11188 = vmatprep.subr.mxu0 0.0
    %11189 = vmatpush1.msra.mxu0 0.0
    %11190 = vmatprep.subr.mxu0 0.0
    %11191 = vmatpush1.msra.mxu0 0.0
    %11192 = vmatprep.subr.mxu0 0.0
    %11193 = vmatpush1.msra.mxu0 0.0
    %11194 = vmatprep.subr.mxu0 0.0
    %11195 = vmatpush1.msra.mxu0 0.0
    %11196 = vmatprep.subr.mxu0 0.0
    %11197 = vmatpush1.msra.mxu0 0.0
    %11198 = vmatprep.subr.mxu0 0.0
    %11199 = vmatpush1.msra.mxu0 0.0
    %11200 = vmatprep.subr.mxu0 0.0
    %11201 = vmatpush1.msra.mxu0 0.0
    %11202 = vmatprep.subr.mxu0 0.0
    %11203 = vmatpush1.msra.mxu0 0.0
    %11204 = vmatprep.subr.mxu0 0.0
    %11205 = vmatpush1.msra.mxu0 0.0
    %11206 = vmatprep.subr.mxu0 0.0
    %11207 = vmatpush1.msra.mxu0 0.0
    %11208 = vmatprep.mubr.f32.mxu0 0.0
    %11209 = vmatmul.mubr.f32.gmra.mrb[0].mxu0 %v11142
    %v11210 = vpop.f32.mrb[0].mxu0
    %v11211 = vadd.f32 0.0, %v11210
    %v11212 = vpop.f32.mrb[0].mxu0
    %11213 = vdwg.mxu0
    %v11215 = vsel %vm647, %v10688, 0
    %11217 = vmatprep.subr.mxu0 0.0
    %11218 = vmatpush1.msra.mxu0 %v9682
    %11219 = vmatprep.subr.mxu0 0.0
    %11220 = vmatpush1.msra.mxu0 0.0
    %11221 = vmatprep.subr.mxu0 0.0
    %11222 = vmatpush1.msra.mxu0 0.0
    %11223 = vmatprep.subr.mxu0 0.0
    %11224 = vmatpush1.msra.mxu0 0.0
    %11225 = vmatprep.subr.mxu0 0.0
    %11226 = vmatpush1.msra.mxu0 0.0
    %11227 = vmatprep.subr.mxu0 0.0
    %11228 = vmatpush1.msra.mxu0 0.0
    %11229 = vmatprep.subr.mxu0 0.0
    %11230 = vmatpush1.msra.mxu0 0.0
    %11231 = vmatprep.subr.mxu0 0.0
    %11232 = vmatpush1.msra.mxu0 0.0
    %11233 = vmatprep.subr.mxu0 0.0
    %11234 = vmatpush1.msra.mxu0 0.0
    %11235 = vmatprep.subr.mxu0 0.0
    %11236 = vmatpush1.msra.mxu0 0.0
    %11237 = vmatprep.subr.mxu0 0.0
    %11238 = vmatpush1.msra.mxu0 0.0
    %11239 = vmatprep.subr.mxu0 0.0
    %11240 = vmatpush1.msra.mxu0 0.0
    %11241 = vmatprep.subr.mxu0 0.0
    %11242 = vmatpush1.msra.mxu0 0.0
    %11243 = vmatprep.subr.mxu0 0.0
    %11244 = vmatpush1.msra.mxu0 0.0
    %11245 = vmatprep.subr.mxu0 0.0
    %11246 = vmatpush1.msra.mxu0 0.0
    %11247 = vmatprep.subr.mxu0 0.0
    %11248 = vmatpush1.msra.mxu0 0.0
    %11249 = vmatprep.subr.mxu0 0.0
    %11250 = vmatpush1.msra.mxu0 0.0
    %11251 = vmatprep.subr.mxu0 0.0
    %11252 = vmatpush1.msra.mxu0 0.0
    %11253 = vmatprep.subr.mxu0 0.0
    %11254 = vmatpush1.msra.mxu0 0.0
    %11255 = vmatprep.subr.mxu0 0.0
    %11256 = vmatpush1.msra.mxu0 0.0
    %11257 = vmatprep.subr.mxu0 0.0
    %11258 = vmatpush1.msra.mxu0 0.0
    %11259 = vmatprep.subr.mxu0 0.0
    %11260 = vmatpush1.msra.mxu0 0.0
    %11261 = vmatprep.subr.mxu0 0.0
    %11262 = vmatpush1.msra.mxu0 0.0
    %11263 = vmatprep.subr.mxu0 0.0
    %11264 = vmatpush1.msra.mxu0 0.0
    %11265 = vmatprep.subr.mxu0 0.0
    %11266 = vmatpush1.msra.mxu0 0.0
    %11267 = vmatprep.subr.mxu0 0.0
    %11268 = vmatpush1.msra.mxu0 0.0
    %11269 = vmatprep.subr.mxu0 0.0
    %11270 = vmatpush1.msra.mxu0 0.0
    %11271 = vmatprep.subr.mxu0 0.0
    %11272 = vmatpush1.msra.mxu0 0.0
    %11273 = vmatprep.subr.mxu0 0.0
    %11274 = vmatpush1.msra.mxu0 0.0
    %11275 = vmatprep.subr.mxu0 0.0
    %11276 = vmatpush1.msra.mxu0 0.0
    %11277 = vmatprep.subr.mxu0 0.0
    %11278 = vmatpush1.msra.mxu0 0.0
    %11279 = vmatprep.subr.mxu0 0.0
    %11280 = vmatpush1.msra.mxu0 0.0
    %11281 = vmatprep.mubr.f32.mxu0 0.0
    %11282 = vmatmul.mubr.f32.gmra.mrb[0].mxu0 %v11215
    %v11283 = vpop.f32.mrb[0].mxu0
    %v11284 = vadd.f32 0.0, %v11283
    %v11285 = vpop.f32.mrb[0].mxu0
    %11286 = vdwg.mxu0
    %v11288 = vsel %vm647, %v10764, 0
    %11290 = vmatprep.subr.mxu0 0.0
    %11291 = vmatpush1.msra.mxu0 %v9679
    %11292 = vmatprep.subr.mxu0 0.0
    %11293 = vmatpush1.msra.mxu0 0.0
    %11294 = vmatprep.subr.mxu0 0.0
    %11295 = vmatpush1.msra.mxu0 0.0
    %11296 = vmatprep.subr.mxu0 0.0
    %11297 = vmatpush1.msra.mxu0 0.0
    %11298 = vmatprep.subr.mxu0 0.0
    %11299 = vmatpush1.msra.mxu0 0.0
    %11300 = vmatprep.subr.mxu0 0.0
    %11301 = vmatpush1.msra.mxu0 0.0
    %11302 = vmatprep.subr.mxu0 0.0
    %11303 = vmatpush1.msra.mxu0 0.0
    %11304 = vmatprep.subr.mxu0 0.0
    %11305 = vmatpush1.msra.mxu0 0.0
    %11306 = vmatprep.subr.mxu0 0.0
    %11307 = vmatpush1.msra.mxu0 0.0
    %11308 = vmatprep.subr.mxu0 0.0
    %11309 = vmatpush1.msra.mxu0 0.0
    %11310 = vmatprep.subr.mxu0 0.0
    %11311 = vmatpush1.msra.mxu0 0.0
    %11312 = vmatprep.subr.mxu0 0.0
    %11313 = vmatpush1.msra.mxu0 0.0
    %11314 = vmatprep.subr.mxu0 0.0
    %11315 = vmatpush1.msra.mxu0 0.0
    %11316 = vmatprep.subr.mxu0 0.0
    %11317 = vmatpush1.msra.mxu0 0.0
    %11318 = vmatprep.subr.mxu0 0.0
    %11319 = vmatpush1.msra.mxu0 0.0
    %11320 = vmatprep.subr.mxu0 0.0
    %11321 = vmatpush1.msra.mxu0 0.0
    %11322 = vmatprep.subr.mxu0 0.0
    %11323 = vmatpush1.msra.mxu0 0.0
    %11324 = vmatprep.subr.mxu0 0.0
    %11325 = vmatpush1.msra.mxu0 0.0
    %11326 = vmatprep.subr.mxu0 0.0
    %11327 = vmatpush1.msra.mxu0 0.0
    %11328 = vmatprep.subr.mxu0 0.0
    %11329 = vmatpush1.msra.mxu0 0.0
    %11330 = vmatprep.subr.mxu0 0.0
    %11331 = vmatpush1.msra.mxu0 0.0
    %11332 = vmatprep.subr.mxu0 0.0
    %11333 = vmatpush1.msra.mxu0 0.0
    %11334 = vmatprep.subr.mxu0 0.0
    %11335 = vmatpush1.msra.mxu0 0.0
    %11336 = vmatprep.subr.mxu0 0.0
    %11337 = vmatpush1.msra.mxu0 0.0
    %11338 = vmatprep.subr.mxu0 0.0
    %11339 = vmatpush1.msra.mxu0 0.0
    %11340 = vmatprep.subr.mxu0 0.0
    %11341 = vmatpush1.msra.mxu0 0.0
    %11342 = vmatprep.subr.mxu0 0.0
    %11343 = vmatpush1.msra.mxu0 0.0
    %11344 = vmatprep.subr.mxu0 0.0
    %11345 = vmatpush1.msra.mxu0 0.0
    %11346 = vmatprep.subr.mxu0 0.0
    %11347 = vmatpush1.msra.mxu0 0.0
    %11348 = vmatprep.subr.mxu0 0.0
    %11349 = vmatpush1.msra.mxu0 0.0
    %11350 = vmatprep.subr.mxu0 0.0
    %11351 = vmatpush1.msra.mxu0 0.0
    %11352 = vmatprep.subr.mxu0 0.0
    %11353 = vmatpush1.msra.mxu0 0.0
    %11354 = vmatprep.mubr.f32.mxu0 0.0
    %11355 = vmatmul.mubr.f32.gmra.mrb[0].mxu0 %v11288
    %v11356 = vpop.f32.mrb[0].mxu0
    %v11357 = vadd.f32 0.0, %v11356
    %v11358 = vpop.f32.mrb[0].mxu0
    %11359 = vdwg.mxu0
    %v11361 = vsel %vm647, %v10840, 0
    %11363 = vmatprep.subr.mxu0 0.0
    %11364 = vmatpush1.msra.mxu0 %v9680
    %11365 = vmatprep.subr.mxu0 0.0
    %11366 = vmatpush1.msra.mxu0 0.0
    %11367 = vmatprep.subr.mxu0 0.0
    %11368 = vmatpush1.msra.mxu0 0.0
    %11369 = vmatprep.subr.mxu0 0.0
    %11370 = vmatpush1.msra.mxu0 0.0
    %11371 = vmatprep.subr.mxu0 0.0
    %11372 = vmatpush1.msra.mxu0 0.0
    %11373 = vmatprep.subr.mxu0 0.0
    %11374 = vmatpush1.msra.mxu0 0.0
    %11375 = vmatprep.subr.mxu0 0.0
    %11376 = vmatpush1.msra.mxu0 0.0
    %11377 = vmatprep.subr.mxu0 0.0
    %11378 = vmatpush1.msra.mxu0 0.0
    %11379 = vmatprep.subr.mxu0 0.0
    %11380 = vmatpush1.msra.mxu0 0.0
    %11381 = vmatprep.subr.mxu0 0.0
    %11382 = vmatpush1.msra.mxu0 0.0
    %11383 = vmatprep.subr.mxu0 0.0
    %11384 = vmatpush1.msra.mxu0 0.0
    %11385 = vmatprep.subr.mxu0 0.0
    %11386 = vmatpush1.msra.mxu0 0.0
    %11387 = vmatprep.subr.mxu0 0.0
    %11388 = vmatpush1.msra.mxu0 0.0
    %11389 = vmatprep.subr.mxu0 0.0
    %11390 = vmatpush1.msra.mxu0 0.0
    %11391 = vmatprep.subr.mxu0 0.0
    %11392 = vmatpush1.msra.mxu0 0.0
    %11393 = vmatprep.subr.mxu0 0.0
    %11394 = vmatpush1.msra.mxu0 0.0
    %11395 = vmatprep.subr.mxu0 0.0
    %11396 = vmatpush1.msra.mxu0 0.0
    %11397 = vmatprep.subr.mxu0 0.0
    %11398 = vmatpush1.msra.mxu0 0.0
    %11399 = vmatprep.subr.mxu0 0.0
    %11400 = vmatpush1.msra.mxu0 0.0
    %11401 = vmatprep.subr.mxu0 0.0
    %11402 = vmatpush1.msra.mxu0 0.0
    %11403 = vmatprep.subr.mxu0 0.0
    %11404 = vmatpush1.msra.mxu0 0.0
    %11405 = vmatprep.subr.mxu0 0.0
    %11406 = vmatpush1.msra.mxu0 0.0
    %11407 = vmatprep.subr.mxu0 0.0
    %11408 = vmatpush1.msra.mxu0 0.0
    %11409 = vmatprep.subr.mxu0 0.0
    %11410 = vmatpush1.msra.mxu0 0.0
    %11411 = vmatprep.subr.mxu0 0.0
    %11412 = vmatpush1.msra.mxu0 0.0
    %11413 = vmatprep.subr.mxu0 0.0
    %11414 = vmatpush1.msra.mxu0 0.0
    %11415 = vmatprep.subr.mxu0 0.0
    %11416 = vmatpush1.msra.mxu0 0.0
    %11417 = vmatprep.subr.mxu0 0.0
    %11418 = vmatpush1.msra.mxu0 0.0
    %11419 = vmatprep.subr.mxu0 0.0
    %11420 = vmatpush1.msra.mxu0 0.0
    %11421 = vmatprep.subr.mxu0 0.0
    %11422 = vmatpush1.msra.mxu0 0.0
    %11423 = vmatprep.subr.mxu0 0.0
    %11424 = vmatpush1.msra.mxu0 0.0
    %11425 = vmatprep.subr.mxu0 0.0
    %11426 = vmatpush1.msra.mxu0 0.0
    %11427 = vmatprep.mubr.f32.mxu0 0.0
    %11428 = vmatmul.mubr.f32.gmra.mrb[0].mxu0 %v11361
    %v11429 = vpop.f32.mrb[0].mxu0
    %v11430 = vadd.f32 0.0, %v11429
    %v11431 = vpop.f32.mrb[0].mxu0
    %11432 = vdwg.mxu0
    %v11434 = vsel %vm647, %v10916, 0
    %11436 = vmatprep.subr.mxu0 0.0
    %11437 = vmatpush1.msra.mxu0 %v9681
    %11438 = vmatprep.subr.mxu0 0.0
    %11439 = vmatpush1.msra.mxu0 0.0
    %11440 = vmatprep.subr.mxu0 0.0
    %11441 = vmatpush1.msra.mxu0 0.0
    %11442 = vmatprep.subr.mxu0 0.0
    %11443 = vmatpush1.msra.mxu0 0.0
    %11444 = vmatprep.subr.mxu0 0.0
    %11445 = vmatpush1.msra.mxu0 0.0
    %11446 = vmatprep.subr.mxu0 0.0
    %11447 = vmatpush1.msra.mxu0 0.0
    %11448 = vmatprep.subr.mxu0 0.0
    %11449 = vmatpush1.msra.mxu0 0.0
    %11450 = vmatprep.subr.mxu0 0.0
    %11451 = vmatpush1.msra.mxu0 0.0
    %11452 = vmatprep.subr.mxu0 0.0
    %11453 = vmatpush1.msra.mxu0 0.0
    %11454 = vmatprep.subr.mxu0 0.0
    %11455 = vmatpush1.msra.mxu0 0.0
    %11456 = vmatprep.subr.mxu0 0.0
    %11457 = vmatpush1.msra.mxu0 0.0
    %11458 = vmatprep.subr.mxu0 0.0
    %11459 = vmatpush1.msra.mxu0 0.0
    %11460 = vmatprep.subr.mxu0 0.0
    %11461 = vmatpush1.msra.mxu0 0.0
    %11462 = vmatprep.subr.mxu0 0.0
    %11463 = vmatpush1.msra.mxu0 0.0
    %11464 = vmatprep.subr.mxu0 0.0
    %11465 = vmatpush1.msra.mxu0 0.0
    %11466 = vmatprep.subr.mxu0 0.0
    %11467 = vmatpush1.msra.mxu0 0.0
    %11468 = vmatprep.subr.mxu0 0.0
    %11469 = vmatpush1.msra.mxu0 0.0
    %11470 = vmatprep.subr.mxu0 0.0
    %11471 = vmatpush1.msra.mxu0 0.0
    %11472 = vmatprep.subr.mxu0 0.0
    %11473 = vmatpush1.msra.mxu0 0.0
    %11474 = vmatprep.subr.mxu0 0.0
    %11475 = vmatpush1.msra.mxu0 0.0
    %11476 = vmatprep.subr.mxu0 0.0
    %11477 = vmatpush1.msra.mxu0 0.0
    %11478 = vmatprep.subr.mxu0 0.0
    %11479 = vmatpush1.msra.mxu0 0.0
    %11480 = vmatprep.subr.mxu0 0.0
    %11481 = vmatpush1.msra.mxu0 0.0
    %11482 = vmatprep.subr.mxu0 0.0
    %11483 = vmatpush1.msra.mxu0 0.0
    %11484 = vmatprep.subr.mxu0 0.0
    %11485 = vmatpush1.msra.mxu0 0.0
    %11486 = vmatprep.subr.mxu0 0.0
    %11487 = vmatpush1.msra.mxu0 0.0
    %11488 = vmatprep.subr.mxu0 0.0
    %11489 = vmatpush1.msra.mxu0 0.0
    %11490 = vmatprep.subr.mxu0 0.0
    %11491 = vmatpush1.msra.mxu0 0.0
    %11492 = vmatprep.subr.mxu0 0.0
    %11493 = vmatpush1.msra.mxu0 0.0
    %11494 = vmatprep.subr.mxu0 0.0
    %11495 = vmatpush1.msra.mxu0 0.0
    %11496 = vmatprep.subr.mxu0 0.0
    %11497 = vmatpush1.msra.mxu0 0.0
    %11498 = vmatprep.subr.mxu0 0.0
    %11499 = vmatpush1.msra.mxu0 0.0
    %11500 = vmatprep.mubr.f32.mxu0 0.0
    %11501 = vmatmul.mubr.f32.gmra.mrb[0].mxu0 %v11434
    %v11502 = vpop.f32.mrb[0].mxu0
    %v11503 = vadd.f32 0.0, %v11502
    %v11504 = vpop.f32.mrb[0].mxu0
    %11505 = vdwg.mxu0
    %v11507 = vsel %vm647, %v10992, 0
    %11509 = vmatprep.subr.mxu0 0.0
    %11510 = vmatpush1.msra.mxu0 %v9682
    %11511 = vmatprep.subr.mxu0 0.0
    %11512 = vmatpush1.msra.mxu0 0.0
    %11513 = vmatprep.subr.mxu0 0.0
    %11514 = vmatpush1.msra.mxu0 0.0
    %11515 = vmatprep.subr.mxu0 0.0
    %11516 = vmatpush1.msra.mxu0 0.0
    %11517 = vmatprep.subr.mxu0 0.0
    %11518 = vmatpush1.msra.mxu0 0.0
    %11519 = vmatprep.subr.mxu0 0.0
    %11520 = vmatpush1.msra.mxu0 0.0
    %11521 = vmatprep.subr.mxu0 0.0
    %11522 = vmatpush1.msra.mxu0 0.0
    %11523 = vmatprep.subr.mxu0 0.0
    %11524 = vmatpush1.msra.mxu0 0.0
    %11525 = vmatprep.subr.mxu0 0.0
    %11526 = vmatpush1.msra.mxu0 0.0
    %11527 = vmatprep.subr.mxu0 0.0
    %11528 = vmatpush1.msra.mxu0 0.0
    %11529 = vmatprep.subr.mxu0 0.0
    %11530 = vmatpush1.msra.mxu0 0.0
    %11531 = vmatprep.subr.mxu0 0.0
    %11532 = vmatpush1.msra.mxu0 0.0
    %11533 = vmatprep.subr.mxu0 0.0
    %11534 = vmatpush1.msra.mxu0 0.0
    %11535 = vmatprep.subr.mxu0 0.0
    %11536 = vmatpush1.msra.mxu0 0.0
    %11537 = vmatprep.subr.mxu0 0.0
    %11538 = vmatpush1.msra.mxu0 0.0
    %11539 = vmatprep.subr.mxu0 0.0
    %11540 = vmatpush1.msra.mxu0 0.0
    %11541 = vmatprep.subr.mxu0 0.0
    %11542 = vmatpush1.msra.mxu0 0.0
    %11543 = vmatprep.subr.mxu0 0.0
    %11544 = vmatpush1.msra.mxu0 0.0
    %11545 = vmatprep.subr.mxu0 0.0
    %11546 = vmatpush1.msra.mxu0 0.0
    %11547 = vmatprep.subr.mxu0 0.0
    %11548 = vmatpush1.msra.mxu0 0.0
    %11549 = vmatprep.subr.mxu0 0.0
    %11550 = vmatpush1.msra.mxu0 0.0
    %11551 = vmatprep.subr.mxu0 0.0
    %11552 = vmatpush1.msra.mxu0 0.0
    %11553 = vmatprep.subr.mxu0 0.0
    %11554 = vmatpush1.msra.mxu0 0.0
    %11555 = vmatprep.subr.mxu0 0.0
    %11556 = vmatpush1.msra.mxu0 0.0
    %11557 = vmatprep.subr.mxu0 0.0
    %11558 = vmatpush1.msra.mxu0 0.0
    %11559 = vmatprep.subr.mxu0 0.0
    %11560 = vmatpush1.msra.mxu0 0.0
    %11561 = vmatprep.subr.mxu0 0.0
    %11562 = vmatpush1.msra.mxu0 0.0
    %11563 = vmatprep.subr.mxu0 0.0
    %11564 = vmatpush1.msra.mxu0 0.0
    %11565 = vmatprep.subr.mxu0 0.0
    %11566 = vmatpush1.msra.mxu0 0.0
    %11567 = vmatprep.subr.mxu0 0.0
    %11568 = vmatpush1.msra.mxu0 0.0
    %11569 = vmatprep.subr.mxu0 0.0
    %11570 = vmatpush1.msra.mxu0 0.0
    %11571 = vmatprep.subr.mxu0 0.0
    %11572 = vmatpush1.msra.mxu0 0.0
    %11573 = vmatprep.mubr.f32.mxu0 0.0
    %11574 = vmatmul.mubr.f32.gmra.mrb[0].mxu0 %v11507
    %v11575 = vpop.f32.mrb[0].mxu0
    %v11576 = vadd.f32 0.0, %v11575
    %v11577 = vpop.f32.mrb[0].mxu0
    %11578 = vdwg.mxu0
    %v11579 = vsel %vm73, %v11065, 0.0
    %v11580 = vsel %vm73, %v11138, 0.0
    %v11581 = vadd.f32 %v11579, %v11580
    %v11582 = vsel %vm73, %v11211, 0.0
    %v11583 = vadd.f32 %v11581, %v11582
    %v11584 = vsel %vm73, %v11284, 0.0
    %v11585 = vadd.f32 %v11583, %v11584
    %v11586 = vsel %vm73, %v11357, 0.0
    %v11587 = vsel %vm73, %v11430, 0.0
    %v11588 = vadd.f32 %v11586, %v11587
    %v11589 = vsel %vm73, %v11503, 0.0
    %v11590 = vadd.f32 %v11588, %v11589
    %v11591 = vsel %vm73, %v11576, 0.0
    %v11592 = vadd.f32 %v11590, %v11591
    %v11593 = vlaneseq
    %v11594 = vshrl.u32 %v11593, 7
    %v11595 = vsub.s32 3, %v11594
    %v11596 = vrot.slane %v5964, %v11595
    %v11597 = vadd.f32 %v11585, %v11596
    %v11598 = vadd.f32 %v11592, %v11596
    %v11599 = vadd.f32 %v11597, %v8516
    %v11600 = vadd.f32 %v11598, %v8517
    %v11601 = vsel %vm73, %v11599, 0.0
    %11602 = vadd.xlane.f32.xlu0 %v11601
    %v11603 = vpop.xlane.xlu0 %11602
    %v11604 = vsel %vm73, %v11600, 0.0
    %11605 = vadd.xlane.f32.xlu0 %v11604
    %v11606 = vpop.xlane.xlu0 %11605
    %v11607 = vmul.f32 %v11603, %v2577
    %v11608 = vmul.f32 %v11606, %v2577
    %v11609 = vsub.f32 %v11599, %v11607
    %v11610 = vsub.f32 %v11600, %v11608
    %v11611 = vmul.f32 %v11609, %v11609
    %v11612 = vmul.f32 %v11610, %v11610
    %v11613 = vsel %vm73, %v11611, 0.0
    %11614 = vadd.xlane.f32.xlu0 %v11613
    %v11615 = vpop.xlane.xlu0 %11614
    %v11616 = vsel %vm73, %v11612, 0.0
    %11617 = vadd.xlane.f32.xlu0 %v11616
    %v11618 = vpop.xlane.xlu0 %11617
    %v11619 = vmul.f32 %v11615, %v2577
    %v11620 = vmul.f32 %v11618, %v2577
    %v11621 = vadd.f32 %v11619, 1e-05
    %v11622 = vadd.f32 %v11620, 1e-05
    %v11623 = vrsqrt.pop %v11621
    %v11624 = vrsqrt.pop %v11622
    %v11625 = vmul.f32 %v11609, %v11623
    %v11626 = vmul.f32 %v11610, %v11624
    %v11627 = vlaneseq
    %v11628 = vshrl.u32 %v11627, 7
    %v11629 = vsub.s32 4, %v11628
    %v11630 = vrot.slane %v5964, %v11629
    %v11631 = vmul.f32 %v11625, %v11630
    %v11632 = vmul.f32 %v11626, %v11630
    %v11633 = vlaneseq
    %v11634 = vshrl.u32 %v11633, 7
    %v11635 = vsub.s32 5, %v11634
    %v11636 = vrot.slane %v5964, %v11635
    %v11637 = vadd.f32 %v11631, %v11636
    %v11638 = vadd.f32 %v11632, %v11636
    %s11639 = scalar_lea.vmem %s8, 32
    %v11640 = vld [vmem:[%s11639] sm:$0xff]
    %v11641 = vld [vmem:[%s11639 + $0x8] sm:$0xff]
    %v11642 = vld [vmem:[%s11639 + $0x10] sm:$0xff]
    %v11643 = vld [vmem:[%s11639 + $0x18] sm:$0xff]
    %s11644 = scalar_lea.vmem %s9, 1
    %v11645 = vld [vmem:[%s11644] sm:$0x1]
    %v11647 = vlaneseq
    %v11648 = vshrl.u32 %v11647, 7
    %v11649 = vsub.s32 0, %v11648
    %v11650 = vrot.slane %v11645, %v11649
    %v11653 = vsel %vm73, %v11637, 0
    %v11656 = vsel %vm73, %v11638, 0
    %11658 = vmatprep.subr.mxu0 0.0
    %11659 = vmatpush1.msra.mxu0 %v11640
    %11660 = vmatprep.subr.mxu0 0.0
    %11661 = vmatpush1.msra.mxu0 %v11641
    %11662 = vmatprep.subr.mxu0 0.0
    %11663 = vmatpush1.msra.mxu0 %v11642
    %11664 = vmatprep.subr.mxu0 0.0
    %11665 = vmatpush1.msra.mxu0 %v11643
    %11666 = vmatprep.subr.mxu0 0.0
    %11667 = vmatpush1.msra.mxu0 0.0
    %11668 = vmatprep.subr.mxu0 0.0
    %11669 = vmatpush1.msra.mxu0 0.0
    %11670 = vmatprep.subr.mxu0 0.0
    %11671 = vmatpush1.msra.mxu0 0.0
    %11672 = vmatprep.subr.mxu0 0.0
    %11673 = vmatpush1.msra.mxu0 0.0
    %11674 = vmatprep.subr.mxu0 0.0
    %11675 = vmatpush1.msra.mxu0 0.0
    %11676 = vmatprep.subr.mxu0 0.0
    %11677 = vmatpush1.msra.mxu0 0.0
    %11678 = vmatprep.subr.mxu0 0.0
    %11679 = vmatpush1.msra.mxu0 0.0
    %11680 = vmatprep.subr.mxu0 0.0
    %11681 = vmatpush1.msra.mxu0 0.0
    %11682 = vmatprep.subr.mxu0 0.0
    %11683 = vmatpush1.msra.mxu0 0.0
    %11684 = vmatprep.subr.mxu0 0.0
    %11685 = vmatpush1.msra.mxu0 0.0
    %11686 = vmatprep.subr.mxu0 0.0
    %11687 = vmatpush1.msra.mxu0 0.0
    %11688 = vmatprep.subr.mxu0 0.0
    %11689 = vmatpush1.msra.mxu0 0.0
    %11690 = vmatprep.subr.mxu0 0.0
    %11691 = vmatpush1.msra.mxu0 0.0
    %11692 = vmatprep.subr.mxu0 0.0
    %11693 = vmatpush1.msra.mxu0 0.0
    %11694 = vmatprep.subr.mxu0 0.0
    %11695 = vmatpush1.msra.mxu0 0.0
    %11696 = vmatprep.subr.mxu0 0.0
    %11697 = vmatpush1.msra.mxu0 0.0
    %11698 = vmatprep.subr.mxu0 0.0
    %11699 = vmatpush1.msra.mxu0 0.0
    %11700 = vmatprep.subr.mxu0 0.0
    %11701 = vmatpush1.msra.mxu0 0.0
    %11702 = vmatprep.subr.mxu0 0.0
    %11703 = vmatpush1.msra.mxu0 0.0
    %11704 = vmatprep.subr.mxu0 0.0
    %11705 = vmatpush1.msra.mxu0 0.0
    %11706 = vmatprep.subr.mxu0 0.0
    %11707 = vmatpush1.msra.mxu0 0.0
    %11708 = vmatprep.subr.mxu0 0.0
    %11709 = vmatpush1.msra.mxu0 0.0
    %11710 = vmatprep.subr.mxu0 0.0
    %11711 = vmatpush1.msra.mxu0 0.0
    %11712 = vmatprep.subr.mxu0 0.0
    %11713 = vmatpush1.msra.mxu0 0.0
    %11714 = vmatprep.subr.mxu0 0.0
    %11715 = vmatpush1.msra.mxu0 0.0
    %11716 = vmatprep.subr.mxu0 0.0
    %11717 = vmatpush1.msra.mxu0 0.0
    %11718 = vmatprep.subr.mxu0 0.0
    %11719 = vmatpush1.msra.mxu0 0.0
    %11720 = vmatprep.subr.mxu0 0.0
    %11721 = vmatpush1.msra.mxu0 0.0
    %11722 = vmatprep.mubr.f32.mxu0 0.0
    %11723 = vmatmul.mubr.f32.gmra.mrb[0].mxu0 %v11653
    %v11724 = vpop.f32.mrb[0].mxu0
    %v11725 = vadd.f32 %v11650, %v11724
    %v11726 = vpop.f32.mrb[0].mxu0
    %11727 = vmatprep.mubr.f32.mxu0 0.0
    %11728 = vmatmul.mubr.f32.gmra.mrb[0].mxu0 %v11656
    %v11729 = vpop.f32.mrb[0].mxu0
    %v11730 = vadd.f32 %v11650, %v11729
    %v11731 = vpop.f32.mrb[0].mxu0
    %11732 = vdwg.mxu0
    %v11733 = vmax.f32 %v11725, 0.0
    %v11734 = vmax.f32 %v11730, 0.0
    %s11735 = scalar_lea.vmem %s10, 128
    %v11736 = vld [vmem:[%s11735] sm:$0xff]
    %v11737 = vld [vmem:[%s11735 + $0x8] sm:$0xff]
    %v11738 = vld [vmem:[%s11735 + $0x10] sm:$0xff]
    %v11739 = vld [vmem:[%s11735 + $0x18] sm:$0xff]
    %v11740 = vld [vmem:[%s11735 + $0x20] sm:$0xff]
    %v11741 = vld [vmem:[%s11735 + $0x28] sm:$0xff]
    %v11742 = vld [vmem:[%s11735 + $0x30] sm:$0xff]
    %v11743 = vld [vmem:[%s11735 + $0x38] sm:$0xff]
    %v11744 = vld [vmem:[%s11735 + $0x40] sm:$0xff]
    %v11745 = vld [vmem:[%s11735 + $0x48] sm:$0xff]
    %v11746 = vld [vmem:[%s11735 + $0x50] sm:$0xff]
    %v11747 = vld [vmem:[%s11735 + $0x58] sm:$0xff]
    %v11748 = vld [vmem:[%s11735 + $0x60] sm:$0xff]
    %v11749 = vld [vmem:[%s11735 + $0x68] sm:$0xff]
    %v11750 = vld [vmem:[%s11735 + $0x70] sm:$0xff]
    %v11751 = vld [vmem:[%s11735 + $0x78] sm:$0xff]
    %v11752 = vlaneseq
    %v11753 = vshrl.u32 %v11752, 7
    %v11754 = vsub.s32 6, %v11753
    %v11755 = vrot.slane %v5964, %v11754
    %11756 = vmatprep.subr.mxu0 0.0
    %11757 = vmatpush1.msra.mxu0 %v11736
    %11758 = vmatprep.subr.mxu0 0.0
    %11759 = vmatpush1.msra.mxu0 %v11737
    %11760 = vmatprep.subr.mxu0 0.0
    %11761 = vmatpush1.msra.mxu0 %v11738
    %11762 = vmatprep.subr.mxu0 0.0
    %11763 = vmatpush1.msra.mxu0 %v11739
    %11764 = vmatprep.subr.mxu0 0.0
    %11765 = vmatpush1.msra.mxu0 %v11740
    %11766 = vmatprep.subr.mxu0 0.0
    %11767 = vmatpush1.msra.mxu0 %v11741
    %11768 = vmatprep.subr.mxu0 0.0
    %11769 = vmatpush1.msra.mxu0 %v11742
    %11770 = vmatprep.subr.mxu0 0.0
    %11771 = vmatpush1.msra.mxu0 %v11743
    %11772 = vmatprep.subr.mxu0 0.0
    %11773 = vmatpush1.msra.mxu0 %v11744
    %11774 = vmatprep.subr.mxu0 0.0
    %11775 = vmatpush1.msra.mxu0 %v11745
    %11776 = vmatprep.subr.mxu0 0.0
    %11777 = vmatpush1.msra.mxu0 %v11746
    %11778 = vmatprep.subr.mxu0 0.0
    %11779 = vmatpush1.msra.mxu0 %v11747
    %11780 = vmatprep.subr.mxu0 0.0
    %11781 = vmatpush1.msra.mxu0 %v11748
    %11782 = vmatprep.subr.mxu0 0.0
    %11783 = vmatpush1.msra.mxu0 %v11749
    %11784 = vmatprep.subr.mxu0 0.0
    %11785 = vmatpush1.msra.mxu0 %v11750
    %11786 = vmatprep.subr.mxu0 0.0
    %11787 = vmatpush1.msra.mxu0 %v11751
    %11788 = vmatprep.subr.mxu0 0.0
    %11789 = vmatpush1.msra.mxu0 0.0
    %11790 = vmatprep.subr.mxu0 0.0
    %11791 = vmatpush1.msra.mxu0 0.0
    %11792 = vmatprep.subr.mxu0 0.0
    %11793 = vmatpush1.msra.mxu0 0.0
    %11794 = vmatprep.subr.mxu0 0.0
    %11795 = vmatpush1.msra.mxu0 0.0
    %11796 = vmatprep.subr.mxu0 0.0
    %11797 = vmatpush1.msra.mxu0 0.0
    %11798 = vmatprep.subr.mxu0 0.0
    %11799 = vmatpush1.msra.mxu0 0.0
    %11800 = vmatprep.subr.mxu0 0.0
    %11801 = vmatpush1.msra.mxu0 0.0
    %11802 = vmatprep.subr.mxu0 0.0
    %11803 = vmatpush1.msra.mxu0 0.0
    %11804 = vmatprep.subr.mxu0 0.0
    %11805 = vmatpush1.msra.mxu0 0.0
    %11806 = vmatprep.subr.mxu0 0.0
    %11807 = vmatpush1.msra.mxu0 0.0
    %11808 = vmatprep.subr.mxu0 0.0
    %11809 = vmatpush1.msra.mxu0 0.0
    %11810 = vmatprep.subr.mxu0 0.0
    %11811 = vmatpush1.msra.mxu0 0.0
    %11812 = vmatprep.subr.mxu0 0.0
    %11813 = vmatpush1.msra.mxu0 0.0
    %11814 = vmatprep.subr.mxu0 0.0
    %11815 = vmatpush1.msra.mxu0 0.0
    %11816 = vmatprep.subr.mxu0 0.0
    %11817 = vmatpush1.msra.mxu0 0.0
    %11818 = vmatprep.subr.mxu0 0.0
    %11819 = vmatpush1.msra.mxu0 0.0
    %11820 = vmatprep.mubr.f32.mxu0 0.0
    %11821 = vmatmul.mubr.f32.gmra.mrb[0].mxu0 %v11733
    %v11822 = vpop.f32.mrb[0].mxu0
    %v11823 = vadd.f32 %v11755, %v11822
    %v11824 = vpop.f32.mrb[0].mxu0
    %11825 = vmatprep.mubr.f32.mxu0 0.0
    %11826 = vmatmul.mubr.f32.gmra.mrb[0].mxu0 %v11734
    %v11827 = vpop.f32.mrb[0].mxu0
    %v11828 = vadd.f32 %v11755, %v11827
    %v11829 = vpop.f32.mrb[0].mxu0
    %11830 = vdwg.mxu0
    %v11831 = vadd.f32 %v11823, %v11637
    %v11832 = vadd.f32 %v11828, %v11638
    %v11833 = vsel %vm73, %v11831, 0.0
    %11834 = vadd.xlane.f32.xlu0 %v11833
    %v11835 = vpop.xlane.xlu0 %11834
    %v11836 = vsel %vm73, %v11832, 0.0
    %11837 = vadd.xlane.f32.xlu0 %v11836
    %v11838 = vpop.xlane.xlu0 %11837
    %v11839 = vmul.f32 %v11835, %v2577
    %v11840 = vmul.f32 %v11838, %v2577
    %v11841 = vsub.f32 %v11831, %v11839
    %v11842 = vsub.f32 %v11832, %v11840
    %v11843 = vmul.f32 %v11841, %v11841
    %v11844 = vmul.f32 %v11842, %v11842
    %v11845 = vsel %vm73, %v11843, 0.0
    %11846 = vadd.xlane.f32.xlu0 %v11845
    %v11847 = vpop.xlane.xlu0 %11846
    %v11848 = vsel %vm73, %v11844, 0.0
    %11849 = vadd.xlane.f32.xlu0 %v11848
    %v11850 = vpop.xlane.xlu0 %11849
    %v11851 = vmul.f32 %v11847, %v2577
    %v11852 = vmul.f32 %v11850, %v2577
    %v11853 = vadd.f32 %v11851, 1e-05
    %v11854 = vadd.f32 %v11852, 1e-05
    %v11855 = vrsqrt.pop %v11853
    %v11856 = vrsqrt.pop %v11854
    %v11857 = vmul.f32 %v11841, %v11855
    %v11858 = vmul.f32 %v11842, %v11856
    %v11859 = vlaneseq
    %v11860 = vshrl.u32 %v11859, 7
    %v11861 = vsub.s32 7, %v11860
    %v11862 = vrot.slane %v5964, %v11861
    %v11863 = vmul.f32 %v11857, %v11862
    %v11864 = vmul.f32 %v11858, %v11862
    %v11865 = vlaneseq
    %v11866 = vshrl.u32 %v11865, 7
    %v11867 = vsub.s32 0, %v11866
    %v11868 = vrot.slane %v5965, %v11867
    %v11869 = vadd.f32 %v11863, %v11868
    %v11870 = vadd.f32 %v11864, %v11868
    %v11871 = vld [vmem:[%s12] sm:$0xff]
    %v11872 = vld [vmem:[%s12 + $0x8] sm:$0xff]
    %v11873 = vld [vmem:[%s12 + $0x10] sm:$0xff]
    %v11874 = vld [vmem:[%s12 + $0x18] sm:$0xff]
    %v11875 = vld [vmem:[%s13] sm:$0x1]
    %v11877 = vlaneseq
    %v11878 = vshrl.u32 %v11877, 7
    %v11879 = vsub.s32 0, %v11878
    %v11880 = vrot.slane %v11875, %v11879
    %v11883 = vsel %vm73, %v11869, 0
    %v11886 = vsel %vm73, %v11870, 0
    %11888 = vmatprep.subr.mxu0 0.0
    %11889 = vmatpush1.msra.mxu0 %v11871
    %11890 = vmatprep.subr.mxu0 0.0
    %11891 = vmatpush1.msra.mxu0 %v11872
    %11892 = vmatprep.subr.mxu0 0.0
    %11893 = vmatpush1.msra.mxu0 %v11873
    %11894 = vmatprep.subr.mxu0 0.0
    %11895 = vmatpush1.msra.mxu0 %v11874
    %11896 = vmatprep.subr.mxu0 0.0
    %11897 = vmatpush1.msra.mxu0 0.0
    %11898 = vmatprep.subr.mxu0 0.0
    %11899 = vmatpush1.msra.mxu0 0.0
    %11900 = vmatprep.subr.mxu0 0.0
    %11901 = vmatpush1.msra.mxu0 0.0
    %11902 = vmatprep.subr.mxu0 0.0
    %11903 = vmatpush1.msra.mxu0 0.0
    %11904 = vmatprep.subr.mxu0 0.0
    %11905 = vmatpush1.msra.mxu0 0.0
    %11906 = vmatprep.subr.mxu0 0.0
    %11907 = vmatpush1.msra.mxu0 0.0
    %11908 = vmatprep.subr.mxu0 0.0
    %11909 = vmatpush1.msra.mxu0 0.0
    %11910 = vmatprep.subr.mxu0 0.0
    %11911 = vmatpush1.msra.mxu0 0.0
    %11912 = vmatprep.subr.mxu0 0.0
    %11913 = vmatpush1.msra.mxu0 0.0
    %11914 = vmatprep.subr.mxu0 0.0
    %11915 = vmatpush1.msra.mxu0 0.0
    %11916 = vmatprep.subr.mxu0 0.0
    %11917 = vmatpush1.msra.mxu0 0.0
    %11918 = vmatprep.subr.mxu0 0.0
    %11919 = vmatpush1.msra.mxu0 0.0
    %11920 = vmatprep.subr.mxu0 0.0
    %11921 = vmatpush1.msra.mxu0 0.0
    %11922 = vmatprep.subr.mxu0 0.0
    %11923 = vmatpush1.msra.mxu0 0.0
    %11924 = vmatprep.subr.mxu0 0.0
    %11925 = vmatpush1.msra.mxu0 0.0
    %11926 = vmatprep.subr.mxu0 0.0
    %11927 = vmatpush1.msra.mxu0 0.0
    %11928 = vmatprep.subr.mxu0 0.0
    %11929 = vmatpush1.msra.mxu0 0.0
    %11930 = vmatprep.subr.mxu0 0.0
    %11931 = vmatpush1.msra.mxu0 0.0
    %11932 = vmatprep.subr.mxu0 0.0
    %11933 = vmatpush1.msra.mxu0 0.0
    %11934 = vmatprep.subr.mxu0 0.0
    %11935 = vmatpush1.msra.mxu0 0.0
    %11936 = vmatprep.subr.mxu0 0.0
    %11937 = vmatpush1.msra.mxu0 0.0
    %11938 = vmatprep.subr.mxu0 0.0
    %11939 = vmatpush1.msra.mxu0 0.0
    %11940 = vmatprep.subr.mxu0 0.0
    %11941 = vmatpush1.msra.mxu0 0.0
    %11942 = vmatprep.subr.mxu0 0.0
    %11943 = vmatpush1.msra.mxu0 0.0
    %11944 = vmatprep.subr.mxu0 0.0
    %11945 = vmatpush1.msra.mxu0 0.0
    %11946 = vmatprep.subr.mxu0 0.0
    %11947 = vmatpush1.msra.mxu0 0.0
    %11948 = vmatprep.subr.mxu0 0.0
    %11949 = vmatpush1.msra.mxu0 0.0
    %11950 = vmatprep.subr.mxu0 0.0
    %11951 = vmatpush1.msra.mxu0 0.0
    %11952 = vmatprep.mubr.f32.mxu0 0.0
    %11953 = vmatmul.mubr.f32.gmra.mrb[0].mxu0 %v11883
    %v11954 = vpop.f32.mrb[0].mxu0
    %v11955 = vadd.f32 %v11880, %v11954
    %v11956 = vpop.f32.mrb[0].mxu0
    %11957 = vmatprep.mubr.f32.mxu0 0.0
    %11958 = vmatmul.mubr.f32.gmra.mrb[0].mxu0 %v11886
    %v11959 = vpop.f32.mrb[0].mxu0
    %v11960 = vadd.f32 %v11880, %v11959
    %v11961 = vpop.f32.mrb[0].mxu0
    %11962 = vdwg.mxu0
    %11963 = vst [vmem:[#allocation2] sm:$0xff] %v11955
    %11964 = vst [vmem:[#allocation2 + $0x8] sm:$0xff] %v11960
    // Predicated region
    $region58: #{decoder_pallas.1} parent=1 // pred_check
      _
    $region59: #{decoder_pallas.1} parent=1 // pred_check_branch
      %11966 = sbr.rel (0) target = $region61
    $region60: #{decoder_pallas.1} parent=1 // pred_region
      %s11968 = ssub.s32 256, 256
      %11969 = vsyncadd [#allocation3], %s11968
      %s11970 = sshll.u32 [#allocation2], 4
      %s11971 = int_to_ptr.vmem [resolvable:$true] %s11970
      %11976 = dma.vmem_to_hbm [thread:$0]  %s11971, 256, %s14, [#allocation3], 128, 128, 8
    $region61: #{decoder_pallas.1} parent=1 // pred_fallthru
      _
    // Predicated region
    $region62: #{decoder_pallas.1} parent=1 // pred_check
      _
    $region63: #{decoder_pallas.1} parent=1 // pred_check_branch
      %11978 = sbr.rel (0) target = $region65
    $region64: #{decoder_pallas.1} parent=1 // pred_region
      %11979 = dma.done [#allocation3], 256
    $region65: #{decoder_pallas.1} parent=1 // pred_fallthru
      _
    %11980 = vsyncpa [#allocation3], 1

</llo_original>
